<compile_context>
chip_gen: v5e
topology: v5e:2x2
jax: 0.10.0
libtpu: 0.0.40
codegen_flags: <defaults>
</compile_context>

<pallas_src>
import math
import functools

import jax
import jax.numpy as jnp
from jax.experimental import pallas as pl
from jax.experimental.pallas import tpu as pltpu

_LANE = 128
_SUBLANE = 8


# ----------------------------- chip-aware defaults -----------------------------

@functools.lru_cache(maxsize=None)
def _chip_defaults():
    """Per-generation tile defaults + scoped-VMEM limit (v5e/v6e: 128MiB phys, v7x: 64MiB)."""
    try:
        cap = pltpu.get_tpu_info().vmem_capacity_bytes
    except Exception:
        return {"tm": 256, "tk": 512, "vmem": None}
    if cap >= 100 * 1024 * 1024:                      # v5e / v6e
        return {"tm": 512, "tk": 1024, "vmem": 96 * 1024 * 1024}
    return {"tm": 256, "tk": 512, "vmem": 40 * 1024 * 1024}   # v7x


def _round_up(x, m):
    return (x + m - 1) // m * m


def _pick_tile(dim, max_tile, align):
    """Largest tile <= max_tile that is a multiple of `align` and divides `dim`;
    falls back to the full dim (always a legal block).  Callers pad dims that must
    not hit the full-dim fallback (e.g. vocab-sized N)."""
    if dim <= max_tile:
        return dim
    t = (max_tile // align) * align
    while t >= align:
        if dim % t == 0:
            return t
        t -= align
    return dim


def _bf16(x):
    return x if x.dtype == jnp.bfloat16 else x.astype(jnp.bfloat16)


# ----------------------------- linear (tiled matmul) -----------------------------

def _linear_kernel(x_ref, w_ref, b_ref, o_ref, acc_ref, *, activation):
    @pl.when(pl.program_id(2) == 0)
    def _init():
        acc_ref[...] = jnp.zeros_like(acc_ref)

    acc_ref[...] += jnp.dot(x_ref[...], w_ref[...], preferred_element_type=jnp.float32)

    @pl.when(pl.program_id(2) == pl.num_programs(2) - 1)
    def _finalize():
        acc = acc_ref[...] + b_ref[...].astype(jnp.float32)
        if activation == "relu":
            acc = jnp.maximum(acc, 0.0)
        o_ref[...] = acc.astype(o_ref.dtype)


def linear(x, w, b, activation=None, out_dtype=jnp.bfloat16, tm=None, tn=256, tk=None):
    """x: (M, K) bf16, w: (K, N) bf16, b: (N,) f32 -> (M, N) out_dtype.
    M padded to 8, N padded to 128 so tiles are always lane/sublane aligned."""
    d = _chip_defaults()
    M, K = x.shape
    N = w.shape[1]
    Mp, Np = _round_up(M, _SUBLANE), _round_up(N, _LANE)
    if Mp != M:
        x = jnp.pad(x, ((0, Mp - M), (0, 0)))
    if Np != N:
        w = jnp.pad(w, ((0, 0), (0, Np - N)))
        b = jnp.pad(b, (0, Np - N))
    tm = _pick_tile(Mp, tm or d["tm"], _SUBLANE)
    tn = _pick_tile(Np, tn, _LANE)
    tk = _pick_tile(K, tk or d["tk"], _LANE)
    grid = (Mp // tm, Np // tn, K // tk)

    xb = jnp.dtype(x.dtype).itemsize
    wb = jnp.dtype(w.dtype).itemsize
    ob = jnp.dtype(out_dtype).itemsize
    cost = pl.CostEstimate(flops=2 * Mp * Np * K, transcendentals=0,
                           bytes_accessed=xb * Mp * K + wb * K * Np + ob * Mp * Np)

    out = pl.pallas_call(
        functools.partial(_linear_kernel, activation=activation),
        out_shape=jax.ShapeDtypeStruct((Mp, Np), out_dtype),
        grid=grid,
        in_specs=[pl.BlockSpec((tm, tk), lambda i, j, k: (i, k)),
                  pl.BlockSpec((tk, tn), lambda i, j, k: (k, j)),
                  pl.BlockSpec((1, tn), lambda i, j, k: (0, j))],
        out_specs=pl.BlockSpec((tm, tn), lambda i, j, k: (i, j)),
        scratch_shapes=[pltpu.VMEM((tm, tn), jnp.float32)],
        compiler_params=pltpu.CompilerParams(
            dimension_semantics=("parallel", "parallel", "arbitrary"),
            vmem_limit_bytes=d["vmem"]),
        cost_estimate=cost,
    )(x, w, b.reshape(1, Np))
    if Mp != M or Np != N:
        out = out[:M, :N]
    return out


# ----------------- linear + residual-add + LayerNorm (fused epilogue) -----------------

def _linear_ln_kernel(x_ref, w_ref, b_ref, res_ref, g_ref, bt_ref, o_ref, acc_ref, *, eps):
    @pl.when(pl.program_id(1) == 0)
    def _init():
        acc_ref[...] = jnp.zeros_like(acc_ref)

    acc_ref[...] += jnp.dot(x_ref[...], w_ref[...], preferred_element_type=jnp.float32)

    @pl.when(pl.program_id(1) == pl.num_programs(1) - 1)
    def _finalize():
        y = (acc_ref[...] + b_ref[...].astype(jnp.float32)
             + res_ref[...].astype(jnp.float32))           # residual add, f32
        mean = jnp.mean(y, axis=-1, keepdims=True)
        cen = y - mean
        var = jnp.mean(cen * cen, axis=-1, keepdims=True)
        norm = cen * jax.lax.rsqrt(var + eps)
        o_ref[...] = (norm * g_ref[...].astype(jnp.float32)
                      + bt_ref[...].astype(jnp.float32)).astype(o_ref.dtype)


def linear_ln(x, w, b, res, gamma, beta, eps=1e-5, out_dtype=jnp.bfloat16, tm=None, tk=None):
    """LayerNorm(res + x @ w + b): the add+LN runs in the matmul finalize (tn == D)."""
    d = _chip_defaults()
    M, K = x.shape
    D = w.shape[1]
    Mp = _round_up(M, _SUBLANE)
    if Mp != M:
        x = jnp.pad(x, ((0, Mp - M), (0, 0)))
        res = jnp.pad(res, ((0, Mp - M), (0, 0)))
    tm = _pick_tile(Mp, tm or d["tm"], _SUBLANE)
    tk = _pick_tile(K, tk or d["tk"], _LANE)
    grid = (Mp // tm, K // tk)

    out = pl.pallas_call(
        functools.partial(_linear_ln_kernel, eps=eps),
        out_shape=jax.ShapeDtypeStruct((Mp, D), out_dtype),
        grid=grid,
        in_specs=[pl.BlockSpec((tm, tk), lambda i, k: (i, k)),
                  pl.BlockSpec((tk, D), lambda i, k: (k, 0)),
                  pl.BlockSpec((1, D), lambda i, k: (0, 0)),
                  pl.BlockSpec((tm, D), lambda i, k: (i, 0)),
                  pl.BlockSpec((1, D), lambda i, k: (0, 0)),
                  pl.BlockSpec((1, D), lambda i, k: (0, 0))],
        out_specs=pl.BlockSpec((tm, D), lambda i, k: (i, 0)),
        scratch_shapes=[pltpu.VMEM((tm, D), jnp.float32)],
        compiler_params=pltpu.CompilerParams(
            dimension_semantics=("parallel", "arbitrary"),
            vmem_limit_bytes=d["vmem"]),
    )(x, w, b.reshape(1, D), res, gamma.reshape(1, D), beta.reshape(1, D))
    return out[:M] if Mp != M else out


# ----------------------------- flash-style multi-head attention -----------------------------

def _mha_kernel(q_ref, k_ref, v_ref, o_ref, m_ref, l_ref, acc_ref, *,
                nhead, dh, q_off, k_off, v_off, scale, causal, tq, tk):
    qi = pl.program_id(1)
    ki = pl.program_id(2)

    @pl.when(ki == 0)
    def _init():
        m_ref[...] = jnp.full_like(m_ref, -jnp.inf)
        l_ref[...] = jnp.zeros_like(l_ref)
        acc_ref[...] = jnp.zeros_like(acc_ref)

    def _update():
        if causal:
            q_ids = qi * tq + jax.lax.broadcasted_iota(jnp.int32, (tq, tk), 0)
            k_ids = ki * tk + jax.lax.broadcasted_iota(jnp.int32, (tq, tk), 1)
            visible = k_ids <= q_ids
        for h in range(nhead):
            q = _bf16(q_ref[0, :, pl.ds(q_off + h * dh, dh)] * scale)     # (tq, dh)
            k = _bf16(k_ref[0, :, pl.ds(k_off + h * dh, dh)])             # (tk, dh)
            v = _bf16(v_ref[0, :, pl.ds(v_off + h * dh, dh)])             # (tk, dh)
            s = jax.lax.dot_general(q, k, (((1,), (1,)), ((), ())),
                                    preferred_element_type=jnp.float32)   # (tq, tk)
            if causal:
                s = jnp.where(visible, s, -1e30)
            m_prev = m_ref[h]                                              # (tq, 1)
            m_new = jnp.maximum(m_prev, jnp.max(s, axis=-1, keepdims=True))
            alpha = jnp.exp(m_prev - m_new)
            p = jnp.exp(s - m_new)
            l_ref[h] = alpha * l_ref[h] + jnp.sum(p, axis=-1, keepdims=True)
            m_ref[h] = m_new
            pv = jnp.dot(p.astype(jnp.bfloat16), v, preferred_element_type=jnp.float32)
            hs = pl.ds(h * dh, dh)
            acc_ref[:, hs] = alpha * acc_ref[:, hs] + pv

    if causal:
        # Skip kv blocks that are entirely in the future for this q block.
        pl.when(ki * tk <= qi * tq + (tq - 1))(_update)
    else:
        _update()

    @pl.when(ki == pl.num_programs(2) - 1)
    def _finalize():
        for h in range(nhead):
            hs = pl.ds(h * dh, dh)
            inv = 1.0 / l_ref[h]                                           # exact, (tq, 1)
            o_ref[0, :, hs] = (acc_ref[:, hs] * inv).astype(o_ref.dtype)


def mha(q_src, k_src, v_src, *, q_col, k_col, v_col, nhead, d_model, causal,
        tq=128, tk=128, out_dtype=jnp.bfloat16):
    """q_src: (Nb, Lq, Wq), k_src/v_src: (Nb, Lk, Wk/Wv); each width is a multiple of
    d_model and {q,k,v}_col selects which d_model-wide column group to use (so fused
    QKV / K|V projections are consumed without any HBM transpose or slice)."""
    d = _chip_defaults()
    Nb, Lq, Wq = q_src.shape
    _, Lk, Wk = k_src.shape
    Wv = v_src.shape[2]
    dh = d_model // nhead
    tq = _pick_tile(Lq, tq, _SUBLANE)
    tk = _pick_tile(Lk, tk, _SUBLANE)
    grid = (Nb, Lq // tq, Lk // tk)

    def make_spec(width, col, is_q):
        t = tq if is_q else tk
        full = (lambda b, i, j: (b, i, 0)) if is_q else (lambda b, i, j: (b, j, 0))
        split = (lambda b, i, j: (b, i, col)) if is_q else (lambda b, i, j: (b, j, col))
        if width == d_model:
            return pl.BlockSpec((1, t, d_model), full), 0
        if d_model % _LANE == 0:
            return pl.BlockSpec((1, t, d_model), split), 0      # column-block head split
        return pl.BlockSpec((1, t, width), full), col * d_model  # fallback: slice in-kernel

    q_spec, q_off = make_spec(Wq, q_col, True)
    k_spec, k_off = make_spec(Wk, k_col, False)
    v_spec, v_off = make_spec(Wv, v_col, False)

    kernel = functools.partial(
        _mha_kernel, nhead=nhead, dh=dh, q_off=q_off, k_off=k_off, v_off=v_off,
        scale=1.0 / math.sqrt(dh), causal=causal, tq=tq, tk=tk)

    return pl.pallas_call(
        kernel,
        out_shape=jax.ShapeDtypeStruct((Nb, Lq, d_model), out_dtype),
        grid=grid,
        in_specs=[q_spec, k_spec, v_spec],
        out_specs=pl.BlockSpec((1, tq, d_model), lambda b, i, j: (b, i, 0)),
        scratch_shapes=[pltpu.VMEM((nhead, tq, 1), jnp.float32),
                        pltpu.VMEM((nhead, tq, 1), jnp.float32),
                        pltpu.VMEM((tq, d_model), jnp.float32)],
        compiler_params=pltpu.CompilerParams(
            dimension_semantics=("parallel", "parallel", "arbitrary"),
            vmem_limit_bytes=d["vmem"]),
    )(q_src, k_src, v_src)


# ----------------------------- positional encoding -----------------------------

def _posenc_kernel(x_ref, pe_ref, o_ref, *, scale):
    o_ref[...] = (x_ref[...].astype(jnp.float32) * scale
                  + pe_ref[...][None].astype(jnp.float32)).astype(o_ref.dtype)


def pos_encode(x, pe, d_model, out_dtype=jnp.bfloat16, ts=256):
    """x: (Nb, S, D) f32 embeddings, pe: (S, D); out = x*sqrt(d_model) + pe, bf16.
    Tiled over (batch, seq) with a parallel grid; dropout is eval-mode identity."""
    Nb, S, D = x.shape
    ts = _pick_tile(S, ts, _SUBLANE)
    return pl.pallas_call(
        functools.partial(_posenc_kernel, scale=math.sqrt(d_model)),
        out_shape=jax.ShapeDtypeStruct((Nb, S, D), out_dtype),
        grid=(Nb, S // ts),
        in_specs=[pl.BlockSpec((1, ts, D), lambda b, s: (b, s, 0)),
                  pl.BlockSpec((ts, D), lambda b, s: (s, 0))],
        out_specs=pl.BlockSpec((1, ts, D), lambda b, s: (b, s, 0)),
        compiler_params=pltpu.CompilerParams(
            dimension_semantics=("parallel", "parallel")),
    )(x, pe)


# ----------------------------- model glue (plain JAX between kernels) -----------------------------

def encoder_layer(p, x, nhead):
    Nb, S, D = x.shape
    xf = x.reshape(Nb * S, D)
    sa = p["self_attn"]
    qkv = linear(xf, sa["w_qkv"], sa["b_qkv"]).reshape(Nb, S, 3 * D)      # fused QKV, bf16
    ctx = mha(qkv, qkv, qkv, q_col=0, k_col=1, v_col=2,
              nhead=nhead, d_model=D, causal=False).reshape(Nb * S, D)
    x1 = linear_ln(ctx, sa["wo"], sa["bo"], xf, p["ln1_g"], p["ln1_b"])   # out-proj + add + LN
    h = linear(x1, p["ff_w1"], p["ff_b1"], activation="relu")
    x2 = linear_ln(h, p["ff_w2"], p["ff_b2"], x1, p["ln2_g"], p["ln2_b"])
    return x2.reshape(Nb, S, D)


def decoder_layer(p, x, memory, nhead):
    Nb, T, D = x.shape
    S = memory.shape[1]
    xf = x.reshape(Nb * T, D)

    sa = p["self_attn"]
    qkv = linear(xf, sa["w_qkv"], sa["b_qkv"]).reshape(Nb, T, 3 * D)
    ctx = mha(qkv, qkv, qkv, q_col=0, k_col=1, v_col=2,
              nhead=nhead, d_model=D, causal=True).reshape(Nb * T, D)     # causal in-kernel
    x1 = linear_ln(ctx, sa["wo"], sa["bo"], xf, p["ln1_g"], p["ln1_b"])

    ca = p["cross_attn"]
    q = linear(x1, ca["wq"], ca["bq"]).reshape(Nb, T, D)
    kv = linear(memory.reshape(Nb * S, D), ca["w_kv"], ca["b_kv"]).reshape(Nb, S, 2 * D)
    ctx2 = mha(q, kv, kv, q_col=0, k_col=0, v_col=1,
               nhead=nhead, d_model=D, causal=False).reshape(Nb * T, D)
    x2 = linear_ln(ctx2, ca["wo"], ca["bo"], x1, p["ln2_g"], p["ln2_b"])

    h = linear(x2, p["ff_w1"], p["ff_b1"], activation="relu")
    x3 = linear_ln(h, p["ff_w2"], p["ff_b2"], x2, p["ln3_g"], p["ln3_b"])
    return x3.reshape(Nb, T, D)


def transformer_forward(params, src, tgt, *, d_model, nhead):
    """src, tgt: (S, N) / (T, N) int32 token ids (seq-first, nn.Transformer layout)."""
    S, Nb = src.shape
    T = tgt.shape[0]
    V = params["fc_b"].shape[0]

    # TODO(synk): embedding lookup is a data-dependent gather; kept in plain JAX.
    src_e = params["src_emb"][src.T]                   # (Nb, S, D) batch-major, f32
    tgt_e = params["tgt_emb"][tgt.T]                   # (Nb, T, D)

    x = pos_encode(src_e, params["pe"][:S], d_model)   # bf16 activation stream starts here
    for lp in params["enc_layers"]:
        x = encoder_layer(lp, x, nhead)
    memory = x

    y = pos_encode(tgt_e, params["pe"][:T], d_model)
    for lp in params["dec_layers"]:
        y = decoder_layer(lp, y, memory, nhead)

    logits = linear(y.reshape(Nb * T, d_model), params["fc_w"], params["fc_b"],
                    out_dtype=jnp.float32)
    return logits.reshape(Nb, T, V).transpose(1, 0, 2)  # back to (T, N, V) seq-first


# ----------------------------- deterministic parameter init -----------------------------

def make_pe(max_len, d_model):
    position = jnp.arange(max_len, dtype=jnp.float32)[:, None]
    div_term = jnp.exp(jnp.arange(0, d_model, 2, dtype=jnp.float32)
                       * (-math.log(10000.0) / d_model))
    pe = jnp.zeros((max_len, d_model), jnp.float32)
    pe = pe.at[:, 0::2].set(jnp.sin(position * div_term))
    pe = pe.at[:, 1::2].set(jnp.cos(position * div_term))
    return pe


def _dense(key, fan_in, fan_out):
    # matmul weights stored in bf16 (halves weight DMA; MXU is bf16-native).
    w = jax.random.normal(key, (fan_in, fan_out), jnp.float32) * 0.02
    return w.astype(jnp.bfloat16)


def init_self_attn_params(key, d):
    k1, k2 = jax.random.split(key)
    return {"w_qkv": _dense(k1, d, 3 * d), "b_qkv": jnp.zeros((3 * d,), jnp.float32),
            "wo": _dense(k2, d, d), "bo": jnp.zeros((d,), jnp.float32)}


def init_cross_attn_params(key, d):
    k1, k2, k3 = jax.random.split(key, 3)
    return {"wq": _dense(k1, d, d), "bq": jnp.zeros((d,), jnp.float32),
            "w_kv": _dense(k2, d, 2 * d), "b_kv": jnp.zeros((2 * d,), jnp.float32),
            "wo": _dense(k3, d, d), "bo": jnp.zeros((d,), jnp.float32)}


def init_encoder_layer_params(key, d, ff):
    ks = jax.random.split(key, 3)
    return {"self_attn": init_self_attn_params(ks[0], d),
            "ff_w1": _dense(ks[1], d, ff), "ff_b1": jnp.zeros((ff,), jnp.float32),
            "ff_w2": _dense(ks[2], ff, d), "ff_b2": jnp.zeros((d,), jnp.float32),
            "ln1_g": jnp.ones((d,), jnp.float32), "ln1_b": jnp.zeros((d,), jnp.float32),
            "ln2_g": jnp.ones((d,), jnp.float32), "ln2_b": jnp.zeros((d,), jnp.float32)}


def init_decoder_layer_params(key, d, ff):
    ks = jax.random.split(key, 4)
    return {"self_attn": init_self_attn_params(ks[0], d),
            "cross_attn": init_cross_attn_params(ks[1], d),
            "ff_w1": _dense(ks[2], d, ff), "ff_b1": jnp.zeros((ff,), jnp.float32),
            "ff_w2": _dense(ks[3], ff, d), "ff_b2": jnp.zeros((d,), jnp.float32),
            "ln1_g": jnp.ones((d,), jnp.float32), "ln1_b": jnp.zeros((d,), jnp.float32),
            "ln2_g": jnp.ones((d,), jnp.float32), "ln2_b": jnp.zeros((d,), jnp.float32),
            "ln3_g": jnp.ones((d,), jnp.float32), "ln3_b": jnp.zeros((d,), jnp.float32)}


def init_params(key, src_vocab, tgt_vocab, d, n_enc, n_dec, ff, max_len=64):
    ks = jax.random.split(key, 3 + n_enc + n_dec)
    return {
        "src_emb": jax.random.normal(ks[0], (src_vocab, d), jnp.float32) * 0.02,
        "tgt_emb": jax.random.normal(ks[1], (tgt_vocab, d), jnp.float32) * 0.02,
        "fc_w": _dense(ks[2], d, tgt_vocab),
        "fc_b": jnp.zeros((tgt_vocab,), jnp.float32),
        "pe": make_pe(max_len, d),
        "enc_layers": [init_encoder_layer_params(ks[3 + i], d, ff) for i in range(n_enc)],
        "dec_layers": [init_decoder_layer_params(ks[3 + n_enc + i], d, ff)
                       for i in range(n_dec)],
    }


# ----------------------------- demo -----------------------------

if __name__ == "__main__":
    # Small config consistent with the module (scaled down; d_model kept lane-aligned).
    SRC_VOCAB, TGT_VOCAB = 50, 60
    D_MODEL, NHEAD, FF = 128, 4, 256
    N_ENC, N_DEC = 2, 2
    S_LEN, T_LEN, BATCH = 8, 8, 2

    root = jax.random.PRNGKey(0)
    k_params, k_src, k_tgt = jax.random.split(root, 3)
    params = init_params(k_params, SRC_VOCAB, TGT_VOCAB, D_MODEL, N_ENC, N_DEC, FF)

    src = jax.random.randint(k_src, (S_LEN, BATCH), 0, SRC_VOCAB, dtype=jnp.int32)
    tgt = jax.random.randint(k_tgt, (T_LEN, BATCH), 0, TGT_VOCAB, dtype=jnp.int32)

    fwd = jax.jit(functools.partial(transformer_forward, d_model=D_MODEL, nhead=NHEAD))
    out = jax.block_until_ready(fwd(params, src, tgt))

    assert out.shape == (T_LEN, BATCH, TGT_VOCAB), out.shape
    assert bool(jnp.all(jnp.isfinite(out)))
    print("KERNEL_OK")
</pallas_src>

<mosaic_0001>
module attributes {stable_mosaic.version = 11 : i64} {
  func.func @_linear_kernel(%arg0: i32, %arg1: i32, %arg2: i32, %arg3: memref<16x128xbf16, #tpu.memory_space<vmem>>, %arg4: memref<128x128xbf16, #tpu.memory_space<vmem>>, %arg5: memref<1x128xf32, #tpu.memory_space<vmem>>, %arg6: memref<16x128xbf16, #tpu.memory_space<vmem>>, %arg7: memref<16x128xf32, #tpu.memory_space<vmem>>) attributes {dimension_semantics = [#tpu.dimension_semantics<parallel>, #tpu.dimension_semantics<parallel>, #tpu.dimension_semantics<arbitrary>], iteration_bounds = array<i64: 1, 3, 1>, scalar_prefetch = 0 : i64, scratch_operands = 1 : i64, tpu.core_type = #tpu.core_type<tc>, window_params = [{transform_indices = @transform_0, window_bounds = array<i64: 16, 128>}, {transform_indices = @transform_1, window_bounds = array<i64: 128, 128>}, {transform_indices = @transform_2, window_bounds = array<i64: 1, 128>}, {transform_indices = @transform_3, window_bounds = array<i64: 16, 128>}]} {
    %c0_i32 = arith.constant 0 : i32
    %0 = arith.cmpi eq, %arg2, %c0_i32 : i32
    %1 = arith.extui %0 : i1 to i32
    %c0_i32_0 = arith.constant 0 : i32
    %2 = arith.cmpi ne, %1, %c0_i32_0 : i32
    scf.if %2 {
      %cst_10 = arith.constant 0.000000e+00 : f32
      %12 = vector.broadcast %cst_10 : f32 to vector<16x128xf32>
      %c0_11 = arith.constant 0 : index
      %c0_12 = arith.constant 0 : index
      %13 = vector.load %arg7[%c0_11, %c0_12] : memref<16x128xf32, #tpu.memory_space<vmem>>, vector<16x128xf32>
      tpu.vector_store %arg7[%c0_11, %c0_12], %12 {strides = array<i32>} : memref<16x128xf32, #tpu.memory_space<vmem>>, vector<16x128xf32>,
    } else {
    }
    %c0 = arith.constant 0 : index
    %c0_1 = arith.constant 0 : index
    %3 = vector.load %arg7[%c0, %c0_1] : memref<16x128xf32, #tpu.memory_space<vmem>>, vector<16x128xf32>
    %c0_2 = arith.constant 0 : index
    %c0_3 = arith.constant 0 : index
    %4 = vector.load %arg3[%c0_2, %c0_3] : memref<16x128xbf16, #tpu.memory_space<vmem>>, vector<16x128xbf16>
    %c0_4 = arith.constant 0 : index
    %c0_5 = arith.constant 0 : index
    %5 = vector.load %arg4[%c0_4, %c0_5] : memref<128x128xbf16, #tpu.memory_space<vmem>>, vector<128x128xbf16>
    %cst = arith.constant dense<0.000000e+00> : vector<16x128xf32>
    %6 = tpu.matmul %4, %5, %cst {dimension_numbers = #tpu.dot_dimension_numbers<[1], [0], [0], [1], [0, 0, 1, 1], [], []>} : vector<16x128xbf16>, vector<128x128xbf16>, vector<16x128xf32> -> vector<16x128xf32>
    %7 = arith.addf %3, %6 : vector<16x128xf32>
    %c0_6 = arith.constant 0 : index
    %c0_7 = arith.constant 0 : index
    %8 = vector.load %arg7[%c0_6, %c0_7] : memref<16x128xf32, #tpu.memory_space<vmem>>, vector<16x128xf32>
    tpu.vector_store %arg7[%c0_6, %c0_7], %7 {strides = array<i32>} : memref<16x128xf32, #tpu.memory_space<vmem>>, vector<16x128xf32>,
    %c0_i32_8 = arith.constant 0 : i32
    %9 = arith.cmpi eq, %arg2, %c0_i32_8 : i32
    %10 = arith.extui %9 : i1 to i32
    %c0_i32_9 = arith.constant 0 : i32
    %11 = arith.cmpi ne, %10, %c0_i32_9 : i32
    scf.if %11 {
      %c0_10 = arith.constant 0 : index
      %c0_11 = arith.constant 0 : index
      %12 = vector.load %arg7[%c0_10, %c0_11] : memref<16x128xf32, #tpu.memory_space<vmem>>, vector<16x128xf32>
      %c0_12 = arith.constant 0 : index
      %c0_13 = arith.constant 0 : index
      %13 = vector.load %arg5[%c0_12, %c0_13] : memref<1x128xf32, #tpu.memory_space<vmem>>, vector<1x128xf32>
      %14 = vector.broadcast %13 : vector<1x128xf32> to vector<16x128xf32>
      %15 = arith.addf %12, %14 : vector<16x128xf32>
      %16 = arith.truncf %15 : vector<16x128xf32> to vector<16x128xbf16>
      %c0_14 = arith.constant 0 : index
      %c0_15 = arith.constant 0 : index
      %17 = vector.load %arg6[%c0_14, %c0_15] : memref<16x128xbf16, #tpu.memory_space<vmem>>, vector<16x128xbf16>
      tpu.vector_store %arg6[%c0_14, %c0_15], %16 {strides = array<i32>} : memref<16x128xbf16, #tpu.memory_space<vmem>>, vector<16x128xbf16>,
    } else {
    }
    return
  }
  func.func @transform_0(%arg0: i32, %arg1: i32, %arg2: i32) -> (i32, i32) {
    %c0_i32 = arith.constant 0 : i32
    return %arg0, %arg2 : i32, i32
  }
  func.func @transform_1(%arg0: i32, %arg1: i32, %arg2: i32) -> (i32, i32) {
    %c0_i32 = arith.constant 0 : i32
    return %arg2, %arg1 : i32, i32
  }
  func.func @transform_2(%arg0: i32, %arg1: i32, %arg2: i32) -> (i32, i32) {
    %c0_i32 = arith.constant 0 : i32
    %c0_i32_0 = arith.constant 0 : i32
    return %c0_i32, %arg1 : i32, i32
  }
  func.func @transform_3(%arg0: i32, %arg1: i32, %arg2: i32) -> (i32, i32) {
    %c0_i32 = arith.constant 0 : i32
    return %arg0, %arg1 : i32, i32
  }
}

module attributes {stable_mosaic.version = 11 : i64} {
  func.func @_posenc_kernel(%arg0: i32, %arg1: i32, %arg2: memref<1x8x128xf32, #tpu.memory_space<vmem>>, %arg3: memref<8x128xf32, #tpu.memory_space<vmem>>, %arg4: memref<1x8x128xbf16, #tpu.memory_space<vmem>>) attributes {dimension_semantics = [#tpu.dimension_semantics<parallel>, #tpu.dimension_semantics<parallel>], iteration_bounds = array<i64: 2, 1>, scalar_prefetch = 0 : i64, scratch_operands = 0 : i64, tpu.core_type = #tpu.core_type<tc>, window_params = [{transform_indices = @transform_0, window_bounds = array<i64: 1, 8, 128>}, {transform_indices = @transform_1, window_bounds = array<i64: 8, 128>}, {transform_indices = @transform_2, window_bounds = array<i64: 1, 8, 128>}]} {
    %c0 = arith.constant 0 : index
    %c0_0 = arith.constant 0 : index
    %c0_1 = arith.constant 0 : index
    %0 = vector.load %arg2[%c0, %c0_0, %c0_1] : memref<1x8x128xf32, #tpu.memory_space<vmem>>, vector<1x8x128xf32>
    %cst = arith.constant 11.3137083 : f32
    %1 = vector.broadcast %cst : f32 to vector<1x8x128xf32>
    %2 = arith.mulf %0, %1 : vector<1x8x128xf32>
    %c0_2 = arith.constant 0 : index
    %c0_3 = arith.constant 0 : index
    %3 = vector.load %arg3[%c0_2, %c0_3] : memref<8x128xf32, #tpu.memory_space<vmem>>, vector<8x128xf32>
    %4 = vector.shape_cast %3 : vector<8x128xf32> to vector<1x8x128xf32>
    %5 = arith.addf %2, %4 : vector<1x8x128xf32>
    %6 = arith.truncf %5 : vector<1x8x128xf32> to vector<1x8x128xbf16>
    %c0_4 = arith.constant 0 : index
    %c0_5 = arith.constant 0 : index
    %c0_6 = arith.constant 0 : index
    %7 = vector.load %arg4[%c0_4, %c0_5, %c0_6] : memref<1x8x128xbf16, #tpu.memory_space<vmem>>, vector<1x8x128xbf16>
    tpu.vector_store %arg4[%c0_4, %c0_5, %c0_6], %6 {strides = array<i32>} : memref<1x8x128xbf16, #tpu.memory_space<vmem>>, vector<1x8x128xbf16>,
    return
  }
  func.func @transform_0(%arg0: i32, %arg1: i32) -> (i32, i32, i32) {
    %c0_i32 = arith.constant 0 : i32
    %c0_i32_0 = arith.constant 0 : i32
    return %arg0, %arg1, %c0_i32 : i32, i32, i32
  }
  func.func @transform_1(%arg0: i32, %arg1: i32) -> (i32, i32) {
    %c0_i32 = arith.constant 0 : i32
    %c0_i32_0 = arith.constant 0 : i32
    return %arg1, %c0_i32 : i32, i32
  }
  func.func @transform_2(%arg0: i32, %arg1: i32) -> (i32, i32, i32) {
    %c0_i32 = arith.constant 0 : i32
    %c0_i32_0 = arith.constant 0 : i32
    return %arg0, %arg1, %c0_i32 : i32, i32, i32
  }
}

module attributes {stable_mosaic.version = 11 : i64} {
  func.func @_mha_kernel(%arg0: i32, %arg1: i32, %arg2: i32, %arg3: memref<1x8x128xbf16, #tpu.memory_space<vmem>>, %arg4: memref<1x8x128xbf16, #tpu.memory_space<vmem>>, %arg5: memref<1x8x128xbf16, #tpu.memory_space<vmem>>, %arg6: memref<1x8x128xbf16, #tpu.memory_space<vmem>>, %arg7: memref<4x8x1xf32, #tpu.memory_space<vmem>>, %arg8: memref<4x8x1xf32, #tpu.memory_space<vmem>>, %arg9: memref<8x128xf32, #tpu.memory_space<vmem>>) attributes {dimension_semantics = [#tpu.dimension_semantics<parallel>, #tpu.dimension_semantics<parallel>, #tpu.dimension_semantics<arbitrary>], iteration_bounds = array<i64: 2, 1, 1>, scalar_prefetch = 0 : i64, scratch_operands = 3 : i64, tpu.core_type = #tpu.core_type<tc>, window_params = [{transform_indices = @transform_0, window_bounds = array<i64: 1, 8, 128>}, {transform_indices = @transform_1, window_bounds = array<i64: 1, 8, 128>}, {transform_indices = @transform_2, window_bounds = array<i64: 1, 8, 128>}, {transform_indices = @transform_3, window_bounds = array<i64: 1, 8, 128>}]} {
    %c0_i32 = arith.constant 0 : i32
    %0 = arith.cmpi eq, %arg2, %c0_i32 : i32
    %1 = arith.extui %0 : i1 to i32
    %c0_i32_0 = arith.constant 0 : i32
    %2 = arith.cmpi ne, %1, %c0_i32_0 : i32
    scf.if %2 {
      %cst_115 = arith.constant 0xFF800000 : f32
      %158 = vector.broadcast %cst_115 : f32 to vector<4x8x1xf32>
      %c0_116 = arith.constant 0 : index
      %c0_117 = arith.constant 0 : index
      %c0_118 = arith.constant 0 : index
      %159 = vector.load %arg7[%c0_116, %c0_117, %c0_118] : memref<4x8x1xf32, #tpu.memory_space<vmem>>, vector<4x8x1xf32>
      tpu.vector_store %arg7[%c0_116, %c0_117, %c0_118], %158 {strides = array<i32>} : memref<4x8x1xf32, #tpu.memory_space<vmem>>, vector<4x8x1xf32>,
      %cst_119 = arith.constant 0.000000e+00 : f32
      %160 = vector.broadcast %cst_119 : f32 to vector<4x8x1xf32>
      %c0_120 = arith.constant 0 : index
      %c0_121 = arith.constant 0 : index
      %c0_122 = arith.constant 0 : index
      %161 = vector.load %arg8[%c0_120, %c0_121, %c0_122] : memref<4x8x1xf32, #tpu.memory_space<vmem>>, vector<4x8x1xf32>
      tpu.vector_store %arg8[%c0_120, %c0_121, %c0_122], %160 {strides = array<i32>} : memref<4x8x1xf32, #tpu.memory_space<vmem>>, vector<4x8x1xf32>,
      %cst_123 = arith.constant 0.000000e+00 : f32
      %162 = vector.broadcast %cst_123 : f32 to vector<8x128xf32>
      %c0_124 = arith.constant 0 : index
      %c0_125 = arith.constant 0 : index
      %163 = vector.load %arg9[%c0_124, %c0_125] : memref<8x128xf32, #tpu.memory_space<vmem>>, vector<8x128xf32>
      tpu.vector_store %arg9[%c0_124, %c0_125], %162 {strides = array<i32>} : memref<8x128xf32, #tpu.memory_space<vmem>>, vector<8x128xf32>,
    } else {
    }
    %c0 = arith.constant 0 : index
    %c0_1 = arith.constant 0 : index
    %c0_2 = arith.constant 0 : index
    %3 = vector.load %arg3[%c0, %c0_1, %c0_2] : memref<1x8x128xbf16, #tpu.memory_space<vmem>>, vector<1x8x32xbf16>
    %4 = vector.shape_cast %3 : vector<1x8x32xbf16> to vector<8x32xbf16>
    %cst = arith.constant 1.767580e-01 : bf16
    %5 = vector.broadcast %cst : bf16 to vector<8x32xbf16>
    %6 = arith.mulf %4, %5 : vector<8x32xbf16>
    %c0_3 = arith.constant 0 : index
    %c0_4 = arith.constant 0 : index
    %c0_5 = arith.constant 0 : index
    %7 = vector.load %arg4[%c0_3, %c0_4, %c0_5] : memref<1x8x128xbf16, #tpu.memory_space<vmem>>, vector<1x8x32xbf16>
    %8 = vector.shape_cast %7 : vector<1x8x32xbf16> to vector<8x32xbf16>
    %c0_6 = arith.constant 0 : index
    %c0_7 = arith.constant 0 : index
    %c0_8 = arith.constant 0 : index
    %9 = vector.load %arg5[%c0_6, %c0_7, %c0_8] : memref<1x8x128xbf16, #tpu.memory_space<vmem>>, vector<1x8x32xbf16>
    %10 = vector.shape_cast %9 : vector<1x8x32xbf16> to vector<8x32xbf16>
    %cst_9 = arith.constant dense<0.000000e+00> : vector<8x8xf32>
    %11 = tpu.matmul %6, %8, %cst_9 {dimension_numbers = #tpu.dot_dimension_numbers<[1], [1], [0], [0], [0, 0, 1, 0], [], []>} : vector<8x32xbf16>, vector<8x32xbf16>, vector<8x8xf32> -> vector<8x8xf32>
    %c0_10 = arith.constant 0 : index
    %c0_11 = arith.constant 0 : index
    %c0_12 = arith.constant 0 : index
    %12 = vector.load %arg7[%c0_10, %c0_11, %c0_12] : memref<4x8x1xf32, #tpu.memory_space<vmem>>, vector<1x8x1xf32>
    %13 = vector.shape_cast %12 : vector<1x8x1xf32> to vector<8x1xf32>
    %cst_13 = arith.constant dense<0xFF800000> : vector<8xf32>
    %14 = vector.multi_reduction <maximumf>, %11, %cst_13 [1] : vector<8x8xf32> to vector<8xf32>
    %15 = vector.shape_cast %14 : vector<8xf32> to vector<8x1xf32>
    %16 = arith.maximumf %13, %15 : vector<8x1xf32>
    %17 = arith.subf %13, %16 : vector<8x1xf32>
    %18 = math.exp %17 : vector<8x1xf32>
    %19 = vector.broadcast %16 : vector<8x1xf32> to vector<8x8xf32>
    %20 = arith.subf %11, %19 : vector<8x8xf32>
    %21 = math.exp %20 : vector<8x8xf32>
    %c0_14 = arith.constant 0 : index
    %c0_15 = arith.constant 0 : index
    %c0_16 = arith.constant 0 : index
    %22 = vector.load %arg8[%c0_14, %c0_15, %c0_16] : memref<4x8x1xf32, #tpu.memory_space<vmem>>, vector<1x8x1xf32>
    %23 = vector.shape_cast %22 : vector<1x8x1xf32> to vector<8x1xf32>
    %24 = arith.mulf %18, %23 : vector<8x1xf32>
    %cst_17 = arith.constant dense<0.000000e+00> : vector<8xf32>
    %25 = vector.multi_reduction <add>, %21, %cst_17 [1] : vector<8x8xf32> to vector<8xf32>
    %26 = vector.shape_cast %25 : vector<8xf32> to vector<8x1xf32>
    %27 = arith.addf %24, %26 : vector<8x1xf32>
    %c0_18 = arith.constant 0 : index
    %c0_19 = arith.constant 0 : index
    %c0_20 = arith.constant 0 : index
    %28 = vector.load %arg8[%c0_18, %c0_19, %c0_20] : memref<4x8x1xf32, #tpu.memory_space<vmem>>, vector<1x8x1xf32>
    %29 = vector.shape_cast %28 : vector<1x8x1xf32> to vector<8x1xf32>
    %30 = vector.shape_cast %27 : vector<8x1xf32> to vector<1x8x1xf32>
    tpu.vector_store %arg8[%c0_18, %c0_19, %c0_20], %30 {strides = array<i32>} : memref<4x8x1xf32, #tpu.memory_space<vmem>>, vector<1x8x1xf32>,
    %c0_21 = arith.constant 0 : index
    %c0_22 = arith.constant 0 : index
    %c0_23 = arith.constant 0 : index
    %31 = vector.load %arg7[%c0_21, %c0_22, %c0_23] : memref<4x8x1xf32, #tpu.memory_space<vmem>>, vector<1x8x1xf32>
    %32 = vector.shape_cast %31 : vector<1x8x1xf32> to vector<8x1xf32>
    %33 = vector.shape_cast %16 : vector<8x1xf32> to vector<1x8x1xf32>
    tpu.vector_store %arg7[%c0_21, %c0_22, %c0_23], %33 {strides = array<i32>} : memref<4x8x1xf32, #tpu.memory_space<vmem>>, vector<1x8x1xf32>,
    %34 = arith.truncf %21 : vector<8x8xf32> to vector<8x8xbf16>
    %cst_24 = arith.constant dense<0.000000e+00> : vector<8x32xf32>
    %35 = tpu.matmul %34, %10, %cst_24 {dimension_numbers = #tpu.dot_dimension_numbers<[1], [0], [0], [1], [0, 0, 1, 1], [], []>} : vector<8x8xbf16>, vector<8x32xbf16>, vector<8x32xf32> -> vector<8x32xf32>
    %c0_25 = arith.constant 0 : index
    %c0_26 = arith.constant 0 : index
    %36 = vector.load %arg9[%c0_25, %c0_26] : memref<8x128xf32, #tpu.memory_space<vmem>>, vector<8x32xf32>
    %37 = vector.broadcast %18 : vector<8x1xf32> to vector<8x32xf32>
    %38 = arith.mulf %37, %36 : vector<8x32xf32>
    %39 = arith.addf %38, %35 : vector<8x32xf32>
    %c0_27 = arith.constant 0 : index
    %c0_28 = arith.constant 0 : index
    %40 = vector.load %arg9[%c0_27, %c0_28] : memref<8x128xf32, #tpu.memory_space<vmem>>, vector<8x32xf32>
    tpu.vector_store %arg9[%c0_27, %c0_28], %39 {strides = array<i32>} : memref<8x128xf32, #tpu.memory_space<vmem>>, vector<8x32xf32>,
    %c0_29 = arith.constant 0 : index
    %c0_30 = arith.constant 0 : index
    %c32 = arith.constant 32 : index
    %41 = vector.load %arg3[%c0_29, %c0_30, %c32] : memref<1x8x128xbf16, #tpu.memory_space<vmem>>, vector<1x8x32xbf16>
    %42 = vector.shape_cast %41 : vector<1x8x32xbf16> to vector<8x32xbf16>
    %cst_31 = arith.constant 1.767580e-01 : bf16
    %43 = vector.broadcast %cst_31 : bf16 to vector<8x32xbf16>
    %44 = arith.mulf %42, %43 : vector<8x32xbf16>
    %c0_32 = arith.constant 0 : index
    %c0_33 = arith.constant 0 : index
    %c32_34 = arith.constant 32 : index
    %45 = vector.load %arg4[%c0_32, %c0_33, %c32_34] : memref<1x8x128xbf16, #tpu.memory_space<vmem>>, vector<1x8x32xbf16>
    %46 = vector.shape_cast %45 : vector<1x8x32xbf16> to vector<8x32xbf16>
    %c0_35 = arith.constant 0 : index
    %c0_36 = arith.constant 0 : index
    %c32_37 = arith.constant 32 : index
    %47 = vector.load %arg5[%c0_35, %c0_36, %c32_37] : memref<1x8x128xbf16, #tpu.memory_space<vmem>>, vector<1x8x32xbf16>
    %48 = vector.shape_cast %47 : vector<1x8x32xbf16> to vector<8x32xbf16>
    %cst_38 = arith.constant dense<0.000000e+00> : vector<8x8xf32>
    %49 = tpu.matmul %44, %46, %cst_38 {dimension_numbers = #tpu.dot_dimension_numbers<[1], [1], [0], [0], [0, 0, 1, 0], [], []>} : vector<8x32xbf16>, vector<8x32xbf16>, vector<8x8xf32> -> vector<8x8xf32>
    %c1 = arith.constant 1 : index
    %c0_39 = arith.constant 0 : index
    %c0_40 = arith.constant 0 : index
    %50 = vector.load %arg7[%c1, %c0_39, %c0_40] : memref<4x8x1xf32, #tpu.memory_space<vmem>>, vector<1x8x1xf32>
    %51 = vector.shape_cast %50 : vector<1x8x1xf32> to vector<8x1xf32>
    %cst_41 = arith.constant dense<0xFF800000> : vector<8xf32>
    %52 = vector.multi_reduction <maximumf>, %49, %cst_41 [1] : vector<8x8xf32> to vector<8xf32>
    %53 = vector.shape_cast %52 : vector<8xf32> to vector<8x1xf32>
    %54 = arith.maximumf %51, %53 : vector<8x1xf32>
    %55 = arith.subf %51, %54 : vector<8x1xf32>
    %56 = math.exp %55 : vector<8x1xf32>
    %57 = vector.broadcast %54 : vector<8x1xf32> to vector<8x8xf32>
    %58 = arith.subf %49, %57 : vector<8x8xf32>
    %59 = math.exp %58 : vector<8x8xf32>
    %c1_42 = arith.constant 1 : index
    %c0_43 = arith.constant 0 : index
    %c0_44 = arith.constant 0 : index
    %60 = vector.load %arg8[%c1_42, %c0_43, %c0_44] : memref<4x8x1xf32, #tpu.memory_space<vmem>>, vector<1x8x1xf32>
    %61 = vector.shape_cast %60 : vector<1x8x1xf32> to vector<8x1xf32>
    %62 = arith.mulf %56, %61 : vector<8x1xf32>
    %cst_45 = arith.constant dense<0.000000e+00> : vector<8xf32>
    %63 = vector.multi_reduction <add>, %59, %cst_45 [1] : vector<8x8xf32> to vector<8xf32>
    %64 = vector.shape_cast %63 : vector<8xf32> to vector<8x1xf32>
    %65 = arith.addf %62, %64 : vector<8x1xf32>
    %c1_46 = arith.constant 1 : index
    %c0_47 = arith.constant 0 : index
    %c0_48 = arith.constant 0 : index
    %66 = vector.load %arg8[%c1_46, %c0_47, %c0_48] : memref<4x8x1xf32, #tpu.memory_space<vmem>>, vector<1x8x1xf32>
    %67 = vector.shape_cast %66 : vector<1x8x1xf32> to vector<8x1xf32>
    %68 = vector.shape_cast %65 : vector<8x1xf32> to vector<1x8x1xf32>
    tpu.vector_store %arg8[%c1_46, %c0_47, %c0_48], %68 {strides = array<i32>} : memref<4x8x1xf32, #tpu.memory_space<vmem>>, vector<1x8x1xf32>,
    %c1_49 = arith.constant 1 : index
    %c0_50 = arith.constant 0 : index
    %c0_51 = arith.constant 0 : index
    %69 = vector.load %arg7[%c1_49, %c0_50, %c0_51] : memref<4x8x1xf32, #tpu.memory_space<vmem>>, vector<1x8x1xf32>
    %70 = vector.shape_cast %69 : vector<1x8x1xf32> to vector<8x1xf32>
    %71 = vector.shape_cast %54 : vector<8x1xf32> to vector<1x8x1xf32>
    tpu.vector_store %arg7[%c1_49, %c0_50, %c0_51], %71 {strides = array<i32>} : memref<4x8x1xf32, #tpu.memory_space<vmem>>, vector<1x8x1xf32>,
    %72 = arith.truncf %59 : vector<8x8xf32> to vector<8x8xbf16>
    %cst_52 = arith.constant dense<0.000000e+00> : vector<8x32xf32>
    %73 = tpu.matmul %72, %48, %cst_52 {dimension_numbers = #tpu.dot_dimension_numbers<[1], [0], [0], [1], [0, 0, 1, 1], [], []>} : vector<8x8xbf16>, vector<8x32xbf16>, vector<8x32xf32> -> vector<8x32xf32>
    %c0_53 = arith.constant 0 : index
    %c32_54 = arith.constant 32 : index
    %74 = vector.load %arg9[%c0_53, %c32_54] : memref<8x128xf32, #tpu.memory_space<vmem>>, vector<8x32xf32>
    %75 = vector.broadcast %56 : vector<8x1xf32> to vector<8x32xf32>
    %76 = arith.mulf %75, %74 : vector<8x32xf32>
    %77 = arith.addf %76, %73 : vector<8x32xf32>
    %c0_55 = arith.constant 0 : index
    %c32_56 = arith.constant 32 : index
    %78 = vector.load %arg9[%c0_55, %c32_56] : memref<8x128xf32, #tpu.memory_space<vmem>>, vector<8x32xf32>
    tpu.vector_store %arg9[%c0_55, %c32_56], %77 {strides = array<i32>} : memref<8x128xf32, #tpu.memory_space<vmem>>, vector<8x32xf32>,
    %c0_57 = arith.constant 0 : index
    %c0_58 = arith.constant 0 : index
    %c64 = arith.constant 64 : index
    %79 = vector.load %arg3[%c0_57, %c0_58, %c64] : memref<1x8x128xbf16, #tpu.memory_space<vmem>>, vector<1x8x32xbf16>
    %80 = vector.shape_cast %79 : vector<1x8x32xbf16> to vector<8x32xbf16>
    %cst_59 = arith.constant 1.767580e-01 : bf16
    %81 = vector.broadcast %cst_59 : bf16 to vector<8x32xbf16>
    %82 = arith.mulf %80, %81 : vector<8x32xbf16>
    %c0_60 = arith.constant 0 : index
    %c0_61 = arith.constant 0 : index
    %c64_62 = arith.constant 64 : index
    %83 = vector.load %arg4[%c0_60, %c0_61, %c64_62] : memref<1x8x128xbf16, #tpu.memory_space<vmem>>, vector<1x8x32xbf16>
    %84 = vector.shape_cast %83 : vector<1x8x32xbf16> to vector<8x32xbf16>
    %c0_63 = arith.constant 0 : index
    %c0_64 = arith.constant 0 : index
    %c64_65 = arith.constant 64 : index
    %85 = vector.load %arg5[%c0_63, %c0_64, %c64_65] : memref<1x8x128xbf16, #tpu.memory_space<vmem>>, vector<1x8x32xbf16>
    %86 = vector.shape_cast %85 : vector<1x8x32xbf16> to vector<8x32xbf16>
    %cst_66 = arith.constant dense<0.000000e+00> : vector<8x8xf32>
    %87 = tpu.matmul %82, %84, %cst_66 {dimension_numbers = #tpu.dot_dimension_numbers<[1], [1], [0], [0], [0, 0, 1, 0], [], []>} : vector<8x32xbf16>, vector<8x32xbf16>, vector<8x8xf32> -> vector<8x8xf32>
    %c2 = arith.constant 2 : index
    %c0_67 = arith.constant 0 : index
    %c0_68 = arith.constant 0 : index
    %88 = vector.load %arg7[%c2, %c0_67, %c0_68] : memref<4x8x1xf32, #tpu.memory_space<vmem>>, vector<1x8x1xf32>
    %89 = vector.shape_cast %88 : vector<1x8x1xf32> to vector<8x1xf32>
    %cst_69 = arith.constant dense<0xFF800000> : vector<8xf32>
    %90 = vector.multi_reduction <maximumf>, %87, %cst_69 [1] : vector<8x8xf32> to vector<8xf32>
    %91 = vector.shape_cast %90 : vector<8xf32> to vector<8x1xf32>
    %92 = arith.maximumf %89, %91 : vector<8x1xf32>
    %93 = arith.subf %89, %92 : vector<8x1xf32>
    %94 = math.exp %93 : vector<8x1xf32>
    %95 = vector.broadcast %92 : vector<8x1xf32> to vector<8x8xf32>
    %96 = arith.subf %87, %95 : vector<8x8xf32>
    %97 = math.exp %96 : vector<8x8xf32>
    %c2_70 = arith.constant 2 : index
    %c0_71 = arith.constant 0 : index
    %c0_72 = arith.constant 0 : index
    %98 = vector.load %arg8[%c2_70, %c0_71, %c0_72] : memref<4x8x1xf32, #tpu.memory_space<vmem>>, vector<1x8x1xf32>
    %99 = vector.shape_cast %98 : vector<1x8x1xf32> to vector<8x1xf32>
    %100 = arith.mulf %94, %99 : vector<8x1xf32>
    %cst_73 = arith.constant dense<0.000000e+00> : vector<8xf32>
    %101 = vector.multi_reduction <add>, %97, %cst_73 [1] : vector<8x8xf32> to vector<8xf32>
    %102 = vector.shape_cast %101 : vector<8xf32> to vector<8x1xf32>
    %103 = arith.addf %100, %102 : vector<8x1xf32>
    %c2_74 = arith.constant 2 : index
    %c0_75 = arith.constant 0 : index
    %c0_76 = arith.constant 0 : index
    %104 = vector.load %arg8[%c2_74, %c0_75, %c0_76] : memref<4x8x1xf32, #tpu.memory_space<vmem>>, vector<1x8x1xf32>
    %105 = vector.shape_cast %104 : vector<1x8x1xf32> to vector<8x1xf32>
    %106 = vector.shape_cast %103 : vector<8x1xf32> to vector<1x8x1xf32>
    tpu.vector_store %arg8[%c2_74, %c0_75, %c0_76], %106 {strides = array<i32>} : memref<4x8x1xf32, #tpu.memory_space<vmem>>, vector<1x8x1xf32>,
    %c2_77 = arith.constant 2 : index
    %c0_78 = arith.constant 0 : index
    %c0_79 = arith.constant 0 : index
    %107 = vector.load %arg7[%c2_77, %c0_78, %c0_79] : memref<4x8x1xf32, #tpu.memory_space<vmem>>, vector<1x8x1xf32>
    %108 = vector.shape_cast %107 : vector<1x8x1xf32> to vector<8x1xf32>
    %109 = vector.shape_cast %92 : vector<8x1xf32> to vector<1x8x1xf32>
    tpu.vector_store %arg7[%c2_77, %c0_78, %c0_79], %109 {strides = array<i32>} : memref<4x8x1xf32, #tpu.memory_space<vmem>>, vector<1x8x1xf32>,
    %110 = arith.truncf %97 : vector<8x8xf32> to vector<8x8xbf16>
    %cst_80 = arith.constant dense<0.000000e+00> : vector<8x32xf32>
    %111 = tpu.matmul %110, %86, %cst_80 {dimension_numbers = #tpu.dot_dimension_numbers<[1], [0], [0], [1], [0, 0, 1, 1], [], []>} : vector<8x8xbf16>, vector<8x32xbf16>, vector<8x32xf32> -> vector<8x32xf32>
    %c0_81 = arith.constant 0 : index
    %c64_82 = arith.constant 64 : index
    %112 = vector.load %arg9[%c0_81, %c64_82] : memref<8x128xf32, #tpu.memory_space<vmem>>, vector<8x32xf32>
    %113 = vector.broadcast %94 : vector<8x1xf32> to vector<8x32xf32>
    %114 = arith.mulf %113, %112 : vector<8x32xf32>
    %115 = arith.addf %114, %111 : vector<8x32xf32>
    %c0_83 = arith.constant 0 : index
    %c64_84 = arith.constant 64 : index
    %116 = vector.load %arg9[%c0_83, %c64_84] : memref<8x128xf32, #tpu.memory_space<vmem>>, vector<8x32xf32>
    tpu.vector_store %arg9[%c0_83, %c64_84], %115 {strides = array<i32>} : memref<8x128xf32, #tpu.memory_space<vmem>>, vector<8x32xf32>,
    %c0_85 = arith.constant 0 : index
    %c0_86 = arith.constant 0 : index
    %c96 = arith.constant 96 : index
    %117 = vector.load %arg3[%c0_85, %c0_86, %c96] : memref<1x8x128xbf16, #tpu.memory_space<vmem>>, vector<1x8x32xbf16>
    %118 = vector.shape_cast %117 : vector<1x8x32xbf16> to vector<8x32xbf16>
    %cst_87 = arith.constant 1.767580e-01 : bf16
    %119 = vector.broadcast %cst_87 : bf16 to vector<8x32xbf16>
    %120 = arith.mulf %118, %119 : vector<8x32xbf16>
    %c0_88 = arith.constant 0 : index
    %c0_89 = arith.constant 0 : index
    %c96_90 = arith.constant 96 : index
    %121 = vector.load %arg4[%c0_88, %c0_89, %c96_90] : memref<1x8x128xbf16, #tpu.memory_space<vmem>>, vector<1x8x32xbf16>
    %122 = vector.shape_cast %121 : vector<1x8x32xbf16> to vector<8x32xbf16>
    %c0_91 = arith.constant 0 : index
    %c0_92 = arith.constant 0 : index
    %c96_93 = arith.constant 96 : index
    %123 = vector.load %arg5[%c0_91, %c0_92, %c96_93] : memref<1x8x128xbf16, #tpu.memory_space<vmem>>, vector<1x8x32xbf16>
    %124 = vector.shape_cast %123 : vector<1x8x32xbf16> to vector<8x32xbf16>
    %cst_94 = arith.constant dense<0.000000e+00> : vector<8x8xf32>
    %125 = tpu.matmul %120, %122, %cst_94 {dimension_numbers = #tpu.dot_dimension_numbers<[1], [1], [0], [0], [0, 0, 1, 0], [], []>} : vector<8x32xbf16>, vector<8x32xbf16>, vector<8x8xf32> -> vector<8x8xf32>
    %c3 = arith.constant 3 : index
    %c0_95 = arith.constant 0 : index
    %c0_96 = arith.constant 0 : index
    %126 = vector.load %arg7[%c3, %c0_95, %c0_96] : memref<4x8x1xf32, #tpu.memory_space<vmem>>, vector<1x8x1xf32>
    %127 = vector.shape_cast %126 : vector<1x8x1xf32> to vector<8x1xf32>
    %cst_97 = arith.constant dense<0xFF800000> : vector<8xf32>
    %128 = vector.multi_reduction <maximumf>, %125, %cst_97 [1] : vector<8x8xf32> to vector<8xf32>
    %129 = vector.shape_cast %128 : vector<8xf32> to vector<8x1xf32>
    %130 = arith.maximumf %127, %129 : vector<8x1xf32>
    %131 = arith.subf %127, %130 : vector<8x1xf32>
    %132 = math.exp %131 : vector<8x1xf32>
    %133 = vector.broadcast %130 : vector<8x1xf32> to vector<8x8xf32>
    %134 = arith.subf %125, %133 : vector<8x8xf32>
    %135 = math.exp %134 : vector<8x8xf32>
    %c3_98 = arith.constant 3 : index
    %c0_99 = arith.constant 0 : index
    %c0_100 = arith.constant 0 : index
    %136 = vector.load %arg8[%c3_98, %c0_99, %c0_100] : memref<4x8x1xf32, #tpu.memory_space<vmem>>, vector<1x8x1xf32>
    %137 = vector.shape_cast %136 : vector<1x8x1xf32> to vector<8x1xf32>
    %138 = arith.mulf %132, %137 : vector<8x1xf32>
    %cst_101 = arith.constant dense<0.000000e+00> : vector<8xf32>
    %139 = vector.multi_reduction <add>, %135, %cst_101 [1] : vector<8x8xf32> to vector<8xf32>
    %140 = vector.shape_cast %139 : vector<8xf32> to vector<8x1xf32>
    %141 = arith.addf %138, %140 : vector<8x1xf32>
    %c3_102 = arith.constant 3 : index
    %c0_103 = arith.constant 0 : index
    %c0_104 = arith.constant 0 : index
    %142 = vector.load %arg8[%c3_102, %c0_103, %c0_104] : memref<4x8x1xf32, #tpu.memory_space<vmem>>, vector<1x8x1xf32>
    %143 = vector.shape_cast %142 : vector<1x8x1xf32> to vector<8x1xf32>
    %144 = vector.shape_cast %141 : vector<8x1xf32> to vector<1x8x1xf32>
    tpu.vector_store %arg8[%c3_102, %c0_103, %c0_104], %144 {strides = array<i32>} : memref<4x8x1xf32, #tpu.memory_space<vmem>>, vector<1x8x1xf32>,
    %c3_105 = arith.constant 3 : index
    %c0_106 = arith.constant 0 : index
    %c0_107 = arith.constant 0 : index
    %145 = vector.load %arg7[%c3_105, %c0_106, %c0_107] : memref<4x8x1xf32, #tpu.memory_space<vmem>>, vector<1x8x1xf32>
    %146 = vector.shape_cast %145 : vector<1x8x1xf32> to vector<8x1xf32>
    %147 = vector.shape_cast %130 : vector<8x1xf32> to vector<1x8x1xf32>
    tpu.vector_store %arg7[%c3_105, %c0_106, %c0_107], %147 {strides = array<i32>} : memref<4x8x1xf32, #tpu.memory_space<vmem>>, vector<1x8x1xf32>,
    %148 = arith.truncf %135 : vector<8x8xf32> to vector<8x8xbf16>
    %cst_108 = arith.constant dense<0.000000e+00> : vector<8x32xf32>
    %149 = tpu.matmul %148, %124, %cst_108 {dimension_numbers = #tpu.dot_dimension_numbers<[1], [0], [0], [1], [0, 0, 1, 1], [], []>} : vector<8x8xbf16>, vector<8x32xbf16>, vector<8x32xf32> -> vector<8x32xf32>
    %c0_109 = arith.constant 0 : index
    %c96_110 = arith.constant 96 : index
    %150 = vector.load %arg9[%c0_109, %c96_110] : memref<8x128xf32, #tpu.memory_space<vmem>>, vector<8x32xf32>
    %151 = vector.broadcast %132 : vector<8x1xf32> to vector<8x32xf32>
    %152 = arith.mulf %151, %150 : vector<8x32xf32>
    %153 = arith.addf %152, %149 : vector<8x32xf32>
    %c0_111 = arith.constant 0 : index
    %c96_112 = arith.constant 96 : index
    %154 = vector.load %arg9[%c0_111, %c96_112] : memref<8x128xf32, #tpu.memory_space<vmem>>, vector<8x32xf32>
    tpu.vector_store %arg9[%c0_111, %c96_112], %153 {strides = array<i32>} : memref<8x128xf32, #tpu.memory_space<vmem>>, vector<8x32xf32>,
    %c0_i32_113 = arith.constant 0 : i32
    %155 = arith.cmpi eq, %arg2, %c0_i32_113 : i32
    %156 = arith.extui %155 : i1 to i32
    %c0_i32_114 = arith.constant 0 : i32
    %157 = arith.cmpi ne, %156, %c0_i32_114 : i32
    scf.if %157 {
      %c0_115 = arith.constant 0 : index
      %c0_116 = arith.constant 0 : index
      %c0_117 = arith.constant 0 : index
      %158 = vector.load %arg8[%c0_115, %c0_116, %c0_117] : memref<4x8x1xf32, #tpu.memory_space<vmem>>, vector<1x8x1xf32>
      %159 = vector.shape_cast %158 : vector<1x8x1xf32> to vector<8x1xf32>
      %cst_118 = arith.constant 1.000000e+00 : f32
      %160 = vector.broadcast %cst_118 : f32 to vector<8x1xf32>
      %161 = arith.divf %160, %159 : vector<8x1xf32>
      %c0_119 = arith.constant 0 : index
      %c0_120 = arith.constant 0 : index
      %162 = vector.load %arg9[%c0_119, %c0_120] : memref<8x128xf32, #tpu.memory_space<vmem>>, vector<8x32xf32>
      %163 = vector.broadcast %161 : vector<8x1xf32> to vector<8x32xf32>
      %164 = arith.mulf %162, %163 : vector<8x32xf32>
      %165 = arith.truncf %164 : vector<8x32xf32> to vector<8x32xbf16>
      %c0_121 = arith.constant 0 : index
      %c0_122 = arith.constant 0 : index
      %c0_123 = arith.constant 0 : index
      %166 = vector.load %arg6[%c0_121, %c0_122, %c0_123] : memref<1x8x128xbf16, #tpu.memory_space<vmem>>, vector<1x8x32xbf16>
      %167 = vector.shape_cast %166 : vector<1x8x32xbf16> to vector<8x32xbf16>
      %168 = vector.shape_cast %165 : vector<8x32xbf16> to vector<1x8x32xbf16>
      tpu.vector_store %arg6[%c0_121, %c0_122, %c0_123], %168 {strides = array<i32>} : memref<1x8x128xbf16, #tpu.memory_space<vmem>>, vector<1x8x32xbf16>,
      %c1_124 = arith.constant 1 : index
      %c0_125 = arith.constant 0 : index
      %c0_126 = arith.constant 0 : index
      %169 = vector.load %arg8[%c1_124, %c0_125, %c0_126] : memref<4x8x1xf32, #tpu.memory_space<vmem>>, vector<1x8x1xf32>
      %170 = vector.shape_cast %169 : vector<1x8x1xf32> to vector<8x1xf32>
      %cst_127 = arith.constant 1.000000e+00 : f32
      %171 = vector.broadcast %cst_127 : f32 to vector<8x1xf32>
      %172 = arith.divf %171, %170 : vector<8x1xf32>
      %c0_128 = arith.constant 0 : index
      %c32_129 = arith.constant 32 : index
      %173 = vector.load %arg9[%c0_128, %c32_129] : memref<8x128xf32, #tpu.memory_space<vmem>>, vector<8x32xf32>
      %174 = vector.broadcast %172 : vector<8x1xf32> to vector<8x32xf32>
      %175 = arith.mulf %173, %174 : vector<8x32xf32>
      %176 = arith.truncf %175 : vector<8x32xf32> to vector<8x32xbf16>
      %c0_130 = arith.constant 0 : index
      %c0_131 = arith.constant 0 : index
      %c32_132 = arith.constant 32 : index
      %177 = vector.load %arg6[%c0_130, %c0_131, %c32_132] : memref<1x8x128xbf16, #tpu.memory_space<vmem>>, vector<1x8x32xbf16>
      %178 = vector.shape_cast %177 : vector<1x8x32xbf16> to vector<8x32xbf16>
      %179 = vector.shape_cast %176 : vector<8x32xbf16> to vector<1x8x32xbf16>
      tpu.vector_store %arg6[%c0_130, %c0_131, %c32_132], %179 {strides = array<i32>} : memref<1x8x128xbf16, #tpu.memory_space<vmem>>, vector<1x8x32xbf16>,
      %c2_133 = arith.constant 2 : index
      %c0_134 = arith.constant 0 : index
      %c0_135 = arith.constant 0 : index
      %180 = vector.load %arg8[%c2_133, %c0_134, %c0_135] : memref<4x8x1xf32, #tpu.memory_space<vmem>>, vector<1x8x1xf32>
      %181 = vector.shape_cast %180 : vector<1x8x1xf32> to vector<8x1xf32>
      %cst_136 = arith.constant 1.000000e+00 : f32
      %182 = vector.broadcast %cst_136 : f32 to vector<8x1xf32>
      %183 = arith.divf %182, %181 : vector<8x1xf32>
      %c0_137 = arith.constant 0 : index
      %c64_138 = arith.constant 64 : index
      %184 = vector.load %arg9[%c0_137, %c64_138] : memref<8x128xf32, #tpu.memory_space<vmem>>, vector<8x32xf32>
      %185 = vector.broadcast %183 : vector<8x1xf32> to vector<8x32xf32>
      %186 = arith.mulf %184, %185 : vector<8x32xf32>
      %187 = arith.truncf %186 : vector<8x32xf32> to vector<8x32xbf16>
      %c0_139 = arith.constant 0 : index
      %c0_140 = arith.constant 0 : index
      %c64_141 = arith.constant 64 : index
      %188 = vector.load %arg6[%c0_139, %c0_140, %c64_141] : memref<1x8x128xbf16, #tpu.memory_space<vmem>>, vector<1x8x32xbf16>
      %189 = vector.shape_cast %188 : vector<1x8x32xbf16> to vector<8x32xbf16>
      %190 = vector.shape_cast %187 : vector<8x32xbf16> to vector<1x8x32xbf16>
      tpu.vector_store %arg6[%c0_139, %c0_140, %c64_141], %190 {strides = array<i32>} : memref<1x8x128xbf16, #tpu.memory_space<vmem>>, vector<1x8x32xbf16>,
      %c3_142 = arith.constant 3 : index
      %c0_143 = arith.constant 0 : index
      %c0_144 = arith.constant 0 : index
      %191 = vector.load %arg8[%c3_142, %c0_143, %c0_144] : memref<4x8x1xf32, #tpu.memory_space<vmem>>, vector<1x8x1xf32>
      %192 = vector.shape_cast %191 : vector<1x8x1xf32> to vector<8x1xf32>
      %cst_145 = arith.constant 1.000000e+00 : f32
      %193 = vector.broadcast %cst_145 : f32 to vector<8x1xf32>
      %194 = arith.divf %193, %192 : vector<8x1xf32>
      %c0_146 = arith.constant 0 : index
      %c96_147 = arith.constant 96 : index
      %195 = vector.load %arg9[%c0_146, %c96_147] : memref<8x128xf32, #tpu.memory_space<vmem>>, vector<8x32xf32>
      %196 = vector.broadcast %194 : vector<8x1xf32> to vector<8x32xf32>
      %197 = arith.mulf %195, %196 : vector<8x32xf32>
      %198 = arith.truncf %197 : vector<8x32xf32> to vector<8x32xbf16>
      %c0_148 = arith.constant 0 : index
      %c0_149 = arith.constant 0 : index
      %c96_150 = arith.constant 96 : index
      %199 = vector.load %arg6[%c0_148, %c0_149, %c96_150] : memref<1x8x128xbf16, #tpu.memory_space<vmem>>, vector<1x8x32xbf16>
      %200 = vector.shape_cast %199 : vector<1x8x32xbf16> to vector<8x32xbf16>
      %201 = vector.shape_cast %198 : vector<8x32xbf16> to vector<1x8x32xbf16>
      tpu.vector_store %arg6[%c0_148, %c0_149, %c96_150], %201 {strides = array<i32>} : memref<1x8x128xbf16, #tpu.memory_space<vmem>>, vector<1x8x32xbf16>,
    } else {
    }
    return
  }
  func.func @transform_0(%arg0: i32, %arg1: i32, %arg2: i32) -> (i32, i32, i32) {
    %c0_i32 = arith.constant 0 : i32
    %c0_i32_0 = arith.constant 0 : i32
    return %arg0, %arg1, %c0_i32 : i32, i32, i32
  }
  func.func @transform_1(%arg0: i32, %arg1: i32, %arg2: i32) -> (i32, i32, i32) {
    %c1_i32 = arith.constant 1 : i32
    %c0_i32 = arith.constant 0 : i32
    return %arg0, %arg2, %c1_i32 : i32, i32, i32
  }
  func.func @transform_2(%arg0: i32, %arg1: i32, %arg2: i32) -> (i32, i32, i32) {
    %c2_i32 = arith.constant 2 : i32
    %c0_i32 = arith.constant 0 : i32
    return %arg0, %arg2, %c2_i32 : i32, i32, i32
  }
  func.func @transform_3(%arg0: i32, %arg1: i32, %arg2: i32) -> (i32, i32, i32) {
    %c0_i32 = arith.constant 0 : i32
    %c0_i32_0 = arith.constant 0 : i32
    return %arg0, %arg1, %c0_i32 : i32, i32, i32
  }
}

module attributes {stable_mosaic.version = 11 : i64} {
  func.func @_linear_ln_kernel(%arg0: i32, %arg1: i32, %arg2: memref<16x128xbf16, #tpu.memory_space<vmem>>, %arg3: memref<128x128xbf16, #tpu.memory_space<vmem>>, %arg4: memref<1x128xf32, #tpu.memory_space<vmem>>, %arg5: memref<16x128xbf16, #tpu.memory_space<vmem>>, %arg6: memref<1x128xf32, #tpu.memory_space<vmem>>, %arg7: memref<1x128xf32, #tpu.memory_space<vmem>>, %arg8: memref<16x128xbf16, #tpu.memory_space<vmem>>, %arg9: memref<16x128xf32, #tpu.memory_space<vmem>>) attributes {dimension_semantics = [#tpu.dimension_semantics<parallel>, #tpu.dimension_semantics<arbitrary>], iteration_bounds = array<i64: 1, 1>, scalar_prefetch = 0 : i64, scratch_operands = 1 : i64, tpu.core_type = #tpu.core_type<tc>, window_params = [{transform_indices = @transform_0, window_bounds = array<i64: 16, 128>}, {transform_indices = @transform_1, window_bounds = array<i64: 128, 128>}, {pipeline_mode = #tpu.pipeline_mode<synchronous>, transform_indices = @transform_2, window_bounds = array<i64: 1, 128>}, {transform_indices = @transform_3, window_bounds = array<i64: 16, 128>}, {pipeline_mode = #tpu.pipeline_mode<synchronous>, transform_indices = @transform_4, window_bounds = array<i64: 1, 128>}, {pipeline_mode = #tpu.pipeline_mode<synchronous>, transform_indices = @transform_5, window_bounds = array<i64: 1, 128>}, {transform_indices = @transform_6, window_bounds = array<i64: 16, 128>}]} {
    %c0_i32 = arith.constant 0 : i32
    %0 = arith.cmpi eq, %arg1, %c0_i32 : i32
    %1 = arith.extui %0 : i1 to i32
    %c0_i32_0 = arith.constant 0 : i32
    %2 = arith.cmpi ne, %1, %c0_i32_0 : i32
    scf.if %2 {
      %cst_10 = arith.constant 0.000000e+00 : f32
      %12 = vector.broadcast %cst_10 : f32 to vector<16x128xf32>
      %c0_11 = arith.constant 0 : index
      %c0_12 = arith.constant 0 : index
      %13 = vector.load %arg9[%c0_11, %c0_12] : memref<16x128xf32, #tpu.memory_space<vmem>>, vector<16x128xf32>
      tpu.vector_store %arg9[%c0_11, %c0_12], %12 {strides = array<i32>} : memref<16x128xf32, #tpu.memory_space<vmem>>, vector<16x128xf32>,
    } else {
    }
    %c0 = arith.constant 0 : index
    %c0_1 = arith.constant 0 : index
    %3 = vector.load %arg9[%c0, %c0_1] : memref<16x128xf32, #tpu.memory_space<vmem>>, vector<16x128xf32>
    %c0_2 = arith.constant 0 : index
    %c0_3 = arith.constant 0 : index
    %4 = vector.load %arg2[%c0_2, %c0_3] : memref<16x128xbf16, #tpu.memory_space<vmem>>, vector<16x128xbf16>
    %c0_4 = arith.constant 0 : index
    %c0_5 = arith.constant 0 : index
    %5 = vector.load %arg3[%c0_4, %c0_5] : memref<128x128xbf16, #tpu.memory_space<vmem>>, vector<128x128xbf16>
    %cst = arith.constant dense<0.000000e+00> : vector<16x128xf32>
    %6 = tpu.matmul %4, %5, %cst {dimension_numbers = #tpu.dot_dimension_numbers<[1], [0], [0], [1], [0, 0, 1, 1], [], []>} : vector<16x128xbf16>, vector<128x128xbf16>, vector<16x128xf32> -> vector<16x128xf32>
    %7 = arith.addf %3, %6 : vector<16x128xf32>
    %c0_6 = arith.constant 0 : index
    %c0_7 = arith.constant 0 : index
    %8 = vector.load %arg9[%c0_6, %c0_7] : memref<16x128xf32, #tpu.memory_space<vmem>>, vector<16x128xf32>
    tpu.vector_store %arg9[%c0_6, %c0_7], %7 {strides = array<i32>} : memref<16x128xf32, #tpu.memory_space<vmem>>, vector<16x128xf32>,
    %c0_i32_8 = arith.constant 0 : i32
    %9 = arith.cmpi eq, %arg1, %c0_i32_8 : i32
    %10 = arith.extui %9 : i1 to i32
    %c0_i32_9 = arith.constant 0 : i32
    %11 = arith.cmpi ne, %10, %c0_i32_9 : i32
    scf.if %11 {
      %c0_10 = arith.constant 0 : index
      %c0_11 = arith.constant 0 : index
      %12 = vector.load %arg9[%c0_10, %c0_11] : memref<16x128xf32, #tpu.memory_space<vmem>>, vector<16x128xf32>
      %c0_12 = arith.constant 0 : index
      %c0_13 = arith.constant 0 : index
      %13 = vector.load %arg4[%c0_12, %c0_13] : memref<1x128xf32, #tpu.memory_space<vmem>>, vector<1x128xf32>
      %14 = vector.broadcast %13 : vector<1x128xf32> to vector<16x128xf32>
      %15 = arith.addf %12, %14 : vector<16x128xf32>
      %c0_14 = arith.constant 0 : index
      %c0_15 = arith.constant 0 : index
      %16 = vector.load %arg5[%c0_14, %c0_15] : memref<16x128xbf16, #tpu.memory_space<vmem>>, vector<16x128xbf16>
      %17 = arith.extf %16 : vector<16x128xbf16> to vector<16x128xf32>
      %18 = arith.addf %15, %17 : vector<16x128xf32>
      %cst_16 = arith.constant dense<0.000000e+00> : vector<16xf32>
      %19 = vector.multi_reduction <add>, %18, %cst_16 [1] : vector<16x128xf32> to vector<16xf32>
      %20 = vector.shape_cast %19 : vector<16xf32> to vector<16x1xf32>
      %cst_17 = arith.constant 1.280000e+02 : f32
      %21 = vector.broadcast %cst_17 : f32 to vector<16x1xf32>
      %22 = arith.divf %20, %21 : vector<16x1xf32>
      %23 = vector.broadcast %22 : vector<16x1xf32> to vector<16x128xf32>
      %24 = arith.subf %18, %23 : vector<16x128xf32>
      %25 = arith.mulf %24, %24 : vector<16x128xf32>
      %cst_18 = arith.constant dense<0.000000e+00> : vector<16xf32>
      %26 = vector.multi_reduction <add>, %25, %cst_18 [1] : vector<16x128xf32> to vector<16xf32>
      %27 = vector.shape_cast %26 : vector<16xf32> to vector<16x1xf32>
      %cst_19 = arith.constant 1.280000e+02 : f32
      %28 = vector.broadcast %cst_19 : f32 to vector<16x1xf32>
      %29 = arith.divf %27, %28 : vector<16x1xf32>
      %cst_20 = arith.constant 9.99999974E-6 : f32
      %30 = vector.broadcast %cst_20 : f32 to vector<16x1xf32>
      %31 = arith.addf %29, %30 : vector<16x1xf32>
      %32 = math.rsqrt %31 : vector<16x1xf32>
      %33 = vector.broadcast %32 : vector<16x1xf32> to vector<16x128xf32>
      %34 = arith.mulf %24, %33 : vector<16x128xf32>
      %c0_21 = arith.constant 0 : index
      %c0_22 = arith.constant 0 : index
      %35 = vector.load %arg6[%c0_21, %c0_22] : memref<1x128xf32, #tpu.memory_space<vmem>>, vector<1x128xf32>
      %36 = vector.broadcast %35 : vector<1x128xf32> to vector<16x128xf32>
      %37 = arith.mulf %34, %36 : vector<16x128xf32>
      %c0_23 = arith.constant 0 : index
      %c0_24 = arith.constant 0 : index
      %38 = vector.load %arg7[%c0_23, %c0_24] : memref<1x128xf32, #tpu.memory_space<vmem>>, vector<1x128xf32>
      %39 = vector.broadcast %38 : vector<1x128xf32> to vector<16x128xf32>
      %40 = arith.addf %37, %39 : vector<16x128xf32>
      %41 = arith.truncf %40 : vector<16x128xf32> to vector<16x128xbf16>
      %c0_25 = arith.constant 0 : index
      %c0_26 = arith.constant 0 : index
      %42 = vector.load %arg8[%c0_25, %c0_26] : memref<16x128xbf16, #tpu.memory_space<vmem>>, vector<16x128xbf16>
      tpu.vector_store %arg8[%c0_25, %c0_26], %41 {strides = array<i32>} : memref<16x128xbf16, #tpu.memory_space<vmem>>, vector<16x128xbf16>,
    } else {
    }
    return
  }
  func.func @transform_0(%arg0: i32, %arg1: i32) -> (i32, i32) {
    %c0_i32 = arith.constant 0 : i32
    return %arg0, %arg1 : i32, i32
  }
  func.func @transform_1(%arg0: i32, %arg1: i32) -> (i32, i32) {
    %c0_i32 = arith.constant 0 : i32
    %c0_i32_0 = arith.constant 0 : i32
    return %arg1, %c0_i32 : i32, i32
  }
  func.func @transform_2(%arg0: i32, %arg1: i32) -> (i32, i32) {
    %c0_i32 = arith.constant 0 : i32
    %c0_i32_0 = arith.constant 0 : i32
    %c0_i32_1 = arith.constant 0 : i32
    return %c0_i32, %c0_i32_0 : i32, i32
  }
  func.func @transform_3(%arg0: i32, %arg1: i32) -> (i32, i32) {
    %c0_i32 = arith.constant 0 : i32
    %c0_i32_0 = arith.constant 0 : i32
    return %arg0, %c0_i32 : i32, i32
  }
  func.func @transform_4(%arg0: i32, %arg1: i32) -> (i32, i32) {
    %c0_i32 = arith.constant 0 : i32
    %c0_i32_0 = arith.constant 0 : i32
    %c0_i32_1 = arith.constant 0 : i32
    return %c0_i32, %c0_i32_0 : i32, i32
  }
  func.func @transform_5(%arg0: i32, %arg1: i32) -> (i32, i32) {
    %c0_i32 = arith.constant 0 : i32
    %c0_i32_0 = arith.constant 0 : i32
    %c0_i32_1 = arith.constant 0 : i32
    return %c0_i32, %c0_i32_0 : i32, i32
  }
  func.func @transform_6(%arg0: i32, %arg1: i32) -> (i32, i32) {
    %c0_i32 = arith.constant 0 : i32
    %c0_i32_0 = arith.constant 0 : i32
    return %arg0, %c0_i32 : i32, i32
  }
}

module attributes {stable_mosaic.version = 11 : i64} {
  func.func @_linear_ln_kernel(%arg0: i32, %arg1: i32, %arg2: memref<16x256xbf16, #tpu.memory_space<vmem>>, %arg3: memref<256x128xbf16, #tpu.memory_space<vmem>>, %arg4: memref<1x128xf32, #tpu.memory_space<vmem>>, %arg5: memref<16x128xbf16, #tpu.memory_space<vmem>>, %arg6: memref<1x128xf32, #tpu.memory_space<vmem>>, %arg7: memref<1x128xf32, #tpu.memory_space<vmem>>, %arg8: memref<16x128xbf16, #tpu.memory_space<vmem>>, %arg9: memref<16x128xf32, #tpu.memory_space<vmem>>) attributes {dimension_semantics = [#tpu.dimension_semantics<parallel>, #tpu.dimension_semantics<arbitrary>], iteration_bounds = array<i64: 1, 1>, scalar_prefetch = 0 : i64, scratch_operands = 1 : i64, tpu.core_type = #tpu.core_type<tc>, window_params = [{transform_indices = @transform_0, window_bounds = array<i64: 16, 256>}, {transform_indices = @transform_1, window_bounds = array<i64: 256, 128>}, {pipeline_mode = #tpu.pipeline_mode<synchronous>, transform_indices = @transform_2, window_bounds = array<i64: 1, 128>}, {transform_indices = @transform_3, window_bounds = array<i64: 16, 128>}, {pipeline_mode = #tpu.pipeline_mode<synchronous>, transform_indices = @transform_4, window_bounds = array<i64: 1, 128>}, {pipeline_mode = #tpu.pipeline_mode<synchronous>, transform_indices = @transform_5, window_bounds = array<i64: 1, 128>}, {transform_indices = @transform_6, window_bounds = array<i64: 16, 128>}]} {
    %c0_i32 = arith.constant 0 : i32
    %0 = arith.cmpi eq, %arg1, %c0_i32 : i32
    %1 = arith.extui %0 : i1 to i32
    %c0_i32_0 = arith.constant 0 : i32
    %2 = arith.cmpi ne, %1, %c0_i32_0 : i32
    scf.if %2 {
      %cst_10 = arith.constant 0.000000e+00 : f32
      %12 = vector.broadcast %cst_10 : f32 to vector<16x128xf32>
      %c0_11 = arith.constant 0 : index
      %c0_12 = arith.constant 0 : index
      %13 = vector.load %arg9[%c0_11, %c0_12] : memref<16x128xf32, #tpu.memory_space<vmem>>, vector<16x128xf32>
      tpu.vector_store %arg9[%c0_11, %c0_12], %12 {strides = array<i32>} : memref<16x128xf32, #tpu.memory_space<vmem>>, vector<16x128xf32>,
    } else {
    }
    %c0 = arith.constant 0 : index
    %c0_1 = arith.constant 0 : index
    %3 = vector.load %arg9[%c0, %c0_1] : memref<16x128xf32, #tpu.memory_space<vmem>>, vector<16x128xf32>
    %c0_2 = arith.constant 0 : index
    %c0_3 = arith.constant 0 : index
    %4 = vector.load %arg2[%c0_2, %c0_3] : memref<16x256xbf16, #tpu.memory_space<vmem>>, vector<16x256xbf16>
    %c0_4 = arith.constant 0 : index
    %c0_5 = arith.constant 0 : index
    %5 = vector.load %arg3[%c0_4, %c0_5] : memref<256x128xbf16, #tpu.memory_space<vmem>>, vector<256x128xbf16>
    %cst = arith.constant dense<0.000000e+00> : vector<16x128xf32>
    %6 = tpu.matmul %4, %5, %cst {dimension_numbers = #tpu.dot_dimension_numbers<[1], [0], [0], [1], [0, 0, 1, 1], [], []>} : vector<16x256xbf16>, vector<256x128xbf16>, vector<16x128xf32> -> vector<16x128xf32>
    %7 = arith.addf %3, %6 : vector<16x128xf32>
    %c0_6 = arith.constant 0 : index
    %c0_7 = arith.constant 0 : index
    %8 = vector.load %arg9[%c0_6, %c0_7] : memref<16x128xf32, #tpu.memory_space<vmem>>, vector<16x128xf32>
    tpu.vector_store %arg9[%c0_6, %c0_7], %7 {strides = array<i32>} : memref<16x128xf32, #tpu.memory_space<vmem>>, vector<16x128xf32>,
    %c0_i32_8 = arith.constant 0 : i32
    %9 = arith.cmpi eq, %arg1, %c0_i32_8 : i32
    %10 = arith.extui %9 : i1 to i32
    %c0_i32_9 = arith.constant 0 : i32
    %11 = arith.cmpi ne, %10, %c0_i32_9 : i32
    scf.if %11 {
      %c0_10 = arith.constant 0 : index
      %c0_11 = arith.constant 0 : index
      %12 = vector.load %arg9[%c0_10, %c0_11] : memref<16x128xf32, #tpu.memory_space<vmem>>, vector<16x128xf32>
      %c0_12 = arith.constant 0 : index
      %c0_13 = arith.constant 0 : index
      %13 = vector.load %arg4[%c0_12, %c0_13] : memref<1x128xf32, #tpu.memory_space<vmem>>, vector<1x128xf32>
      %14 = vector.broadcast %13 : vector<1x128xf32> to vector<16x128xf32>
      %15 = arith.addf %12, %14 : vector<16x128xf32>
      %c0_14 = arith.constant 0 : index
      %c0_15 = arith.constant 0 : index
      %16 = vector.load %arg5[%c0_14, %c0_15] : memref<16x128xbf16, #tpu.memory_space<vmem>>, vector<16x128xbf16>
      %17 = arith.extf %16 : vector<16x128xbf16> to vector<16x128xf32>
      %18 = arith.addf %15, %17 : vector<16x128xf32>
      %cst_16 = arith.constant dense<0.000000e+00> : vector<16xf32>
      %19 = vector.multi_reduction <add>, %18, %cst_16 [1] : vector<16x128xf32> to vector<16xf32>
      %20 = vector.shape_cast %19 : vector<16xf32> to vector<16x1xf32>
      %cst_17 = arith.constant 1.280000e+02 : f32
      %21 = vector.broadcast %cst_17 : f32 to vector<16x1xf32>
      %22 = arith.divf %20, %21 : vector<16x1xf32>
      %23 = vector.broadcast %22 : vector<16x1xf32> to vector<16x128xf32>
      %24 = arith.subf %18, %23 : vector<16x128xf32>
      %25 = arith.mulf %24, %24 : vector<16x128xf32>
      %cst_18 = arith.constant dense<0.000000e+00> : vector<16xf32>
      %26 = vector.multi_reduction <add>, %25, %cst_18 [1] : vector<16x128xf32> to vector<16xf32>
      %27 = vector.shape_cast %26 : vector<16xf32> to vector<16x1xf32>
      %cst_19 = arith.constant 1.280000e+02 : f32
      %28 = vector.broadcast %cst_19 : f32 to vector<16x1xf32>
      %29 = arith.divf %27, %28 : vector<16x1xf32>
      %cst_20 = arith.constant 9.99999974E-6 : f32
      %30 = vector.broadcast %cst_20 : f32 to vector<16x1xf32>
      %31 = arith.addf %29, %30 : vector<16x1xf32>
      %32 = math.rsqrt %31 : vector<16x1xf32>
      %33 = vector.broadcast %32 : vector<16x1xf32> to vector<16x128xf32>
      %34 = arith.mulf %24, %33 : vector<16x128xf32>
      %c0_21 = arith.constant 0 : index
      %c0_22 = arith.constant 0 : index
      %35 = vector.load %arg6[%c0_21, %c0_22] : memref<1x128xf32, #tpu.memory_space<vmem>>, vector<1x128xf32>
      %36 = vector.broadcast %35 : vector<1x128xf32> to vector<16x128xf32>
      %37 = arith.mulf %34, %36 : vector<16x128xf32>
      %c0_23 = arith.constant 0 : index
      %c0_24 = arith.constant 0 : index
      %38 = vector.load %arg7[%c0_23, %c0_24] : memref<1x128xf32, #tpu.memory_space<vmem>>, vector<1x128xf32>
      %39 = vector.broadcast %38 : vector<1x128xf32> to vector<16x128xf32>
      %40 = arith.addf %37, %39 : vector<16x128xf32>
      %41 = arith.truncf %40 : vector<16x128xf32> to vector<16x128xbf16>
      %c0_25 = arith.constant 0 : index
      %c0_26 = arith.constant 0 : index
      %42 = vector.load %arg8[%c0_25, %c0_26] : memref<16x128xbf16, #tpu.memory_space<vmem>>, vector<16x128xbf16>
      tpu.vector_store %arg8[%c0_25, %c0_26], %41 {strides = array<i32>} : memref<16x128xbf16, #tpu.memory_space<vmem>>, vector<16x128xbf16>,
    } else {
    }
    return
  }
  func.func @transform_0(%arg0: i32, %arg1: i32) -> (i32, i32) {
    %c0_i32 = arith.constant 0 : i32
    return %arg0, %arg1 : i32, i32
  }
  func.func @transform_1(%arg0: i32, %arg1: i32) -> (i32, i32) {
    %c0_i32 = arith.constant 0 : i32
    %c0_i32_0 = arith.constant 0 : i32
    return %arg1, %c0_i32 : i32, i32
  }
  func.func @transform_2(%arg0: i32, %arg1: i32) -> (i32, i32) {
    %c0_i32 = arith.constant 0 : i32
    %c0_i32_0 = arith.constant 0 : i32
    %c0_i32_1 = arith.constant 0 : i32
    return %c0_i32, %c0_i32_0 : i32, i32
  }
  func.func @transform_3(%arg0: i32, %arg1: i32) -> (i32, i32) {
    %c0_i32 = arith.constant 0 : i32
    %c0_i32_0 = arith.constant 0 : i32
    return %arg0, %c0_i32 : i32, i32
  }
  func.func @transform_4(%arg0: i32, %arg1: i32) -> (i32, i32) {
    %c0_i32 = arith.constant 0 : i32
    %c0_i32_0 = arith.constant 0 : i32
    %c0_i32_1 = arith.constant 0 : i32
    return %c0_i32, %c0_i32_0 : i32, i32
  }
  func.func @transform_5(%arg0: i32, %arg1: i32) -> (i32, i32) {
    %c0_i32 = arith.constant 0 : i32
    %c0_i32_0 = arith.constant 0 : i32
    %c0_i32_1 = arith.constant 0 : i32
    return %c0_i32, %c0_i32_0 : i32, i32
  }
  func.func @transform_6(%arg0: i32, %arg1: i32) -> (i32, i32) {
    %c0_i32 = arith.constant 0 : i32
    %c0_i32_0 = arith.constant 0 : i32
    return %arg0, %c0_i32 : i32, i32
  }
}

module attributes {stable_mosaic.version = 11 : i64} {
  func.func @_linear_ln_kernel(%arg0: i32, %arg1: i32, %arg2: memref<16x128xbf16, #tpu.memory_space<vmem>>, %arg3: memref<128x128xbf16, #tpu.memory_space<vmem>>, %arg4: memref<1x128xf32, #tpu.memory_space<vmem>>, %arg5: memref<16x128xbf16, #tpu.memory_space<vmem>>, %arg6: memref<1x128xf32, #tpu.memory_space<vmem>>, %arg7: memref<1x128xf32, #tpu.memory_space<vmem>>, %arg8: memref<16x128xbf16, #tpu.memory_space<vmem>>, %arg9: memref<16x128xf32, #tpu.memory_space<vmem>>) attributes {dimension_semantics = [#tpu.dimension_semantics<parallel>, #tpu.dimension_semantics<arbitrary>], iteration_bounds = array<i64: 1, 1>, scalar_prefetch = 0 : i64, scratch_operands = 1 : i64, tpu.core_type = #tpu.core_type<tc>, window_params = [{transform_indices = @transform_0, window_bounds = array<i64: 16, 128>}, {transform_indices = @transform_1, window_bounds = array<i64: 128, 128>}, {pipeline_mode = #tpu.pipeline_mode<synchronous>, transform_indices = @transform_2, window_bounds = array<i64: 1, 128>}, {transform_indices = @transform_3, window_bounds = array<i64: 16, 128>}, {pipeline_mode = #tpu.pipeline_mode<synchronous>, transform_indices = @transform_4, window_bounds = array<i64: 1, 128>}, {pipeline_mode = #tpu.pipeline_mode<synchronous>, transform_indices = @transform_5, window_bounds = array<i64: 1, 128>}, {transform_indices = @transform_6, window_bounds = array<i64: 16, 128>}]} {
    %c0_i32 = arith.constant 0 : i32
    %0 = arith.cmpi eq, %arg1, %c0_i32 : i32
    %1 = arith.extui %0 : i1 to i32
    %c0_i32_0 = arith.constant 0 : i32
    %2 = arith.cmpi ne, %1, %c0_i32_0 : i32
    scf.if %2 {
      %cst_10 = arith.constant 0.000000e+00 : f32
      %12 = vector.broadcast %cst_10 : f32 to vector<16x128xf32>
      %c0_11 = arith.constant 0 : index
      %c0_12 = arith.constant 0 : index
      %13 = vector.load %arg9[%c0_11, %c0_12] : memref<16x128xf32, #tpu.memory_space<vmem>>, vector<16x128xf32>
      tpu.vector_store %arg9[%c0_11, %c0_12], %12 {strides = array<i32>} : memref<16x128xf32, #tpu.memory_space<vmem>>, vector<16x128xf32>,
    } else {
    }
    %c0 = arith.constant 0 : index
    %c0_1 = arith.constant 0 : index
    %3 = vector.load %arg9[%c0, %c0_1] : memref<16x128xf32, #tpu.memory_space<vmem>>, vector<16x128xf32>
    %c0_2 = arith.constant 0 : index
    %c0_3 = arith.constant 0 : index
    %4 = vector.load %arg2[%c0_2, %c0_3] : memref<16x128xbf16, #tpu.memory_space<vmem>>, vector<16x128xbf16>
    %c0_4 = arith.constant 0 : index
    %c0_5 = arith.constant 0 : index
    %5 = vector.load %arg3[%c0_4, %c0_5] : memref<128x128xbf16, #tpu.memory_space<vmem>>, vector<128x128xbf16>
    %cst = arith.constant dense<0.000000e+00> : vector<16x128xf32>
    %6 = tpu.matmul %4, %5, %cst {dimension_numbers = #tpu.dot_dimension_numbers<[1], [0], [0], [1], [0, 0, 1, 1], [], []>} : vector<16x128xbf16>, vector<128x128xbf16>, vector<16x128xf32> -> vector<16x128xf32>
    %7 = arith.addf %3, %6 : vector<16x128xf32>
    %c0_6 = arith.constant 0 : index
    %c0_7 = arith.constant 0 : index
    %8 = vector.load %arg9[%c0_6, %c0_7] : memref<16x128xf32, #tpu.memory_space<vmem>>, vector<16x128xf32>
    tpu.vector_store %arg9[%c0_6, %c0_7], %7 {strides = array<i32>} : memref<16x128xf32, #tpu.memory_space<vmem>>, vector<16x128xf32>,
    %c0_i32_8 = arith.constant 0 : i32
    %9 = arith.cmpi eq, %arg1, %c0_i32_8 : i32
    %10 = arith.extui %9 : i1 to i32
    %c0_i32_9 = arith.constant 0 : i32
    %11 = arith.cmpi ne, %10, %c0_i32_9 : i32
    scf.if %11 {
      %c0_10 = arith.constant 0 : index
      %c0_11 = arith.constant 0 : index
      %12 = vector.load %arg9[%c0_10, %c0_11] : memref<16x128xf32, #tpu.memory_space<vmem>>, vector<16x128xf32>
      %c0_12 = arith.constant 0 : index
      %c0_13 = arith.constant 0 : index
      %13 = vector.load %arg4[%c0_12, %c0_13] : memref<1x128xf32, #tpu.memory_space<vmem>>, vector<1x128xf32>
      %14 = vector.broadcast %13 : vector<1x128xf32> to vector<16x128xf32>
      %15 = arith.addf %12, %14 : vector<16x128xf32>
      %c0_14 = arith.constant 0 : index
      %c0_15 = arith.constant 0 : index
      %16 = vector.load %arg5[%c0_14, %c0_15] : memref<16x128xbf16, #tpu.memory_space<vmem>>, vector<16x128xbf16>
      %17 = arith.extf %16 : vector<16x128xbf16> to vector<16x128xf32>
      %18 = arith.addf %15, %17 : vector<16x128xf32>
      %cst_16 = arith.constant dense<0.000000e+00> : vector<16xf32>
      %19 = vector.multi_reduction <add>, %18, %cst_16 [1] : vector<16x128xf32> to vector<16xf32>
      %20 = vector.shape_cast %19 : vector<16xf32> to vector<16x1xf32>
      %cst_17 = arith.constant 1.280000e+02 : f32
      %21 = vector.broadcast %cst_17 : f32 to vector<16x1xf32>
      %22 = arith.divf %20, %21 : vector<16x1xf32>
      %23 = vector.broadcast %22 : vector<16x1xf32> to vector<16x128xf32>
      %24 = arith.subf %18, %23 : vector<16x128xf32>
      %25 = arith.mulf %24, %24 : vector<16x128xf32>
      %cst_18 = arith.constant dense<0.000000e+00> : vector<16xf32>
      %26 = vector.multi_reduction <add>, %25, %cst_18 [1] : vector<16x128xf32> to vector<16xf32>
      %27 = vector.shape_cast %26 : vector<16xf32> to vector<16x1xf32>
      %cst_19 = arith.constant 1.280000e+02 : f32
      %28 = vector.broadcast %cst_19 : f32 to vector<16x1xf32>
      %29 = arith.divf %27, %28 : vector<16x1xf32>
      %cst_20 = arith.constant 9.99999974E-6 : f32
      %30 = vector.broadcast %cst_20 : f32 to vector<16x1xf32>
      %31 = arith.addf %29, %30 : vector<16x1xf32>
      %32 = math.rsqrt %31 : vector<16x1xf32>
      %33 = vector.broadcast %32 : vector<16x1xf32> to vector<16x128xf32>
      %34 = arith.mulf %24, %33 : vector<16x128xf32>
      %c0_21 = arith.constant 0 : index
      %c0_22 = arith.constant 0 : index
      %35 = vector.load %arg6[%c0_21, %c0_22] : memref<1x128xf32, #tpu.memory_space<vmem>>, vector<1x128xf32>
      %36 = vector.broadcast %35 : vector<1x128xf32> to vector<16x128xf32>
      %37 = arith.mulf %34, %36 : vector<16x128xf32>
      %c0_23 = arith.constant 0 : index
      %c0_24 = arith.constant 0 : index
      %38 = vector.load %arg7[%c0_23, %c0_24] : memref<1x128xf32, #tpu.memory_space<vmem>>, vector<1x128xf32>
      %39 = vector.broadcast %38 : vector<1x128xf32> to vector<16x128xf32>
      %40 = arith.addf %37, %39 : vector<16x128xf32>
      %41 = arith.truncf %40 : vector<16x128xf32> to vector<16x128xbf16>
      %c0_25 = arith.constant 0 : index
      %c0_26 = arith.constant 0 : index
      %42 = vector.load %arg8[%c0_25, %c0_26] : memref<16x128xbf16, #tpu.memory_space<vmem>>, vector<16x128xbf16>
      tpu.vector_store %arg8[%c0_25, %c0_26], %41 {strides = array<i32>} : memref<16x128xbf16, #tpu.memory_space<vmem>>, vector<16x128xbf16>,
    } else {
    }
    return
  }
  func.func @transform_0(%arg0: i32, %arg1: i32) -> (i32, i32) {
    %c0_i32 = arith.constant 0 : i32
    return %arg0, %arg1 : i32, i32
  }
  func.func @transform_1(%arg0: i32, %arg1: i32) -> (i32, i32) {
    %c0_i32 = arith.constant 0 : i32
    %c0_i32_0 = arith.constant 0 : i32
    return %arg1, %c0_i32 : i32, i32
  }
  func.func @transform_2(%arg0: i32, %arg1: i32) -> (i32, i32) {
    %c0_i32 = arith.constant 0 : i32
    %c0_i32_0 = arith.constant 0 : i32
    %c0_i32_1 = arith.constant 0 : i32
    return %c0_i32, %c0_i32_0 : i32, i32
  }
  func.func @transform_3(%arg0: i32, %arg1: i32) -> (i32, i32) {
    %c0_i32 = arith.constant 0 : i32
    %c0_i32_0 = arith.constant 0 : i32
    return %arg0, %c0_i32 : i32, i32
  }
  func.func @transform_4(%arg0: i32, %arg1: i32) -> (i32, i32) {
    %c0_i32 = arith.constant 0 : i32
    %c0_i32_0 = arith.constant 0 : i32
    %c0_i32_1 = arith.constant 0 : i32
    return %c0_i32, %c0_i32_0 : i32, i32
  }
  func.func @transform_5(%arg0: i32, %arg1: i32) -> (i32, i32) {
    %c0_i32 = arith.constant 0 : i32
    %c0_i32_0 = arith.constant 0 : i32
    %c0_i32_1 = arith.constant 0 : i32
    return %c0_i32, %c0_i32_0 : i32, i32
  }
  func.func @transform_6(%arg0: i32, %arg1: i32) -> (i32, i32) {
    %c0_i32 = arith.constant 0 : i32
    %c0_i32_0 = arith.constant 0 : i32
    return %arg0, %c0_i32 : i32, i32
  }
}

module attributes {stable_mosaic.version = 11 : i64} {
  func.func @_linear_kernel(%arg0: i32, %arg1: i32, %arg2: i32, %arg3: memref<16x128xbf16, #tpu.memory_space<vmem>>, %arg4: memref<128x256xbf16, #tpu.memory_space<vmem>>, %arg5: memref<1x256xf32, #tpu.memory_space<vmem>>, %arg6: memref<16x256xbf16, #tpu.memory_space<vmem>>, %arg7: memref<16x256xf32, #tpu.memory_space<vmem>>) attributes {dimension_semantics = [#tpu.dimension_semantics<parallel>, #tpu.dimension_semantics<parallel>, #tpu.dimension_semantics<arbitrary>], iteration_bounds = array<i64: 1, 1, 1>, scalar_prefetch = 0 : i64, scratch_operands = 1 : i64, tpu.core_type = #tpu.core_type<tc>, window_params = [{transform_indices = @transform_0, window_bounds = array<i64: 16, 128>}, {transform_indices = @transform_1, window_bounds = array<i64: 128, 256>}, {transform_indices = @transform_2, window_bounds = array<i64: 1, 256>}, {transform_indices = @transform_3, window_bounds = array<i64: 16, 256>}]} {
    %c0_i32 = arith.constant 0 : i32
    %0 = arith.cmpi eq, %arg2, %c0_i32 : i32
    %1 = arith.extui %0 : i1 to i32
    %c0_i32_0 = arith.constant 0 : i32
    %2 = arith.cmpi ne, %1, %c0_i32_0 : i32
    scf.if %2 {
      %cst_10 = arith.constant 0.000000e+00 : f32
      %12 = vector.broadcast %cst_10 : f32 to vector<16x256xf32>
      %c0_11 = arith.constant 0 : index
      %c0_12 = arith.constant 0 : index
      %13 = vector.load %arg7[%c0_11, %c0_12] : memref<16x256xf32, #tpu.memory_space<vmem>>, vector<16x256xf32>
      tpu.vector_store %arg7[%c0_11, %c0_12], %12 {strides = array<i32>} : memref<16x256xf32, #tpu.memory_space<vmem>>, vector<16x256xf32>,
    } else {
    }
    %c0 = arith.constant 0 : index
    %c0_1 = arith.constant 0 : index
    %3 = vector.load %arg7[%c0, %c0_1] : memref<16x256xf32, #tpu.memory_space<vmem>>, vector<16x256xf32>
    %c0_2 = arith.constant 0 : index
    %c0_3 = arith.constant 0 : index
    %4 = vector.load %arg3[%c0_2, %c0_3] : memref<16x128xbf16, #tpu.memory_space<vmem>>, vector<16x128xbf16>
    %c0_4 = arith.constant 0 : index
    %c0_5 = arith.constant 0 : index
    %5 = vector.load %arg4[%c0_4, %c0_5] : memref<128x256xbf16, #tpu.memory_space<vmem>>, vector<128x256xbf16>
    %cst = arith.constant dense<0.000000e+00> : vector<16x256xf32>
    %6 = tpu.matmul %4, %5, %cst {dimension_numbers = #tpu.dot_dimension_numbers<[1], [0], [0], [1], [0, 0, 1, 1], [], []>} : vector<16x128xbf16>, vector<128x256xbf16>, vector<16x256xf32> -> vector<16x256xf32>
    %7 = arith.addf %3, %6 : vector<16x256xf32>
    %c0_6 = arith.constant 0 : index
    %c0_7 = arith.constant 0 : index
    %8 = vector.load %arg7[%c0_6, %c0_7] : memref<16x256xf32, #tpu.memory_space<vmem>>, vector<16x256xf32>
    tpu.vector_store %arg7[%c0_6, %c0_7], %7 {strides = array<i32>} : memref<16x256xf32, #tpu.memory_space<vmem>>, vector<16x256xf32>,
    %c0_i32_8 = arith.constant 0 : i32
    %9 = arith.cmpi eq, %arg2, %c0_i32_8 : i32
    %10 = arith.extui %9 : i1 to i32
    %c0_i32_9 = arith.constant 0 : i32
    %11 = arith.cmpi ne, %10, %c0_i32_9 : i32
    scf.if %11 {
      %c0_10 = arith.constant 0 : index
      %c0_11 = arith.constant 0 : index
      %12 = vector.load %arg7[%c0_10, %c0_11] : memref<16x256xf32, #tpu.memory_space<vmem>>, vector<16x256xf32>
      %c0_12 = arith.constant 0 : index
      %c0_13 = arith.constant 0 : index
      %13 = vector.load %arg5[%c0_12, %c0_13] : memref<1x256xf32, #tpu.memory_space<vmem>>, vector<1x256xf32>
      %14 = vector.broadcast %13 : vector<1x256xf32> to vector<16x256xf32>
      %15 = arith.addf %12, %14 : vector<16x256xf32>
      %cst_14 = arith.constant 0.000000e+00 : f32
      %16 = vector.broadcast %cst_14 : f32 to vector<16x256xf32>
      %17 = arith.maximumf %15, %16 : vector<16x256xf32>
      %18 = arith.truncf %17 : vector<16x256xf32> to vector<16x256xbf16>
      %c0_15 = arith.constant 0 : index
      %c0_16 = arith.constant 0 : index
      %19 = vector.load %arg6[%c0_15, %c0_16] : memref<16x256xbf16, #tpu.memory_space<vmem>>, vector<16x256xbf16>
      tpu.vector_store %arg6[%c0_15, %c0_16], %18 {strides = array<i32>} : memref<16x256xbf16, #tpu.memory_space<vmem>>, vector<16x256xbf16>,
    } else {
    }
    return
  }
  func.func @transform_0(%arg0: i32, %arg1: i32, %arg2: i32) -> (i32, i32) {
    %c0_i32 = arith.constant 0 : i32
    return %arg0, %arg2 : i32, i32
  }
  func.func @transform_1(%arg0: i32, %arg1: i32, %arg2: i32) -> (i32, i32) {
    %c0_i32 = arith.constant 0 : i32
    return %arg2, %arg1 : i32, i32
  }
  func.func @transform_2(%arg0: i32, %arg1: i32, %arg2: i32) -> (i32, i32) {
    %c0_i32 = arith.constant 0 : i32
    %c0_i32_0 = arith.constant 0 : i32
    return %c0_i32, %arg1 : i32, i32
  }
  func.func @transform_3(%arg0: i32, %arg1: i32, %arg2: i32) -> (i32, i32) {
    %c0_i32 = arith.constant 0 : i32
    return %arg0, %arg1 : i32, i32
  }
}

module attributes {stable_mosaic.version = 11 : i64} {
  func.func @_linear_ln_kernel(%arg0: i32, %arg1: i32, %arg2: memref<16x256xbf16, #tpu.memory_space<vmem>>, %arg3: memref<256x128xbf16, #tpu.memory_space<vmem>>, %arg4: memref<1x128xf32, #tpu.memory_space<vmem>>, %arg5: memref<16x128xbf16, #tpu.memory_space<vmem>>, %arg6: memref<1x128xf32, #tpu.memory_space<vmem>>, %arg7: memref<1x128xf32, #tpu.memory_space<vmem>>, %arg8: memref<16x128xbf16, #tpu.memory_space<vmem>>, %arg9: memref<16x128xf32, #tpu.memory_space<vmem>>) attributes {dimension_semantics = [#tpu.dimension_semantics<parallel>, #tpu.dimension_semantics<arbitrary>], iteration_bounds = array<i64: 1, 1>, scalar_prefetch = 0 : i64, scratch_operands = 1 : i64, tpu.core_type = #tpu.core_type<tc>, window_params = [{transform_indices = @transform_0, window_bounds = array<i64: 16, 256>}, {transform_indices = @transform_1, window_bounds = array<i64: 256, 128>}, {pipeline_mode = #tpu.pipeline_mode<synchronous>, transform_indices = @transform_2, window_bounds = array<i64: 1, 128>}, {transform_indices = @transform_3, window_bounds = array<i64: 16, 128>}, {pipeline_mode = #tpu.pipeline_mode<synchronous>, transform_indices = @transform_4, window_bounds = array<i64: 1, 128>}, {pipeline_mode = #tpu.pipeline_mode<synchronous>, transform_indices = @transform_5, window_bounds = array<i64: 1, 128>}, {transform_indices = @transform_6, window_bounds = array<i64: 16, 128>}]} {
    %c0_i32 = arith.constant 0 : i32
    %0 = arith.cmpi eq, %arg1, %c0_i32 : i32
    %1 = arith.extui %0 : i1 to i32
    %c0_i32_0 = arith.constant 0 : i32
    %2 = arith.cmpi ne, %1, %c0_i32_0 : i32
    scf.if %2 {
      %cst_10 = arith.constant 0.000000e+00 : f32
      %12 = vector.broadcast %cst_10 : f32 to vector<16x128xf32>
      %c0_11 = arith.constant 0 : index
      %c0_12 = arith.constant 0 : index
      %13 = vector.load %arg9[%c0_11, %c0_12] : memref<16x128xf32, #tpu.memory_space<vmem>>, vector<16x128xf32>
      tpu.vector_store %arg9[%c0_11, %c0_12], %12 {strides = array<i32>} : memref<16x128xf32, #tpu.memory_space<vmem>>, vector<16x128xf32>,
    } else {
    }
    %c0 = arith.constant 0 : index
    %c0_1 = arith.constant 0 : index
    %3 = vector.load %arg9[%c0, %c0_1] : memref<16x128xf32, #tpu.memory_space<vmem>>, vector<16x128xf32>
    %c0_2 = arith.constant 0 : index
    %c0_3 = arith.constant 0 : index
    %4 = vector.load %arg2[%c0_2, %c0_3] : memref<16x256xbf16, #tpu.memory_space<vmem>>, vector<16x256xbf16>
    %c0_4 = arith.constant 0 : index
    %c0_5 = arith.constant 0 : index
    %5 = vector.load %arg3[%c0_4, %c0_5] : memref<256x128xbf16, #tpu.memory_space<vmem>>, vector<256x128xbf16>
    %cst = arith.constant dense<0.000000e+00> : vector<16x128xf32>
    %6 = tpu.matmul %4, %5, %cst {dimension_numbers = #tpu.dot_dimension_numbers<[1], [0], [0], [1], [0, 0, 1, 1], [], []>} : vector<16x256xbf16>, vector<256x128xbf16>, vector<16x128xf32> -> vector<16x128xf32>
    %7 = arith.addf %3, %6 : vector<16x128xf32>
    %c0_6 = arith.constant 0 : index
    %c0_7 = arith.constant 0 : index
    %8 = vector.load %arg9[%c0_6, %c0_7] : memref<16x128xf32, #tpu.memory_space<vmem>>, vector<16x128xf32>
    tpu.vector_store %arg9[%c0_6, %c0_7], %7 {strides = array<i32>} : memref<16x128xf32, #tpu.memory_space<vmem>>, vector<16x128xf32>,
    %c0_i32_8 = arith.constant 0 : i32
    %9 = arith.cmpi eq, %arg1, %c0_i32_8 : i32
    %10 = arith.extui %9 : i1 to i32
    %c0_i32_9 = arith.constant 0 : i32
    %11 = arith.cmpi ne, %10, %c0_i32_9 : i32
    scf.if %11 {
      %c0_10 = arith.constant 0 : index
      %c0_11 = arith.constant 0 : index
      %12 = vector.load %arg9[%c0_10, %c0_11] : memref<16x128xf32, #tpu.memory_space<vmem>>, vector<16x128xf32>
      %c0_12 = arith.constant 0 : index
      %c0_13 = arith.constant 0 : index
      %13 = vector.load %arg4[%c0_12, %c0_13] : memref<1x128xf32, #tpu.memory_space<vmem>>, vector<1x128xf32>
      %14 = vector.broadcast %13 : vector<1x128xf32> to vector<16x128xf32>
      %15 = arith.addf %12, %14 : vector<16x128xf32>
      %c0_14 = arith.constant 0 : index
      %c0_15 = arith.constant 0 : index
      %16 = vector.load %arg5[%c0_14, %c0_15] : memref<16x128xbf16, #tpu.memory_space<vmem>>, vector<16x128xbf16>
      %17 = arith.extf %16 : vector<16x128xbf16> to vector<16x128xf32>
      %18 = arith.addf %15, %17 : vector<16x128xf32>
      %cst_16 = arith.constant dense<0.000000e+00> : vector<16xf32>
      %19 = vector.multi_reduction <add>, %18, %cst_16 [1] : vector<16x128xf32> to vector<16xf32>
      %20 = vector.shape_cast %19 : vector<16xf32> to vector<16x1xf32>
      %cst_17 = arith.constant 1.280000e+02 : f32
      %21 = vector.broadcast %cst_17 : f32 to vector<16x1xf32>
      %22 = arith.divf %20, %21 : vector<16x1xf32>
      %23 = vector.broadcast %22 : vector<16x1xf32> to vector<16x128xf32>
      %24 = arith.subf %18, %23 : vector<16x128xf32>
      %25 = arith.mulf %24, %24 : vector<16x128xf32>
      %cst_18 = arith.constant dense<0.000000e+00> : vector<16xf32>
      %26 = vector.multi_reduction <add>, %25, %cst_18 [1] : vector<16x128xf32> to vector<16xf32>
      %27 = vector.shape_cast %26 : vector<16xf32> to vector<16x1xf32>
      %cst_19 = arith.constant 1.280000e+02 : f32
      %28 = vector.broadcast %cst_19 : f32 to vector<16x1xf32>
      %29 = arith.divf %27, %28 : vector<16x1xf32>
      %cst_20 = arith.constant 9.99999974E-6 : f32
      %30 = vector.broadcast %cst_20 : f32 to vector<16x1xf32>
      %31 = arith.addf %29, %30 : vector<16x1xf32>
      %32 = math.rsqrt %31 : vector<16x1xf32>
      %33 = vector.broadcast %32 : vector<16x1xf32> to vector<16x128xf32>
      %34 = arith.mulf %24, %33 : vector<16x128xf32>
      %c0_21 = arith.constant 0 : index
      %c0_22 = arith.constant 0 : index
      %35 = vector.load %arg6[%c0_21, %c0_22] : memref<1x128xf32, #tpu.memory_space<vmem>>, vector<1x128xf32>
      %36 = vector.broadcast %35 : vector<1x128xf32> to vector<16x128xf32>
      %37 = arith.mulf %34, %36 : vector<16x128xf32>
      %c0_23 = arith.constant 0 : index
      %c0_24 = arith.constant 0 : index
      %38 = vector.load %arg7[%c0_23, %c0_24] : memref<1x128xf32, #tpu.memory_space<vmem>>, vector<1x128xf32>
      %39 = vector.broadcast %38 : vector<1x128xf32> to vector<16x128xf32>
      %40 = arith.addf %37, %39 : vector<16x128xf32>
      %41 = arith.truncf %40 : vector<16x128xf32> to vector<16x128xbf16>
      %c0_25 = arith.constant 0 : index
      %c0_26 = arith.constant 0 : index
      %42 = vector.load %arg8[%c0_25, %c0_26] : memref<16x128xbf16, #tpu.memory_space<vmem>>, vector<16x128xbf16>
      tpu.vector_store %arg8[%c0_25, %c0_26], %41 {strides = array<i32>} : memref<16x128xbf16, #tpu.memory_space<vmem>>, vector<16x128xbf16>,
    } else {
    }
    return
  }
  func.func @transform_0(%arg0: i32, %arg1: i32) -> (i32, i32) {
    %c0_i32 = arith.constant 0 : i32
    return %arg0, %arg1 : i32, i32
  }
  func.func @transform_1(%arg0: i32, %arg1: i32) -> (i32, i32) {
    %c0_i32 = arith.constant 0 : i32
    %c0_i32_0 = arith.constant 0 : i32
    return %arg1, %c0_i32 : i32, i32
  }
  func.func @transform_2(%arg0: i32, %arg1: i32) -> (i32, i32) {
    %c0_i32 = arith.constant 0 : i32
    %c0_i32_0 = arith.constant 0 : i32
    %c0_i32_1 = arith.constant 0 : i32
    return %c0_i32, %c0_i32_0 : i32, i32
  }
  func.func @transform_3(%arg0: i32, %arg1: i32) -> (i32, i32) {
    %c0_i32 = arith.constant 0 : i32
    %c0_i32_0 = arith.constant 0 : i32
    return %arg0, %c0_i32 : i32, i32
  }
  func.func @transform_4(%arg0: i32, %arg1: i32) -> (i32, i32) {
    %c0_i32 = arith.constant 0 : i32
    %c0_i32_0 = arith.constant 0 : i32
    %c0_i32_1 = arith.constant 0 : i32
    return %c0_i32, %c0_i32_0 : i32, i32
  }
  func.func @transform_5(%arg0: i32, %arg1: i32) -> (i32, i32) {
    %c0_i32 = arith.constant 0 : i32
    %c0_i32_0 = arith.constant 0 : i32
    %c0_i32_1 = arith.constant 0 : i32
    return %c0_i32, %c0_i32_0 : i32, i32
  }
  func.func @transform_6(%arg0: i32, %arg1: i32) -> (i32, i32) {
    %c0_i32 = arith.constant 0 : i32
    %c0_i32_0 = arith.constant 0 : i32
    return %arg0, %c0_i32 : i32, i32
  }
}

module attributes {stable_mosaic.version = 11 : i64} {
  func.func @_linear_kernel(%arg0: i32, %arg1: i32, %arg2: i32, %arg3: memref<16x128xbf16, #tpu.memory_space<vmem>>, %arg4: memref<128x256xbf16, #tpu.memory_space<vmem>>, %arg5: memref<1x256xf32, #tpu.memory_space<vmem>>, %arg6: memref<16x256xbf16, #tpu.memory_space<vmem>>, %arg7: memref<16x256xf32, #tpu.memory_space<vmem>>) attributes {dimension_semantics = [#tpu.dimension_semantics<parallel>, #tpu.dimension_semantics<parallel>, #tpu.dimension_semantics<arbitrary>], iteration_bounds = array<i64: 1, 1, 1>, scalar_prefetch = 0 : i64, scratch_operands = 1 : i64, tpu.core_type = #tpu.core_type<tc>, window_params = [{transform_indices = @transform_0, window_bounds = array<i64: 16, 128>}, {transform_indices = @transform_1, window_bounds = array<i64: 128, 256>}, {transform_indices = @transform_2, window_bounds = array<i64: 1, 256>}, {transform_indices = @transform_3, window_bounds = array<i64: 16, 256>}]} {
    %c0_i32 = arith.constant 0 : i32
    %0 = arith.cmpi eq, %arg2, %c0_i32 : i32
    %1 = arith.extui %0 : i1 to i32
    %c0_i32_0 = arith.constant 0 : i32
    %2 = arith.cmpi ne, %1, %c0_i32_0 : i32
    scf.if %2 {
      %cst_10 = arith.constant 0.000000e+00 : f32
      %12 = vector.broadcast %cst_10 : f32 to vector<16x256xf32>
      %c0_11 = arith.constant 0 : index
      %c0_12 = arith.constant 0 : index
      %13 = vector.load %arg7[%c0_11, %c0_12] : memref<16x256xf32, #tpu.memory_space<vmem>>, vector<16x256xf32>
      tpu.vector_store %arg7[%c0_11, %c0_12], %12 {strides = array<i32>} : memref<16x256xf32, #tpu.memory_space<vmem>>, vector<16x256xf32>,
    } else {
    }
    %c0 = arith.constant 0 : index
    %c0_1 = arith.constant 0 : index
    %3 = vector.load %arg7[%c0, %c0_1] : memref<16x256xf32, #tpu.memory_space<vmem>>, vector<16x256xf32>
    %c0_2 = arith.constant 0 : index
    %c0_3 = arith.constant 0 : index
    %4 = vector.load %arg3[%c0_2, %c0_3] : memref<16x128xbf16, #tpu.memory_space<vmem>>, vector<16x128xbf16>
    %c0_4 = arith.constant 0 : index
    %c0_5 = arith.constant 0 : index
    %5 = vector.load %arg4[%c0_4, %c0_5] : memref<128x256xbf16, #tpu.memory_space<vmem>>, vector<128x256xbf16>
    %cst = arith.constant dense<0.000000e+00> : vector<16x256xf32>
    %6 = tpu.matmul %4, %5, %cst {dimension_numbers = #tpu.dot_dimension_numbers<[1], [0], [0], [1], [0, 0, 1, 1], [], []>} : vector<16x128xbf16>, vector<128x256xbf16>, vector<16x256xf32> -> vector<16x256xf32>
    %7 = arith.addf %3, %6 : vector<16x256xf32>
    %c0_6 = arith.constant 0 : index
    %c0_7 = arith.constant 0 : index
    %8 = vector.load %arg7[%c0_6, %c0_7] : memref<16x256xf32, #tpu.memory_space<vmem>>, vector<16x256xf32>
    tpu.vector_store %arg7[%c0_6, %c0_7], %7 {strides = array<i32>} : memref<16x256xf32, #tpu.memory_space<vmem>>, vector<16x256xf32>,
    %c0_i32_8 = arith.constant 0 : i32
    %9 = arith.cmpi eq, %arg2, %c0_i32_8 : i32
    %10 = arith.extui %9 : i1 to i32
    %c0_i32_9 = arith.constant 0 : i32
    %11 = arith.cmpi ne, %10, %c0_i32_9 : i32
    scf.if %11 {
      %c0_10 = arith.constant 0 : index
      %c0_11 = arith.constant 0 : index
      %12 = vector.load %arg7[%c0_10, %c0_11] : memref<16x256xf32, #tpu.memory_space<vmem>>, vector<16x256xf32>
      %c0_12 = arith.constant 0 : index
      %c0_13 = arith.constant 0 : index
      %13 = vector.load %arg5[%c0_12, %c0_13] : memref<1x256xf32, #tpu.memory_space<vmem>>, vector<1x256xf32>
      %14 = vector.broadcast %13 : vector<1x256xf32> to vector<16x256xf32>
      %15 = arith.addf %12, %14 : vector<16x256xf32>
      %16 = arith.truncf %15 : vector<16x256xf32> to vector<16x256xbf16>
      %c0_14 = arith.constant 0 : index
      %c0_15 = arith.constant 0 : index
      %17 = vector.load %arg6[%c0_14, %c0_15] : memref<16x256xbf16, #tpu.memory_space<vmem>>, vector<16x256xbf16>
      tpu.vector_store %arg6[%c0_14, %c0_15], %16 {strides = array<i32>} : memref<16x256xbf16, #tpu.memory_space<vmem>>, vector<16x256xbf16>,
    } else {
    }
    return
  }
  func.func @transform_0(%arg0: i32, %arg1: i32, %arg2: i32) -> (i32, i32) {
    %c0_i32 = arith.constant 0 : i32
    return %arg0, %arg2 : i32, i32
  }
  func.func @transform_1(%arg0: i32, %arg1: i32, %arg2: i32) -> (i32, i32) {
    %c0_i32 = arith.constant 0 : i32
    return %arg2, %arg1 : i32, i32
  }
  func.func @transform_2(%arg0: i32, %arg1: i32, %arg2: i32) -> (i32, i32) {
    %c0_i32 = arith.constant 0 : i32
    %c0_i32_0 = arith.constant 0 : i32
    return %c0_i32, %arg1 : i32, i32
  }
  func.func @transform_3(%arg0: i32, %arg1: i32, %arg2: i32) -> (i32, i32) {
    %c0_i32 = arith.constant 0 : i32
    return %arg0, %arg1 : i32, i32
  }
}

module attributes {stable_mosaic.version = 11 : i64} {
  func.func @_linear_kernel(%arg0: i32, %arg1: i32, %arg2: i32, %arg3: memref<16x128xbf16, #tpu.memory_space<vmem>>, %arg4: memref<128x128xbf16, #tpu.memory_space<vmem>>, %arg5: memref<1x128xf32, #tpu.memory_space<vmem>>, %arg6: memref<16x128xbf16, #tpu.memory_space<vmem>>, %arg7: memref<16x128xf32, #tpu.memory_space<vmem>>) attributes {dimension_semantics = [#tpu.dimension_semantics<parallel>, #tpu.dimension_semantics<parallel>, #tpu.dimension_semantics<arbitrary>], iteration_bounds = array<i64: 1, 1, 1>, scalar_prefetch = 0 : i64, scratch_operands = 1 : i64, tpu.core_type = #tpu.core_type<tc>, window_params = [{transform_indices = @transform_0, window_bounds = array<i64: 16, 128>}, {transform_indices = @transform_1, window_bounds = array<i64: 128, 128>}, {transform_indices = @transform_2, window_bounds = array<i64: 1, 128>}, {transform_indices = @transform_3, window_bounds = array<i64: 16, 128>}]} {
    %c0_i32 = arith.constant 0 : i32
    %0 = arith.cmpi eq, %arg2, %c0_i32 : i32
    %1 = arith.extui %0 : i1 to i32
    %c0_i32_0 = arith.constant 0 : i32
    %2 = arith.cmpi ne, %1, %c0_i32_0 : i32
    scf.if %2 {
      %cst_10 = arith.constant 0.000000e+00 : f32
      %12 = vector.broadcast %cst_10 : f32 to vector<16x128xf32>
      %c0_11 = arith.constant 0 : index
      %c0_12 = arith.constant 0 : index
      %13 = vector.load %arg7[%c0_11, %c0_12] : memref<16x128xf32, #tpu.memory_space<vmem>>, vector<16x128xf32>
      tpu.vector_store %arg7[%c0_11, %c0_12], %12 {strides = array<i32>} : memref<16x128xf32, #tpu.memory_space<vmem>>, vector<16x128xf32>,
    } else {
    }
    %c0 = arith.constant 0 : index
    %c0_1 = arith.constant 0 : index
    %3 = vector.load %arg7[%c0, %c0_1] : memref<16x128xf32, #tpu.memory_space<vmem>>, vector<16x128xf32>
    %c0_2 = arith.constant 0 : index
    %c0_3 = arith.constant 0 : index
    %4 = vector.load %arg3[%c0_2, %c0_3] : memref<16x128xbf16, #tpu.memory_space<vmem>>, vector<16x128xbf16>
    %c0_4 = arith.constant 0 : index
    %c0_5 = arith.constant 0 : index
    %5 = vector.load %arg4[%c0_4, %c0_5] : memref<128x128xbf16, #tpu.memory_space<vmem>>, vector<128x128xbf16>
    %cst = arith.constant dense<0.000000e+00> : vector<16x128xf32>
    %6 = tpu.matmul %4, %5, %cst {dimension_numbers = #tpu.dot_dimension_numbers<[1], [0], [0], [1], [0, 0, 1, 1], [], []>} : vector<16x128xbf16>, vector<128x128xbf16>, vector<16x128xf32> -> vector<16x128xf32>
    %7 = arith.addf %3, %6 : vector<16x128xf32>
    %c0_6 = arith.constant 0 : index
    %c0_7 = arith.constant 0 : index
    %8 = vector.load %arg7[%c0_6, %c0_7] : memref<16x128xf32, #tpu.memory_space<vmem>>, vector<16x128xf32>
    tpu.vector_store %arg7[%c0_6, %c0_7], %7 {strides = array<i32>} : memref<16x128xf32, #tpu.memory_space<vmem>>, vector<16x128xf32>,
    %c0_i32_8 = arith.constant 0 : i32
    %9 = arith.cmpi eq, %arg2, %c0_i32_8 : i32
    %10 = arith.extui %9 : i1 to i32
    %c0_i32_9 = arith.constant 0 : i32
    %11 = arith.cmpi ne, %10, %c0_i32_9 : i32
    scf.if %11 {
      %c0_10 = arith.constant 0 : index
      %c0_11 = arith.constant 0 : index
      %12 = vector.load %arg7[%c0_10, %c0_11] : memref<16x128xf32, #tpu.memory_space<vmem>>, vector<16x128xf32>
      %c0_12 = arith.constant 0 : index
      %c0_13 = arith.constant 0 : index
      %13 = vector.load %arg5[%c0_12, %c0_13] : memref<1x128xf32, #tpu.memory_space<vmem>>, vector<1x128xf32>
      %14 = vector.broadcast %13 : vector<1x128xf32> to vector<16x128xf32>
      %15 = arith.addf %12, %14 : vector<16x128xf32>
      %16 = arith.truncf %15 : vector<16x128xf32> to vector<16x128xbf16>
      %c0_14 = arith.constant 0 : index
      %c0_15 = arith.constant 0 : index
      %17 = vector.load %arg6[%c0_14, %c0_15] : memref<16x128xbf16, #tpu.memory_space<vmem>>, vector<16x128xbf16>
      tpu.vector_store %arg6[%c0_14, %c0_15], %16 {strides = array<i32>} : memref<16x128xbf16, #tpu.memory_space<vmem>>, vector<16x128xbf16>,
    } else {
    }
    return
  }
  func.func @transform_0(%arg0: i32, %arg1: i32, %arg2: i32) -> (i32, i32) {
    %c0_i32 = arith.constant 0 : i32
    return %arg0, %arg2 : i32, i32
  }
  func.func @transform_1(%arg0: i32, %arg1: i32, %arg2: i32) -> (i32, i32) {
    %c0_i32 = arith.constant 0 : i32
    return %arg2, %arg1 : i32, i32
  }
  func.func @transform_2(%arg0: i32, %arg1: i32, %arg2: i32) -> (i32, i32) {
    %c0_i32 = arith.constant 0 : i32
    %c0_i32_0 = arith.constant 0 : i32
    return %c0_i32, %arg1 : i32, i32
  }
  func.func @transform_3(%arg0: i32, %arg1: i32, %arg2: i32) -> (i32, i32) {
    %c0_i32 = arith.constant 0 : i32
    return %arg0, %arg1 : i32, i32
  }
}

module attributes {stable_mosaic.version = 11 : i64} {
  func.func @_mha_kernel(%arg0: i32, %arg1: i32, %arg2: i32, %arg3: memref<1x8x128xbf16, #tpu.memory_space<vmem>>, %arg4: memref<1x8x128xbf16, #tpu.memory_space<vmem>>, %arg5: memref<1x8x128xbf16, #tpu.memory_space<vmem>>, %arg6: memref<1x8x128xbf16, #tpu.memory_space<vmem>>, %arg7: memref<4x8x1xf32, #tpu.memory_space<vmem>>, %arg8: memref<4x8x1xf32, #tpu.memory_space<vmem>>, %arg9: memref<8x128xf32, #tpu.memory_space<vmem>>) attributes {dimension_semantics = [#tpu.dimension_semantics<parallel>, #tpu.dimension_semantics<parallel>, #tpu.dimension_semantics<arbitrary>], iteration_bounds = array<i64: 2, 1, 1>, scalar_prefetch = 0 : i64, scratch_operands = 3 : i64, tpu.core_type = #tpu.core_type<tc>, window_params = [{transform_indices = @transform_0, window_bounds = array<i64: 1, 8, 128>}, {transform_indices = @transform_1, window_bounds = array<i64: 1, 8, 128>}, {transform_indices = @transform_2, window_bounds = array<i64: 1, 8, 128>}, {transform_indices = @transform_3, window_bounds = array<i64: 1, 8, 128>}]} {
    %c0_i32 = arith.constant 0 : i32
    %0 = arith.cmpi eq, %arg2, %c0_i32 : i32
    %1 = arith.extui %0 : i1 to i32
    %c0_i32_0 = arith.constant 0 : i32
    %2 = arith.cmpi ne, %1, %c0_i32_0 : i32
    scf.if %2 {
      %cst = arith.constant 0xFF800000 : f32
      %12 = vector.broadcast %cst : f32 to vector<4x8x1xf32>
      %c0 = arith.constant 0 : index
      %c0_5 = arith.constant 0 : index
      %c0_6 = arith.constant 0 : index
      %13 = vector.load %arg7[%c0, %c0_5, %c0_6] : memref<4x8x1xf32, #tpu.memory_space<vmem>>, vector<4x8x1xf32>
      tpu.vector_store %arg7[%c0, %c0_5, %c0_6], %12 {strides = array<i32>} : memref<4x8x1xf32, #tpu.memory_space<vmem>>, vector<4x8x1xf32>,
      %cst_7 = arith.constant 0.000000e+00 : f32
      %14 = vector.broadcast %cst_7 : f32 to vector<4x8x1xf32>
      %c0_8 = arith.constant 0 : index
      %c0_9 = arith.constant 0 : index
      %c0_10 = arith.constant 0 : index
      %15 = vector.load %arg8[%c0_8, %c0_9, %c0_10] : memref<4x8x1xf32, #tpu.memory_space<vmem>>, vector<4x8x1xf32>
      tpu.vector_store %arg8[%c0_8, %c0_9, %c0_10], %14 {strides = array<i32>} : memref<4x8x1xf32, #tpu.memory_space<vmem>>, vector<4x8x1xf32>,
      %cst_11 = arith.constant 0.000000e+00 : f32
      %16 = vector.broadcast %cst_11 : f32 to vector<8x128xf32>
      %c0_12 = arith.constant 0 : index
      %c0_13 = arith.constant 0 : index
      %17 = vector.load %arg9[%c0_12, %c0_13] : memref<8x128xf32, #tpu.memory_space<vmem>>, vector<8x128xf32>
      tpu.vector_store %arg9[%c0_12, %c0_13], %16 {strides = array<i32>} : memref<8x128xf32, #tpu.memory_space<vmem>>, vector<8x128xf32>,
    } else {
    }
    %c8_i32 = arith.constant 8 : i32
    %3 = arith.muli %arg2, %c8_i32 : i32
    %c8_i32_1 = arith.constant 8 : i32
    %4 = arith.muli %arg1, %c8_i32_1 : i32
    %c7_i32 = arith.constant 7 : i32
    %5 = arith.addi %4, %c7_i32 : i32
    %6 = arith.cmpi sle, %3, %5 : i32
    %7 = arith.extui %6 : i1 to i32
    %c0_i32_2 = arith.constant 0 : i32
    %8 = arith.cmpi ne, %7, %c0_i32_2 : i32
    scf.if %8 {
      %c8_i32_5 = arith.constant 8 : i32
      %12 = arith.muli %arg1, %c8_i32_5 : i32
      %13 = tpu.iota {dimensions = array<i32: 0>} : vector<8x8xi32>
      %14 = vector.broadcast %12 : i32 to vector<8x8xi32>
      %15 = arith.addi %14, %13 : vector<8x8xi32>
      %c8_i32_6 = arith.constant 8 : i32
      %16 = arith.muli %arg2, %c8_i32_6 : i32
      %17 = tpu.iota {dimensions = array<i32: 1>} : vector<8x8xi32>
      %18 = vector.broadcast %16 : i32 to vector<8x8xi32>
      %19 = arith.addi %18, %17 : vector<8x8xi32>
      %20 = arith.cmpi sle, %19, %15 : vector<8x8xi32>
      %c0 = arith.constant 0 : index
      %c0_7 = arith.constant 0 : index
      %c0_8 = arith.constant 0 : index
      %21 = vector.load %arg3[%c0, %c0_7, %c0_8] : memref<1x8x128xbf16, #tpu.memory_space<vmem>>, vector<1x8x32xbf16>
      %22 = vector.shape_cast %21 : vector<1x8x32xbf16> to vector<8x32xbf16>
      %cst = arith.constant 1.767580e-01 : bf16
      %23 = vector.broadcast %cst : bf16 to vector<8x32xbf16>
      %24 = arith.mulf %22, %23 : vector<8x32xbf16>
      %c0_9 = arith.constant 0 : index
      %c0_10 = arith.constant 0 : index
      %c0_11 = arith.constant 0 : index
      %25 = vector.load %arg4[%c0_9, %c0_10, %c0_11] : memref<1x8x128xbf16, #tpu.memory_space<vmem>>, vector<1x8x32xbf16>
      %26 = vector.shape_cast %25 : vector<1x8x32xbf16> to vector<8x32xbf16>
      %c0_12 = arith.constant 0 : index
      %c0_13 = arith.constant 0 : index
      %c0_14 = arith.constant 0 : index
      %27 = vector.load %arg5[%c0_12, %c0_13, %c0_14] : memref<1x8x128xbf16, #tpu.memory_space<vmem>>, vector<1x8x32xbf16>
      %28 = vector.shape_cast %27 : vector<1x8x32xbf16> to vector<8x32xbf16>
      %cst_15 = arith.constant dense<0.000000e+00> : vector<8x8xf32>
      %29 = tpu.matmul %24, %26, %cst_15 {dimension_numbers = #tpu.dot_dimension_numbers<[1], [1], [0], [0], [0, 0, 1, 0], [], []>} : vector<8x32xbf16>, vector<8x32xbf16>, vector<8x8xf32> -> vector<8x8xf32>
      %cst_16 = arith.constant -1.000000e+30 : f32
      %30 = vector.broadcast %cst_16 : f32 to vector<8x8xf32>
      %31 = arith.select %20, %29, %30 : vector<8x8xi1>, vector<8x8xf32>
      %c0_17 = arith.constant 0 : index
      %c0_18 = arith.constant 0 : index
      %c0_19 = arith.constant 0 : index
      %32 = vector.load %arg7[%c0_17, %c0_18, %c0_19] : memref<4x8x1xf32, #tpu.memory_space<vmem>>, vector<1x8x1xf32>
      %33 = vector.shape_cast %32 : vector<1x8x1xf32> to vector<8x1xf32>
      %cst_20 = arith.constant dense<0xFF800000> : vector<8xf32>
      %34 = vector.multi_reduction <maximumf>, %31, %cst_20 [1] : vector<8x8xf32> to vector<8xf32>
      %35 = vector.shape_cast %34 : vector<8xf32> to vector<8x1xf32>
      %36 = arith.maximumf %33, %35 : vector<8x1xf32>
      %37 = arith.subf %33, %36 : vector<8x1xf32>
      %38 = math.exp %37 : vector<8x1xf32>
      %39 = vector.broadcast %36 : vector<8x1xf32> to vector<8x8xf32>
      %40 = arith.subf %31, %39 : vector<8x8xf32>
      %41 = math.exp %40 : vector<8x8xf32>
      %c0_21 = arith.constant 0 : index
      %c0_22 = arith.constant 0 : index
      %c0_23 = arith.constant 0 : index
      %42 = vector.load %arg8[%c0_21, %c0_22, %c0_23] : memref<4x8x1xf32, #tpu.memory_space<vmem>>, vector<1x8x1xf32>
      %43 = vector.shape_cast %42 : vector<1x8x1xf32> to vector<8x1xf32>
      %44 = arith.mulf %38, %43 : vector<8x1xf32>
      %cst_24 = arith.constant dense<0.000000e+00> : vector<8xf32>
      %45 = vector.multi_reduction <add>, %41, %cst_24 [1] : vector<8x8xf32> to vector<8xf32>
      %46 = vector.shape_cast %45 : vector<8xf32> to vector<8x1xf32>
      %47 = arith.addf %44, %46 : vector<8x1xf32>
      %c0_25 = arith.constant 0 : index
      %c0_26 = arith.constant 0 : index
      %c0_27 = arith.constant 0 : index
      %48 = vector.load %arg8[%c0_25, %c0_26, %c0_27] : memref<4x8x1xf32, #tpu.memory_space<vmem>>, vector<1x8x1xf32>
      %49 = vector.shape_cast %48 : vector<1x8x1xf32> to vector<8x1xf32>
      %50 = vector.shape_cast %47 : vector<8x1xf32> to vector<1x8x1xf32>
      tpu.vector_store %arg8[%c0_25, %c0_26, %c0_27], %50 {strides = array<i32>} : memref<4x8x1xf32, #tpu.memory_space<vmem>>, vector<1x8x1xf32>,
      %c0_28 = arith.constant 0 : index
      %c0_29 = arith.constant 0 : index
      %c0_30 = arith.constant 0 : index
      %51 = vector.load %arg7[%c0_28, %c0_29, %c0_30] : memref<4x8x1xf32, #tpu.memory_space<vmem>>, vector<1x8x1xf32>
      %52 = vector.shape_cast %51 : vector<1x8x1xf32> to vector<8x1xf32>
      %53 = vector.shape_cast %36 : vector<8x1xf32> to vector<1x8x1xf32>
      tpu.vector_store %arg7[%c0_28, %c0_29, %c0_30], %53 {strides = array<i32>} : memref<4x8x1xf32, #tpu.memory_space<vmem>>, vector<1x8x1xf32>,
      %54 = arith.truncf %41 : vector<8x8xf32> to vector<8x8xbf16>
      %cst_31 = arith.constant dense<0.000000e+00> : vector<8x32xf32>
      %55 = tpu.matmul %54, %28, %cst_31 {dimension_numbers = #tpu.dot_dimension_numbers<[1], [0], [0], [1], [0, 0, 1, 1], [], []>} : vector<8x8xbf16>, vector<8x32xbf16>, vector<8x32xf32> -> vector<8x32xf32>
      %c0_32 = arith.constant 0 : index
      %c0_33 = arith.constant 0 : index
      %56 = vector.load %arg9[%c0_32, %c0_33] : memref<8x128xf32, #tpu.memory_space<vmem>>, vector<8x32xf32>
      %57 = vector.broadcast %38 : vector<8x1xf32> to vector<8x32xf32>
      %58 = arith.mulf %57, %56 : vector<8x32xf32>
      %59 = arith.addf %58, %55 : vector<8x32xf32>
      %c0_34 = arith.constant 0 : index
      %c0_35 = arith.constant 0 : index
      %60 = vector.load %arg9[%c0_34, %c0_35] : memref<8x128xf32, #tpu.memory_space<vmem>>, vector<8x32xf32>
      tpu.vector_store %arg9[%c0_34, %c0_35], %59 {strides = array<i32>} : memref<8x128xf32, #tpu.memory_space<vmem>>, vector<8x32xf32>,
      %c0_36 = arith.constant 0 : index
      %c0_37 = arith.constant 0 : index
      %c32 = arith.constant 32 : index
      %61 = vector.load %arg3[%c0_36, %c0_37, %c32] : memref<1x8x128xbf16, #tpu.memory_space<vmem>>, vector<1x8x32xbf16>
      %62 = vector.shape_cast %61 : vector<1x8x32xbf16> to vector<8x32xbf16>
      %cst_38 = arith.constant 1.767580e-01 : bf16
      %63 = vector.broadcast %cst_38 : bf16 to vector<8x32xbf16>
      %64 = arith.mulf %62, %63 : vector<8x32xbf16>
      %c0_39 = arith.constant 0 : index
      %c0_40 = arith.constant 0 : index
      %c32_41 = arith.constant 32 : index
      %65 = vector.load %arg4[%c0_39, %c0_40, %c32_41] : memref<1x8x128xbf16, #tpu.memory_space<vmem>>, vector<1x8x32xbf16>
      %66 = vector.shape_cast %65 : vector<1x8x32xbf16> to vector<8x32xbf16>
      %c0_42 = arith.constant 0 : index
      %c0_43 = arith.constant 0 : index
      %c32_44 = arith.constant 32 : index
      %67 = vector.load %arg5[%c0_42, %c0_43, %c32_44] : memref<1x8x128xbf16, #tpu.memory_space<vmem>>, vector<1x8x32xbf16>
      %68 = vector.shape_cast %67 : vector<1x8x32xbf16> to vector<8x32xbf16>
      %cst_45 = arith.constant dense<0.000000e+00> : vector<8x8xf32>
      %69 = tpu.matmul %64, %66, %cst_45 {dimension_numbers = #tpu.dot_dimension_numbers<[1], [1], [0], [0], [0, 0, 1, 0], [], []>} : vector<8x32xbf16>, vector<8x32xbf16>, vector<8x8xf32> -> vector<8x8xf32>
      %cst_46 = arith.constant -1.000000e+30 : f32
      %70 = vector.broadcast %cst_46 : f32 to vector<8x8xf32>
      %71 = arith.select %20, %69, %70 : vector<8x8xi1>, vector<8x8xf32>
      %c1 = arith.constant 1 : index
      %c0_47 = arith.constant 0 : index
      %c0_48 = arith.constant 0 : index
      %72 = vector.load %arg7[%c1, %c0_47, %c0_48] : memref<4x8x1xf32, #tpu.memory_space<vmem>>, vector<1x8x1xf32>
      %73 = vector.shape_cast %72 : vector<1x8x1xf32> to vector<8x1xf32>
      %cst_49 = arith.constant dense<0xFF800000> : vector<8xf32>
      %74 = vector.multi_reduction <maximumf>, %71, %cst_49 [1] : vector<8x8xf32> to vector<8xf32>
      %75 = vector.shape_cast %74 : vector<8xf32> to vector<8x1xf32>
      %76 = arith.maximumf %73, %75 : vector<8x1xf32>
      %77 = arith.subf %73, %76 : vector<8x1xf32>
      %78 = math.exp %77 : vector<8x1xf32>
      %79 = vector.broadcast %76 : vector<8x1xf32> to vector<8x8xf32>
      %80 = arith.subf %71, %79 : vector<8x8xf32>
      %81 = math.exp %80 : vector<8x8xf32>
      %c1_50 = arith.constant 1 : index
      %c0_51 = arith.constant 0 : index
      %c0_52 = arith.constant 0 : index
      %82 = vector.load %arg8[%c1_50, %c0_51, %c0_52] : memref<4x8x1xf32, #tpu.memory_space<vmem>>, vector<1x8x1xf32>
      %83 = vector.shape_cast %82 : vector<1x8x1xf32> to vector<8x1xf32>
      %84 = arith.mulf %78, %83 : vector<8x1xf32>
      %cst_53 = arith.constant dense<0.000000e+00> : vector<8xf32>
      %85 = vector.multi_reduction <add>, %81, %cst_53 [1] : vector<8x8xf32> to vector<8xf32>
      %86 = vector.shape_cast %85 : vector<8xf32> to vector<8x1xf32>
      %87 = arith.addf %84, %86 : vector<8x1xf32>
      %c1_54 = arith.constant 1 : index
      %c0_55 = arith.constant 0 : index
      %c0_56 = arith.constant 0 : index
      %88 = vector.load %arg8[%c1_54, %c0_55, %c0_56] : memref<4x8x1xf32, #tpu.memory_space<vmem>>, vector<1x8x1xf32>
      %89 = vector.shape_cast %88 : vector<1x8x1xf32> to vector<8x1xf32>
      %90 = vector.shape_cast %87 : vector<8x1xf32> to vector<1x8x1xf32>
      tpu.vector_store %arg8[%c1_54, %c0_55, %c0_56], %90 {strides = array<i32>} : memref<4x8x1xf32, #tpu.memory_space<vmem>>, vector<1x8x1xf32>,
      %c1_57 = arith.constant 1 : index
      %c0_58 = arith.constant 0 : index
      %c0_59 = arith.constant 0 : index
      %91 = vector.load %arg7[%c1_57, %c0_58, %c0_59] : memref<4x8x1xf32, #tpu.memory_space<vmem>>, vector<1x8x1xf32>
      %92 = vector.shape_cast %91 : vector<1x8x1xf32> to vector<8x1xf32>
      %93 = vector.shape_cast %76 : vector<8x1xf32> to vector<1x8x1xf32>
      tpu.vector_store %arg7[%c1_57, %c0_58, %c0_59], %93 {strides = array<i32>} : memref<4x8x1xf32, #tpu.memory_space<vmem>>, vector<1x8x1xf32>,
      %94 = arith.truncf %81 : vector<8x8xf32> to vector<8x8xbf16>
      %cst_60 = arith.constant dense<0.000000e+00> : vector<8x32xf32>
      %95 = tpu.matmul %94, %68, %cst_60 {dimension_numbers = #tpu.dot_dimension_numbers<[1], [0], [0], [1], [0, 0, 1, 1], [], []>} : vector<8x8xbf16>, vector<8x32xbf16>, vector<8x32xf32> -> vector<8x32xf32>
      %c0_61 = arith.constant 0 : index
      %c32_62 = arith.constant 32 : index
      %96 = vector.load %arg9[%c0_61, %c32_62] : memref<8x128xf32, #tpu.memory_space<vmem>>, vector<8x32xf32>
      %97 = vector.broadcast %78 : vector<8x1xf32> to vector<8x32xf32>
      %98 = arith.mulf %97, %96 : vector<8x32xf32>
      %99 = arith.addf %98, %95 : vector<8x32xf32>
      %c0_63 = arith.constant 0 : index
      %c32_64 = arith.constant 32 : index
      %100 = vector.load %arg9[%c0_63, %c32_64] : memref<8x128xf32, #tpu.memory_space<vmem>>, vector<8x32xf32>
      tpu.vector_store %arg9[%c0_63, %c32_64], %99 {strides = array<i32>} : memref<8x128xf32, #tpu.memory_space<vmem>>, vector<8x32xf32>,
      %c0_65 = arith.constant 0 : index
      %c0_66 = arith.constant 0 : index
      %c64 = arith.constant 64 : index
      %101 = vector.load %arg3[%c0_65, %c0_66, %c64] : memref<1x8x128xbf16, #tpu.memory_space<vmem>>, vector<1x8x32xbf16>
      %102 = vector.shape_cast %101 : vector<1x8x32xbf16> to vector<8x32xbf16>
      %cst_67 = arith.constant 1.767580e-01 : bf16
      %103 = vector.broadcast %cst_67 : bf16 to vector<8x32xbf16>
      %104 = arith.mulf %102, %103 : vector<8x32xbf16>
      %c0_68 = arith.constant 0 : index
      %c0_69 = arith.constant 0 : index
      %c64_70 = arith.constant 64 : index
      %105 = vector.load %arg4[%c0_68, %c0_69, %c64_70] : memref<1x8x128xbf16, #tpu.memory_space<vmem>>, vector<1x8x32xbf16>
      %106 = vector.shape_cast %105 : vector<1x8x32xbf16> to vector<8x32xbf16>
      %c0_71 = arith.constant 0 : index
      %c0_72 = arith.constant 0 : index
      %c64_73 = arith.constant 64 : index
      %107 = vector.load %arg5[%c0_71, %c0_72, %c64_73] : memref<1x8x128xbf16, #tpu.memory_space<vmem>>, vector<1x8x32xbf16>
      %108 = vector.shape_cast %107 : vector<1x8x32xbf16> to vector<8x32xbf16>
      %cst_74 = arith.constant dense<0.000000e+00> : vector<8x8xf32>
      %109 = tpu.matmul %104, %106, %cst_74 {dimension_numbers = #tpu.dot_dimension_numbers<[1], [1], [0], [0], [0, 0, 1, 0], [], []>} : vector<8x32xbf16>, vector<8x32xbf16>, vector<8x8xf32> -> vector<8x8xf32>
      %cst_75 = arith.constant -1.000000e+30 : f32
      %110 = vector.broadcast %cst_75 : f32 to vector<8x8xf32>
      %111 = arith.select %20, %109, %110 : vector<8x8xi1>, vector<8x8xf32>
      %c2 = arith.constant 2 : index
      %c0_76 = arith.constant 0 : index
      %c0_77 = arith.constant 0 : index
      %112 = vector.load %arg7[%c2, %c0_76, %c0_77] : memref<4x8x1xf32, #tpu.memory_space<vmem>>, vector<1x8x1xf32>
      %113 = vector.shape_cast %112 : vector<1x8x1xf32> to vector<8x1xf32>
      %cst_78 = arith.constant dense<0xFF800000> : vector<8xf32>
      %114 = vector.multi_reduction <maximumf>, %111, %cst_78 [1] : vector<8x8xf32> to vector<8xf32>
      %115 = vector.shape_cast %114 : vector<8xf32> to vector<8x1xf32>
      %116 = arith.maximumf %113, %115 : vector<8x1xf32>
      %117 = arith.subf %113, %116 : vector<8x1xf32>
      %118 = math.exp %117 : vector<8x1xf32>
      %119 = vector.broadcast %116 : vector<8x1xf32> to vector<8x8xf32>
      %120 = arith.subf %111, %119 : vector<8x8xf32>
      %121 = math.exp %120 : vector<8x8xf32>
      %c2_79 = arith.constant 2 : index
      %c0_80 = arith.constant 0 : index
      %c0_81 = arith.constant 0 : index
      %122 = vector.load %arg8[%c2_79, %c0_80, %c0_81] : memref<4x8x1xf32, #tpu.memory_space<vmem>>, vector<1x8x1xf32>
      %123 = vector.shape_cast %122 : vector<1x8x1xf32> to vector<8x1xf32>
      %124 = arith.mulf %118, %123 : vector<8x1xf32>
      %cst_82 = arith.constant dense<0.000000e+00> : vector<8xf32>
      %125 = vector.multi_reduction <add>, %121, %cst_82 [1] : vector<8x8xf32> to vector<8xf32>
      %126 = vector.shape_cast %125 : vector<8xf32> to vector<8x1xf32>
      %127 = arith.addf %124, %126 : vector<8x1xf32>
      %c2_83 = arith.constant 2 : index
      %c0_84 = arith.constant 0 : index
      %c0_85 = arith.constant 0 : index
      %128 = vector.load %arg8[%c2_83, %c0_84, %c0_85] : memref<4x8x1xf32, #tpu.memory_space<vmem>>, vector<1x8x1xf32>
      %129 = vector.shape_cast %128 : vector<1x8x1xf32> to vector<8x1xf32>
      %130 = vector.shape_cast %127 : vector<8x1xf32> to vector<1x8x1xf32>
      tpu.vector_store %arg8[%c2_83, %c0_84, %c0_85], %130 {strides = array<i32>} : memref<4x8x1xf32, #tpu.memory_space<vmem>>, vector<1x8x1xf32>,
      %c2_86 = arith.constant 2 : index
      %c0_87 = arith.constant 0 : index
      %c0_88 = arith.constant 0 : index
      %131 = vector.load %arg7[%c2_86, %c0_87, %c0_88] : memref<4x8x1xf32, #tpu.memory_space<vmem>>, vector<1x8x1xf32>
      %132 = vector.shape_cast %131 : vector<1x8x1xf32> to vector<8x1xf32>
      %133 = vector.shape_cast %116 : vector<8x1xf32> to vector<1x8x1xf32>
      tpu.vector_store %arg7[%c2_86, %c0_87, %c0_88], %133 {strides = array<i32>} : memref<4x8x1xf32, #tpu.memory_space<vmem>>, vector<1x8x1xf32>,
      %134 = arith.truncf %121 : vector<8x8xf32> to vector<8x8xbf16>
      %cst_89 = arith.constant dense<0.000000e+00> : vector<8x32xf32>
      %135 = tpu.matmul %134, %108, %cst_89 {dimension_numbers = #tpu.dot_dimension_numbers<[1], [0], [0], [1], [0, 0, 1, 1], [], []>} : vector<8x8xbf16>, vector<8x32xbf16>, vector<8x32xf32> -> vector<8x32xf32>
      %c0_90 = arith.constant 0 : index
      %c64_91 = arith.constant 64 : index
      %136 = vector.load %arg9[%c0_90, %c64_91] : memref<8x128xf32, #tpu.memory_space<vmem>>, vector<8x32xf32>
      %137 = vector.broadcast %118 : vector<8x1xf32> to vector<8x32xf32>
      %138 = arith.mulf %137, %136 : vector<8x32xf32>
      %139 = arith.addf %138, %135 : vector<8x32xf32>
      %c0_92 = arith.constant 0 : index
      %c64_93 = arith.constant 64 : index
      %140 = vector.load %arg9[%c0_92, %c64_93] : memref<8x128xf32, #tpu.memory_space<vmem>>, vector<8x32xf32>
      tpu.vector_store %arg9[%c0_92, %c64_93], %139 {strides = array<i32>} : memref<8x128xf32, #tpu.memory_space<vmem>>, vector<8x32xf32>,
      %c0_94 = arith.constant 0 : index
      %c0_95 = arith.constant 0 : index
      %c96 = arith.constant 96 : index
      %141 = vector.load %arg3[%c0_94, %c0_95, %c96] : memref<1x8x128xbf16, #tpu.memory_space<vmem>>, vector<1x8x32xbf16>
      %142 = vector.shape_cast %141 : vector<1x8x32xbf16> to vector<8x32xbf16>
      %cst_96 = arith.constant 1.767580e-01 : bf16
      %143 = vector.broadcast %cst_96 : bf16 to vector<8x32xbf16>
      %144 = arith.mulf %142, %143 : vector<8x32xbf16>
      %c0_97 = arith.constant 0 : index
      %c0_98 = arith.constant 0 : index
      %c96_99 = arith.constant 96 : index
      %145 = vector.load %arg4[%c0_97, %c0_98, %c96_99] : memref<1x8x128xbf16, #tpu.memory_space<vmem>>, vector<1x8x32xbf16>
      %146 = vector.shape_cast %145 : vector<1x8x32xbf16> to vector<8x32xbf16>
      %c0_100 = arith.constant 0 : index
      %c0_101 = arith.constant 0 : index
      %c96_102 = arith.constant 96 : index
      %147 = vector.load %arg5[%c0_100, %c0_101, %c96_102] : memref<1x8x128xbf16, #tpu.memory_space<vmem>>, vector<1x8x32xbf16>
      %148 = vector.shape_cast %147 : vector<1x8x32xbf16> to vector<8x32xbf16>
      %cst_103 = arith.constant dense<0.000000e+00> : vector<8x8xf32>
      %149 = tpu.matmul %144, %146, %cst_103 {dimension_numbers = #tpu.dot_dimension_numbers<[1], [1], [0], [0], [0, 0, 1, 0], [], []>} : vector<8x32xbf16>, vector<8x32xbf16>, vector<8x8xf32> -> vector<8x8xf32>
      %cst_104 = arith.constant -1.000000e+30 : f32
      %150 = vector.broadcast %cst_104 : f32 to vector<8x8xf32>
      %151 = arith.select %20, %149, %150 : vector<8x8xi1>, vector<8x8xf32>
      %c3 = arith.constant 3 : index
      %c0_105 = arith.constant 0 : index
      %c0_106 = arith.constant 0 : index
      %152 = vector.load %arg7[%c3, %c0_105, %c0_106] : memref<4x8x1xf32, #tpu.memory_space<vmem>>, vector<1x8x1xf32>
      %153 = vector.shape_cast %152 : vector<1x8x1xf32> to vector<8x1xf32>
      %cst_107 = arith.constant dense<0xFF800000> : vector<8xf32>
      %154 = vector.multi_reduction <maximumf>, %151, %cst_107 [1] : vector<8x8xf32> to vector<8xf32>
      %155 = vector.shape_cast %154 : vector<8xf32> to vector<8x1xf32>
      %156 = arith.maximumf %153, %155 : vector<8x1xf32>
      %157 = arith.subf %153, %156 : vector<8x1xf32>
      %158 = math.exp %157 : vector<8x1xf32>
      %159 = vector.broadcast %156 : vector<8x1xf32> to vector<8x8xf32>
      %160 = arith.subf %151, %159 : vector<8x8xf32>
      %161 = math.exp %160 : vector<8x8xf32>
      %c3_108 = arith.constant 3 : index
      %c0_109 = arith.constant 0 : index
      %c0_110 = arith.constant 0 : index
      %162 = vector.load %arg8[%c3_108, %c0_109, %c0_110] : memref<4x8x1xf32, #tpu.memory_space<vmem>>, vector<1x8x1xf32>
      %163 = vector.shape_cast %162 : vector<1x8x1xf32> to vector<8x1xf32>
      %164 = arith.mulf %158, %163 : vector<8x1xf32>
      %cst_111 = arith.constant dense<0.000000e+00> : vector<8xf32>
      %165 = vector.multi_reduction <add>, %161, %cst_111 [1] : vector<8x8xf32> to vector<8xf32>
      %166 = vector.shape_cast %165 : vector<8xf32> to vector<8x1xf32>
      %167 = arith.addf %164, %166 : vector<8x1xf32>
      %c3_112 = arith.constant 3 : index
      %c0_113 = arith.constant 0 : index
      %c0_114 = arith.constant 0 : index
      %168 = vector.load %arg8[%c3_112, %c0_113, %c0_114] : memref<4x8x1xf32, #tpu.memory_space<vmem>>, vector<1x8x1xf32>
      %169 = vector.shape_cast %168 : vector<1x8x1xf32> to vector<8x1xf32>
      %170 = vector.shape_cast %167 : vector<8x1xf32> to vector<1x8x1xf32>
      tpu.vector_store %arg8[%c3_112, %c0_113, %c0_114], %170 {strides = array<i32>} : memref<4x8x1xf32, #tpu.memory_space<vmem>>, vector<1x8x1xf32>,
      %c3_115 = arith.constant 3 : index
      %c0_116 = arith.constant 0 : index
      %c0_117 = arith.constant 0 : index
      %171 = vector.load %arg7[%c3_115, %c0_116, %c0_117] : memref<4x8x1xf32, #tpu.memory_space<vmem>>, vector<1x8x1xf32>
      %172 = vector.shape_cast %171 : vector<1x8x1xf32> to vector<8x1xf32>
      %173 = vector.shape_cast %156 : vector<8x1xf32> to vector<1x8x1xf32>
      tpu.vector_store %arg7[%c3_115, %c0_116, %c0_117], %173 {strides = array<i32>} : memref<4x8x1xf32, #tpu.memory_space<vmem>>, vector<1x8x1xf32>,
      %174 = arith.truncf %161 : vector<8x8xf32> to vector<8x8xbf16>
      %cst_118 = arith.constant dense<0.000000e+00> : vector<8x32xf32>
      %175 = tpu.matmul %174, %148, %cst_118 {dimension_numbers = #tpu.dot_dimension_numbers<[1], [0], [0], [1], [0, 0, 1, 1], [], []>} : vector<8x8xbf16>, vector<8x32xbf16>, vector<8x32xf32> -> vector<8x32xf32>
      %c0_119 = arith.constant 0 : index
      %c96_120 = arith.constant 96 : index
      %176 = vector.load %arg9[%c0_119, %c96_120] : memref<8x128xf32, #tpu.memory_space<vmem>>, vector<8x32xf32>
      %177 = vector.broadcast %158 : vector<8x1xf32> to vector<8x32xf32>
      %178 = arith.mulf %177, %176 : vector<8x32xf32>
      %179 = arith.addf %178, %175 : vector<8x32xf32>
      %c0_121 = arith.constant 0 : index
      %c96_122 = arith.constant 96 : index
      %180 = vector.load %arg9[%c0_121, %c96_122] : memref<8x128xf32, #tpu.memory_space<vmem>>, vector<8x32xf32>
      tpu.vector_store %arg9[%c0_121, %c96_122], %179 {strides = array<i32>} : memref<8x128xf32, #tpu.memory_space<vmem>>, vector<8x32xf32>,
    } else {
    }
    %c0_i32_3 = arith.constant 0 : i32
    %9 = arith.cmpi eq, %arg2, %c0_i32_3 : i32
    %10 = arith.extui %9 : i1 to i32
    %c0_i32_4 = arith.constant 0 : i32
    %11 = arith.cmpi ne, %10, %c0_i32_4 : i32
    scf.if %11 {
      %c0 = arith.constant 0 : index
      %c0_5 = arith.constant 0 : index
      %c0_6 = arith.constant 0 : index
      %12 = vector.load %arg8[%c0, %c0_5, %c0_6] : memref<4x8x1xf32, #tpu.memory_space<vmem>>, vector<1x8x1xf32>
      %13 = vector.shape_cast %12 : vector<1x8x1xf32> to vector<8x1xf32>
      %cst = arith.constant 1.000000e+00 : f32
      %14 = vector.broadcast %cst : f32 to vector<8x1xf32>
      %15 = arith.divf %14, %13 : vector<8x1xf32>
      %c0_7 = arith.constant 0 : index
      %c0_8 = arith.constant 0 : index
      %16 = vector.load %arg9[%c0_7, %c0_8] : memref<8x128xf32, #tpu.memory_space<vmem>>, vector<8x32xf32>
      %17 = vector.broadcast %15 : vector<8x1xf32> to vector<8x32xf32>
      %18 = arith.mulf %16, %17 : vector<8x32xf32>
      %19 = arith.truncf %18 : vector<8x32xf32> to vector<8x32xbf16>
      %c0_9 = arith.constant 0 : index
      %c0_10 = arith.constant 0 : index
      %c0_11 = arith.constant 0 : index
      %20 = vector.load %arg6[%c0_9, %c0_10, %c0_11] : memref<1x8x128xbf16, #tpu.memory_space<vmem>>, vector<1x8x32xbf16>
      %21 = vector.shape_cast %20 : vector<1x8x32xbf16> to vector<8x32xbf16>
      %22 = vector.shape_cast %19 : vector<8x32xbf16> to vector<1x8x32xbf16>
      tpu.vector_store %arg6[%c0_9, %c0_10, %c0_11], %22 {strides = array<i32>} : memref<1x8x128xbf16, #tpu.memory_space<vmem>>, vector<1x8x32xbf16>,
      %c1 = arith.constant 1 : index
      %c0_12 = arith.constant 0 : index
      %c0_13 = arith.constant 0 : index
      %23 = vector.load %arg8[%c1, %c0_12, %c0_13] : memref<4x8x1xf32, #tpu.memory_space<vmem>>, vector<1x8x1xf32>
      %24 = vector.shape_cast %23 : vector<1x8x1xf32> to vector<8x1xf32>
      %cst_14 = arith.constant 1.000000e+00 : f32
      %25 = vector.broadcast %cst_14 : f32 to vector<8x1xf32>
      %26 = arith.divf %25, %24 : vector<8x1xf32>
      %c0_15 = arith.constant 0 : index
      %c32 = arith.constant 32 : index
      %27 = vector.load %arg9[%c0_15, %c32] : memref<8x128xf32, #tpu.memory_space<vmem>>, vector<8x32xf32>
      %28 = vector.broadcast %26 : vector<8x1xf32> to vector<8x32xf32>
      %29 = arith.mulf %27, %28 : vector<8x32xf32>
      %30 = arith.truncf %29 : vector<8x32xf32> to vector<8x32xbf16>
      %c0_16 = arith.constant 0 : index
      %c0_17 = arith.constant 0 : index
      %c32_18 = arith.constant 32 : index
      %31 = vector.load %arg6[%c0_16, %c0_17, %c32_18] : memref<1x8x128xbf16, #tpu.memory_space<vmem>>, vector<1x8x32xbf16>
      %32 = vector.shape_cast %31 : vector<1x8x32xbf16> to vector<8x32xbf16>
      %33 = vector.shape_cast %30 : vector<8x32xbf16> to vector<1x8x32xbf16>
      tpu.vector_store %arg6[%c0_16, %c0_17, %c32_18], %33 {strides = array<i32>} : memref<1x8x128xbf16, #tpu.memory_space<vmem>>, vector<1x8x32xbf16>,
      %c2 = arith.constant 2 : index
      %c0_19 = arith.constant 0 : index
      %c0_20 = arith.constant 0 : index
      %34 = vector.load %arg8[%c2, %c0_19, %c0_20] : memref<4x8x1xf32, #tpu.memory_space<vmem>>, vector<1x8x1xf32>
      %35 = vector.shape_cast %34 : vector<1x8x1xf32> to vector<8x1xf32>
      %cst_21 = arith.constant 1.000000e+00 : f32
      %36 = vector.broadcast %cst_21 : f32 to vector<8x1xf32>
      %37 = arith.divf %36, %35 : vector<8x1xf32>
      %c0_22 = arith.constant 0 : index
      %c64 = arith.constant 64 : index
      %38 = vector.load %arg9[%c0_22, %c64] : memref<8x128xf32, #tpu.memory_space<vmem>>, vector<8x32xf32>
      %39 = vector.broadcast %37 : vector<8x1xf32> to vector<8x32xf32>
      %40 = arith.mulf %38, %39 : vector<8x32xf32>
      %41 = arith.truncf %40 : vector<8x32xf32> to vector<8x32xbf16>
      %c0_23 = arith.constant 0 : index
      %c0_24 = arith.constant 0 : index
      %c64_25 = arith.constant 64 : index
      %42 = vector.load %arg6[%c0_23, %c0_24, %c64_25] : memref<1x8x128xbf16, #tpu.memory_space<vmem>>, vector<1x8x32xbf16>
      %43 = vector.shape_cast %42 : vector<1x8x32xbf16> to vector<8x32xbf16>
      %44 = vector.shape_cast %41 : vector<8x32xbf16> to vector<1x8x32xbf16>
      tpu.vector_store %arg6[%c0_23, %c0_24, %c64_25], %44 {strides = array<i32>} : memref<1x8x128xbf16, #tpu.memory_space<vmem>>, vector<1x8x32xbf16>,
      %c3 = arith.constant 3 : index
      %c0_26 = arith.constant 0 : index
      %c0_27 = arith.constant 0 : index
      %45 = vector.load %arg8[%c3, %c0_26, %c0_27] : memref<4x8x1xf32, #tpu.memory_space<vmem>>, vector<1x8x1xf32>
      %46 = vector.shape_cast %45 : vector<1x8x1xf32> to vector<8x1xf32>
      %cst_28 = arith.constant 1.000000e+00 : f32
      %47 = vector.broadcast %cst_28 : f32 to vector<8x1xf32>
      %48 = arith.divf %47, %46 : vector<8x1xf32>
      %c0_29 = arith.constant 0 : index
      %c96 = arith.constant 96 : index
      %49 = vector.load %arg9[%c0_29, %c96] : memref<8x128xf32, #tpu.memory_space<vmem>>, vector<8x32xf32>
      %50 = vector.broadcast %48 : vector<8x1xf32> to vector<8x32xf32>
      %51 = arith.mulf %49, %50 : vector<8x32xf32>
      %52 = arith.truncf %51 : vector<8x32xf32> to vector<8x32xbf16>
      %c0_30 = arith.constant 0 : index
      %c0_31 = arith.constant 0 : index
      %c96_32 = arith.constant 96 : index
      %53 = vector.load %arg6[%c0_30, %c0_31, %c96_32] : memref<1x8x128xbf16, #tpu.memory_space<vmem>>, vector<1x8x32xbf16>
      %54 = vector.shape_cast %53 : vector<1x8x32xbf16> to vector<8x32xbf16>
      %55 = vector.shape_cast %52 : vector<8x32xbf16> to vector<1x8x32xbf16>
      tpu.vector_store %arg6[%c0_30, %c0_31, %c96_32], %55 {strides = array<i32>} : memref<1x8x128xbf16, #tpu.memory_space<vmem>>, vector<1x8x32xbf16>,
    } else {
    }
    return
  }
  func.func @transform_0(%arg0: i32, %arg1: i32, %arg2: i32) -> (i32, i32, i32) {
    %c0_i32 = arith.constant 0 : i32
    %c0_i32_0 = arith.constant 0 : i32
    return %arg0, %arg1, %c0_i32 : i32, i32, i32
  }
  func.func @transform_1(%arg0: i32, %arg1: i32, %arg2: i32) -> (i32, i32, i32) {
    %c1_i32 = arith.constant 1 : i32
    %c0_i32 = arith.constant 0 : i32
    return %arg0, %arg2, %c1_i32 : i32, i32, i32
  }
  func.func @transform_2(%arg0: i32, %arg1: i32, %arg2: i32) -> (i32, i32, i32) {
    %c2_i32 = arith.constant 2 : i32
    %c0_i32 = arith.constant 0 : i32
    return %arg0, %arg2, %c2_i32 : i32, i32, i32
  }
  func.func @transform_3(%arg0: i32, %arg1: i32, %arg2: i32) -> (i32, i32, i32) {
    %c0_i32 = arith.constant 0 : i32
    %c0_i32_0 = arith.constant 0 : i32
    return %arg0, %arg1, %c0_i32 : i32, i32, i32
  }
}

module attributes {stable_mosaic.version = 11 : i64} {
  func.func @_mha_kernel(%arg0: i32, %arg1: i32, %arg2: i32, %arg3: memref<1x8x128xbf16, #tpu.memory_space<vmem>>, %arg4: memref<1x8x128xbf16, #tpu.memory_space<vmem>>, %arg5: memref<1x8x128xbf16, #tpu.memory_space<vmem>>, %arg6: memref<1x8x128xbf16, #tpu.memory_space<vmem>>, %arg7: memref<4x8x1xf32, #tpu.memory_space<vmem>>, %arg8: memref<4x8x1xf32, #tpu.memory_space<vmem>>, %arg9: memref<8x128xf32, #tpu.memory_space<vmem>>) attributes {dimension_semantics = [#tpu.dimension_semantics<parallel>, #tpu.dimension_semantics<parallel>, #tpu.dimension_semantics<arbitrary>], iteration_bounds = array<i64: 2, 1, 1>, scalar_prefetch = 0 : i64, scratch_operands = 3 : i64, tpu.core_type = #tpu.core_type<tc>, window_params = [{transform_indices = @transform_0, window_bounds = array<i64: 1, 8, 128>}, {transform_indices = @transform_1, window_bounds = array<i64: 1, 8, 128>}, {transform_indices = @transform_2, window_bounds = array<i64: 1, 8, 128>}, {transform_indices = @transform_3, window_bounds = array<i64: 1, 8, 128>}]} {
    %c0_i32 = arith.constant 0 : i32
    %0 = arith.cmpi eq, %arg2, %c0_i32 : i32
    %1 = arith.extui %0 : i1 to i32
    %c0_i32_0 = arith.constant 0 : i32
    %2 = arith.cmpi ne, %1, %c0_i32_0 : i32
    scf.if %2 {
      %cst_115 = arith.constant 0xFF800000 : f32
      %158 = vector.broadcast %cst_115 : f32 to vector<4x8x1xf32>
      %c0_116 = arith.constant 0 : index
      %c0_117 = arith.constant 0 : index
      %c0_118 = arith.constant 0 : index
      %159 = vector.load %arg7[%c0_116, %c0_117, %c0_118] : memref<4x8x1xf32, #tpu.memory_space<vmem>>, vector<4x8x1xf32>
      tpu.vector_store %arg7[%c0_116, %c0_117, %c0_118], %158 {strides = array<i32>} : memref<4x8x1xf32, #tpu.memory_space<vmem>>, vector<4x8x1xf32>,
      %cst_119 = arith.constant 0.000000e+00 : f32
      %160 = vector.broadcast %cst_119 : f32 to vector<4x8x1xf32>
      %c0_120 = arith.constant 0 : index
      %c0_121 = arith.constant 0 : index
      %c0_122 = arith.constant 0 : index
      %161 = vector.load %arg8[%c0_120, %c0_121, %c0_122] : memref<4x8x1xf32, #tpu.memory_space<vmem>>, vector<4x8x1xf32>
      tpu.vector_store %arg8[%c0_120, %c0_121, %c0_122], %160 {strides = array<i32>} : memref<4x8x1xf32, #tpu.memory_space<vmem>>, vector<4x8x1xf32>,
      %cst_123 = arith.constant 0.000000e+00 : f32
      %162 = vector.broadcast %cst_123 : f32 to vector<8x128xf32>
      %c0_124 = arith.constant 0 : index
      %c0_125 = arith.constant 0 : index
      %163 = vector.load %arg9[%c0_124, %c0_125] : memref<8x128xf32, #tpu.memory_space<vmem>>, vector<8x128xf32>
      tpu.vector_store %arg9[%c0_124, %c0_125], %162 {strides = array<i32>} : memref<8x128xf32, #tpu.memory_space<vmem>>, vector<8x128xf32>,
    } else {
    }
    %c0 = arith.constant 0 : index
    %c0_1 = arith.constant 0 : index
    %c0_2 = arith.constant 0 : index
    %3 = vector.load %arg3[%c0, %c0_1, %c0_2] : memref<1x8x128xbf16, #tpu.memory_space<vmem>>, vector<1x8x32xbf16>
    %4 = vector.shape_cast %3 : vector<1x8x32xbf16> to vector<8x32xbf16>
    %cst = arith.constant 1.767580e-01 : bf16
    %5 = vector.broadcast %cst : bf16 to vector<8x32xbf16>
    %6 = arith.mulf %4, %5 : vector<8x32xbf16>
    %c0_3 = arith.constant 0 : index
    %c0_4 = arith.constant 0 : index
    %c0_5 = arith.constant 0 : index
    %7 = vector.load %arg4[%c0_3, %c0_4, %c0_5] : memref<1x8x128xbf16, #tpu.memory_space<vmem>>, vector<1x8x32xbf16>
    %8 = vector.shape_cast %7 : vector<1x8x32xbf16> to vector<8x32xbf16>
    %c0_6 = arith.constant 0 : index
    %c0_7 = arith.constant 0 : index
    %c0_8 = arith.constant 0 : index
    %9 = vector.load %arg5[%c0_6, %c0_7, %c0_8] : memref<1x8x128xbf16, #tpu.memory_space<vmem>>, vector<1x8x32xbf16>
    %10 = vector.shape_cast %9 : vector<1x8x32xbf16> to vector<8x32xbf16>
    %cst_9 = arith.constant dense<0.000000e+00> : vector<8x8xf32>
    %11 = tpu.matmul %6, %8, %cst_9 {dimension_numbers = #tpu.dot_dimension_numbers<[1], [1], [0], [0], [0, 0, 1, 0], [], []>} : vector<8x32xbf16>, vector<8x32xbf16>, vector<8x8xf32> -> vector<8x8xf32>
    %c0_10 = arith.constant 0 : index
    %c0_11 = arith.constant 0 : index
    %c0_12 = arith.constant 0 : index
    %12 = vector.load %arg7[%c0_10, %c0_11, %c0_12] : memref<4x8x1xf32, #tpu.memory_space<vmem>>, vector<1x8x1xf32>
    %13 = vector.shape_cast %12 : vector<1x8x1xf32> to vector<8x1xf32>
    %cst_13 = arith.constant dense<0xFF800000> : vector<8xf32>
    %14 = vector.multi_reduction <maximumf>, %11, %cst_13 [1] : vector<8x8xf32> to vector<8xf32>
    %15 = vector.shape_cast %14 : vector<8xf32> to vector<8x1xf32>
    %16 = arith.maximumf %13, %15 : vector<8x1xf32>
    %17 = arith.subf %13, %16 : vector<8x1xf32>
    %18 = math.exp %17 : vector<8x1xf32>
    %19 = vector.broadcast %16 : vector<8x1xf32> to vector<8x8xf32>
    %20 = arith.subf %11, %19 : vector<8x8xf32>
    %21 = math.exp %20 : vector<8x8xf32>
    %c0_14 = arith.constant 0 : index
    %c0_15 = arith.constant 0 : index
    %c0_16 = arith.constant 0 : index
    %22 = vector.load %arg8[%c0_14, %c0_15, %c0_16] : memref<4x8x1xf32, #tpu.memory_space<vmem>>, vector<1x8x1xf32>
    %23 = vector.shape_cast %22 : vector<1x8x1xf32> to vector<8x1xf32>
    %24 = arith.mulf %18, %23 : vector<8x1xf32>
    %cst_17 = arith.constant dense<0.000000e+00> : vector<8xf32>
    %25 = vector.multi_reduction <add>, %21, %cst_17 [1] : vector<8x8xf32> to vector<8xf32>
    %26 = vector.shape_cast %25 : vector<8xf32> to vector<8x1xf32>
    %27 = arith.addf %24, %26 : vector<8x1xf32>
    %c0_18 = arith.constant 0 : index
    %c0_19 = arith.constant 0 : index
    %c0_20 = arith.constant 0 : index
    %28 = vector.load %arg8[%c0_18, %c0_19, %c0_20] : memref<4x8x1xf32, #tpu.memory_space<vmem>>, vector<1x8x1xf32>
    %29 = vector.shape_cast %28 : vector<1x8x1xf32> to vector<8x1xf32>
    %30 = vector.shape_cast %27 : vector<8x1xf32> to vector<1x8x1xf32>
    tpu.vector_store %arg8[%c0_18, %c0_19, %c0_20], %30 {strides = array<i32>} : memref<4x8x1xf32, #tpu.memory_space<vmem>>, vector<1x8x1xf32>,
    %c0_21 = arith.constant 0 : index
    %c0_22 = arith.constant 0 : index
    %c0_23 = arith.constant 0 : index
    %31 = vector.load %arg7[%c0_21, %c0_22, %c0_23] : memref<4x8x1xf32, #tpu.memory_space<vmem>>, vector<1x8x1xf32>
    %32 = vector.shape_cast %31 : vector<1x8x1xf32> to vector<8x1xf32>
    %33 = vector.shape_cast %16 : vector<8x1xf32> to vector<1x8x1xf32>
    tpu.vector_store %arg7[%c0_21, %c0_22, %c0_23], %33 {strides = array<i32>} : memref<4x8x1xf32, #tpu.memory_space<vmem>>, vector<1x8x1xf32>,
    %34 = arith.truncf %21 : vector<8x8xf32> to vector<8x8xbf16>
    %cst_24 = arith.constant dense<0.000000e+00> : vector<8x32xf32>
    %35 = tpu.matmul %34, %10, %cst_24 {dimension_numbers = #tpu.dot_dimension_numbers<[1], [0], [0], [1], [0, 0, 1, 1], [], []>} : vector<8x8xbf16>, vector<8x32xbf16>, vector<8x32xf32> -> vector<8x32xf32>
    %c0_25 = arith.constant 0 : index
    %c0_26 = arith.constant 0 : index
    %36 = vector.load %arg9[%c0_25, %c0_26] : memref<8x128xf32, #tpu.memory_space<vmem>>, vector<8x32xf32>
    %37 = vector.broadcast %18 : vector<8x1xf32> to vector<8x32xf32>
    %38 = arith.mulf %37, %36 : vector<8x32xf32>
    %39 = arith.addf %38, %35 : vector<8x32xf32>
    %c0_27 = arith.constant 0 : index
    %c0_28 = arith.constant 0 : index
    %40 = vector.load %arg9[%c0_27, %c0_28] : memref<8x128xf32, #tpu.memory_space<vmem>>, vector<8x32xf32>
    tpu.vector_store %arg9[%c0_27, %c0_28], %39 {strides = array<i32>} : memref<8x128xf32, #tpu.memory_space<vmem>>, vector<8x32xf32>,
    %c0_29 = arith.constant 0 : index
    %c0_30 = arith.constant 0 : index
    %c32 = arith.constant 32 : index
    %41 = vector.load %arg3[%c0_29, %c0_30, %c32] : memref<1x8x128xbf16, #tpu.memory_space<vmem>>, vector<1x8x32xbf16>
    %42 = vector.shape_cast %41 : vector<1x8x32xbf16> to vector<8x32xbf16>
    %cst_31 = arith.constant 1.767580e-01 : bf16
    %43 = vector.broadcast %cst_31 : bf16 to vector<8x32xbf16>
    %44 = arith.mulf %42, %43 : vector<8x32xbf16>
    %c0_32 = arith.constant 0 : index
    %c0_33 = arith.constant 0 : index
    %c32_34 = arith.constant 32 : index
    %45 = vector.load %arg4[%c0_32, %c0_33, %c32_34] : memref<1x8x128xbf16, #tpu.memory_space<vmem>>, vector<1x8x32xbf16>
    %46 = vector.shape_cast %45 : vector<1x8x32xbf16> to vector<8x32xbf16>
    %c0_35 = arith.constant 0 : index
    %c0_36 = arith.constant 0 : index
    %c32_37 = arith.constant 32 : index
    %47 = vector.load %arg5[%c0_35, %c0_36, %c32_37] : memref<1x8x128xbf16, #tpu.memory_space<vmem>>, vector<1x8x32xbf16>
    %48 = vector.shape_cast %47 : vector<1x8x32xbf16> to vector<8x32xbf16>
    %cst_38 = arith.constant dense<0.000000e+00> : vector<8x8xf32>
    %49 = tpu.matmul %44, %46, %cst_38 {dimension_numbers = #tpu.dot_dimension_numbers<[1], [1], [0], [0], [0, 0, 1, 0], [], []>} : vector<8x32xbf16>, vector<8x32xbf16>, vector<8x8xf32> -> vector<8x8xf32>
    %c1 = arith.constant 1 : index
    %c0_39 = arith.constant 0 : index
    %c0_40 = arith.constant 0 : index
    %50 = vector.load %arg7[%c1, %c0_39, %c0_40] : memref<4x8x1xf32, #tpu.memory_space<vmem>>, vector<1x8x1xf32>
    %51 = vector.shape_cast %50 : vector<1x8x1xf32> to vector<8x1xf32>
    %cst_41 = arith.constant dense<0xFF800000> : vector<8xf32>
    %52 = vector.multi_reduction <maximumf>, %49, %cst_41 [1] : vector<8x8xf32> to vector<8xf32>
    %53 = vector.shape_cast %52 : vector<8xf32> to vector<8x1xf32>
    %54 = arith.maximumf %51, %53 : vector<8x1xf32>
    %55 = arith.subf %51, %54 : vector<8x1xf32>
    %56 = math.exp %55 : vector<8x1xf32>
    %57 = vector.broadcast %54 : vector<8x1xf32> to vector<8x8xf32>
    %58 = arith.subf %49, %57 : vector<8x8xf32>
    %59 = math.exp %58 : vector<8x8xf32>
    %c1_42 = arith.constant 1 : index
    %c0_43 = arith.constant 0 : index
    %c0_44 = arith.constant 0 : index
    %60 = vector.load %arg8[%c1_42, %c0_43, %c0_44] : memref<4x8x1xf32, #tpu.memory_space<vmem>>, vector<1x8x1xf32>
    %61 = vector.shape_cast %60 : vector<1x8x1xf32> to vector<8x1xf32>
    %62 = arith.mulf %56, %61 : vector<8x1xf32>
    %cst_45 = arith.constant dense<0.000000e+00> : vector<8xf32>
    %63 = vector.multi_reduction <add>, %59, %cst_45 [1] : vector<8x8xf32> to vector<8xf32>
    %64 = vector.shape_cast %63 : vector<8xf32> to vector<8x1xf32>
    %65 = arith.addf %62, %64 : vector<8x1xf32>
    %c1_46 = arith.constant 1 : index
    %c0_47 = arith.constant 0 : index
    %c0_48 = arith.constant 0 : index
    %66 = vector.load %arg8[%c1_46, %c0_47, %c0_48] : memref<4x8x1xf32, #tpu.memory_space<vmem>>, vector<1x8x1xf32>
    %67 = vector.shape_cast %66 : vector<1x8x1xf32> to vector<8x1xf32>
    %68 = vector.shape_cast %65 : vector<8x1xf32> to vector<1x8x1xf32>
    tpu.vector_store %arg8[%c1_46, %c0_47, %c0_48], %68 {strides = array<i32>} : memref<4x8x1xf32, #tpu.memory_space<vmem>>, vector<1x8x1xf32>,
    %c1_49 = arith.constant 1 : index
    %c0_50 = arith.constant 0 : index
    %c0_51 = arith.constant 0 : index
    %69 = vector.load %arg7[%c1_49, %c0_50, %c0_51] : memref<4x8x1xf32, #tpu.memory_space<vmem>>, vector<1x8x1xf32>
    %70 = vector.shape_cast %69 : vector<1x8x1xf32> to vector<8x1xf32>
    %71 = vector.shape_cast %54 : vector<8x1xf32> to vector<1x8x1xf32>
    tpu.vector_store %arg7[%c1_49, %c0_50, %c0_51], %71 {strides = array<i32>} : memref<4x8x1xf32, #tpu.memory_space<vmem>>, vector<1x8x1xf32>,
    %72 = arith.truncf %59 : vector<8x8xf32> to vector<8x8xbf16>
    %cst_52 = arith.constant dense<0.000000e+00> : vector<8x32xf32>
    %73 = tpu.matmul %72, %48, %cst_52 {dimension_numbers = #tpu.dot_dimension_numbers<[1], [0], [0], [1], [0, 0, 1, 1], [], []>} : vector<8x8xbf16>, vector<8x32xbf16>, vector<8x32xf32> -> vector<8x32xf32>
    %c0_53 = arith.constant 0 : index
    %c32_54 = arith.constant 32 : index
    %74 = vector.load %arg9[%c0_53, %c32_54] : memref<8x128xf32, #tpu.memory_space<vmem>>, vector<8x32xf32>
    %75 = vector.broadcast %56 : vector<8x1xf32> to vector<8x32xf32>
    %76 = arith.mulf %75, %74 : vector<8x32xf32>
    %77 = arith.addf %76, %73 : vector<8x32xf32>
    %c0_55 = arith.constant 0 : index
    %c32_56 = arith.constant 32 : index
    %78 = vector.load %arg9[%c0_55, %c32_56] : memref<8x128xf32, #tpu.memory_space<vmem>>, vector<8x32xf32>
    tpu.vector_store %arg9[%c0_55, %c32_56], %77 {strides = array<i32>} : memref<8x128xf32, #tpu.memory_space<vmem>>, vector<8x32xf32>,
    %c0_57 = arith.constant 0 : index
    %c0_58 = arith.constant 0 : index
    %c64 = arith.constant 64 : index
    %79 = vector.load %arg3[%c0_57, %c0_58, %c64] : memref<1x8x128xbf16, #tpu.memory_space<vmem>>, vector<1x8x32xbf16>
    %80 = vector.shape_cast %79 : vector<1x8x32xbf16> to vector<8x32xbf16>
    %cst_59 = arith.constant 1.767580e-01 : bf16
    %81 = vector.broadcast %cst_59 : bf16 to vector<8x32xbf16>
    %82 = arith.mulf %80, %81 : vector<8x32xbf16>
    %c0_60 = arith.constant 0 : index
    %c0_61 = arith.constant 0 : index
    %c64_62 = arith.constant 64 : index
    %83 = vector.load %arg4[%c0_60, %c0_61, %c64_62] : memref<1x8x128xbf16, #tpu.memory_space<vmem>>, vector<1x8x32xbf16>
    %84 = vector.shape_cast %83 : vector<1x8x32xbf16> to vector<8x32xbf16>
    %c0_63 = arith.constant 0 : index
    %c0_64 = arith.constant 0 : index
    %c64_65 = arith.constant 64 : index
    %85 = vector.load %arg5[%c0_63, %c0_64, %c64_65] : memref<1x8x128xbf16, #tpu.memory_space<vmem>>, vector<1x8x32xbf16>
    %86 = vector.shape_cast %85 : vector<1x8x32xbf16> to vector<8x32xbf16>
    %cst_66 = arith.constant dense<0.000000e+00> : vector<8x8xf32>
    %87 = tpu.matmul %82, %84, %cst_66 {dimension_numbers = #tpu.dot_dimension_numbers<[1], [1], [0], [0], [0, 0, 1, 0], [], []>} : vector<8x32xbf16>, vector<8x32xbf16>, vector<8x8xf32> -> vector<8x8xf32>
    %c2 = arith.constant 2 : index
    %c0_67 = arith.constant 0 : index
    %c0_68 = arith.constant 0 : index
    %88 = vector.load %arg7[%c2, %c0_67, %c0_68] : memref<4x8x1xf32, #tpu.memory_space<vmem>>, vector<1x8x1xf32>
    %89 = vector.shape_cast %88 : vector<1x8x1xf32> to vector<8x1xf32>
    %cst_69 = arith.constant dense<0xFF800000> : vector<8xf32>
    %90 = vector.multi_reduction <maximumf>, %87, %cst_69 [1] : vector<8x8xf32> to vector<8xf32>
    %91 = vector.shape_cast %90 : vector<8xf32> to vector<8x1xf32>
    %92 = arith.maximumf %89, %91 : vector<8x1xf32>
    %93 = arith.subf %89, %92 : vector<8x1xf32>
    %94 = math.exp %93 : vector<8x1xf32>
    %95 = vector.broadcast %92 : vector<8x1xf32> to vector<8x8xf32>
    %96 = arith.subf %87, %95 : vector<8x8xf32>
    %97 = math.exp %96 : vector<8x8xf32>
    %c2_70 = arith.constant 2 : index
    %c0_71 = arith.constant 0 : index
    %c0_72 = arith.constant 0 : index
    %98 = vector.load %arg8[%c2_70, %c0_71, %c0_72] : memref<4x8x1xf32, #tpu.memory_space<vmem>>, vector<1x8x1xf32>
    %99 = vector.shape_cast %98 : vector<1x8x1xf32> to vector<8x1xf32>
    %100 = arith.mulf %94, %99 : vector<8x1xf32>
    %cst_73 = arith.constant dense<0.000000e+00> : vector<8xf32>
    %101 = vector.multi_reduction <add>, %97, %cst_73 [1] : vector<8x8xf32> to vector<8xf32>
    %102 = vector.shape_cast %101 : vector<8xf32> to vector<8x1xf32>
    %103 = arith.addf %100, %102 : vector<8x1xf32>
    %c2_74 = arith.constant 2 : index
    %c0_75 = arith.constant 0 : index
    %c0_76 = arith.constant 0 : index
    %104 = vector.load %arg8[%c2_74, %c0_75, %c0_76] : memref<4x8x1xf32, #tpu.memory_space<vmem>>, vector<1x8x1xf32>
    %105 = vector.shape_cast %104 : vector<1x8x1xf32> to vector<8x1xf32>
    %106 = vector.shape_cast %103 : vector<8x1xf32> to vector<1x8x1xf32>
    tpu.vector_store %arg8[%c2_74, %c0_75, %c0_76], %106 {strides = array<i32>} : memref<4x8x1xf32, #tpu.memory_space<vmem>>, vector<1x8x1xf32>,
    %c2_77 = arith.constant 2 : index
    %c0_78 = arith.constant 0 : index
    %c0_79 = arith.constant 0 : index
    %107 = vector.load %arg7[%c2_77, %c0_78, %c0_79] : memref<4x8x1xf32, #tpu.memory_space<vmem>>, vector<1x8x1xf32>
    %108 = vector.shape_cast %107 : vector<1x8x1xf32> to vector<8x1xf32>
    %109 = vector.shape_cast %92 : vector<8x1xf32> to vector<1x8x1xf32>
    tpu.vector_store %arg7[%c2_77, %c0_78, %c0_79], %109 {strides = array<i32>} : memref<4x8x1xf32, #tpu.memory_space<vmem>>, vector<1x8x1xf32>,
    %110 = arith.truncf %97 : vector<8x8xf32> to vector<8x8xbf16>
    %cst_80 = arith.constant dense<0.000000e+00> : vector<8x32xf32>
    %111 = tpu.matmul %110, %86, %cst_80 {dimension_numbers = #tpu.dot_dimension_numbers<[1], [0], [0], [1], [0, 0, 1, 1], [], []>} : vector<8x8xbf16>, vector<8x32xbf16>, vector<8x32xf32> -> vector<8x32xf32>
    %c0_81 = arith.constant 0 : index
    %c64_82 = arith.constant 64 : index
    %112 = vector.load %arg9[%c0_81, %c64_82] : memref<8x128xf32, #tpu.memory_space<vmem>>, vector<8x32xf32>
    %113 = vector.broadcast %94 : vector<8x1xf32> to vector<8x32xf32>
    %114 = arith.mulf %113, %112 : vector<8x32xf32>
    %115 = arith.addf %114, %111 : vector<8x32xf32>
    %c0_83 = arith.constant 0 : index
    %c64_84 = arith.constant 64 : index
    %116 = vector.load %arg9[%c0_83, %c64_84] : memref<8x128xf32, #tpu.memory_space<vmem>>, vector<8x32xf32>
    tpu.vector_store %arg9[%c0_83, %c64_84], %115 {strides = array<i32>} : memref<8x128xf32, #tpu.memory_space<vmem>>, vector<8x32xf32>,
    %c0_85 = arith.constant 0 : index
    %c0_86 = arith.constant 0 : index
    %c96 = arith.constant 96 : index
    %117 = vector.load %arg3[%c0_85, %c0_86, %c96] : memref<1x8x128xbf16, #tpu.memory_space<vmem>>, vector<1x8x32xbf16>
    %118 = vector.shape_cast %117 : vector<1x8x32xbf16> to vector<8x32xbf16>
    %cst_87 = arith.constant 1.767580e-01 : bf16
    %119 = vector.broadcast %cst_87 : bf16 to vector<8x32xbf16>
    %120 = arith.mulf %118, %119 : vector<8x32xbf16>
    %c0_88 = arith.constant 0 : index
    %c0_89 = arith.constant 0 : index
    %c96_90 = arith.constant 96 : index
    %121 = vector.load %arg4[%c0_88, %c0_89, %c96_90] : memref<1x8x128xbf16, #tpu.memory_space<vmem>>, vector<1x8x32xbf16>
    %122 = vector.shape_cast %121 : vector<1x8x32xbf16> to vector<8x32xbf16>
    %c0_91 = arith.constant 0 : index
    %c0_92 = arith.constant 0 : index
    %c96_93 = arith.constant 96 : index
    %123 = vector.load %arg5[%c0_91, %c0_92, %c96_93] : memref<1x8x128xbf16, #tpu.memory_space<vmem>>, vector<1x8x32xbf16>
    %124 = vector.shape_cast %123 : vector<1x8x32xbf16> to vector<8x32xbf16>
    %cst_94 = arith.constant dense<0.000000e+00> : vector<8x8xf32>
    %125 = tpu.matmul %120, %122, %cst_94 {dimension_numbers = #tpu.dot_dimension_numbers<[1], [1], [0], [0], [0, 0, 1, 0], [], []>} : vector<8x32xbf16>, vector<8x32xbf16>, vector<8x8xf32> -> vector<8x8xf32>
    %c3 = arith.constant 3 : index
    %c0_95 = arith.constant 0 : index
    %c0_96 = arith.constant 0 : index
    %126 = vector.load %arg7[%c3, %c0_95, %c0_96] : memref<4x8x1xf32, #tpu.memory_space<vmem>>, vector<1x8x1xf32>
    %127 = vector.shape_cast %126 : vector<1x8x1xf32> to vector<8x1xf32>
    %cst_97 = arith.constant dense<0xFF800000> : vector<8xf32>
    %128 = vector.multi_reduction <maximumf>, %125, %cst_97 [1] : vector<8x8xf32> to vector<8xf32>
    %129 = vector.shape_cast %128 : vector<8xf32> to vector<8x1xf32>
    %130 = arith.maximumf %127, %129 : vector<8x1xf32>
    %131 = arith.subf %127, %130 : vector<8x1xf32>
    %132 = math.exp %131 : vector<8x1xf32>
    %133 = vector.broadcast %130 : vector<8x1xf32> to vector<8x8xf32>
    %134 = arith.subf %125, %133 : vector<8x8xf32>
    %135 = math.exp %134 : vector<8x8xf32>
    %c3_98 = arith.constant 3 : index
    %c0_99 = arith.constant 0 : index
    %c0_100 = arith.constant 0 : index
    %136 = vector.load %arg8[%c3_98, %c0_99, %c0_100] : memref<4x8x1xf32, #tpu.memory_space<vmem>>, vector<1x8x1xf32>
    %137 = vector.shape_cast %136 : vector<1x8x1xf32> to vector<8x1xf32>
    %138 = arith.mulf %132, %137 : vector<8x1xf32>
    %cst_101 = arith.constant dense<0.000000e+00> : vector<8xf32>
    %139 = vector.multi_reduction <add>, %135, %cst_101 [1] : vector<8x8xf32> to vector<8xf32>
    %140 = vector.shape_cast %139 : vector<8xf32> to vector<8x1xf32>
    %141 = arith.addf %138, %140 : vector<8x1xf32>
    %c3_102 = arith.constant 3 : index
    %c0_103 = arith.constant 0 : index
    %c0_104 = arith.constant 0 : index
    %142 = vector.load %arg8[%c3_102, %c0_103, %c0_104] : memref<4x8x1xf32, #tpu.memory_space<vmem>>, vector<1x8x1xf32>
    %143 = vector.shape_cast %142 : vector<1x8x1xf32> to vector<8x1xf32>
    %144 = vector.shape_cast %141 : vector<8x1xf32> to vector<1x8x1xf32>
    tpu.vector_store %arg8[%c3_102, %c0_103, %c0_104], %144 {strides = array<i32>} : memref<4x8x1xf32, #tpu.memory_space<vmem>>, vector<1x8x1xf32>,
    %c3_105 = arith.constant 3 : index
    %c0_106 = arith.constant 0 : index
    %c0_107 = arith.constant 0 : index
    %145 = vector.load %arg7[%c3_105, %c0_106, %c0_107] : memref<4x8x1xf32, #tpu.memory_space<vmem>>, vector<1x8x1xf32>
    %146 = vector.shape_cast %145 : vector<1x8x1xf32> to vector<8x1xf32>
    %147 = vector.shape_cast %130 : vector<8x1xf32> to vector<1x8x1xf32>
    tpu.vector_store %arg7[%c3_105, %c0_106, %c0_107], %147 {strides = array<i32>} : memref<4x8x1xf32, #tpu.memory_space<vmem>>, vector<1x8x1xf32>,
    %148 = arith.truncf %135 : vector<8x8xf32> to vector<8x8xbf16>
    %cst_108 = arith.constant dense<0.000000e+00> : vector<8x32xf32>
    %149 = tpu.matmul %148, %124, %cst_108 {dimension_numbers = #tpu.dot_dimension_numbers<[1], [0], [0], [1], [0, 0, 1, 1], [], []>} : vector<8x8xbf16>, vector<8x32xbf16>, vector<8x32xf32> -> vector<8x32xf32>
    %c0_109 = arith.constant 0 : index
    %c96_110 = arith.constant 96 : index
    %150 = vector.load %arg9[%c0_109, %c96_110] : memref<8x128xf32, #tpu.memory_space<vmem>>, vector<8x32xf32>
    %151 = vector.broadcast %132 : vector<8x1xf32> to vector<8x32xf32>
    %152 = arith.mulf %151, %150 : vector<8x32xf32>
    %153 = arith.addf %152, %149 : vector<8x32xf32>
    %c0_111 = arith.constant 0 : index
    %c96_112 = arith.constant 96 : index
    %154 = vector.load %arg9[%c0_111, %c96_112] : memref<8x128xf32, #tpu.memory_space<vmem>>, vector<8x32xf32>
    tpu.vector_store %arg9[%c0_111, %c96_112], %153 {strides = array<i32>} : memref<8x128xf32, #tpu.memory_space<vmem>>, vector<8x32xf32>,
    %c0_i32_113 = arith.constant 0 : i32
    %155 = arith.cmpi eq, %arg2, %c0_i32_113 : i32
    %156 = arith.extui %155 : i1 to i32
    %c0_i32_114 = arith.constant 0 : i32
    %157 = arith.cmpi ne, %156, %c0_i32_114 : i32
    scf.if %157 {
      %c0_115 = arith.constant 0 : index
      %c0_116 = arith.constant 0 : index
      %c0_117 = arith.constant 0 : index
      %158 = vector.load %arg8[%c0_115, %c0_116, %c0_117] : memref<4x8x1xf32, #tpu.memory_space<vmem>>, vector<1x8x1xf32>
      %159 = vector.shape_cast %158 : vector<1x8x1xf32> to vector<8x1xf32>
      %cst_118 = arith.constant 1.000000e+00 : f32
      %160 = vector.broadcast %cst_118 : f32 to vector<8x1xf32>
      %161 = arith.divf %160, %159 : vector<8x1xf32>
      %c0_119 = arith.constant 0 : index
      %c0_120 = arith.constant 0 : index
      %162 = vector.load %arg9[%c0_119, %c0_120] : memref<8x128xf32, #tpu.memory_space<vmem>>, vector<8x32xf32>
      %163 = vector.broadcast %161 : vector<8x1xf32> to vector<8x32xf32>
      %164 = arith.mulf %162, %163 : vector<8x32xf32>
      %165 = arith.truncf %164 : vector<8x32xf32> to vector<8x32xbf16>
      %c0_121 = arith.constant 0 : index
      %c0_122 = arith.constant 0 : index
      %c0_123 = arith.constant 0 : index
      %166 = vector.load %arg6[%c0_121, %c0_122, %c0_123] : memref<1x8x128xbf16, #tpu.memory_space<vmem>>, vector<1x8x32xbf16>
      %167 = vector.shape_cast %166 : vector<1x8x32xbf16> to vector<8x32xbf16>
      %168 = vector.shape_cast %165 : vector<8x32xbf16> to vector<1x8x32xbf16>
      tpu.vector_store %arg6[%c0_121, %c0_122, %c0_123], %168 {strides = array<i32>} : memref<1x8x128xbf16, #tpu.memory_space<vmem>>, vector<1x8x32xbf16>,
      %c1_124 = arith.constant 1 : index
      %c0_125 = arith.constant 0 : index
      %c0_126 = arith.constant 0 : index
      %169 = vector.load %arg8[%c1_124, %c0_125, %c0_126] : memref<4x8x1xf32, #tpu.memory_space<vmem>>, vector<1x8x1xf32>
      %170 = vector.shape_cast %169 : vector<1x8x1xf32> to vector<8x1xf32>
      %cst_127 = arith.constant 1.000000e+00 : f32
      %171 = vector.broadcast %cst_127 : f32 to vector<8x1xf32>
      %172 = arith.divf %171, %170 : vector<8x1xf32>
      %c0_128 = arith.constant 0 : index
      %c32_129 = arith.constant 32 : index
      %173 = vector.load %arg9[%c0_128, %c32_129] : memref<8x128xf32, #tpu.memory_space<vmem>>, vector<8x32xf32>
      %174 = vector.broadcast %172 : vector<8x1xf32> to vector<8x32xf32>
      %175 = arith.mulf %173, %174 : vector<8x32xf32>
      %176 = arith.truncf %175 : vector<8x32xf32> to vector<8x32xbf16>
      %c0_130 = arith.constant 0 : index
      %c0_131 = arith.constant 0 : index
      %c32_132 = arith.constant 32 : index
      %177 = vector.load %arg6[%c0_130, %c0_131, %c32_132] : memref<1x8x128xbf16, #tpu.memory_space<vmem>>, vector<1x8x32xbf16>
      %178 = vector.shape_cast %177 : vector<1x8x32xbf16> to vector<8x32xbf16>
      %179 = vector.shape_cast %176 : vector<8x32xbf16> to vector<1x8x32xbf16>
      tpu.vector_store %arg6[%c0_130, %c0_131, %c32_132], %179 {strides = array<i32>} : memref<1x8x128xbf16, #tpu.memory_space<vmem>>, vector<1x8x32xbf16>,
      %c2_133 = arith.constant 2 : index
      %c0_134 = arith.constant 0 : index
      %c0_135 = arith.constant 0 : index
      %180 = vector.load %arg8[%c2_133, %c0_134, %c0_135] : memref<4x8x1xf32, #tpu.memory_space<vmem>>, vector<1x8x1xf32>
      %181 = vector.shape_cast %180 : vector<1x8x1xf32> to vector<8x1xf32>
      %cst_136 = arith.constant 1.000000e+00 : f32
      %182 = vector.broadcast %cst_136 : f32 to vector<8x1xf32>
      %183 = arith.divf %182, %181 : vector<8x1xf32>
      %c0_137 = arith.constant 0 : index
      %c64_138 = arith.constant 64 : index
      %184 = vector.load %arg9[%c0_137, %c64_138] : memref<8x128xf32, #tpu.memory_space<vmem>>, vector<8x32xf32>
      %185 = vector.broadcast %183 : vector<8x1xf32> to vector<8x32xf32>
      %186 = arith.mulf %184, %185 : vector<8x32xf32>
      %187 = arith.truncf %186 : vector<8x32xf32> to vector<8x32xbf16>
      %c0_139 = arith.constant 0 : index
      %c0_140 = arith.constant 0 : index
      %c64_141 = arith.constant 64 : index
      %188 = vector.load %arg6[%c0_139, %c0_140, %c64_141] : memref<1x8x128xbf16, #tpu.memory_space<vmem>>, vector<1x8x32xbf16>
      %189 = vector.shape_cast %188 : vector<1x8x32xbf16> to vector<8x32xbf16>
      %190 = vector.shape_cast %187 : vector<8x32xbf16> to vector<1x8x32xbf16>
      tpu.vector_store %arg6[%c0_139, %c0_140, %c64_141], %190 {strides = array<i32>} : memref<1x8x128xbf16, #tpu.memory_space<vmem>>, vector<1x8x32xbf16>,
      %c3_142 = arith.constant 3 : index
      %c0_143 = arith.constant 0 : index
      %c0_144 = arith.constant 0 : index
      %191 = vector.load %arg8[%c3_142, %c0_143, %c0_144] : memref<4x8x1xf32, #tpu.memory_space<vmem>>, vector<1x8x1xf32>
      %192 = vector.shape_cast %191 : vector<1x8x1xf32> to vector<8x1xf32>
      %cst_145 = arith.constant 1.000000e+00 : f32
      %193 = vector.broadcast %cst_145 : f32 to vector<8x1xf32>
      %194 = arith.divf %193, %192 : vector<8x1xf32>
      %c0_146 = arith.constant 0 : index
      %c96_147 = arith.constant 96 : index
      %195 = vector.load %arg9[%c0_146, %c96_147] : memref<8x128xf32, #tpu.memory_space<vmem>>, vector<8x32xf32>
      %196 = vector.broadcast %194 : vector<8x1xf32> to vector<8x32xf32>
      %197 = arith.mulf %195, %196 : vector<8x32xf32>
      %198 = arith.truncf %197 : vector<8x32xf32> to vector<8x32xbf16>
      %c0_148 = arith.constant 0 : index
      %c0_149 = arith.constant 0 : index
      %c96_150 = arith.constant 96 : index
      %199 = vector.load %arg6[%c0_148, %c0_149, %c96_150] : memref<1x8x128xbf16, #tpu.memory_space<vmem>>, vector<1x8x32xbf16>
      %200 = vector.shape_cast %199 : vector<1x8x32xbf16> to vector<8x32xbf16>
      %201 = vector.shape_cast %198 : vector<8x32xbf16> to vector<1x8x32xbf16>
      tpu.vector_store %arg6[%c0_148, %c0_149, %c96_150], %201 {strides = array<i32>} : memref<1x8x128xbf16, #tpu.memory_space<vmem>>, vector<1x8x32xbf16>,
    } else {
    }
    return
  }
  func.func @transform_0(%arg0: i32, %arg1: i32, %arg2: i32) -> (i32, i32, i32) {
    %c0_i32 = arith.constant 0 : i32
    %c0_i32_0 = arith.constant 0 : i32
    return %arg0, %arg1, %c0_i32 : i32, i32, i32
  }
  func.func @transform_1(%arg0: i32, %arg1: i32, %arg2: i32) -> (i32, i32, i32) {
    %c0_i32 = arith.constant 0 : i32
    %c0_i32_0 = arith.constant 0 : i32
    return %arg0, %arg2, %c0_i32 : i32, i32, i32
  }
  func.func @transform_2(%arg0: i32, %arg1: i32, %arg2: i32) -> (i32, i32, i32) {
    %c1_i32 = arith.constant 1 : i32
    %c0_i32 = arith.constant 0 : i32
    return %arg0, %arg2, %c1_i32 : i32, i32, i32
  }
  func.func @transform_3(%arg0: i32, %arg1: i32, %arg2: i32) -> (i32, i32, i32) {
    %c0_i32 = arith.constant 0 : i32
    %c0_i32_0 = arith.constant 0 : i32
    return %arg0, %arg1, %c0_i32 : i32, i32, i32
  }
}

module attributes {stable_mosaic.version = 11 : i64} {
  func.func @_linear_ln_kernel(%arg0: i32, %arg1: i32, %arg2: memref<16x128xbf16, #tpu.memory_space<vmem>>, %arg3: memref<128x128xbf16, #tpu.memory_space<vmem>>, %arg4: memref<1x128xf32, #tpu.memory_space<vmem>>, %arg5: memref<16x128xbf16, #tpu.memory_space<vmem>>, %arg6: memref<1x128xf32, #tpu.memory_space<vmem>>, %arg7: memref<1x128xf32, #tpu.memory_space<vmem>>, %arg8: memref<16x128xbf16, #tpu.memory_space<vmem>>, %arg9: memref<16x128xf32, #tpu.memory_space<vmem>>) attributes {dimension_semantics = [#tpu.dimension_semantics<parallel>, #tpu.dimension_semantics<arbitrary>], iteration_bounds = array<i64: 1, 1>, scalar_prefetch = 0 : i64, scratch_operands = 1 : i64, tpu.core_type = #tpu.core_type<tc>, window_params = [{transform_indices = @transform_0, window_bounds = array<i64: 16, 128>}, {transform_indices = @transform_1, window_bounds = array<i64: 128, 128>}, {pipeline_mode = #tpu.pipeline_mode<synchronous>, transform_indices = @transform_2, window_bounds = array<i64: 1, 128>}, {transform_indices = @transform_3, window_bounds = array<i64: 16, 128>}, {pipeline_mode = #tpu.pipeline_mode<synchronous>, transform_indices = @transform_4, window_bounds = array<i64: 1, 128>}, {pipeline_mode = #tpu.pipeline_mode<synchronous>, transform_indices = @transform_5, window_bounds = array<i64: 1, 128>}, {transform_indices = @transform_6, window_bounds = array<i64: 16, 128>}]} {
    %c0_i32 = arith.constant 0 : i32
    %0 = arith.cmpi eq, %arg1, %c0_i32 : i32
    %1 = arith.extui %0 : i1 to i32
    %c0_i32_0 = arith.constant 0 : i32
    %2 = arith.cmpi ne, %1, %c0_i32_0 : i32
    scf.if %2 {
      %cst_10 = arith.constant 0.000000e+00 : f32
      %12 = vector.broadcast %cst_10 : f32 to vector<16x128xf32>
      %c0_11 = arith.constant 0 : index
      %c0_12 = arith.constant 0 : index
      %13 = vector.load %arg9[%c0_11, %c0_12] : memref<16x128xf32, #tpu.memory_space<vmem>>, vector<16x128xf32>
      tpu.vector_store %arg9[%c0_11, %c0_12], %12 {strides = array<i32>} : memref<16x128xf32, #tpu.memory_space<vmem>>, vector<16x128xf32>,
    } else {
    }
    %c0 = arith.constant 0 : index
    %c0_1 = arith.constant 0 : index
    %3 = vector.load %arg9[%c0, %c0_1] : memref<16x128xf32, #tpu.memory_space<vmem>>, vector<16x128xf32>
    %c0_2 = arith.constant 0 : index
    %c0_3 = arith.constant 0 : index
    %4 = vector.load %arg2[%c0_2, %c0_3] : memref<16x128xbf16, #tpu.memory_space<vmem>>, vector<16x128xbf16>
    %c0_4 = arith.constant 0 : index
    %c0_5 = arith.constant 0 : index
    %5 = vector.load %arg3[%c0_4, %c0_5] : memref<128x128xbf16, #tpu.memory_space<vmem>>, vector<128x128xbf16>
    %cst = arith.constant dense<0.000000e+00> : vector<16x128xf32>
    %6 = tpu.matmul %4, %5, %cst {dimension_numbers = #tpu.dot_dimension_numbers<[1], [0], [0], [1], [0, 0, 1, 1], [], []>} : vector<16x128xbf16>, vector<128x128xbf16>, vector<16x128xf32> -> vector<16x128xf32>
    %7 = arith.addf %3, %6 : vector<16x128xf32>
    %c0_6 = arith.constant 0 : index
    %c0_7 = arith.constant 0 : index
    %8 = vector.load %arg9[%c0_6, %c0_7] : memref<16x128xf32, #tpu.memory_space<vmem>>, vector<16x128xf32>
    tpu.vector_store %arg9[%c0_6, %c0_7], %7 {strides = array<i32>} : memref<16x128xf32, #tpu.memory_space<vmem>>, vector<16x128xf32>,
    %c0_i32_8 = arith.constant 0 : i32
    %9 = arith.cmpi eq, %arg1, %c0_i32_8 : i32
    %10 = arith.extui %9 : i1 to i32
    %c0_i32_9 = arith.constant 0 : i32
    %11 = arith.cmpi ne, %10, %c0_i32_9 : i32
    scf.if %11 {
      %c0_10 = arith.constant 0 : index
      %c0_11 = arith.constant 0 : index
      %12 = vector.load %arg9[%c0_10, %c0_11] : memref<16x128xf32, #tpu.memory_space<vmem>>, vector<16x128xf32>
      %c0_12 = arith.constant 0 : index
      %c0_13 = arith.constant 0 : index
      %13 = vector.load %arg4[%c0_12, %c0_13] : memref<1x128xf32, #tpu.memory_space<vmem>>, vector<1x128xf32>
      %14 = vector.broadcast %13 : vector<1x128xf32> to vector<16x128xf32>
      %15 = arith.addf %12, %14 : vector<16x128xf32>
      %c0_14 = arith.constant 0 : index
      %c0_15 = arith.constant 0 : index
      %16 = vector.load %arg5[%c0_14, %c0_15] : memref<16x128xbf16, #tpu.memory_space<vmem>>, vector<16x128xbf16>
      %17 = arith.extf %16 : vector<16x128xbf16> to vector<16x128xf32>
      %18 = arith.addf %15, %17 : vector<16x128xf32>
      %cst_16 = arith.constant dense<0.000000e+00> : vector<16xf32>
      %19 = vector.multi_reduction <add>, %18, %cst_16 [1] : vector<16x128xf32> to vector<16xf32>
      %20 = vector.shape_cast %19 : vector<16xf32> to vector<16x1xf32>
      %cst_17 = arith.constant 1.280000e+02 : f32
      %21 = vector.broadcast %cst_17 : f32 to vector<16x1xf32>
      %22 = arith.divf %20, %21 : vector<16x1xf32>
      %23 = vector.broadcast %22 : vector<16x1xf32> to vector<16x128xf32>
      %24 = arith.subf %18, %23 : vector<16x128xf32>
      %25 = arith.mulf %24, %24 : vector<16x128xf32>
      %cst_18 = arith.constant dense<0.000000e+00> : vector<16xf32>
      %26 = vector.multi_reduction <add>, %25, %cst_18 [1] : vector<16x128xf32> to vector<16xf32>
      %27 = vector.shape_cast %26 : vector<16xf32> to vector<16x1xf32>
      %cst_19 = arith.constant 1.280000e+02 : f32
      %28 = vector.broadcast %cst_19 : f32 to vector<16x1xf32>
      %29 = arith.divf %27, %28 : vector<16x1xf32>
      %cst_20 = arith.constant 9.99999974E-6 : f32
      %30 = vector.broadcast %cst_20 : f32 to vector<16x1xf32>
      %31 = arith.addf %29, %30 : vector<16x1xf32>
      %32 = math.rsqrt %31 : vector<16x1xf32>
      %33 = vector.broadcast %32 : vector<16x1xf32> to vector<16x128xf32>
      %34 = arith.mulf %24, %33 : vector<16x128xf32>
      %c0_21 = arith.constant 0 : index
      %c0_22 = arith.constant 0 : index
      %35 = vector.load %arg6[%c0_21, %c0_22] : memref<1x128xf32, #tpu.memory_space<vmem>>, vector<1x128xf32>
      %36 = vector.broadcast %35 : vector<1x128xf32> to vector<16x128xf32>
      %37 = arith.mulf %34, %36 : vector<16x128xf32>
      %c0_23 = arith.constant 0 : index
      %c0_24 = arith.constant 0 : index
      %38 = vector.load %arg7[%c0_23, %c0_24] : memref<1x128xf32, #tpu.memory_space<vmem>>, vector<1x128xf32>
      %39 = vector.broadcast %38 : vector<1x128xf32> to vector<16x128xf32>
      %40 = arith.addf %37, %39 : vector<16x128xf32>
      %41 = arith.truncf %40 : vector<16x128xf32> to vector<16x128xbf16>
      %c0_25 = arith.constant 0 : index
      %c0_26 = arith.constant 0 : index
      %42 = vector.load %arg8[%c0_25, %c0_26] : memref<16x128xbf16, #tpu.memory_space<vmem>>, vector<16x128xbf16>
      tpu.vector_store %arg8[%c0_25, %c0_26], %41 {strides = array<i32>} : memref<16x128xbf16, #tpu.memory_space<vmem>>, vector<16x128xbf16>,
    } else {
    }
    return
  }
  func.func @transform_0(%arg0: i32, %arg1: i32) -> (i32, i32) {
    %c0_i32 = arith.constant 0 : i32
    return %arg0, %arg1 : i32, i32
  }
  func.func @transform_1(%arg0: i32, %arg1: i32) -> (i32, i32) {
    %c0_i32 = arith.constant 0 : i32
    %c0_i32_0 = arith.constant 0 : i32
    return %arg1, %c0_i32 : i32, i32
  }
  func.func @transform_2(%arg0: i32, %arg1: i32) -> (i32, i32) {
    %c0_i32 = arith.constant 0 : i32
    %c0_i32_0 = arith.constant 0 : i32
    %c0_i32_1 = arith.constant 0 : i32
    return %c0_i32, %c0_i32_0 : i32, i32
  }
  func.func @transform_3(%arg0: i32, %arg1: i32) -> (i32, i32) {
    %c0_i32 = arith.constant 0 : i32
    %c0_i32_0 = arith.constant 0 : i32
    return %arg0, %c0_i32 : i32, i32
  }
  func.func @transform_4(%arg0: i32, %arg1: i32) -> (i32, i32) {
    %c0_i32 = arith.constant 0 : i32
    %c0_i32_0 = arith.constant 0 : i32
    %c0_i32_1 = arith.constant 0 : i32
    return %c0_i32, %c0_i32_0 : i32, i32
  }
  func.func @transform_5(%arg0: i32, %arg1: i32) -> (i32, i32) {
    %c0_i32 = arith.constant 0 : i32
    %c0_i32_0 = arith.constant 0 : i32
    %c0_i32_1 = arith.constant 0 : i32
    return %c0_i32, %c0_i32_0 : i32, i32
  }
  func.func @transform_6(%arg0: i32, %arg1: i32) -> (i32, i32) {
    %c0_i32 = arith.constant 0 : i32
    %c0_i32_0 = arith.constant 0 : i32
    return %arg0, %c0_i32 : i32, i32
  }
}

module attributes {stable_mosaic.version = 11 : i64} {
  func.func @_linear_ln_kernel(%arg0: i32, %arg1: i32, %arg2: memref<16x256xbf16, #tpu.memory_space<vmem>>, %arg3: memref<256x128xbf16, #tpu.memory_space<vmem>>, %arg4: memref<1x128xf32, #tpu.memory_space<vmem>>, %arg5: memref<16x128xbf16, #tpu.memory_space<vmem>>, %arg6: memref<1x128xf32, #tpu.memory_space<vmem>>, %arg7: memref<1x128xf32, #tpu.memory_space<vmem>>, %arg8: memref<16x128xbf16, #tpu.memory_space<vmem>>, %arg9: memref<16x128xf32, #tpu.memory_space<vmem>>) attributes {dimension_semantics = [#tpu.dimension_semantics<parallel>, #tpu.dimension_semantics<arbitrary>], iteration_bounds = array<i64: 1, 1>, scalar_prefetch = 0 : i64, scratch_operands = 1 : i64, tpu.core_type = #tpu.core_type<tc>, window_params = [{transform_indices = @transform_0, window_bounds = array<i64: 16, 256>}, {transform_indices = @transform_1, window_bounds = array<i64: 256, 128>}, {pipeline_mode = #tpu.pipeline_mode<synchronous>, transform_indices = @transform_2, window_bounds = array<i64: 1, 128>}, {transform_indices = @transform_3, window_bounds = array<i64: 16, 128>}, {pipeline_mode = #tpu.pipeline_mode<synchronous>, transform_indices = @transform_4, window_bounds = array<i64: 1, 128>}, {pipeline_mode = #tpu.pipeline_mode<synchronous>, transform_indices = @transform_5, window_bounds = array<i64: 1, 128>}, {transform_indices = @transform_6, window_bounds = array<i64: 16, 128>}]} {
    %c0_i32 = arith.constant 0 : i32
    %0 = arith.cmpi eq, %arg1, %c0_i32 : i32
    %1 = arith.extui %0 : i1 to i32
    %c0_i32_0 = arith.constant 0 : i32
    %2 = arith.cmpi ne, %1, %c0_i32_0 : i32
    scf.if %2 {
      %cst_10 = arith.constant 0.000000e+00 : f32
      %12 = vector.broadcast %cst_10 : f32 to vector<16x128xf32>
      %c0_11 = arith.constant 0 : index
      %c0_12 = arith.constant 0 : index
      %13 = vector.load %arg9[%c0_11, %c0_12] : memref<16x128xf32, #tpu.memory_space<vmem>>, vector<16x128xf32>
      tpu.vector_store %arg9[%c0_11, %c0_12], %12 {strides = array<i32>} : memref<16x128xf32, #tpu.memory_space<vmem>>, vector<16x128xf32>,
    } else {
    }
    %c0 = arith.constant 0 : index
    %c0_1 = arith.constant 0 : index
    %3 = vector.load %arg9[%c0, %c0_1] : memref<16x128xf32, #tpu.memory_space<vmem>>, vector<16x128xf32>
    %c0_2 = arith.constant 0 : index
    %c0_3 = arith.constant 0 : index
    %4 = vector.load %arg2[%c0_2, %c0_3] : memref<16x256xbf16, #tpu.memory_space<vmem>>, vector<16x256xbf16>
    %c0_4 = arith.constant 0 : index
    %c0_5 = arith.constant 0 : index
    %5 = vector.load %arg3[%c0_4, %c0_5] : memref<256x128xbf16, #tpu.memory_space<vmem>>, vector<256x128xbf16>
    %cst = arith.constant dense<0.000000e+00> : vector<16x128xf32>
    %6 = tpu.matmul %4, %5, %cst {dimension_numbers = #tpu.dot_dimension_numbers<[1], [0], [0], [1], [0, 0, 1, 1], [], []>} : vector<16x256xbf16>, vector<256x128xbf16>, vector<16x128xf32> -> vector<16x128xf32>
    %7 = arith.addf %3, %6 : vector<16x128xf32>
    %c0_6 = arith.constant 0 : index
    %c0_7 = arith.constant 0 : index
    %8 = vector.load %arg9[%c0_6, %c0_7] : memref<16x128xf32, #tpu.memory_space<vmem>>, vector<16x128xf32>
    tpu.vector_store %arg9[%c0_6, %c0_7], %7 {strides = array<i32>} : memref<16x128xf32, #tpu.memory_space<vmem>>, vector<16x128xf32>,
    %c0_i32_8 = arith.constant 0 : i32
    %9 = arith.cmpi eq, %arg1, %c0_i32_8 : i32
    %10 = arith.extui %9 : i1 to i32
    %c0_i32_9 = arith.constant 0 : i32
    %11 = arith.cmpi ne, %10, %c0_i32_9 : i32
    scf.if %11 {
      %c0_10 = arith.constant 0 : index
      %c0_11 = arith.constant 0 : index
      %12 = vector.load %arg9[%c0_10, %c0_11] : memref<16x128xf32, #tpu.memory_space<vmem>>, vector<16x128xf32>
      %c0_12 = arith.constant 0 : index
      %c0_13 = arith.constant 0 : index
      %13 = vector.load %arg4[%c0_12, %c0_13] : memref<1x128xf32, #tpu.memory_space<vmem>>, vector<1x128xf32>
      %14 = vector.broadcast %13 : vector<1x128xf32> to vector<16x128xf32>
      %15 = arith.addf %12, %14 : vector<16x128xf32>
      %c0_14 = arith.constant 0 : index
      %c0_15 = arith.constant 0 : index
      %16 = vector.load %arg5[%c0_14, %c0_15] : memref<16x128xbf16, #tpu.memory_space<vmem>>, vector<16x128xbf16>
      %17 = arith.extf %16 : vector<16x128xbf16> to vector<16x128xf32>
      %18 = arith.addf %15, %17 : vector<16x128xf32>
      %cst_16 = arith.constant dense<0.000000e+00> : vector<16xf32>
      %19 = vector.multi_reduction <add>, %18, %cst_16 [1] : vector<16x128xf32> to vector<16xf32>
      %20 = vector.shape_cast %19 : vector<16xf32> to vector<16x1xf32>
      %cst_17 = arith.constant 1.280000e+02 : f32
      %21 = vector.broadcast %cst_17 : f32 to vector<16x1xf32>
      %22 = arith.divf %20, %21 : vector<16x1xf32>
      %23 = vector.broadcast %22 : vector<16x1xf32> to vector<16x128xf32>
      %24 = arith.subf %18, %23 : vector<16x128xf32>
      %25 = arith.mulf %24, %24 : vector<16x128xf32>
      %cst_18 = arith.constant dense<0.000000e+00> : vector<16xf32>
      %26 = vector.multi_reduction <add>, %25, %cst_18 [1] : vector<16x128xf32> to vector<16xf32>
      %27 = vector.shape_cast %26 : vector<16xf32> to vector<16x1xf32>
      %cst_19 = arith.constant 1.280000e+02 : f32
      %28 = vector.broadcast %cst_19 : f32 to vector<16x1xf32>
      %29 = arith.divf %27, %28 : vector<16x1xf32>
      %cst_20 = arith.constant 9.99999974E-6 : f32
      %30 = vector.broadcast %cst_20 : f32 to vector<16x1xf32>
      %31 = arith.addf %29, %30 : vector<16x1xf32>
      %32 = math.rsqrt %31 : vector<16x1xf32>
      %33 = vector.broadcast %32 : vector<16x1xf32> to vector<16x128xf32>
      %34 = arith.mulf %24, %33 : vector<16x128xf32>
      %c0_21 = arith.constant 0 : index
      %c0_22 = arith.constant 0 : index
      %35 = vector.load %arg6[%c0_21, %c0_22] : memref<1x128xf32, #tpu.memory_space<vmem>>, vector<1x128xf32>
      %36 = vector.broadcast %35 : vector<1x128xf32> to vector<16x128xf32>
      %37 = arith.mulf %34, %36 : vector<16x128xf32>
      %c0_23 = arith.constant 0 : index
      %c0_24 = arith.constant 0 : index
      %38 = vector.load %arg7[%c0_23, %c0_24] : memref<1x128xf32, #tpu.memory_space<vmem>>, vector<1x128xf32>
      %39 = vector.broadcast %38 : vector<1x128xf32> to vector<16x128xf32>
      %40 = arith.addf %37, %39 : vector<16x128xf32>
      %41 = arith.truncf %40 : vector<16x128xf32> to vector<16x128xbf16>
      %c0_25 = arith.constant 0 : index
      %c0_26 = arith.constant 0 : index
      %42 = vector.load %arg8[%c0_25, %c0_26] : memref<16x128xbf16, #tpu.memory_space<vmem>>, vector<16x128xbf16>
      tpu.vector_store %arg8[%c0_25, %c0_26], %41 {strides = array<i32>} : memref<16x128xbf16, #tpu.memory_space<vmem>>, vector<16x128xbf16>,
    } else {
    }
    return
  }
  func.func @transform_0(%arg0: i32, %arg1: i32) -> (i32, i32) {
    %c0_i32 = arith.constant 0 : i32
    return %arg0, %arg1 : i32, i32
  }
  func.func @transform_1(%arg0: i32, %arg1: i32) -> (i32, i32) {
    %c0_i32 = arith.constant 0 : i32
    %c0_i32_0 = arith.constant 0 : i32
    return %arg1, %c0_i32 : i32, i32
  }
  func.func @transform_2(%arg0: i32, %arg1: i32) -> (i32, i32) {
    %c0_i32 = arith.constant 0 : i32
    %c0_i32_0 = arith.constant 0 : i32
    %c0_i32_1 = arith.constant 0 : i32
    return %c0_i32, %c0_i32_0 : i32, i32
  }
  func.func @transform_3(%arg0: i32, %arg1: i32) -> (i32, i32) {
    %c0_i32 = arith.constant 0 : i32
    %c0_i32_0 = arith.constant 0 : i32
    return %arg0, %c0_i32 : i32, i32
  }
  func.func @transform_4(%arg0: i32, %arg1: i32) -> (i32, i32) {
    %c0_i32 = arith.constant 0 : i32
    %c0_i32_0 = arith.constant 0 : i32
    %c0_i32_1 = arith.constant 0 : i32
    return %c0_i32, %c0_i32_0 : i32, i32
  }
  func.func @transform_5(%arg0: i32, %arg1: i32) -> (i32, i32) {
    %c0_i32 = arith.constant 0 : i32
    %c0_i32_0 = arith.constant 0 : i32
    %c0_i32_1 = arith.constant 0 : i32
    return %c0_i32, %c0_i32_0 : i32, i32
  }
  func.func @transform_6(%arg0: i32, %arg1: i32) -> (i32, i32) {
    %c0_i32 = arith.constant 0 : i32
    %c0_i32_0 = arith.constant 0 : i32
    return %arg0, %c0_i32 : i32, i32
  }
}

module attributes {stable_mosaic.version = 11 : i64} {
  func.func @_linear_kernel(%arg0: i32, %arg1: i32, %arg2: i32, %arg3: memref<16x128xbf16, #tpu.memory_space<vmem>>, %arg4: memref<128x128xbf16, #tpu.memory_space<vmem>>, %arg5: memref<1x128xf32, #tpu.memory_space<vmem>>, %arg6: memref<16x128xf32, #tpu.memory_space<vmem>>, %arg7: memref<16x128xf32, #tpu.memory_space<vmem>>) attributes {dimension_semantics = [#tpu.dimension_semantics<parallel>, #tpu.dimension_semantics<parallel>, #tpu.dimension_semantics<arbitrary>], iteration_bounds = array<i64: 1, 1, 1>, scalar_prefetch = 0 : i64, scratch_operands = 1 : i64, tpu.core_type = #tpu.core_type<tc>, window_params = [{transform_indices = @transform_0, window_bounds = array<i64: 16, 128>}, {transform_indices = @transform_1, window_bounds = array<i64: 128, 128>}, {transform_indices = @transform_2, window_bounds = array<i64: 1, 128>}, {transform_indices = @transform_3, window_bounds = array<i64: 16, 128>}]} {
    %c0_i32 = arith.constant 0 : i32
    %0 = arith.cmpi eq, %arg2, %c0_i32 : i32
    %1 = arith.extui %0 : i1 to i32
    %c0_i32_0 = arith.constant 0 : i32
    %2 = arith.cmpi ne, %1, %c0_i32_0 : i32
    scf.if %2 {
      %cst_10 = arith.constant 0.000000e+00 : f32
      %12 = vector.broadcast %cst_10 : f32 to vector<16x128xf32>
      %c0_11 = arith.constant 0 : index
      %c0_12 = arith.constant 0 : index
      %13 = vector.load %arg7[%c0_11, %c0_12] : memref<16x128xf32, #tpu.memory_space<vmem>>, vector<16x128xf32>
      tpu.vector_store %arg7[%c0_11, %c0_12], %12 {strides = array<i32>} : memref<16x128xf32, #tpu.memory_space<vmem>>, vector<16x128xf32>,
    } else {
    }
    %c0 = arith.constant 0 : index
    %c0_1 = arith.constant 0 : index
    %3 = vector.load %arg7[%c0, %c0_1] : memref<16x128xf32, #tpu.memory_space<vmem>>, vector<16x128xf32>
    %c0_2 = arith.constant 0 : index
    %c0_3 = arith.constant 0 : index
    %4 = vector.load %arg3[%c0_2, %c0_3] : memref<16x128xbf16, #tpu.memory_space<vmem>>, vector<16x128xbf16>
    %c0_4 = arith.constant 0 : index
    %c0_5 = arith.constant 0 : index
    %5 = vector.load %arg4[%c0_4, %c0_5] : memref<128x128xbf16, #tpu.memory_space<vmem>>, vector<128x128xbf16>
    %cst = arith.constant dense<0.000000e+00> : vector<16x128xf32>
    %6 = tpu.matmul %4, %5, %cst {dimension_numbers = #tpu.dot_dimension_numbers<[1], [0], [0], [1], [0, 0, 1, 1], [], []>} : vector<16x128xbf16>, vector<128x128xbf16>, vector<16x128xf32> -> vector<16x128xf32>
    %7 = arith.addf %3, %6 : vector<16x128xf32>
    %c0_6 = arith.constant 0 : index
    %c0_7 = arith.constant 0 : index
    %8 = vector.load %arg7[%c0_6, %c0_7] : memref<16x128xf32, #tpu.memory_space<vmem>>, vector<16x128xf32>
    tpu.vector_store %arg7[%c0_6, %c0_7], %7 {strides = array<i32>} : memref<16x128xf32, #tpu.memory_space<vmem>>, vector<16x128xf32>,
    %c0_i32_8 = arith.constant 0 : i32
    %9 = arith.cmpi eq, %arg2, %c0_i32_8 : i32
    %10 = arith.extui %9 : i1 to i32
    %c0_i32_9 = arith.constant 0 : i32
    %11 = arith.cmpi ne, %10, %c0_i32_9 : i32
    scf.if %11 {
      %c0_10 = arith.constant 0 : index
      %c0_11 = arith.constant 0 : index
      %12 = vector.load %arg7[%c0_10, %c0_11] : memref<16x128xf32, #tpu.memory_space<vmem>>, vector<16x128xf32>
      %c0_12 = arith.constant 0 : index
      %c0_13 = arith.constant 0 : index
      %13 = vector.load %arg5[%c0_12, %c0_13] : memref<1x128xf32, #tpu.memory_space<vmem>>, vector<1x128xf32>
      %14 = vector.broadcast %13 : vector<1x128xf32> to vector<16x128xf32>
      %15 = arith.addf %12, %14 : vector<16x128xf32>
      %c0_14 = arith.constant 0 : index
      %c0_15 = arith.constant 0 : index
      %16 = vector.load %arg6[%c0_14, %c0_15] : memref<16x128xf32, #tpu.memory_space<vmem>>, vector<16x128xf32>
      tpu.vector_store %arg6[%c0_14, %c0_15], %15 {strides = array<i32>} : memref<16x128xf32, #tpu.memory_space<vmem>>, vector<16x128xf32>,
    } else {
    }
    return
  }
  func.func @transform_0(%arg0: i32, %arg1: i32, %arg2: i32) -> (i32, i32) {
    %c0_i32 = arith.constant 0 : i32
    return %arg0, %arg2 : i32, i32
  }
  func.func @transform_1(%arg0: i32, %arg1: i32, %arg2: i32) -> (i32, i32) {
    %c0_i32 = arith.constant 0 : i32
    return %arg2, %arg1 : i32, i32
  }
  func.func @transform_2(%arg0: i32, %arg1: i32, %arg2: i32) -> (i32, i32) {
    %c0_i32 = arith.constant 0 : i32
    %c0_i32_0 = arith.constant 0 : i32
    return %c0_i32, %arg1 : i32, i32
  }
  func.func @transform_3(%arg0: i32, %arg1: i32, %arg2: i32) -> (i32, i32) {
    %c0_i32 = arith.constant 0 : i32
    return %arg0, %arg1 : i32, i32
  }
}

</mosaic_0001>

<llo_original>
// kernel: transformer_forward.31
$region0: #{transformer_forward.31}
  #allocation0 [shape = 'u32[]', space=smem, size = 0x4, offset = 0x4, fixed_abs, tag = 'smem constant byte address 0x4 - core index']
  #allocation1 [shape = 'u32[72,128]{1,0:T(1,128)}', space=vmem, size = 0x9000, scoped, tag = 'internal scratch']
  %s0 = inlined_call_operand.vmem [shape: f32[2,8,128], index: 0, kind: input, shape index: {}]
  %s1 = inlined_call_operand.vmem [shape: f32[8,128], index: 1, kind: input, shape index: {}]
  %s2 = inlined_call_operand.vmem [shape: bf16[2,8,128], index: 2, kind: output, shape index: {}]
  %s3 = sld [smem:[#allocation0]]
  $region41: #{transformer_forward.31} parent=0
    _
  %s5 = ssub.s32 1, %s3
  %s6 = scalar_select 0, %s5, %s3
  loop: start=0, step=1, limit=4
  $region2: #{transformer_forward.31} parent=0 // loop_pre_header
    _
  $region3: #{transformer_forward.31} parent=0 // loop_header
    %s8 = sphi 0, %s12
    %p9 = scmp.ge.s32.totalorder %s8, 4
    %s15 = sphi 0, %s27
    %s16 = sphi 0, %s23
    %s17 = sphi 0, %s15
    %s18 = sphi 0, %s16
    %s19 = sphi 0, %s17
    %s20 = sphi 0, %s18
    %s32 = sphi 0, %s34
    %s35 = sphi 0, %s32
    %s36 = sphi 0, %s35
    %s52 = sphi 0, %s36
    %s58 = sphi 0, %s60
    %s61 = sphi 0, %s58
    %s62 = sphi 0, %s61
    %s78 = sphi 0, %s62
    %s86 = sphi 0, %s88
    %s89 = sphi 0, %s86
    %s90 = sphi 0, %s89
    %s106 = sphi 0, %s90
  $region4: #{transformer_forward.31} parent=0 // loop_header_branch
    %11 = sbr.rel (%p9) target = $region8
  $region5: #{transformer_forward.31} parent=0 // loop_body
    %s13 = ssub.s32 %s8, 1
    %s14 = ssub.s32 %s8, 2
    %s21 = sadd.s32 1, %s16
    %p22 = scmp.ge.s32.totalorder %s21, 1
    %s23 = scalar_select %p22, 0, %s21
    %s24 = sadd.s32 1, %s15
    %s25 = scalar_select %p22, %s24, %s15
    %p26 = scmp.ge.s32.totalorder %s25, 2
    %s27 = scalar_select %p26, 0, %s25
    %s28 = ssub.s32 %s15, %s27
    %s29 = ssub.s32 %s16, %s23
    %s30 = sor.u32 %s28, %s29
    %p31 = scmp.eq.s32.totalorder %s30, 0
    %s33 = sadd.s32 %s32, 1
    %s34 = scalar_select %p31, %s32, %s33
    %p37 = pneg %p31
    %p38 = scmp.eq.s32.totalorder %s8, 1
    %p39 = por %p37, %p38
    %p40 = scmp.ne.s32.totalorder %s32, %s35
    %p41 = scmp.eq.s32.totalorder %s8, 0
    %p42 = por %p40, %p41
    %p43 = scmp.ne.s32.totalorder %s32, %s35
    %p44 = scmp.eq.s32.totalorder %s13, 1
    %p45 = por %p43, %p44
    %p46 = scmp.ne.s32.totalorder %s35, %s36
    %p47 = scmp.eq.s32.totalorder %s13, 0
    %p48 = por %p46, %p47
    %p49 = scmp.ne.s32.totalorder %s35, %s36
    %p50 = scmp.eq.s32.totalorder %s14, 1
    %p51 = por %p49, %p50
    %p53 = scmp.ne.s32.totalorder %s36, %s52
    %p54 = scmp.eq.s32.totalorder %s14, 0
    %p55 = por %p53, %p54
    %s56 = ssub.s32 %s16, %s23
    %p57 = scmp.eq.s32.totalorder %s56, 0
    %s59 = sadd.s32 %s58, 1
    %s60 = scalar_select %p57, %s58, %s59
    %p63 = pneg %p57
    %p64 = scmp.eq.s32.totalorder %s8, 1
    %p65 = por %p63, %p64
    %p66 = scmp.ne.s32.totalorder %s58, %s61
    %p67 = scmp.eq.s32.totalorder %s8, 0
    %p68 = por %p66, %p67
    %p69 = scmp.ne.s32.totalorder %s58, %s61
    %p70 = scmp.eq.s32.totalorder %s13, 1
    %p71 = por %p69, %p70
    %p72 = scmp.ne.s32.totalorder %s61, %s62
    %p73 = scmp.eq.s32.totalorder %s13, 0
    %p74 = por %p72, %p73
    %p75 = scmp.ne.s32.totalorder %s61, %s62
    %p76 = scmp.eq.s32.totalorder %s14, 1
    %p77 = por %p75, %p76
    %p79 = scmp.ne.s32.totalorder %s62, %s78
    %p80 = scmp.eq.s32.totalorder %s14, 0
    %p81 = por %p79, %p80
    %s82 = ssub.s32 %s15, %s27
    %s83 = ssub.s32 %s16, %s23
    %s84 = sor.u32 %s82, %s83
    %p85 = scmp.eq.s32.totalorder %s84, 0
    %s87 = sadd.s32 %s86, 1
    %s88 = scalar_select %p85, %s86, %s87
    %p91 = pneg %p85
    %p92 = scmp.eq.s32.totalorder %s8, 1
    %p93 = por %p91, %p92
    %p94 = scmp.ne.s32.totalorder %s86, %s89
    %p95 = scmp.eq.s32.totalorder %s8, 0
    %p96 = por %p94, %p95
    %p97 = scmp.ne.s32.totalorder %s86, %s89
    %p98 = scmp.eq.s32.totalorder %s13, 1
    %p99 = por %p97, %p98
    %p100 = scmp.ne.s32.totalorder %s89, %s90
    %p101 = scmp.eq.s32.totalorder %s13, 0
    %p102 = por %p100, %p101
    %p103 = scmp.ne.s32.totalorder %s89, %s90
    %p104 = scmp.eq.s32.totalorder %s14, 1
    %p105 = por %p103, %p104
    %p107 = scmp.ne.s32.totalorder %s90, %s106
    %p108 = scmp.eq.s32.totalorder %s14, 0
    %p109 = por %p107, %p108
    %p110 = scmp.le.s32.totalorder 1, %s8
    %p111 = scmp.lt.s32.totalorder %s8, 3
    %p112 = pnand %p110, %p111
    %p113 = pneg %p112
    // Predicated region
    $region9: #{transformer_forward.31} parent=5 // pred_check
      _
    $region10: #{transformer_forward.31} parent=5 // pred_check_branch
      %115 = sbr.rel (%p112) target = $region12
    $region11: #{transformer_forward.31} parent=5 // pred_region
      %s116 = ssub.s32 %s8, 1
      // Predicated region
      $region13: #{transformer_forward.31} parent=11 // pred_check
        %p117 = pneg %p74
      $region14: #{transformer_forward.31} parent=11 // pred_check_branch
        %119 = sbr.rel (%p117) target = $region16
      $region15: #{transformer_forward.31} parent=11 // pred_region
        %p120 = scmp.lt.s32.totalorder %s18, 0
        %s121 = scalar_select %p120, %s18, 0
        %s122 = smul.addr %s121, 8
        %s123 = scalar_lea.vmem %s1, %s122
      $region16: #{transformer_forward.31} parent=11 // pred_fallthru
        _
    $region12: #{transformer_forward.31} parent=5 // pred_fallthru
      _
    %p124 = scmp.lt.s32.totalorder %s8, 2
    // Predicated region
    $region17: #{transformer_forward.31} parent=5 // pred_check
      %p125 = pneg %p124
    $region18: #{transformer_forward.31} parent=5 // pred_check_branch
      %127 = sbr.rel (%p125) target = $region20
    $region19: #{transformer_forward.31} parent=5 // pred_region
      // Predicated region
      $region21: #{transformer_forward.31} parent=19 // pred_check
        %p128 = pneg %p42
      $region22: #{transformer_forward.31} parent=19 // pred_check_branch
        %130 = sbr.rel (%p128) target = $region24
      $region23: #{transformer_forward.31} parent=19 // pred_region
        %p131 = scmp.lt.s32.totalorder %s15, 1
        %s132 = scalar_select %p131, %s15, 1
        %p133 = scmp.lt.s32.totalorder %s16, 0
        %s134 = scalar_select %p133, %s16, 0
        %s135 = sadd.s32 %s134, %s132
        %s136 = smul.addr %s135, 8
        %s137 = scalar_lea.vmem %s0, %s136
      $region24: #{transformer_forward.31} parent=19 // pred_fallthru
        _
    $region20: #{transformer_forward.31} parent=5 // pred_fallthru
      _
    %p138 = scmp.le.s32.totalorder 1, %s8
    %p139 = scmp.lt.s32.totalorder %s8, 3
    %p140 = pnand %p138, %p139
    %p141 = pneg %p140
    // Predicated region
    $region25: #{transformer_forward.31} parent=5 // pred_check
      _
    $region26: #{transformer_forward.31} parent=5 // pred_check_branch
      %143 = sbr.rel (%p140) target = $region28
    $region27: #{transformer_forward.31} parent=5 // pred_region
      %s144 = ssub.s32 %s8, 1
      %p145 = scmp.lt.s32.totalorder %s17, 1
      %s146 = scalar_select %p145, %s17, 1
      %p147 = scmp.lt.s32.totalorder %s18, 0
      %s148 = scalar_select %p147, %s18, 0
      %s149 = sadd.s32 %s148, %s146
      %s150 = smul.addr %s149, 8
      %s151 = scalar_lea.vmem %s0, %s150
      %p152 = pneg %p48
      %p153 = pneg %p45
      %p154 = scmp.lt.s32.totalorder %s18, 0
      %s155 = scalar_select %p154, %s18, 0
      %s156 = smul.addr %s155, 8
      %s157 = scalar_lea.vmem %s1, %s156
      %p158 = pneg %p74
      %p159 = pneg %p71
      %p160 = pneg %p102
      %p161 = pneg %p99
      %p162 = scmp.lt.s32.totalorder %s17, 1
      %s163 = scalar_select %p162, %s17, 1
      %p164 = scmp.lt.s32.totalorder %s18, 0
      %s165 = scalar_select %p164, %s18, 0
      %s166 = sadd.s32 %s165, %s163
      %s167 = smul.addr %s166, 4
      %s168 = scalar_lea.vmem %s2, %s167
      %p169 = scmp.lt.s32.totalorder %s17, 1
      %s170 = scalar_select %p169, %s17, 1
      %p171 = scmp.lt.s32.totalorder %s18, 0
      %s172 = scalar_select %p171, %s18, 0
      %s173 = sadd.s32 %s172, %s170
      %s174 = smul.addr %s173, 8
      %s175 = scalar_lea.vmem %s0, %s174
      %p176 = scmp.lt.s32.totalorder %s18, 0
      %s177 = scalar_select %p176, %s18, 0
      %s178 = smul.addr %s177, 8
      %s179 = scalar_lea.vmem %s1, %s178
      %p180 = scmp.lt.s32.totalorder %s17, 1
      %s181 = scalar_select %p180, %s17, 1
      %p182 = scmp.lt.s32.totalorder %s18, 0
      %s183 = scalar_select %p182, %s18, 0
      %s184 = sadd.s32 %s183, %s181
      %s185 = smul.addr %s184, 4
      %s186 = scalar_lea.vmem %s2, %s185
      %v187 = vld [vmem:[%s175] sm:$0xff]
      %v188 = vmul.f32 %v187, 11.313708
      %v189 = vld [vmem:[%s179] sm:$0xff]
      %v190 = vadd.f32 %v188, %v189
      %v191 = vpack.c.bf16 %v190, %v190
      %192 = vst [vmem:[%s186] sm:$0xf] %v191
      %p193 = scmp.lt.s32.totalorder %s17, 1
      %s194 = scalar_select %p193, %s17, 1
      %p195 = scmp.lt.s32.totalorder %s18, 0
      %s196 = scalar_select %p195, %s18, 0
      %s197 = sadd.s32 %s196, %s194
      %s198 = smul.addr %s197, 4
      %s199 = scalar_lea.vmem %s2, %s198
      // Predicated region
      $region29: #{transformer_forward.31} parent=27 // pred_check
        %p200 = pneg %p99
      $region30: #{transformer_forward.31} parent=27 // pred_check_branch
        %202 = sbr.rel (%p200) target = $region32
      $region31: #{transformer_forward.31} parent=27 // pred_region
        _
      $region32: #{transformer_forward.31} parent=27 // pred_fallthru
        _
    $region28: #{transformer_forward.31} parent=5 // pred_fallthru
      _
    %p203 = scmp.le.s32.totalorder 2, %s8
    // Predicated region
    $region33: #{transformer_forward.31} parent=5 // pred_check
      %p204 = pneg %p203
    $region34: #{transformer_forward.31} parent=5 // pred_check_branch
      %206 = sbr.rel (%p204) target = $region36
    $region35: #{transformer_forward.31} parent=5 // pred_region
      %s207 = ssub.s32 %s8, 2
      // Predicated region
      $region37: #{transformer_forward.31} parent=35 // pred_check
        %p208 = pneg %p105
      $region38: #{transformer_forward.31} parent=35 // pred_check_branch
        %210 = sbr.rel (%p208) target = $region40
      $region39: #{transformer_forward.31} parent=35 // pred_region
        %p211 = scmp.lt.s32.totalorder %s19, 1
        %s212 = scalar_select %p211, %s19, 1
        %p213 = scmp.lt.s32.totalorder %s20, 0
        %s214 = scalar_select %p213, %s20, 0
        %s215 = sadd.s32 %s214, %s212
        %s216 = smul.addr %s215, 4
        %s217 = scalar_lea.vmem %s2, %s216
      $region40: #{transformer_forward.31} parent=35 // pred_fallthru
        _
    $region36: #{transformer_forward.31} parent=5 // pred_fallthru
      _
  $region6: #{transformer_forward.31} parent=0 // loop_footer
    %s12 = sadd.s32 1, %s8
  $region7: #{transformer_forward.31} parent=0 // loop_footer_branch
    %7 = sbr.rel target = $region3
  $region8: #{transformer_forward.31} parent=0 // loop_exit
    _

// kernel: transformer_forward.32
$region0: #{transformer_forward.32}
  #allocation0 [shape = 'u32[]', space=smem, size = 0x4, offset = 0x4, fixed_abs, tag = 'smem constant byte address 0x4 - core index']
  #allocation1 [shape = 'u32[72,128]{1,0:T(1,128)}', space=vmem, size = 0x9000, scoped, tag = 'internal scratch']
  #allocation2 [shape = 'f32[16,128]{1,0:T(8,128)}', space=vmem, size = 0x2000, scoped, tag = 'scratch operand']
  %s0 = inlined_call_operand.vmem [shape: bf16[16,128], index: 0, kind: input, shape index: {}]
  %s1 = inlined_call_operand.vmem [shape: bf16[128,384], index: 1, kind: input, shape index: {}]
  %s2 = inlined_call_operand.vmem [shape: f32[1,384], index: 2, kind: input, shape index: {}]
  %s3 = inlined_call_operand.vmem [shape: bf16[16,384], index: 3, kind: output, shape index: {}]
  %s4 = sld [smem:[#allocation0]]
  $region131: #{transformer_forward.32} parent=0
    _
  %s6 = ssub.s32 1, %s4
  %s7 = scalar_select 0, %s6, %s4
  $region1: #{transformer_forward.32} parent=0
    #allocation3 [shape = 'u8[65536]{0}', space=vmem, size = 0x10000, scoped, tag = 'input window, operand 1']
    #allocation4 [shape = 'u8[8192]{0}', space=vmem, size = 0x2000, scoped, tag = 'output window, operand 0']
    loop: start=0, step=1, limit=5
    $region2: #{transformer_forward.32} parent=1 // loop_pre_header
      _
    $region3: #{transformer_forward.32} parent=1 // loop_header
      %s9 = sphi 0, %s13
      %p10 = scmp.ge.s32.totalorder %s9, 5
      %s16 = sphi 0, %s35
      %s17 = sphi 0, %s31
      %s18 = sphi 0, %s27
      %s19 = sphi 0, %s16
      %s20 = sphi 0, %s17
      %s21 = sphi 0, %s18
      %s22 = sphi 0, %s19
      %s23 = sphi 0, %s20
      %s24 = sphi 0, %s21
      %s40 = sphi 0, %s42
      %s43 = sphi 0, %s40
      %s44 = sphi 0, %s43
      %s60 = sphi 0, %s44
      %s68 = sphi 0, %s70
      %s71 = sphi 0, %s68
      %s72 = sphi 0, %s71
      %s88 = sphi 0, %s72
      %s94 = sphi 0, %s96
      %s97 = sphi 0, %s94
      %s98 = sphi 0, %s97
      %s114 = sphi 0, %s98
      %s122 = sphi 0, %s124
      %s125 = sphi 0, %s122
      %s126 = sphi 0, %s125
      %s142 = sphi 0, %s126
    $region4: #{transformer_forward.32} parent=1 // loop_header_branch
      %12 = sbr.rel (%p10) target = $region8
    $region5: #{transformer_forward.32} parent=1 // loop_body
      %s14 = ssub.s32 %s9, 1
      %s15 = ssub.s32 %s9, 2
      %s25 = sadd.s32 1, %s18
      %p26 = scmp.ge.s32.totalorder %s25, 1
      %s27 = scalar_select %p26, 0, %s25
      %s28 = sadd.s32 1, %s17
      %s29 = scalar_select %p26, %s28, %s17
      %p30 = scmp.ge.s32.totalorder %s29, 3
      %s31 = scalar_select %p30, 0, %s29
      %s32 = sadd.s32 1, %s16
      %s33 = scalar_select %p30, %s32, %s16
      %p34 = scmp.ge.s32.totalorder %s33, 1
      %s35 = scalar_select %p34, 0, %s33
      %s36 = ssub.s32 %s16, %s35
      %s37 = ssub.s32 %s18, %s27
      %s38 = sor.u32 %s36, %s37
      %p39 = scmp.eq.s32.totalorder %s38, 0
      %s41 = sadd.s32 %s40, 1
      %s42 = scalar_select %p39, %s40, %s41
      %p45 = pneg %p39
      %p46 = scmp.eq.s32.totalorder %s9, 2
      %p47 = por %p45, %p46
      %p48 = scmp.ne.s32.totalorder %s40, %s43
      %p49 = scmp.eq.s32.totalorder %s9, 0
      %p50 = por %p48, %p49
      %p51 = scmp.ne.s32.totalorder %s40, %s43
      %p52 = scmp.eq.s32.totalorder %s14, 2
      %p53 = por %p51, %p52
      %p54 = scmp.ne.s32.totalorder %s43, %s44
      %p55 = scmp.eq.s32.totalorder %s14, 0
      %p56 = por %p54, %p55
      %p57 = scmp.ne.s32.totalorder %s43, %s44
      %p58 = scmp.eq.s32.totalorder %s15, 2
      %p59 = por %p57, %p58
      %p61 = scmp.ne.s32.totalorder %s44, %s60
      %p62 = scmp.eq.s32.totalorder %s15, 0
      %p63 = por %p61, %p62
      %s64 = ssub.s32 %s18, %s27
      %s65 = ssub.s32 %s17, %s31
      %s66 = sor.u32 %s64, %s65
      %p67 = scmp.eq.s32.totalorder %s66, 0
      %s69 = sadd.s32 %s68, 1
      %s70 = scalar_select %p67, %s68, %s69
      %p73 = pneg %p67
      %p74 = scmp.eq.s32.totalorder %s9, 2
      %p75 = por %p73, %p74
      %p76 = scmp.ne.s32.totalorder %s68, %s71
      %p77 = scmp.eq.s32.totalorder %s9, 0
      %p78 = por %p76, %p77
      %p79 = scmp.ne.s32.totalorder %s68, %s71
      %p80 = scmp.eq.s32.totalorder %s14, 2
      %p81 = por %p79, %p80
      %p82 = scmp.ne.s32.totalorder %s71, %s72
      %p83 = scmp.eq.s32.totalorder %s14, 0
      %p84 = por %p82, %p83
      %p85 = scmp.ne.s32.totalorder %s71, %s72
      %p86 = scmp.eq.s32.totalorder %s15, 2
      %p87 = por %p85, %p86
      %p89 = scmp.ne.s32.totalorder %s72, %s88
      %p90 = scmp.eq.s32.totalorder %s15, 0
      %p91 = por %p89, %p90
      %s92 = ssub.s32 %s17, %s31
      %p93 = scmp.eq.s32.totalorder %s92, 0
      %s95 = sadd.s32 %s94, 1
      %s96 = scalar_select %p93, %s94, %s95
      %p99 = pneg %p93
      %p100 = scmp.eq.s32.totalorder %s9, 2
      %p101 = por %p99, %p100
      %p102 = scmp.ne.s32.totalorder %s94, %s97
      %p103 = scmp.eq.s32.totalorder %s9, 0
      %p104 = por %p102, %p103
      %p105 = scmp.ne.s32.totalorder %s94, %s97
      %p106 = scmp.eq.s32.totalorder %s14, 2
      %p107 = por %p105, %p106
      %p108 = scmp.ne.s32.totalorder %s97, %s98
      %p109 = scmp.eq.s32.totalorder %s14, 0
      %p110 = por %p108, %p109
      %p111 = scmp.ne.s32.totalorder %s97, %s98
      %p112 = scmp.eq.s32.totalorder %s15, 2
      %p113 = por %p111, %p112
      %p115 = scmp.ne.s32.totalorder %s98, %s114
      %p116 = scmp.eq.s32.totalorder %s15, 0
      %p117 = por %p115, %p116
      %s118 = ssub.s32 %s16, %s35
      %s119 = ssub.s32 %s17, %s31
      %s120 = sor.u32 %s118, %s119
      %p121 = scmp.eq.s32.totalorder %s120, 0
      %s123 = sadd.s32 %s122, 1
      %s124 = scalar_select %p121, %s122, %s123
      %p127 = pneg %p121
      %p128 = scmp.eq.s32.totalorder %s9, 2
      %p129 = por %p127, %p128
      %p130 = scmp.ne.s32.totalorder %s122, %s125
      %p131 = scmp.eq.s32.totalorder %s9, 0
      %p132 = por %p130, %p131
      %p133 = scmp.ne.s32.totalorder %s122, %s125
      %p134 = scmp.eq.s32.totalorder %s14, 2
      %p135 = por %p133, %p134
      %p136 = scmp.ne.s32.totalorder %s125, %s126
      %p137 = scmp.eq.s32.totalorder %s14, 0
      %p138 = por %p136, %p137
      %p139 = scmp.ne.s32.totalorder %s125, %s126
      %p140 = scmp.eq.s32.totalorder %s15, 2
      %p141 = por %p139, %p140
      %p143 = scmp.ne.s32.totalorder %s126, %s142
      %p144 = scmp.eq.s32.totalorder %s15, 0
      %p145 = por %p143, %p144
      %p146 = scmp.le.s32.totalorder 1, %s9
      %p147 = scmp.lt.s32.totalorder %s9, 4
      %p148 = pnand %p146, %p147
      %p149 = pneg %p148
      // Predicated region
      $region9: #{transformer_forward.32} parent=5 // pred_check
        _
      $region10: #{transformer_forward.32} parent=5 // pred_check_branch
        %151 = sbr.rel (%p148) target = $region12
      $region11: #{transformer_forward.32} parent=5 // pred_region
        %s152 = ssub.s32 %s9, 1
        // Predicated region
        $region13: #{transformer_forward.32} parent=11 // pred_check
          %p153 = pneg %p56
        $region14: #{transformer_forward.32} parent=11 // pred_check_branch
          %155 = sbr.rel (%p153) target = $region16
        $region15: #{transformer_forward.32} parent=11 // pred_region
          %s156 = smul.u32 2, %s19
          %p157 = scmp.lt.s32.totalorder %s156, 1
          %s158 = scalar_select %p157, %s156, 1
          %p159 = scmp.lt.s32.totalorder %s21, 0
          %s160 = scalar_select %p159, %s21, 0
          %s161 = sadd.s32 %s160, %s158
          %s162 = smul.addr %s161, 4
          %s163 = scalar_lea.vmem %s0, %s162
          %s164 = smul.u32 2, %s19
        $region16: #{transformer_forward.32} parent=11 // pred_fallthru
          _
      $region12: #{transformer_forward.32} parent=5 // pred_fallthru
        _
      %p165 = scmp.lt.s32.totalorder %s9, 3
      // Predicated region
      $region17: #{transformer_forward.32} parent=5 // pred_check
        %p166 = pneg %p165
      $region18: #{transformer_forward.32} parent=5 // pred_check_branch
        %168 = sbr.rel (%p166) target = $region20
      $region19: #{transformer_forward.32} parent=5 // pred_region
        // Predicated region
        $region21: #{transformer_forward.32} parent=19 // pred_check
          %p169 = pneg %p78
        $region22: #{transformer_forward.32} parent=19 // pred_check_branch
          %171 = sbr.rel (%p169) target = $region24
        $region23: #{transformer_forward.32} parent=19 // pred_region
          %s172 = sand.u32 %s68, 1
          %s173 = sand.u32 %s68, 1
          %s174 = smul.addr %s173, 64
          %s175 = scalar_lea.vmem [#allocation3], %s174
          %s176 = smul.u32 16, %s18
          %s177 = smul.addr %s176, 3
          %s178 = sadd.s32 %s17, %s177
          %s179 = smul.addr %s178, 4
          %s180 = scalar_lea.vmem %s1, %s179
          // Predicated region
          $region25: #{transformer_forward.32} parent=23 // pred_check
            _
          $region26: #{transformer_forward.32} parent=23 // pred_check_branch
            %182 = sbr.rel (0) target = $region28
          $region27: #{transformer_forward.32} parent=23 // pred_region
            // Predicated region
            $region29: #{transformer_forward.32} parent=27 // pred_check
              _
            $region30: #{transformer_forward.32} parent=27 // pred_check_branch
              %184 = sbr.rel target = $region32
            $region31: #{transformer_forward.32} parent=27 // pred_region
              // Predicated region
              $region44: #{transformer_forward.32} parent=31 // pred_check
                _
              $region45: #{transformer_forward.32} parent=31 // pred_check_branch
                %230 = sbr.rel (0) target = $region47
              $region46: #{transformer_forward.32} parent=31 // pred_region
                loop: start=0, step=1, limit=1
                $region48: #{transformer_forward.32} parent=46 // loop_pre_header
                  _
                $region49: #{transformer_forward.32} parent=46 // loop_header
                  %s232 = sphi 0, %s236
                  %p233 = scmp.ge.s32.totalorder %s232, 1
                  %s237 = sphi %s180, %s180
                  %s238 = sphi %s175, %s175
                $region50: #{transformer_forward.32} parent=46 // loop_header_branch
                  %235 = sbr.rel (%p233) target = $region54
                $region51: #{transformer_forward.32} parent=46 // loop_body
                  _
                $region52: #{transformer_forward.32} parent=46 // loop_footer
                  %s236 = sadd.s32 1, %s232
                $region53: #{transformer_forward.32} parent=46 // loop_footer_branch
                  %231 = sbr.rel target = $region49
                $region54: #{transformer_forward.32} parent=46 // loop_exit
                  _
                %s240 = ssub.s32 16, 1
                loop: start=0, step=1, limit=1
                $region55: #{transformer_forward.32} parent=46 // loop_pre_header
                  _
                $region56: #{transformer_forward.32} parent=46 // loop_header
                  %s242 = sphi 0, %s246
                  %p243 = scmp.ge.s32.totalorder %s242, 1
                  %s247 = sphi %s180, %s180
                  %s248 = sphi %s175, %s175
                $region57: #{transformer_forward.32} parent=46 // loop_header_branch
                  %245 = sbr.rel (%p243) target = $region61
                $region58: #{transformer_forward.32} parent=46 // loop_body
                  %v249 = vld [vmem:[%s247] sm:%s240]
                  %250 = vst [vmem:[%s248] sm:%s240] %v249
                  %v251 = vld [vmem:[%s247 + $0xc] sm:%s240]
                  %252 = vst [vmem:[%s248 + $0x4] sm:%s240] %v251
                  %v253 = vld [vmem:[%s247 + $0x18] sm:%s240]
                  %254 = vst [vmem:[%s248 + $0x8] sm:%s240] %v253
                  %v255 = vld [vmem:[%s247 + $0x24] sm:%s240]
                  %256 = vst [vmem:[%s248 + $0xc] sm:%s240] %v255
                  %v257 = vld [vmem:[%s247 + $0x30] sm:%s240]
                  %258 = vst [vmem:[%s248 + $0x10] sm:%s240] %v257
                  %v259 = vld [vmem:[%s247 + $0x3c] sm:%s240]
                  %260 = vst [vmem:[%s248 + $0x14] sm:%s240] %v259
                  %v261 = vld [vmem:[%s247 + $0x48] sm:%s240]
                  %262 = vst [vmem:[%s248 + $0x18] sm:%s240] %v261
                  %v263 = vld [vmem:[%s247 + $0x54] sm:%s240]
                  %264 = vst [vmem:[%s248 + $0x1c] sm:%s240] %v263
                  %v265 = vld [vmem:[%s247 + $0x60] sm:%s240]
                  %266 = vst [vmem:[%s248 + $0x20] sm:%s240] %v265
                  %v267 = vld [vmem:[%s247 + $0x6c] sm:%s240]
                  %268 = vst [vmem:[%s248 + $0x24] sm:%s240] %v267
                  %v269 = vld [vmem:[%s247 + $0x78] sm:%s240]
                  %270 = vst [vmem:[%s248 + $0x28] sm:%s240] %v269
                  %v271 = vld [vmem:[%s247 + $0x84] sm:%s240]
                  %272 = vst [vmem:[%s248 + $0x2c] sm:%s240] %v271
                  %v273 = vld [vmem:[%s247 + $0x90] sm:%s240]
                  %274 = vst [vmem:[%s248 + $0x30] sm:%s240] %v273
                  %v275 = vld [vmem:[%s247 + $0x9c] sm:%s240]
                  %276 = vst [vmem:[%s248 + $0x34] sm:%s240] %v275
                  %v277 = vld [vmem:[%s247 + $0xa8] sm:%s240]
                  %278 = vst [vmem:[%s248 + $0x38] sm:%s240] %v277
                  %v279 = vld [vmem:[%s247 + $0xb4] sm:%s240]
                  %280 = vst [vmem:[%s248 + $0x3c] sm:%s240] %v279
                $region59: #{transformer_forward.32} parent=46 // loop_footer
                  %s246 = sadd.s32 1, %s242
                $region60: #{transformer_forward.32} parent=46 // loop_footer_branch
                  %241 = sbr.rel target = $region56
                $region61: #{transformer_forward.32} parent=46 // loop_exit
                  _
              $region47: #{transformer_forward.32} parent=31 // pred_fallthru
                _
            $region32: #{transformer_forward.32} parent=27 // pred_fallthru
              _
            // Predicated region
            $region33: #{transformer_forward.32} parent=27 // pred_check
              _
            $region34: #{transformer_forward.32} parent=27 // pred_check_branch
              %186 = sbr.rel (0) target = $region36
            $region35: #{transformer_forward.32} parent=27 // pred_region
              %s188 = ssub.s32 16, 1
              loop: start=0, step=1, limit=1
              $region37: #{transformer_forward.32} parent=35 // loop_pre_header
                _
              $region38: #{transformer_forward.32} parent=35 // loop_header
                %s190 = sphi 0, %s194
                %p191 = scmp.ge.s32.totalorder %s190, 1
                %s195 = sphi %s180, %s180
                %s196 = sphi %s175, %s175
              $region39: #{transformer_forward.32} parent=35 // loop_header_branch
                %193 = sbr.rel (%p191) target = $region43
              $region40: #{transformer_forward.32} parent=35 // loop_body
                %v197 = vld [vmem:[%s195] sm:%s188]
                %198 = vst [vmem:[%s196] sm:%s188] %v197
                %v199 = vld [vmem:[%s195 + $0xc] sm:%s188]
                %200 = vst [vmem:[%s196 + $0x4] sm:%s188] %v199
                %v201 = vld [vmem:[%s195 + $0x18] sm:%s188]
                %202 = vst [vmem:[%s196 + $0x8] sm:%s188] %v201
                %v203 = vld [vmem:[%s195 + $0x24] sm:%s188]
                %204 = vst [vmem:[%s196 + $0xc] sm:%s188] %v203
                %v205 = vld [vmem:[%s195 + $0x30] sm:%s188]
                %206 = vst [vmem:[%s196 + $0x10] sm:%s188] %v205
                %v207 = vld [vmem:[%s195 + $0x3c] sm:%s188]
                %208 = vst [vmem:[%s196 + $0x14] sm:%s188] %v207
                %v209 = vld [vmem:[%s195 + $0x48] sm:%s188]
                %210 = vst [vmem:[%s196 + $0x18] sm:%s188] %v209
                %v211 = vld [vmem:[%s195 + $0x54] sm:%s188]
                %212 = vst [vmem:[%s196 + $0x1c] sm:%s188] %v211
                %v213 = vld [vmem:[%s195 + $0x60] sm:%s188]
                %214 = vst [vmem:[%s196 + $0x20] sm:%s188] %v213
                %v215 = vld [vmem:[%s195 + $0x6c] sm:%s188]
                %216 = vst [vmem:[%s196 + $0x24] sm:%s188] %v215
                %v217 = vld [vmem:[%s195 + $0x78] sm:%s188]
                %218 = vst [vmem:[%s196 + $0x28] sm:%s188] %v217
                %v219 = vld [vmem:[%s195 + $0x84] sm:%s188]
                %220 = vst [vmem:[%s196 + $0x2c] sm:%s188] %v219
                %v221 = vld [vmem:[%s195 + $0x90] sm:%s188]
                %222 = vst [vmem:[%s196 + $0x30] sm:%s188] %v221
                %v223 = vld [vmem:[%s195 + $0x9c] sm:%s188]
                %224 = vst [vmem:[%s196 + $0x34] sm:%s188] %v223
                %v225 = vld [vmem:[%s195 + $0xa8] sm:%s188]
                %226 = vst [vmem:[%s196 + $0x38] sm:%s188] %v225
                %v227 = vld [vmem:[%s195 + $0xb4] sm:%s188]
                %228 = vst [vmem:[%s196 + $0x3c] sm:%s188] %v227
              $region41: #{transformer_forward.32} parent=35 // loop_footer
                %s194 = sadd.s32 1, %s190
              $region42: #{transformer_forward.32} parent=35 // loop_footer_branch
                %189 = sbr.rel target = $region38
              $region43: #{transformer_forward.32} parent=35 // loop_exit
                _
            $region36: #{transformer_forward.32} parent=27 // pred_fallthru
              _
          $region28: #{transformer_forward.32} parent=23 // pred_fallthru
            _
          %281 = vnop
        $region24: #{transformer_forward.32} parent=19 // pred_fallthru
          _
        // Predicated region
        $region62: #{transformer_forward.32} parent=19 // pred_check
          %p282 = pneg %p104
        $region63: #{transformer_forward.32} parent=19 // pred_check_branch
          %284 = sbr.rel (%p282) target = $region65
        $region64: #{transformer_forward.32} parent=19 // pred_region
          %p285 = scmp.lt.s32.totalorder %s17, 2
          %s286 = scalar_select %p285, %s17, 2
          %s287 = scalar_lea.vmem %s2, %s286
        $region65: #{transformer_forward.32} parent=19 // pred_fallthru
          _
      $region20: #{transformer_forward.32} parent=5 // pred_fallthru
        _
      %p288 = scmp.le.s32.totalorder 1, %s9
      %p289 = scmp.lt.s32.totalorder %s9, 4
      %p290 = pnand %p288, %p289
      %p291 = pneg %p290
      // Predicated region
      $region66: #{transformer_forward.32} parent=5 // pred_check
        _
      $region67: #{transformer_forward.32} parent=5 // pred_check_branch
        %293 = sbr.rel (%p290) target = $region69
      $region68: #{transformer_forward.32} parent=5 // pred_region
        %s294 = ssub.s32 %s9, 1
        %s295 = sand.u32 %s71, 1
        %s296 = sand.u32 %s71, 1
        %s297 = smul.addr %s296, 64
        %s298 = scalar_lea.vmem [#allocation3], %s297
        // Predicated region
        $region70: #{transformer_forward.32} parent=68 // pred_check
          %p299 = pneg %p84
        $region71: #{transformer_forward.32} parent=68 // pred_check_branch
          %301 = sbr.rel (%p299) target = $region73
        $region72: #{transformer_forward.32} parent=68 // pred_region
          _
        $region73: #{transformer_forward.32} parent=68 // pred_fallthru
          _
        %s302 = smul.u32 2, %s19
        %p303 = scmp.lt.s32.totalorder %s302, 1
        %s304 = scalar_select %p303, %s302, 1
        %p305 = scmp.lt.s32.totalorder %s21, 0
        %s306 = scalar_select %p305, %s21, 0
        %s307 = sadd.s32 %s306, %s304
        %s308 = smul.addr %s307, 4
        %s309 = scalar_lea.vmem %s0, %s308
        %p310 = pneg %p56
        %p311 = pneg %p53
        %s312 = sand.u32 %s71, 1
        %s313 = sand.u32 %s71, 1
        %s314 = smul.addr %s313, 64
        %s315 = scalar_lea.vmem [#allocation3], %s314
        %p316 = pneg %p84
        %p317 = pneg %p81
        %p318 = scmp.lt.s32.totalorder %s20, 2
        %s319 = scalar_select %p318, %s20, 2
        %s320 = scalar_lea.vmem %s2, %s319
        %p321 = pneg %p110
        %p322 = pneg %p107
        %p323 = pneg %p138
        %p324 = pneg %p135
        %s325 = sand.u32 %s125, 1
        %s326 = sand.u32 %s125, 1
        %s327 = smul.addr %s326, 8
        %s328 = scalar_lea.vmem [#allocation4], %s327
        %s329 = smul.u32 2, %s19
        %p330 = scmp.lt.s32.totalorder %s329, 1
        %s331 = scalar_select %p330, %s329, 1
        %p332 = scmp.lt.s32.totalorder %s21, 0
        %s333 = scalar_select %p332, %s21, 0
        %s334 = sadd.s32 %s333, %s331
        %s335 = smul.addr %s334, 4
        %s336 = scalar_lea.vmem %s0, %s335
        %s337 = smul.u32 2, %s19
        %s338 = smul.u32 16, %s21
        %p339 = scmp.lt.s32.totalorder %s20, 2
        %s340 = scalar_select %p339, %s20, 2
        %s341 = scalar_lea.vmem %s2, %s340
        %s342 = smul.u32 2, %s19
        %p343 = scmp.eq.s32.totalorder %s21, 0
        // Predicated region
        $region74: #{transformer_forward.32} parent=68 // pred_check
          %p344 = pneg %p343
        $region75: #{transformer_forward.32} parent=68 // pred_check_branch
          %346 = sbr.rel (%p344) target = $region77
        $region76: #{transformer_forward.32} parent=68 // pred_region
          %347 = vst [vmem:[#allocation2] sm:$0xff] 0.0
          %348 = vst [vmem:[#allocation2 + $0x8] sm:$0xff] 0.0
        $region77: #{transformer_forward.32} parent=68 // pred_fallthru
          _
        %v349 = vld [vmem:[#allocation2] sm:$0xff]
        %v350 = vld [vmem:[#allocation2 + $0x8] sm:$0xff]
        %v351 = vld [vmem:[%s336] sm:$0xf]
        %v352 = vld [vmem:[%s336 + $0x4] sm:$0xf]
        %v353 = vld [vmem:[%s298] sm:$0xf]
        %v354 = vld [vmem:[%s298 + $0x4] sm:$0xf]
        %v355 = vld [vmem:[%s298 + $0x8] sm:$0xf]
        %v356 = vld [vmem:[%s298 + $0xc] sm:$0xf]
        %v357 = vld [vmem:[%s298 + $0x10] sm:$0xf]
        %v358 = vld [vmem:[%s298 + $0x14] sm:$0xf]
        %v359 = vld [vmem:[%s298 + $0x18] sm:$0xf]
        %v360 = vld [vmem:[%s298 + $0x1c] sm:$0xf]
        %v361 = vld [vmem:[%s298 + $0x20] sm:$0xf]
        %v362 = vld [vmem:[%s298 + $0x24] sm:$0xf]
        %v363 = vld [vmem:[%s298 + $0x28] sm:$0xf]
        %v364 = vld [vmem:[%s298 + $0x2c] sm:$0xf]
        %v365 = vld [vmem:[%s298 + $0x30] sm:$0xf]
        %v366 = vld [vmem:[%s298 + $0x34] sm:$0xf]
        %v367 = vld [vmem:[%s298 + $0x38] sm:$0xf]
        %v368 = vld [vmem:[%s298 + $0x3c] sm:$0xf]
        %v371 = vunpack.c.l.b16 %v351
        %v372 = vunpack.c.l.b16 %v352
        %v373 = vpack.c.b16 %v372, %v371
        %v391 = vunpack.c.l.b16 %v353
        %v392 = vunpack.c.l.b16 %v354
        %v393 = vunpack.c.l.b16 %v355
        %v394 = vunpack.c.l.b16 %v356
        %v395 = vunpack.c.l.b16 %v357
        %v396 = vunpack.c.l.b16 %v358
        %v397 = vunpack.c.l.b16 %v359
        %v398 = vunpack.c.l.b16 %v360
        %v399 = vunpack.c.l.b16 %v361
        %v400 = vunpack.c.l.b16 %v362
        %v401 = vunpack.c.l.b16 %v363
        %v402 = vunpack.c.l.b16 %v364
        %v403 = vunpack.c.l.b16 %v365
        %v404 = vunpack.c.l.b16 %v366
        %v405 = vunpack.c.l.b16 %v367
        %v406 = vunpack.c.l.b16 %v368
        %v407 = vpack.c.b16 %v392, %v391
        %v408 = vpack.c.b16 %v394, %v393
        %v409 = vpack.c.b16 %v396, %v395
        %v410 = vpack.c.b16 %v398, %v397
        %v411 = vpack.c.b16 %v400, %v399
        %v412 = vpack.c.b16 %v402, %v401
        %v413 = vpack.c.b16 %v404, %v403
        %v414 = vpack.c.b16 %v406, %v405
        %423 = vmatpush.bf16.msra.mxu0 %v414
        %424 = vmatpush.bf16.msra.mxu0 %v413
        %425 = vmatpush.bf16.msra.mxu0 %v412
        %426 = vmatpush.bf16.msra.mxu0 %v411
        %427 = vmatpush.bf16.msra.mxu0 %v410
        %428 = vmatpush.bf16.msra.mxu0 %v409
        %429 = vmatpush.bf16.msra.mxu0 %v408
        %430 = vmatpush.bf16.msra.mxu0 %v407
        %431 = vmatmul.bf16.gmra.mxu0 %v373
        %v432 = vpop.f32.mrf.mxu0
        %v433 = vadd.f32 0.0, %v432
        %v434 = vpop.f32.mrf.mxu0
        %v435 = vadd.f32 0.0, %v434
        %436 = vdwg.mxu0
        %v437 = vadd.f32 %v349, %v433
        %v438 = vadd.f32 %v350, %v435
        %439 = vst [vmem:[#allocation2] sm:$0xff] %v437
        %440 = vst [vmem:[#allocation2 + $0x8] sm:$0xff] %v438
        // Predicated region
        $region78: #{transformer_forward.32} parent=68 // pred_check
          %p441 = pneg %p343
        $region79: #{transformer_forward.32} parent=68 // pred_check_branch
          %443 = sbr.rel (%p441) target = $region81
        $region80: #{transformer_forward.32} parent=68 // pred_region
          %v444 = vld [vmem:[#allocation2] sm:$0xff]
          %v445 = vld [vmem:[#allocation2 + $0x8] sm:$0xff]
          %v446 = vld [vmem:[%s341] sm:$0x1]
          %v448 = vperm.slane %v446, 0
          %v450 = vadd.f32 %v444, %v448
          %v451 = vadd.f32 %v445, %v448
          %v452 = vpack.c.bf16 %v450, %v450
          %v453 = vpack.c.bf16 %v451, %v451
          %454 = vst [vmem:[%s328] sm:$0xf] %v452
          %455 = vst [vmem:[%s328 + $0x4] sm:$0xf] %v453
        $region81: #{transformer_forward.32} parent=68 // pred_fallthru
          _
        %s456 = sand.u32 %s125, 1
        %s457 = sand.u32 %s125, 1
        %s458 = smul.addr %s457, 8
        %s459 = scalar_lea.vmem [#allocation4], %s458
        // Predicated region
        $region82: #{transformer_forward.32} parent=68 // pred_check
          %p460 = pneg %p135
        $region83: #{transformer_forward.32} parent=68 // pred_check_branch
          %462 = sbr.rel (%p460) target = $region85
        $region84: #{transformer_forward.32} parent=68 // pred_region
          %s463 = smul.u32 2, %s19
          %s464 = smul.addr %s463, 3
          %s465 = sadd.s32 %s20, %s464
          %s466 = smul.addr %s465, 4
          %s467 = scalar_lea.vmem %s3, %s466
          // Predicated region
          $region86: #{transformer_forward.32} parent=84 // pred_check
            _
          $region87: #{transformer_forward.32} parent=84 // pred_check_branch
            %469 = sbr.rel (0) target = $region89
          $region88: #{transformer_forward.32} parent=84 // pred_region
            // Predicated region
            $region90: #{transformer_forward.32} parent=88 // pred_check
              _
            $region91: #{transformer_forward.32} parent=88 // pred_check_branch
              %471 = sbr.rel target = $region93
            $region92: #{transformer_forward.32} parent=88 // pred_region
              // Predicated region
              $region105: #{transformer_forward.32} parent=92 // pred_check
                _
              $region106: #{transformer_forward.32} parent=92 // pred_check_branch
                %489 = sbr.rel (0) target = $region108
              $region107: #{transformer_forward.32} parent=92 // pred_region
                loop: start=0, step=1, limit=1
                $region109: #{transformer_forward.32} parent=107 // loop_pre_header
                  _
                $region110: #{transformer_forward.32} parent=107 // loop_header
                  %s491 = sphi 0, %s495
                  %p492 = scmp.ge.s32.totalorder %s491, 1
                  %s496 = sphi %s459, %s459
                  %s497 = sphi %s467, %s467
                $region111: #{transformer_forward.32} parent=107 // loop_header_branch
                  %494 = sbr.rel (%p492) target = $region115
                $region112: #{transformer_forward.32} parent=107 // loop_body
                  _
                $region113: #{transformer_forward.32} parent=107 // loop_footer
                  %s495 = sadd.s32 1, %s491
                $region114: #{transformer_forward.32} parent=107 // loop_footer_branch
                  %490 = sbr.rel target = $region110
                $region115: #{transformer_forward.32} parent=107 // loop_exit
                  _
                %s499 = ssub.s32 16, 1
                loop: start=0, step=1, limit=1
                $region116: #{transformer_forward.32} parent=107 // loop_pre_header
                  _
                $region117: #{transformer_forward.32} parent=107 // loop_header
                  %s501 = sphi 0, %s505
                  %p502 = scmp.ge.s32.totalorder %s501, 1
                  %s506 = sphi %s459, %s459
                  %s507 = sphi %s467, %s467
                $region118: #{transformer_forward.32} parent=107 // loop_header_branch
                  %504 = sbr.rel (%p502) target = $region122
                $region119: #{transformer_forward.32} parent=107 // loop_body
                  %v508 = vld [vmem:[%s506] sm:%s499]
                  %509 = vst [vmem:[%s507] sm:%s499] %v508
                  %v510 = vld [vmem:[%s506 + $0x4] sm:%s499]
                  %511 = vst [vmem:[%s507 + $0xc] sm:%s499] %v510
                $region120: #{transformer_forward.32} parent=107 // loop_footer
                  %s505 = sadd.s32 1, %s501
                $region121: #{transformer_forward.32} parent=107 // loop_footer_branch
                  %500 = sbr.rel target = $region117
                $region122: #{transformer_forward.32} parent=107 // loop_exit
                  _
              $region108: #{transformer_forward.32} parent=92 // pred_fallthru
                _
            $region93: #{transformer_forward.32} parent=88 // pred_fallthru
              _
            // Predicated region
            $region94: #{transformer_forward.32} parent=88 // pred_check
              _
            $region95: #{transformer_forward.32} parent=88 // pred_check_branch
              %473 = sbr.rel (0) target = $region97
            $region96: #{transformer_forward.32} parent=88 // pred_region
              %s475 = ssub.s32 16, 1
              loop: start=0, step=1, limit=1
              $region98: #{transformer_forward.32} parent=96 // loop_pre_header
                _
              $region99: #{transformer_forward.32} parent=96 // loop_header
                %s477 = sphi 0, %s481
                %p478 = scmp.ge.s32.totalorder %s477, 1
                %s482 = sphi %s459, %s459
                %s483 = sphi %s467, %s467
              $region100: #{transformer_forward.32} parent=96 // loop_header_branch
                %480 = sbr.rel (%p478) target = $region104
              $region101: #{transformer_forward.32} parent=96 // loop_body
                %v484 = vld [vmem:[%s482] sm:%s475]
                %485 = vst [vmem:[%s483] sm:%s475] %v484
                %v486 = vld [vmem:[%s482 + $0x4] sm:%s475]
                %487 = vst [vmem:[%s483 + $0xc] sm:%s475] %v486
              $region102: #{transformer_forward.32} parent=96 // loop_footer
                %s481 = sadd.s32 1, %s477
              $region103: #{transformer_forward.32} parent=96 // loop_footer_branch
                %476 = sbr.rel target = $region99
              $region104: #{transformer_forward.32} parent=96 // loop_exit
                _
            $region97: #{transformer_forward.32} parent=88 // pred_fallthru
              _
          $region89: #{transformer_forward.32} parent=84 // pred_fallthru
            _
          %512 = vnop
        $region85: #{transformer_forward.32} parent=68 // pred_fallthru
          _
      $region69: #{transformer_forward.32} parent=5 // pred_fallthru
        _
      %p513 = scmp.le.s32.totalorder 2, %s9
      // Predicated region
      $region123: #{transformer_forward.32} parent=5 // pred_check
        %p514 = pneg %p513
      $region124: #{transformer_forward.32} parent=5 // pred_check_branch
        %516 = sbr.rel (%p514) target = $region126
      $region125: #{transformer_forward.32} parent=5 // pred_region
        %s517 = ssub.s32 %s9, 2
        // Predicated region
        $region127: #{transformer_forward.32} parent=125 // pred_check
          %p518 = pneg %p141
        $region128: #{transformer_forward.32} parent=125 // pred_check_branch
          %520 = sbr.rel (%p518) target = $region130
        $region129: #{transformer_forward.32} parent=125 // pred_region
          %s521 = sand.u32 %s126, 1
          %s522 = sand.u32 %s126, 1
          %s523 = smul.addr %s522, 8
          %s524 = scalar_lea.vmem [#allocation4], %s523
        $region130: #{transformer_forward.32} parent=125 // pred_fallthru
          _
      $region126: #{transformer_forward.32} parent=5 // pred_fallthru
        _
    $region6: #{transformer_forward.32} parent=1 // loop_footer
      %s13 = sadd.s32 1, %s9
    $region7: #{transformer_forward.32} parent=1 // loop_footer_branch
      %8 = sbr.rel target = $region3
    $region8: #{transformer_forward.32} parent=1 // loop_exit
      _

// kernel: transformer_forward.34
$region0: #{transformer_forward.34}
  #allocation0 [shape = 'u32[]', space=smem, size = 0x4, offset = 0x4, fixed_abs, tag = 'smem constant byte address 0x4 - core index']
  #allocation1 [shape = 'u32[72,128]{1,0:T(1,128)}', space=vmem, size = 0x9000, scoped, tag = 'internal scratch']
  #allocation2 [shape = 'f32[16,128]{1,0:T(8,128)}', space=vmem, size = 0x2000, scoped, tag = 'scratch operand']
  %s0 = inlined_call_operand.vmem [shape: bf16[16,128], index: 0, kind: input, shape index: {}]
  %s1 = inlined_call_operand.vmem [shape: bf16[128,128], index: 1, kind: input, shape index: {}]
  %s2 = inlined_call_operand.hbm [shape: f32[1,128], index: 2, kind: input, shape index: {}]
  %s3 = inlined_call_operand.vmem [shape: bf16[16,128], index: 3, kind: input, shape index: {}]
  %s4 = inlined_call_operand.hbm [shape: f32[1,128], index: 4, kind: input, shape index: {}]
  %s5 = inlined_call_operand.hbm [shape: f32[1,128], index: 5, kind: input, shape index: {}]
  %s6 = inlined_call_operand.vmem [shape: bf16[16,128], index: 6, kind: output, shape index: {}]
  %s7 = sld [smem:[#allocation0]]
  $region54: #{transformer_forward.34} parent=0
    _
  %s9 = ssub.s32 1, %s7
  %s10 = scalar_select 0, %s9, %s7
  $region1: #{transformer_forward.34} parent=0
    #allocation3 [shape = 'u8[512]{0}', space=vmem, size = 0x400, scoped, tag = 'input window, operand 2, single buffered']
    #allocation4 [shape = 's32[1]{0}', space=sflag, size = 0x4, scoped, tag = 'scoped memory for transformer_forward.34']
    #allocation5 [shape = 'u8[512]{0}', space=vmem, size = 0x400, scoped, tag = 'input window, operand 4, single buffered']
    #allocation6 [shape = 's32[1]{0}', space=sflag, size = 0x4, scoped, tag = 'scoped memory for transformer_forward.34']
    #allocation7 [shape = 'u8[512]{0}', space=vmem, size = 0x400, scoped, tag = 'input window, operand 5, single buffered']
    %11 = vsyncpa [#allocation4], 0
    %12 = vsyncpa [#allocation6], 0
    // Predicated region
    $region2: #{transformer_forward.34} parent=1 // pred_check
      _
    $region3: #{transformer_forward.34} parent=1 // pred_check_branch
      %14 = sbr.rel (0) target = $region5
    $region4: #{transformer_forward.34} parent=1 // pred_region
      _
    $region5: #{transformer_forward.34} parent=1 // pred_fallthru
      _
    // Predicated region
    $region6: #{transformer_forward.34} parent=1 // pred_check
      _
    $region7: #{transformer_forward.34} parent=1 // pred_check_branch
      %16 = sbr.rel (0) target = $region9
    $region8: #{transformer_forward.34} parent=1 // pred_region
      _
    $region9: #{transformer_forward.34} parent=1 // pred_fallthru
      _
    // Predicated region
    $region10: #{transformer_forward.34} parent=1 // pred_check
      _
    $region11: #{transformer_forward.34} parent=1 // pred_check_branch
      %18 = sbr.rel (0) target = $region13
    $region12: #{transformer_forward.34} parent=1 // pred_region
      %20 = vsyncadd [#allocation4], 0
      %s22 = sshll.u32 %s2, 4
      %s23 = int_to_ptr.hbm [resolvable:$true] %s22
      %s24 = sshll.u32 [#allocation3], 4
      %s25 = int_to_ptr.vmem [resolvable:$true] %s24
      %27 = dma.hbm_to_vmem [thread:$0]  %s23, 16, %s25, [#allocation4]
    $region13: #{transformer_forward.34} parent=1 // pred_fallthru
      _
    // Predicated region
    $region14: #{transformer_forward.34} parent=1 // pred_check
      _
    $region15: #{transformer_forward.34} parent=1 // pred_check_branch
      %29 = sbr.rel (0) target = $region17
    $region16: #{transformer_forward.34} parent=1 // pred_region
      _
    $region17: #{transformer_forward.34} parent=1 // pred_fallthru
      _
    // Predicated region
    $region18: #{transformer_forward.34} parent=1 // pred_check
      _
    $region19: #{transformer_forward.34} parent=1 // pred_check_branch
      %31 = sbr.rel (0) target = $region21
    $region20: #{transformer_forward.34} parent=1 // pred_region
      %33 = vsyncadd [#allocation6], 0
      %s35 = sshll.u32 %s4, 4
      %s36 = int_to_ptr.hbm [resolvable:$true] %s35
      %s37 = sshll.u32 [#allocation5], 4
      %s38 = int_to_ptr.vmem [resolvable:$true] %s37
      %40 = dma.hbm_to_vmem [thread:$0]  %s36, 16, %s38, [#allocation6]
    $region21: #{transformer_forward.34} parent=1 // pred_fallthru
      _
    // Predicated region
    $region22: #{transformer_forward.34} parent=1 // pred_check
      _
    $region23: #{transformer_forward.34} parent=1 // pred_check_branch
      %42 = sbr.rel (0) target = $region25
    $region24: #{transformer_forward.34} parent=1 // pred_region
      %44 = vsyncadd [#allocation6], 0
      %s46 = sshll.u32 %s5, 4
      %s47 = int_to_ptr.hbm [resolvable:$true] %s46
      %s48 = sshll.u32 [#allocation7], 4
      %s49 = int_to_ptr.vmem [resolvable:$true] %s48
      %51 = dma.hbm_to_vmem [thread:$0]  %s47, 16, %s49, [#allocation6]
    $region25: #{transformer_forward.34} parent=1 // pred_fallthru
      _
    // Predicated region
    $region26: #{transformer_forward.34} parent=1 // pred_check
      _
    $region27: #{transformer_forward.34} parent=1 // pred_check_branch
      %53 = sbr.rel (0) target = $region29
    $region28: #{transformer_forward.34} parent=1 // pred_region
      %55 = dma.done [#allocation4], 16
    $region29: #{transformer_forward.34} parent=1 // pred_fallthru
      _
    // Predicated region
    $region30: #{transformer_forward.34} parent=1 // pred_check
      _
    $region31: #{transformer_forward.34} parent=1 // pred_check_branch
      %57 = sbr.rel (0) target = $region33
    $region32: #{transformer_forward.34} parent=1 // pred_region
      %59 = dma.done [#allocation6], 16
    $region33: #{transformer_forward.34} parent=1 // pred_fallthru
      _
    // Predicated region
    $region34: #{transformer_forward.34} parent=1 // pred_check
      _
    $region35: #{transformer_forward.34} parent=1 // pred_check_branch
      %61 = sbr.rel (0) target = $region37
    $region36: #{transformer_forward.34} parent=1 // pred_region
      %63 = dma.done [#allocation6], 16
    $region37: #{transformer_forward.34} parent=1 // pred_fallthru
      _
    %p64 = scmp.eq.s32.totalorder 0, 0
    // Predicated region
    $region38: #{transformer_forward.34} parent=1 // pred_check
      %p65 = pneg %p64
    $region39: #{transformer_forward.34} parent=1 // pred_check_branch
      %67 = sbr.rel (%p65) target = $region41
    $region40: #{transformer_forward.34} parent=1 // pred_region
      %68 = vst [vmem:[#allocation2] sm:$0xff] 0.0
      %69 = vst [vmem:[#allocation2 + $0x8] sm:$0xff] 0.0
    $region41: #{transformer_forward.34} parent=1 // pred_fallthru
      _
    %v70 = vld [vmem:[#allocation2] sm:$0xff]
    %v71 = vld [vmem:[#allocation2 + $0x8] sm:$0xff]
    %v72 = vld [vmem:[%s0] sm:$0xf]
    %v73 = vld [vmem:[%s0 + $0x4] sm:$0xf]
    %v74 = vld [vmem:[%s1] sm:$0xf]
    %v75 = vld [vmem:[%s1 + $0x4] sm:$0xf]
    %v76 = vld [vmem:[%s1 + $0x8] sm:$0xf]
    %v77 = vld [vmem:[%s1 + $0xc] sm:$0xf]
    %v78 = vld [vmem:[%s1 + $0x10] sm:$0xf]
    %v79 = vld [vmem:[%s1 + $0x14] sm:$0xf]
    %v80 = vld [vmem:[%s1 + $0x18] sm:$0xf]
    %v81 = vld [vmem:[%s1 + $0x1c] sm:$0xf]
    %v82 = vld [vmem:[%s1 + $0x20] sm:$0xf]
    %v83 = vld [vmem:[%s1 + $0x24] sm:$0xf]
    %v84 = vld [vmem:[%s1 + $0x28] sm:$0xf]
    %v85 = vld [vmem:[%s1 + $0x2c] sm:$0xf]
    %v86 = vld [vmem:[%s1 + $0x30] sm:$0xf]
    %v87 = vld [vmem:[%s1 + $0x34] sm:$0xf]
    %v88 = vld [vmem:[%s1 + $0x38] sm:$0xf]
    %v89 = vld [vmem:[%s1 + $0x3c] sm:$0xf]
    %v92 = vunpack.c.l.b16 %v72
    %v93 = vunpack.c.l.b16 %v73
    %v94 = vpack.c.b16 %v93, %v92
    %v112 = vunpack.c.l.b16 %v74
    %v113 = vunpack.c.l.b16 %v75
    %v114 = vunpack.c.l.b16 %v76
    %v115 = vunpack.c.l.b16 %v77
    %v116 = vunpack.c.l.b16 %v78
    %v117 = vunpack.c.l.b16 %v79
    %v118 = vunpack.c.l.b16 %v80
    %v119 = vunpack.c.l.b16 %v81
    %v120 = vunpack.c.l.b16 %v82
    %v121 = vunpack.c.l.b16 %v83
    %v122 = vunpack.c.l.b16 %v84
    %v123 = vunpack.c.l.b16 %v85
    %v124 = vunpack.c.l.b16 %v86
    %v125 = vunpack.c.l.b16 %v87
    %v126 = vunpack.c.l.b16 %v88
    %v127 = vunpack.c.l.b16 %v89
    %v128 = vpack.c.b16 %v113, %v112
    %v129 = vpack.c.b16 %v115, %v114
    %v130 = vpack.c.b16 %v117, %v116
    %v131 = vpack.c.b16 %v119, %v118
    %v132 = vpack.c.b16 %v121, %v120
    %v133 = vpack.c.b16 %v123, %v122
    %v134 = vpack.c.b16 %v125, %v124
    %v135 = vpack.c.b16 %v127, %v126
    %144 = vmatpush.bf16.msra.mxu0 %v135
    %145 = vmatpush.bf16.msra.mxu0 %v134
    %146 = vmatpush.bf16.msra.mxu0 %v133
    %147 = vmatpush.bf16.msra.mxu0 %v132
    %148 = vmatpush.bf16.msra.mxu0 %v131
    %149 = vmatpush.bf16.msra.mxu0 %v130
    %150 = vmatpush.bf16.msra.mxu0 %v129
    %151 = vmatpush.bf16.msra.mxu0 %v128
    %152 = vmatmul.bf16.gmra.mxu0 %v94
    %v153 = vpop.f32.mrf.mxu0
    %v154 = vadd.f32 0.0, %v153
    %v155 = vpop.f32.mrf.mxu0
    %v156 = vadd.f32 0.0, %v155
    %157 = vdwg.mxu0
    %v158 = vadd.f32 %v70, %v154
    %v159 = vadd.f32 %v71, %v156
    %160 = vst [vmem:[#allocation2] sm:$0xff] %v158
    %161 = vst [vmem:[#allocation2 + $0x8] sm:$0xff] %v159
    // Predicated region
    $region42: #{transformer_forward.34} parent=1 // pred_check
      %p162 = pneg %p64
    $region43: #{transformer_forward.34} parent=1 // pred_check_branch
      %164 = sbr.rel (%p162) target = $region45
    $region44: #{transformer_forward.34} parent=1 // pred_region
      %v165 = vld [vmem:[#allocation2] sm:$0xff]
      %v166 = vld [vmem:[#allocation2 + $0x8] sm:$0xff]
      %v167 = vld [vmem:[#allocation3] sm:$0x1]
      %v169 = vperm.slane %v167, 0
      %v171 = vadd.f32 %v165, %v169
      %v172 = vadd.f32 %v166, %v169
      %v173 = vld [vmem:[%s3] sm:$0xf]
      %v174 = vld [vmem:[%s3 + $0x4] sm:$0xf]
      %v175 = vunpack.c.l.bf16 %v173
      %v176 = vunpack.c.l.bf16 %v174
      %v177 = vadd.f32 %v171, %v175
      %v178 = vadd.f32 %v172, %v176
      %179 = vadd.xlane.f32.xlu0 %v177
      %v180 = vpop.xlane.xlu0 %179
      %181 = vadd.xlane.f32.xlu0 %v178
      %v182 = vpop.xlane.xlu0 %181
      %v183 = vrcp.pop 128.0
      %v184 = vmul.f32 128.0, %v183
      %v185 = vsub.f32 1.0, %v184
      %v186 = vmul.f32 %v183, %v185
      %v187 = vadd.f32 %v183, %v186
      %vm188 = vweird.f32 %v183
      %v189 = vsel %vm188, %v183, %v187
      %v190 = vmul.f32 %v180, %v189
      %v191 = vmul.f32 %v182, %v189
      %v192 = vsub.f32 %v177, %v190
      %v193 = vsub.f32 %v178, %v191
      %v194 = vmul.f32 %v192, %v192
      %v195 = vmul.f32 %v193, %v193
      %196 = vadd.xlane.f32.xlu0 %v194
      %v197 = vpop.xlane.xlu0 %196
      %198 = vadd.xlane.f32.xlu0 %v195
      %v199 = vpop.xlane.xlu0 %198
      %v200 = vmul.f32 %v197, %v189
      %v201 = vmul.f32 %v199, %v189
      %v202 = vadd.f32 %v200, 1e-05
      %v203 = vadd.f32 %v201, 1e-05
      %v204 = vrsqrt.pop %v202
      %v205 = vmul.f32 %v204, %v202
      %v206 = vmul.f32 %v205, %v204
      %v207 = vmul.f32 0.5, %v206
      %v208 = vsub.f32 1.5, %v207
      %v209 = vmul.f32 %v204, %v208
      %vm210 = vweird.f32 %v202
      %vm211 = vweird.f32 %v204
      %vm212 = vmor %vm210, %vm211
      %v213 = vsel %vm212, %v204, %v209
      %v214 = vrsqrt.pop %v203
      %v215 = vmul.f32 %v214, %v203
      %v216 = vmul.f32 %v215, %v214
      %v217 = vmul.f32 0.5, %v216
      %v218 = vsub.f32 1.5, %v217
      %v219 = vmul.f32 %v214, %v218
      %vm220 = vweird.f32 %v203
      %vm221 = vweird.f32 %v214
      %vm222 = vmor %vm220, %vm221
      %v223 = vsel %vm222, %v214, %v219
      %v224 = vmul.f32 %v192, %v213
      %v225 = vmul.f32 %v193, %v223
      %v226 = vld [vmem:[#allocation5] sm:$0x1]
      %v228 = vperm.slane %v226, 0
      %v230 = vmul.f32 %v224, %v228
      %v231 = vmul.f32 %v225, %v228
      %v232 = vld [vmem:[#allocation7] sm:$0x1]
      %v234 = vperm.slane %v232, 0
      %v236 = vadd.f32 %v230, %v234
      %v237 = vadd.f32 %v231, %v234
      %v238 = vpack.c.bf16 %v236, %v236
      %v239 = vpack.c.bf16 %v237, %v237
      %240 = vst [vmem:[%s6] sm:$0xf] %v238
      %241 = vst [vmem:[%s6 + $0x4] sm:$0xf] %v239
    $region45: #{transformer_forward.34} parent=1 // pred_fallthru
      _
    // Predicated region
    $region46: #{transformer_forward.34} parent=1 // pred_check
      _
    $region47: #{transformer_forward.34} parent=1 // pred_check_branch
      %243 = sbr.rel (0) target = $region49
    $region48: #{transformer_forward.34} parent=1 // pred_region
      _
    $region49: #{transformer_forward.34} parent=1 // pred_fallthru
      _
    // Predicated region
    $region50: #{transformer_forward.34} parent=1 // pred_check
      _
    $region51: #{transformer_forward.34} parent=1 // pred_check_branch
      %245 = sbr.rel (0) target = $region53
    $region52: #{transformer_forward.34} parent=1 // pred_region
      _
    $region53: #{transformer_forward.34} parent=1 // pred_fallthru
      _
    %246 = vsyncpa [#allocation4], 1
    %247 = vsyncpa [#allocation6], 1

// kernel: transformer_forward.33
$region0: #{transformer_forward.33}
  #allocation0 [shape = 'u32[]', space=smem, size = 0x4, offset = 0x4, fixed_abs, tag = 'smem constant byte address 0x4 - core index']
  #allocation1 [shape = 'u32[72,128]{1,0:T(1,128)}', space=vmem, size = 0x9000, scoped, tag = 'internal scratch']
  #allocation2 [shape = 'f32[4,8,1]{2,1,0:T(8,128)}', space=vmem, size = 0x4000, scoped, tag = 'scratch operand']
  #allocation3 [shape = 'f32[4,8,1]{2,1,0:T(8,128)}', space=vmem, size = 0x4000, scoped, tag = 'scratch operand']
  #allocation4 [shape = 'f32[8,128]{1,0:T(8,128)}', space=vmem, size = 0x1000, scoped, tag = 'scratch operand']
  %s0 = inlined_call_operand.vmem [shape: bf16[2,8,384], index: 0, kind: input, shape index: {}, may-alias: {0,1,2}]
  %s1 = inlined_call_operand.vmem [shape: bf16[2,8,384], index: 1, kind: input, shape index: {}, may-alias: {0,1,2}]
  %s2 = inlined_call_operand.vmem [shape: bf16[2,8,384], index: 2, kind: input, shape index: {}, may-alias: {0,1,2}]
  %s3 = inlined_call_operand.vmem [shape: bf16[2,8,128], index: 3, kind: output, shape index: {}]
  %s4 = sld [smem:[#allocation0]]
  $region53: #{transformer_forward.33} parent=0
    _
  %s6 = ssub.s32 1, %s4
  %s7 = scalar_select 0, %s6, %s4
  loop: start=0, step=1, limit=4
  $region2: #{transformer_forward.33} parent=0 // loop_pre_header
    _
  $region3: #{transformer_forward.33} parent=0 // loop_header
    %s9 = sphi 0, %s13
    %p10 = scmp.ge.s32.totalorder %s9, 4
    %s16 = sphi 0, %s35
    %s17 = sphi 0, %s31
    %s18 = sphi 0, %s27
    %s19 = sphi 0, %s16
    %s20 = sphi 0, %s17
    %s21 = sphi 0, %s18
    %s22 = sphi 0, %s19
    %s23 = sphi 0, %s20
    %s24 = sphi 0, %s21
    %s40 = sphi 0, %s42
    %s43 = sphi 0, %s40
    %s44 = sphi 0, %s43
    %s60 = sphi 0, %s44
    %s68 = sphi 0, %s70
    %s71 = sphi 0, %s68
    %s72 = sphi 0, %s71
    %s88 = sphi 0, %s72
    %s96 = sphi 0, %s98
    %s99 = sphi 0, %s96
    %s100 = sphi 0, %s99
    %s116 = sphi 0, %s100
    %s124 = sphi 0, %s126
    %s127 = sphi 0, %s124
    %s128 = sphi 0, %s127
    %s144 = sphi 0, %s128
  $region4: #{transformer_forward.33} parent=0 // loop_header_branch
    %12 = sbr.rel (%p10) target = $region8
  $region5: #{transformer_forward.33} parent=0 // loop_body
    %s14 = ssub.s32 %s9, 1
    %s15 = ssub.s32 %s9, 2
    %s25 = sadd.s32 1, %s18
    %p26 = scmp.ge.s32.totalorder %s25, 1
    %s27 = scalar_select %p26, 0, %s25
    %s28 = sadd.s32 1, %s17
    %s29 = scalar_select %p26, %s28, %s17
    %p30 = scmp.ge.s32.totalorder %s29, 1
    %s31 = scalar_select %p30, 0, %s29
    %s32 = sadd.s32 1, %s16
    %s33 = scalar_select %p30, %s32, %s16
    %p34 = scmp.ge.s32.totalorder %s33, 2
    %s35 = scalar_select %p34, 0, %s33
    %s36 = ssub.s32 %s16, %s35
    %s37 = ssub.s32 %s17, %s31
    %s38 = sor.u32 %s36, %s37
    %p39 = scmp.eq.s32.totalorder %s38, 0
    %s41 = sadd.s32 %s40, 1
    %s42 = scalar_select %p39, %s40, %s41
    %p45 = pneg %p39
    %p46 = scmp.eq.s32.totalorder %s9, 1
    %p47 = por %p45, %p46
    %p48 = scmp.ne.s32.totalorder %s40, %s43
    %p49 = scmp.eq.s32.totalorder %s9, 0
    %p50 = por %p48, %p49
    %p51 = scmp.ne.s32.totalorder %s40, %s43
    %p52 = scmp.eq.s32.totalorder %s14, 1
    %p53 = por %p51, %p52
    %p54 = scmp.ne.s32.totalorder %s43, %s44
    %p55 = scmp.eq.s32.totalorder %s14, 0
    %p56 = por %p54, %p55
    %p57 = scmp.ne.s32.totalorder %s43, %s44
    %p58 = scmp.eq.s32.totalorder %s15, 1
    %p59 = por %p57, %p58
    %p61 = scmp.ne.s32.totalorder %s44, %s60
    %p62 = scmp.eq.s32.totalorder %s15, 0
    %p63 = por %p61, %p62
    %s64 = ssub.s32 %s16, %s35
    %s65 = ssub.s32 %s18, %s27
    %s66 = sor.u32 %s64, %s65
    %p67 = scmp.eq.s32.totalorder %s66, 0
    %s69 = sadd.s32 %s68, 1
    %s70 = scalar_select %p67, %s68, %s69
    %p73 = pneg %p67
    %p74 = scmp.eq.s32.totalorder %s9, 1
    %p75 = por %p73, %p74
    %p76 = scmp.ne.s32.totalorder %s68, %s71
    %p77 = scmp.eq.s32.totalorder %s9, 0
    %p78 = por %p76, %p77
    %p79 = scmp.ne.s32.totalorder %s68, %s71
    %p80 = scmp.eq.s32.totalorder %s14, 1
    %p81 = por %p79, %p80
    %p82 = scmp.ne.s32.totalorder %s71, %s72
    %p83 = scmp.eq.s32.totalorder %s14, 0
    %p84 = por %p82, %p83
    %p85 = scmp.ne.s32.totalorder %s71, %s72
    %p86 = scmp.eq.s32.totalorder %s15, 1
    %p87 = por %p85, %p86
    %p89 = scmp.ne.s32.totalorder %s72, %s88
    %p90 = scmp.eq.s32.totalorder %s15, 0
    %p91 = por %p89, %p90
    %s92 = ssub.s32 %s16, %s35
    %s93 = ssub.s32 %s18, %s27
    %s94 = sor.u32 %s92, %s93
    %p95 = scmp.eq.s32.totalorder %s94, 0
    %s97 = sadd.s32 %s96, 1
    %s98 = scalar_select %p95, %s96, %s97
    %p101 = pneg %p95
    %p102 = scmp.eq.s32.totalorder %s9, 1
    %p103 = por %p101, %p102
    %p104 = scmp.ne.s32.totalorder %s96, %s99
    %p105 = scmp.eq.s32.totalorder %s9, 0
    %p106 = por %p104, %p105
    %p107 = scmp.ne.s32.totalorder %s96, %s99
    %p108 = scmp.eq.s32.totalorder %s14, 1
    %p109 = por %p107, %p108
    %p110 = scmp.ne.s32.totalorder %s99, %s100
    %p111 = scmp.eq.s32.totalorder %s14, 0
    %p112 = por %p110, %p111
    %p113 = scmp.ne.s32.totalorder %s99, %s100
    %p114 = scmp.eq.s32.totalorder %s15, 1
    %p115 = por %p113, %p114
    %p117 = scmp.ne.s32.totalorder %s100, %s116
    %p118 = scmp.eq.s32.totalorder %s15, 0
    %p119 = por %p117, %p118
    %s120 = ssub.s32 %s16, %s35
    %s121 = ssub.s32 %s17, %s31
    %s122 = sor.u32 %s120, %s121
    %p123 = scmp.eq.s32.totalorder %s122, 0
    %s125 = sadd.s32 %s124, 1
    %s126 = scalar_select %p123, %s124, %s125
    %p129 = pneg %p123
    %p130 = scmp.eq.s32.totalorder %s9, 1
    %p131 = por %p129, %p130
    %p132 = scmp.ne.s32.totalorder %s124, %s127
    %p133 = scmp.eq.s32.totalorder %s9, 0
    %p134 = por %p132, %p133
    %p135 = scmp.ne.s32.totalorder %s124, %s127
    %p136 = scmp.eq.s32.totalorder %s14, 1
    %p137 = por %p135, %p136
    %p138 = scmp.ne.s32.totalorder %s127, %s128
    %p139 = scmp.eq.s32.totalorder %s14, 0
    %p140 = por %p138, %p139
    %p141 = scmp.ne.s32.totalorder %s127, %s128
    %p142 = scmp.eq.s32.totalorder %s15, 1
    %p143 = por %p141, %p142
    %p145 = scmp.ne.s32.totalorder %s128, %s144
    %p146 = scmp.eq.s32.totalorder %s15, 0
    %p147 = por %p145, %p146
    %p148 = scmp.le.s32.totalorder 1, %s9
    %p149 = scmp.lt.s32.totalorder %s9, 3
    %p150 = pnand %p148, %p149
    %p151 = pneg %p150
    // Predicated region
    $region9: #{transformer_forward.33} parent=5 // pred_check
      _
    $region10: #{transformer_forward.33} parent=5 // pred_check_branch
      %153 = sbr.rel (%p150) target = $region12
    $region11: #{transformer_forward.33} parent=5 // pred_region
      %s154 = ssub.s32 %s9, 1
    $region12: #{transformer_forward.33} parent=5 // pred_fallthru
      _
    %p155 = scmp.lt.s32.totalorder %s9, 2
    // Predicated region
    $region13: #{transformer_forward.33} parent=5 // pred_check
      %p156 = pneg %p155
    $region14: #{transformer_forward.33} parent=5 // pred_check_branch
      %158 = sbr.rel (%p156) target = $region16
    $region15: #{transformer_forward.33} parent=5 // pred_region
      // Predicated region
      $region17: #{transformer_forward.33} parent=15 // pred_check
        %p159 = pneg %p50
      $region18: #{transformer_forward.33} parent=15 // pred_check_branch
        %161 = sbr.rel (%p159) target = $region20
      $region19: #{transformer_forward.33} parent=15 // pred_region
        %p162 = scmp.lt.s32.totalorder %s16, 1
        %s163 = scalar_select %p162, %s16, 1
        %p164 = scmp.lt.s32.totalorder %s17, 0
        %s165 = scalar_select %p164, %s17, 0
        %s166 = smul.addr %s165, 3
        %s167 = smul.addr %s163, 3
        %s168 = sadd.s32 %s166, %s167
        %s169 = smul.addr %s168, 4
        %s170 = scalar_lea.vmem %s0, %s169
      $region20: #{transformer_forward.33} parent=15 // pred_fallthru
        _
      // Predicated region
      $region21: #{transformer_forward.33} parent=15 // pred_check
        %p171 = pneg %p78
      $region22: #{transformer_forward.33} parent=15 // pred_check_branch
        %173 = sbr.rel (%p171) target = $region24
      $region23: #{transformer_forward.33} parent=15 // pred_region
        %p174 = scmp.lt.s32.totalorder %s16, 1
        %s175 = scalar_select %p174, %s16, 1
        %p176 = scmp.lt.s32.totalorder %s18, 0
        %s177 = scalar_select %p176, %s18, 0
        %s178 = smul.addr %s177, 3
        %s179 = sadd.s32 1, %s178
        %s180 = smul.addr %s175, 3
        %s181 = sadd.s32 %s179, %s180
        %s182 = smul.addr %s181, 4
        %s183 = scalar_lea.vmem %s1, %s182
      $region24: #{transformer_forward.33} parent=15 // pred_fallthru
        _
      // Predicated region
      $region25: #{transformer_forward.33} parent=15 // pred_check
        %p184 = pneg %p106
      $region26: #{transformer_forward.33} parent=15 // pred_check_branch
        %186 = sbr.rel (%p184) target = $region28
      $region27: #{transformer_forward.33} parent=15 // pred_region
        %p187 = scmp.lt.s32.totalorder %s16, 1
        %s188 = scalar_select %p187, %s16, 1
        %p189 = scmp.lt.s32.totalorder %s18, 0
        %s190 = scalar_select %p189, %s18, 0
        %s191 = smul.addr %s190, 3
        %s192 = sadd.s32 2, %s191
        %s193 = smul.addr %s188, 3
        %s194 = sadd.s32 %s192, %s193
        %s195 = smul.addr %s194, 4
        %s196 = scalar_lea.vmem %s2, %s195
      $region28: #{transformer_forward.33} parent=15 // pred_fallthru
        _
    $region16: #{transformer_forward.33} parent=5 // pred_fallthru
      _
    %p197 = scmp.le.s32.totalorder 1, %s9
    %p198 = scmp.lt.s32.totalorder %s9, 3
    %p199 = pnand %p197, %p198
    %p200 = pneg %p199
    // Predicated region
    $region29: #{transformer_forward.33} parent=5 // pred_check
      _
    $region30: #{transformer_forward.33} parent=5 // pred_check_branch
      %202 = sbr.rel (%p199) target = $region32
    $region31: #{transformer_forward.33} parent=5 // pred_region
      %s203 = ssub.s32 %s9, 1
      %p204 = scmp.lt.s32.totalorder %s19, 1
      %s205 = scalar_select %p204, %s19, 1
      %p206 = scmp.lt.s32.totalorder %s20, 0
      %s207 = scalar_select %p206, %s20, 0
      %s208 = smul.addr %s207, 3
      %s209 = smul.addr %s205, 3
      %s210 = sadd.s32 %s208, %s209
      %s211 = smul.addr %s210, 4
      %s212 = scalar_lea.vmem %s0, %s211
      %p213 = pneg %p56
      %p214 = pneg %p53
      %p215 = scmp.lt.s32.totalorder %s19, 1
      %s216 = scalar_select %p215, %s19, 1
      %p217 = scmp.lt.s32.totalorder %s21, 0
      %s218 = scalar_select %p217, %s21, 0
      %s219 = smul.addr %s218, 3
      %s220 = sadd.s32 1, %s219
      %s221 = smul.addr %s216, 3
      %s222 = sadd.s32 %s220, %s221
      %s223 = smul.addr %s222, 4
      %s224 = scalar_lea.vmem %s1, %s223
      %p225 = pneg %p84
      %p226 = pneg %p81
      %p227 = scmp.lt.s32.totalorder %s19, 1
      %s228 = scalar_select %p227, %s19, 1
      %p229 = scmp.lt.s32.totalorder %s21, 0
      %s230 = scalar_select %p229, %s21, 0
      %s231 = smul.addr %s230, 3
      %s232 = sadd.s32 2, %s231
      %s233 = smul.addr %s228, 3
      %s234 = sadd.s32 %s232, %s233
      %s235 = smul.addr %s234, 4
      %s236 = scalar_lea.vmem %s2, %s235
      %p237 = pneg %p112
      %p238 = pneg %p109
      %p239 = pneg %p140
      %p240 = pneg %p137
      %p241 = scmp.lt.s32.totalorder %s19, 1
      %s242 = scalar_select %p241, %s19, 1
      %p243 = scmp.lt.s32.totalorder %s20, 0
      %s244 = scalar_select %p243, %s20, 0
      %s245 = sadd.s32 %s244, %s242
      %s246 = smul.addr %s245, 4
      %s247 = scalar_lea.vmem %s3, %s246
      %p248 = scmp.lt.s32.totalorder %s19, 1
      %s249 = scalar_select %p248, %s19, 1
      %p250 = scmp.lt.s32.totalorder %s20, 0
      %s251 = scalar_select %p250, %s20, 0
      %s252 = smul.addr %s251, 3
      %s253 = smul.addr %s249, 3
      %s254 = sadd.s32 %s252, %s253
      %s255 = smul.addr %s254, 4
      %s256 = scalar_lea.vmem %s0, %s255
      %p257 = scmp.lt.s32.totalorder %s19, 1
      %s258 = scalar_select %p257, %s19, 1
      %p259 = scmp.lt.s32.totalorder %s21, 0
      %s260 = scalar_select %p259, %s21, 0
      %s261 = smul.addr %s260, 3
      %s262 = sadd.s32 1, %s261
      %s263 = smul.addr %s258, 3
      %s264 = sadd.s32 %s262, %s263
      %s265 = smul.addr %s264, 4
      %s266 = scalar_lea.vmem %s1, %s265
      %p267 = scmp.lt.s32.totalorder %s19, 1
      %s268 = scalar_select %p267, %s19, 1
      %p269 = scmp.lt.s32.totalorder %s21, 0
      %s270 = scalar_select %p269, %s21, 0
      %s271 = smul.addr %s270, 3
      %s272 = sadd.s32 2, %s271
      %s273 = smul.addr %s268, 3
      %s274 = sadd.s32 %s272, %s273
      %s275 = smul.addr %s274, 4
      %s276 = scalar_lea.vmem %s2, %s275
      %p277 = scmp.lt.s32.totalorder %s19, 1
      %s278 = scalar_select %p277, %s19, 1
      %p279 = scmp.lt.s32.totalorder %s20, 0
      %s280 = scalar_select %p279, %s20, 0
      %s281 = sadd.s32 %s280, %s278
      %s282 = smul.addr %s281, 4
      %s283 = scalar_lea.vmem %s3, %s282
      %p285 = scmp.eq.s32.totalorder %s21, 0
      // Predicated region
      $region33: #{transformer_forward.33} parent=31 // pred_check
        %p286 = pneg %p285
      $region34: #{transformer_forward.33} parent=31 // pred_check_branch
        %288 = sbr.rel (%p286) target = $region36
      $region35: #{transformer_forward.33} parent=31 // pred_region
        %vm289 = vcmask 7168
        %290 = vst.msk [vmem:[#allocation2] sm:$0xff] %vm289, -inf
        %291 = vst.msk [vmem:[#allocation2 + $0x8] sm:$0xff] %vm289, -inf
        %292 = vst.msk [vmem:[#allocation2 + $0x10] sm:$0xff] %vm289, -inf
        %293 = vst.msk [vmem:[#allocation2 + $0x18] sm:$0xff] %vm289, -inf
        %294 = vst.msk [vmem:[#allocation3] sm:$0xff] %vm289, 0.0
        %295 = vst.msk [vmem:[#allocation3 + $0x8] sm:$0xff] %vm289, 0.0
        %296 = vst.msk [vmem:[#allocation3 + $0x10] sm:$0xff] %vm289, 0.0
        %297 = vst.msk [vmem:[#allocation3 + $0x18] sm:$0xff] %vm289, 0.0
        %298 = vst [vmem:[#allocation4] sm:$0xff] 0.0
      $region36: #{transformer_forward.33} parent=31 // pred_fallthru
        _
      %v299 = vld [vmem:[%s256] sm:$0xf]
      %v300 = vunpack.c.l.bf16 %v299
      %v301 = vmul.f32 %v300, 0.17675781
      %v302 = vpack.c.bf16 %v301, %v301
      %v303 = vld [vmem:[%s266] sm:$0xf]
      %v304 = vld [vmem:[%s276] sm:$0xf]
      %vm305 = vcmask 261120
      %v307 = vsel %vm305, %v302, 0
      %v310 = vsel %vm305, %v303, 0
      %312 = vmatpush.bf16.xpose.msra.mxu0 0
      %313 = vmatpush.bf16.xpose.msra.mxu0 0
      %314 = vmatpush.bf16.xpose.msra.mxu0 0
      %315 = vmatpush.bf16.xpose.msra.mxu0 0
      %316 = vmatpush.bf16.xpose.msra.mxu0 0
      %317 = vmatpush.bf16.xpose.msra.mxu0 0
      %318 = vmatpush.bf16.xpose.msra.mxu0 0
      %319 = vmatpush.bf16.xpose.msra.mxu0 %v310
      %320 = vmatmul.bf16.gmra.mxu0 %v307
      %v321 = vpop.f32.mrf.mxu0
      %v322 = vadd.f32 0.0, %v321
      %v323 = vpop.f32.mrf.mxu0
      %324 = vdwg.mxu0
      %v325 = vld [vmem:[#allocation2] sm:$0xff]
      %vm326 = vcmask 64512
      %v327 = vsel %vm326, %v322, -inf
      %328 = vmax.xlane.f32.xlu0 %v327
      %v329 = vpop.xlane.xlu0 %328
      %v330 = vmax.f32 %v325, %v329
      %v331 = vsub.f32 %v325, %v330
      %v332 = vmul.f32 %v331, 1.442695
      %v333 = vpow.pop %v332
      %335 = vset.pattern.permute.xlu0 0
      %336 = vperm.xlu0 %335, %v330
      %v337 = vpop.permute.xlu0 %336
      %v339 = vsub.f32 %v322, %v337
      %v340 = vmul.f32 %v339, 1.442695
      %v341 = vpow.pop %v340
      %v342 = vld [vmem:[#allocation3] sm:$0xff]
      %v343 = vmul.f32 %v333, %v342
      %v344 = vsel %vm326, %v341, 0.0
      %345 = vadd.xlane.f32.xlu0 %v344
      %v346 = vpop.xlane.xlu0 %345
      %v347 = vadd.f32 %v343, %v346
      %vm348 = vcmask 7168
      %349 = vst.msk [vmem:[#allocation3] sm:$0xff] %vm348, %v347
      %350 = vst.msk [vmem:[#allocation2] sm:$0xff] %vm348, %v330
      %v351 = vpack.c.bf16 %v341, %v341
      %v353 = vsel %vm326, %v351, 0
      %vm355 = vcmask 1043456
      %v357 = vsel %vm355, %v304, 0
      %359 = vmatpush.bf16.msra.mxu0 0
      %360 = vmatpush.bf16.msra.mxu0 0
      %361 = vmatpush.bf16.msra.mxu0 0
      %362 = vmatpush.bf16.msra.mxu0 0
      %363 = vmatpush.bf16.msra.mxu0 0
      %364 = vmatpush.bf16.msra.mxu0 0
      %365 = vmatpush.bf16.msra.mxu0 0
      %366 = vmatpush.bf16.msra.mxu0 %v357
      %367 = vmatmul.bf16.gmra.mxu0 %v353
      %v368 = vpop.f32.mrf.mxu0
      %v369 = vadd.f32 0.0, %v368
      %v370 = vpop.f32.mrf.mxu0
      %371 = vdwg.mxu0
      %v372 = vld [vmem:[#allocation4] sm:$0xff]
      %374 = vset.pattern.permute.xlu0 0
      %375 = vperm.xlu0 %374, %v333
      %v376 = vpop.permute.xlu0 %375
      %v378 = vmul.f32 %v376, %v372
      %v379 = vadd.f32 %v378, %v369
      %380 = vst.msk [vmem:[#allocation4] sm:$0xff] %vm305, %v379
      %v381 = vld [vmem:[%s256] sm:$0xf]
      %v382 = vunpack.c.l.bf16 %v381
      %v383 = vmul.f32 %v382, 0.17675781
      %v384 = vpack.c.bf16 %v383, %v383
      %v385 = vld [vmem:[%s266] sm:$0xf]
      %v386 = vld [vmem:[%s276] sm:$0xf]
      %388 = vrot.lane.b32.xlu0 %v384, 96
      %v389 = vpop.permute.xlu0 %388
      %v391 = vunpack.c.l.b16 %v385
      %v392 = vpack.c.b16 %v391, %v391
      %393 = vrot.lane.b32.xlu0 %v392, 96
      %v394 = vpop.permute.xlu0 %393
      %v396 = vsel %vm305, %v389, 0
      %v399 = vsel %vm305, %v394, 0
      %401 = vmatpush.bf16.xpose.msra.mxu0 0
      %402 = vmatpush.bf16.xpose.msra.mxu0 0
      %403 = vmatpush.bf16.xpose.msra.mxu0 0
      %404 = vmatpush.bf16.xpose.msra.mxu0 0
      %405 = vmatpush.bf16.xpose.msra.mxu0 0
      %406 = vmatpush.bf16.xpose.msra.mxu0 0
      %407 = vmatpush.bf16.xpose.msra.mxu0 0
      %408 = vmatpush.bf16.xpose.msra.mxu0 %v399
      %409 = vmatmul.bf16.gmra.mxu0 %v396
      %v410 = vpop.f32.mrf.mxu0
      %v411 = vadd.f32 0.0, %v410
      %v412 = vpop.f32.mrf.mxu0
      %413 = vdwg.mxu0
      %s414 = scalar_lea.vmem [#allocation2], 8
      %v415 = vld [vmem:[%s414] sm:$0xff]
      %v416 = vsel %vm326, %v411, -inf
      %417 = vmax.xlane.f32.xlu0 %v416
      %v418 = vpop.xlane.xlu0 %417
      %v419 = vmax.f32 %v415, %v418
      %v420 = vsub.f32 %v415, %v419
      %v421 = vmul.f32 %v420, 1.442695
      %v422 = vpow.pop %v421
      %424 = vset.pattern.permute.xlu0 0
      %425 = vperm.xlu0 %424, %v419
      %v426 = vpop.permute.xlu0 %425
      %v428 = vsub.f32 %v411, %v426
      %v429 = vmul.f32 %v428, 1.442695
      %v430 = vpow.pop %v429
      %s431 = scalar_lea.vmem [#allocation3], 8
      %v432 = vld [vmem:[%s431] sm:$0xff]
      %v433 = vmul.f32 %v422, %v432
      %v434 = vsel %vm326, %v430, 0.0
      %435 = vadd.xlane.f32.xlu0 %v434
      %v436 = vpop.xlane.xlu0 %435
      %v437 = vadd.f32 %v433, %v436
      %438 = vst.msk [vmem:[%s431] sm:$0xff] %vm348, %v437
      %439 = vst.msk [vmem:[%s414] sm:$0xff] %vm348, %v419
      %v440 = vpack.c.bf16 %v430, %v430
      %v442 = vunpack.c.l.b16 %v386
      %v443 = vpack.c.b16 %v442, %v442
      %444 = vrot.lane.b32.xlu0 %v443, 96
      %v445 = vpop.permute.xlu0 %444
      %v447 = vsel %vm326, %v440, 0
      %v450 = vsel %vm355, %v445, 0
      %452 = vmatpush.bf16.msra.mxu0 0
      %453 = vmatpush.bf16.msra.mxu0 0
      %454 = vmatpush.bf16.msra.mxu0 0
      %455 = vmatpush.bf16.msra.mxu0 0
      %456 = vmatpush.bf16.msra.mxu0 0
      %457 = vmatpush.bf16.msra.mxu0 0
      %458 = vmatpush.bf16.msra.mxu0 0
      %459 = vmatpush.bf16.msra.mxu0 %v450
      %460 = vmatmul.bf16.gmra.mxu0 %v447
      %v461 = vpop.f32.mrf.mxu0
      %v462 = vadd.f32 0.0, %v461
      %v463 = vpop.f32.mrf.mxu0
      %464 = vdwg.mxu0
      %v465 = vld [vmem:[#allocation4] sm:$0xff]
      %467 = vset.pattern.permute.xlu0 0
      %468 = vperm.xlu0 %467, %v422
      %v469 = vpop.permute.xlu0 %468
      %v471 = vmul.f32 %v469, %v465
      %473 = vrot.lane.b32.xlu0 %v462, 32
      %v474 = vpop.permute.xlu0 %473
      %v476 = vadd.f32 %v471, %v474
      %vm477 = vcmask 523520
      %478 = vst.msk [vmem:[#allocation4] sm:$0xff] %vm477, %v476
      %v479 = vld [vmem:[%s256] sm:$0xf]
      %v480 = vunpack.c.l.bf16 %v479
      %v481 = vmul.f32 %v480, 0.17675781
      %v482 = vpack.c.bf16 %v481, %v481
      %v483 = vld [vmem:[%s266] sm:$0xf]
      %v484 = vld [vmem:[%s276] sm:$0xf]
      %486 = vrot.lane.b32.xlu0 %v482, 64
      %v487 = vpop.permute.xlu0 %486
      %v489 = vunpack.c.l.b16 %v483
      %v490 = vpack.c.b16 %v489, %v489
      %491 = vrot.lane.b32.xlu0 %v490, 64
      %v492 = vpop.permute.xlu0 %491
      %v494 = vsel %vm305, %v487, 0
      %v497 = vsel %vm305, %v492, 0
      %499 = vmatpush.bf16.xpose.msra.mxu0 0
      %500 = vmatpush.bf16.xpose.msra.mxu0 0
      %501 = vmatpush.bf16.xpose.msra.mxu0 0
      %502 = vmatpush.bf16.xpose.msra.mxu0 0
      %503 = vmatpush.bf16.xpose.msra.mxu0 0
      %504 = vmatpush.bf16.xpose.msra.mxu0 0
      %505 = vmatpush.bf16.xpose.msra.mxu0 0
      %506 = vmatpush.bf16.xpose.msra.mxu0 %v497
      %507 = vmatmul.bf16.gmra.mxu0 %v494
      %v508 = vpop.f32.mrf.mxu0
      %v509 = vadd.f32 0.0, %v508
      %v510 = vpop.f32.mrf.mxu0
      %511 = vdwg.mxu0
      %s512 = scalar_lea.vmem [#allocation2], 16
      %v513 = vld [vmem:[%s512] sm:$0xff]
      %v514 = vsel %vm326, %v509, -inf
      %515 = vmax.xlane.f32.xlu0 %v514
      %v516 = vpop.xlane.xlu0 %515
      %v517 = vmax.f32 %v513, %v516
      %v518 = vsub.f32 %v513, %v517
      %v519 = vmul.f32 %v518, 1.442695
      %v520 = vpow.pop %v519
      %522 = vset.pattern.permute.xlu0 0
      %523 = vperm.xlu0 %522, %v517
      %v524 = vpop.permute.xlu0 %523
      %v526 = vsub.f32 %v509, %v524
      %v527 = vmul.f32 %v526, 1.442695
      %v528 = vpow.pop %v527
      %s529 = scalar_lea.vmem [#allocation3], 16
      %v530 = vld [vmem:[%s529] sm:$0xff]
      %v531 = vmul.f32 %v520, %v530
      %v532 = vsel %vm326, %v528, 0.0
      %533 = vadd.xlane.f32.xlu0 %v532
      %v534 = vpop.xlane.xlu0 %533
      %v535 = vadd.f32 %v531, %v534
      %536 = vst.msk [vmem:[%s529] sm:$0xff] %vm348, %v535
      %537 = vst.msk [vmem:[%s512] sm:$0xff] %vm348, %v517
      %v538 = vpack.c.bf16 %v528, %v528
      %v540 = vunpack.c.l.b16 %v484
      %v541 = vpack.c.b16 %v540, %v540
      %542 = vrot.lane.b32.xlu0 %v541, 64
      %v543 = vpop.permute.xlu0 %542
      %v545 = vsel %vm326, %v538, 0
      %v548 = vsel %vm355, %v543, 0
      %550 = vmatpush.bf16.msra.mxu0 0
      %551 = vmatpush.bf16.msra.mxu0 0
      %552 = vmatpush.bf16.msra.mxu0 0
      %553 = vmatpush.bf16.msra.mxu0 0
      %554 = vmatpush.bf16.msra.mxu0 0
      %555 = vmatpush.bf16.msra.mxu0 0
      %556 = vmatpush.bf16.msra.mxu0 0
      %557 = vmatpush.bf16.msra.mxu0 %v548
      %558 = vmatmul.bf16.gmra.mxu0 %v545
      %v559 = vpop.f32.mrf.mxu0
      %v560 = vadd.f32 0.0, %v559
      %v561 = vpop.f32.mrf.mxu0
      %562 = vdwg.mxu0
      %v563 = vld [vmem:[#allocation4] sm:$0xff]
      %565 = vset.pattern.permute.xlu0 0
      %566 = vperm.xlu0 %565, %v520
      %v567 = vpop.permute.xlu0 %566
      %v569 = vmul.f32 %v567, %v563
      %571 = vrot.lane.b32.xlu0 %v560, 64
      %v572 = vpop.permute.xlu0 %571
      %v574 = vadd.f32 %v569, %v572
      %vm575 = vcmask 785920
      %576 = vst.msk [vmem:[#allocation4] sm:$0xff] %vm575, %v574
      %v577 = vld [vmem:[%s256] sm:$0xf]
      %v578 = vunpack.c.l.bf16 %v577
      %v579 = vmul.f32 %v578, 0.17675781
      %v580 = vpack.c.bf16 %v579, %v579
      %v581 = vld [vmem:[%s266] sm:$0xf]
      %v582 = vld [vmem:[%s276] sm:$0xf]
      %584 = vrot.lane.b32.xlu0 %v580, 32
      %v585 = vpop.permute.xlu0 %584
      %v587 = vunpack.c.l.b16 %v581
      %v588 = vpack.c.b16 %v587, %v587
      %589 = vrot.lane.b32.xlu0 %v588, 32
      %v590 = vpop.permute.xlu0 %589
      %v592 = vsel %vm305, %v585, 0
      %v595 = vsel %vm305, %v590, 0
      %597 = vmatpush.bf16.xpose.msra.mxu0 0
      %598 = vmatpush.bf16.xpose.msra.mxu0 0
      %599 = vmatpush.bf16.xpose.msra.mxu0 0
      %600 = vmatpush.bf16.xpose.msra.mxu0 0
      %601 = vmatpush.bf16.xpose.msra.mxu0 0
      %602 = vmatpush.bf16.xpose.msra.mxu0 0
      %603 = vmatpush.bf16.xpose.msra.mxu0 0
      %604 = vmatpush.bf16.xpose.msra.mxu0 %v595
      %605 = vmatmul.bf16.gmra.mxu0 %v592
      %v606 = vpop.f32.mrf.mxu0
      %v607 = vadd.f32 0.0, %v606
      %v608 = vpop.f32.mrf.mxu0
      %609 = vdwg.mxu0
      %s610 = scalar_lea.vmem [#allocation2], 24
      %v611 = vld [vmem:[%s610] sm:$0xff]
      %v612 = vsel %vm326, %v607, -inf
      %613 = vmax.xlane.f32.xlu0 %v612
      %v614 = vpop.xlane.xlu0 %613
      %v615 = vmax.f32 %v611, %v614
      %v616 = vsub.f32 %v611, %v615
      %v617 = vmul.f32 %v616, 1.442695
      %v618 = vpow.pop %v617
      %620 = vset.pattern.permute.xlu0 0
      %621 = vperm.xlu0 %620, %v615
      %v622 = vpop.permute.xlu0 %621
      %v624 = vsub.f32 %v607, %v622
      %v625 = vmul.f32 %v624, 1.442695
      %v626 = vpow.pop %v625
      %s627 = scalar_lea.vmem [#allocation3], 24
      %v628 = vld [vmem:[%s627] sm:$0xff]
      %v629 = vmul.f32 %v618, %v628
      %v630 = vsel %vm326, %v626, 0.0
      %631 = vadd.xlane.f32.xlu0 %v630
      %v632 = vpop.xlane.xlu0 %631
      %v633 = vadd.f32 %v629, %v632
      %634 = vst.msk [vmem:[%s627] sm:$0xff] %vm348, %v633
      %635 = vst.msk [vmem:[%s610] sm:$0xff] %vm348, %v615
      %v636 = vpack.c.bf16 %v626, %v626
      %v638 = vunpack.c.l.b16 %v582
      %v639 = vpack.c.b16 %v638, %v638
      %640 = vrot.lane.b32.xlu0 %v639, 32
      %v641 = vpop.permute.xlu0 %640
      %v643 = vsel %vm326, %v636, 0
      %v646 = vsel %vm355, %v641, 0
      %648 = vmatpush.bf16.msra.mxu0 0
      %649 = vmatpush.bf16.msra.mxu0 0
      %650 = vmatpush.bf16.msra.mxu0 0
      %651 = vmatpush.bf16.msra.mxu0 0
      %652 = vmatpush.bf16.msra.mxu0 0
      %653 = vmatpush.bf16.msra.mxu0 0
      %654 = vmatpush.bf16.msra.mxu0 0
      %655 = vmatpush.bf16.msra.mxu0 %v646
      %656 = vmatmul.bf16.gmra.mxu0 %v643
      %v657 = vpop.f32.mrf.mxu0
      %v658 = vadd.f32 0.0, %v657
      %v659 = vpop.f32.mrf.mxu0
      %660 = vdwg.mxu0
      %v661 = vld [vmem:[#allocation4] sm:$0xff]
      %663 = vset.pattern.permute.xlu0 0
      %664 = vperm.xlu0 %663, %v618
      %v665 = vpop.permute.xlu0 %664
      %v667 = vmul.f32 %v665, %v661
      %669 = vrot.lane.b32.xlu0 %v658, 96
      %v670 = vpop.permute.xlu0 %669
      %v672 = vadd.f32 %v667, %v670
      %vm673 = vcmask 1048320
      %674 = vst.msk [vmem:[#allocation4] sm:$0xff] %vm673, %v672
      // Predicated region
      $region37: #{transformer_forward.33} parent=31 // pred_check
        %p675 = pneg %p285
      $region38: #{transformer_forward.33} parent=31 // pred_check_branch
        %677 = sbr.rel (%p675) target = $region40
      $region39: #{transformer_forward.33} parent=31 // pred_region
        %v678 = vld [vmem:[#allocation3] sm:$0xff]
        %v679 = vrcp.pop %v678
        %v680 = vmul.f32 %v678, %v679
        %v681 = vsub.f32 1.0, %v680
        %v682 = vmul.f32 %v679, %v681
        %v683 = vadd.f32 %v679, %v682
        %vm684 = vweird.f32 %v678
        %vm685 = vweird.f32 %v679
        %vm686 = vmor %vm684, %vm685
        %v687 = vsel %vm686, %v679, %v683
        %v688 = vand.u32 2147483647, %v678
        %vm689 = vcmp.eq.f32.partialorder %v688, 8.507059e+37
        %v690 = vand.u32 %v678, 2147483648
        %v691 = vor.u32 1.1754944e-38, %v690
        %v692 = vsel %vm689, %v691, %v687
        %v693 = vmul.f32 1.0, %v692
        %v694 = vld [vmem:[#allocation4] sm:$0xff]
        %696 = vset.pattern.permute.xlu0 0
        %697 = vperm.xlu0 %696, %v693
        %v698 = vpop.permute.xlu0 %697
        %v700 = vmul.f32 %v694, %v698
        %v701 = vpack.c.bf16 %v700, %v700
        %vm702 = vcmask 257024
        %703 = vst.msk [vmem:[%s283] sm:$0xf] %vm702, %v701
        %v704 = vld [vmem:[%s431] sm:$0xff]
        %v705 = vrcp.pop %v704
        %v706 = vmul.f32 %v704, %v705
        %v707 = vsub.f32 1.0, %v706
        %v708 = vmul.f32 %v705, %v707
        %v709 = vadd.f32 %v705, %v708
        %vm710 = vweird.f32 %v704
        %vm711 = vweird.f32 %v705
        %vm712 = vmor %vm710, %vm711
        %v713 = vsel %vm712, %v705, %v709
        %v714 = vand.u32 2147483647, %v704
        %vm715 = vcmp.eq.f32.partialorder %v714, 8.507059e+37
        %v716 = vand.u32 %v704, 2147483648
        %v717 = vor.u32 1.1754944e-38, %v716
        %v718 = vsel %vm715, %v717, %v713
        %v719 = vmul.f32 1.0, %v718
        %v720 = vld [vmem:[#allocation4] sm:$0xff]
        %722 = vset.pattern.permute.xlu0 0
        %723 = vperm.xlu0 %722, %v719
        %v724 = vpop.permute.xlu0 %723
        %v726 = vmul.f32 %v720, %v724
        %v727 = vpack.c.bf16 %v726, %v726
        %vm728 = vcmask 519424
        %729 = vst.msk [vmem:[%s283] sm:$0xf] %vm728, %v727
        %v730 = vld [vmem:[%s529] sm:$0xff]
        %v731 = vrcp.pop %v730
        %v732 = vmul.f32 %v730, %v731
        %v733 = vsub.f32 1.0, %v732
        %v734 = vmul.f32 %v731, %v733
        %v735 = vadd.f32 %v731, %v734
        %vm736 = vweird.f32 %v730
        %vm737 = vweird.f32 %v731
        %vm738 = vmor %vm736, %vm737
        %v739 = vsel %vm738, %v731, %v735
        %v740 = vand.u32 2147483647, %v730
        %vm741 = vcmp.eq.f32.partialorder %v740, 8.507059e+37
        %v742 = vand.u32 %v730, 2147483648
        %v743 = vor.u32 1.1754944e-38, %v742
        %v744 = vsel %vm741, %v743, %v739
        %v745 = vmul.f32 1.0, %v744
        %v746 = vld [vmem:[#allocation4] sm:$0xff]
        %748 = vset.pattern.permute.xlu0 0
        %749 = vperm.xlu0 %748, %v745
        %v750 = vpop.permute.xlu0 %749
        %v752 = vmul.f32 %v746, %v750
        %v753 = vpack.c.bf16 %v752, %v752
        %vm754 = vcmask 781824
        %755 = vst.msk [vmem:[%s283] sm:$0xf] %vm754, %v753
        %v756 = vld [vmem:[%s627] sm:$0xff]
        %v757 = vrcp.pop %v756
        %v758 = vmul.f32 %v756, %v757
        %v759 = vsub.f32 1.0, %v758
        %v760 = vmul.f32 %v757, %v759
        %v761 = vadd.f32 %v757, %v760
        %vm762 = vweird.f32 %v756
        %vm763 = vweird.f32 %v757
        %vm764 = vmor %vm762, %vm763
        %v765 = vsel %vm764, %v757, %v761
        %v766 = vand.u32 2147483647, %v756
        %vm767 = vcmp.eq.f32.partialorder %v766, 8.507059e+37
        %v768 = vand.u32 %v756, 2147483648
        %v769 = vor.u32 1.1754944e-38, %v768
        %v770 = vsel %vm767, %v769, %v765
        %v771 = vmul.f32 1.0, %v770
        %v772 = vld [vmem:[#allocation4] sm:$0xff]
        %774 = vset.pattern.permute.xlu0 0
        %775 = vperm.xlu0 %774, %v771
        %v776 = vpop.permute.xlu0 %775
        %v778 = vmul.f32 %v772, %v776
        %v779 = vpack.c.bf16 %v778, %v778
        %vm780 = vcmask 1044224
        %781 = vst.msk [vmem:[%s283] sm:$0xf] %vm780, %v779
      $region40: #{transformer_forward.33} parent=31 // pred_fallthru
        _
      %p782 = scmp.lt.s32.totalorder %s19, 1
      %s783 = scalar_select %p782, %s19, 1
      %p784 = scmp.lt.s32.totalorder %s20, 0
      %s785 = scalar_select %p784, %s20, 0
      %s786 = sadd.s32 %s785, %s783
      %s787 = smul.addr %s786, 4
      %s788 = scalar_lea.vmem %s3, %s787
      // Predicated region
      $region41: #{transformer_forward.33} parent=31 // pred_check
        %p789 = pneg %p137
      $region42: #{transformer_forward.33} parent=31 // pred_check_branch
        %791 = sbr.rel (%p789) target = $region44
      $region43: #{transformer_forward.33} parent=31 // pred_region
        _
      $region44: #{transformer_forward.33} parent=31 // pred_fallthru
        _
    $region32: #{transformer_forward.33} parent=5 // pred_fallthru
      _
    %p792 = scmp.le.s32.totalorder 2, %s9
    // Predicated region
    $region45: #{transformer_forward.33} parent=5 // pred_check
      %p793 = pneg %p792
    $region46: #{transformer_forward.33} parent=5 // pred_check_branch
      %795 = sbr.rel (%p793) target = $region48
    $region47: #{transformer_forward.33} parent=5 // pred_region
      %s796 = ssub.s32 %s9, 2
      // Predicated region
      $region49: #{transformer_forward.33} parent=47 // pred_check
        %p797 = pneg %p143
      $region50: #{transformer_forward.33} parent=47 // pred_check_branch
        %799 = sbr.rel (%p797) target = $region52
      $region51: #{transformer_forward.33} parent=47 // pred_region
        %p800 = scmp.lt.s32.totalorder %s22, 1
        %s801 = scalar_select %p800, %s22, 1
        %p802 = scmp.lt.s32.totalorder %s23, 0
        %s803 = scalar_select %p802, %s23, 0
        %s804 = sadd.s32 %s803, %s801
        %s805 = smul.addr %s804, 4
        %s806 = scalar_lea.vmem %s3, %s805
      $region52: #{transformer_forward.33} parent=47 // pred_fallthru
        _
    $region48: #{transformer_forward.33} parent=5 // pred_fallthru
      _
  $region6: #{transformer_forward.33} parent=0 // loop_footer
    %s13 = sadd.s32 1, %s9
  $region7: #{transformer_forward.33} parent=0 // loop_footer_branch
    %8 = sbr.rel target = $region3
  $region8: #{transformer_forward.33} parent=0 // loop_exit
    _

// kernel: transformer_forward.36
$region0: #{transformer_forward.36}
  #allocation0 [shape = 'u32[]', space=smem, size = 0x4, offset = 0x4, fixed_abs, tag = 'smem constant byte address 0x4 - core index']
  #allocation1 [shape = 'u32[72,128]{1,0:T(1,128)}', space=vmem, size = 0x9000, scoped, tag = 'internal scratch']
  #allocation2 [shape = 'f32[16,128]{1,0:T(8,128)}', space=vmem, size = 0x2000, scoped, tag = 'scratch operand']
  %s0 = inlined_call_operand.vmem [shape: bf16[16,256], index: 0, kind: input, shape index: {}]
  %s1 = inlined_call_operand.hbm [shape: bf16[256,128], index: 1, kind: input, shape index: {}]
  %s2 = inlined_call_operand.hbm [shape: f32[1,128], index: 2, kind: input, shape index: {}]
  %s3 = inlined_call_operand.vmem [shape: bf16[16,128], index: 3, kind: input, shape index: {}]
  %s4 = inlined_call_operand.hbm [shape: f32[1,128], index: 4, kind: input, shape index: {}]
  %s5 = inlined_call_operand.hbm [shape: f32[1,128], index: 5, kind: input, shape index: {}]
  %s6 = inlined_call_operand.vmem [shape: bf16[16,128], index: 6, kind: output, shape index: {}]
  %s7 = sld [smem:[#allocation0]]
  $region58: #{transformer_forward.36} parent=0
    _
  %s9 = ssub.s32 1, %s7
  %s10 = scalar_select 0, %s9, %s7
  $region1: #{transformer_forward.36} parent=0
    #allocation3 [shape = 'u8[65536]{0}', space=vmem, size = 0x10000, scoped, tag = 'input window, operand 1, single buffered']
    #allocation4 [shape = 's32[1]{0}', space=sflag, size = 0x4, scoped, tag = 'scoped memory for transformer_forward.36']
    #allocation5 [shape = 'u8[512]{0}', space=vmem, size = 0x400, scoped, tag = 'input window, operand 2, single buffered']
    #allocation6 [shape = 's32[1]{0}', space=sflag, size = 0x4, scoped, tag = 'scoped memory for transformer_forward.36']
    #allocation7 [shape = 'u8[512]{0}', space=vmem, size = 0x400, scoped, tag = 'input window, operand 4, single buffered']
    #allocation8 [shape = 'u8[512]{0}', space=vmem, size = 0x400, scoped, tag = 'input window, operand 5, single buffered']
    #allocation9 [shape = 's32[1]{0}', space=sflag, size = 0x4, scoped, tag = 'scoped memory for transformer_forward.36']
    %11 = vsyncpa [#allocation4], 0
    %12 = vsyncpa [#allocation6], 0
    %13 = vsyncpa [#allocation9], 0
    // Predicated region
    $region2: #{transformer_forward.36} parent=1 // pred_check
      _
    $region3: #{transformer_forward.36} parent=1 // pred_check_branch
      %15 = sbr.rel (0) target = $region5
    $region4: #{transformer_forward.36} parent=1 // pred_region
      _
    $region5: #{transformer_forward.36} parent=1 // pred_fallthru
      _
    // Predicated region
    $region6: #{transformer_forward.36} parent=1 // pred_check
      _
    $region7: #{transformer_forward.36} parent=1 // pred_check_branch
      %17 = sbr.rel (0) target = $region9
    $region8: #{transformer_forward.36} parent=1 // pred_region
      %19 = vsyncadd [#allocation4], 0
      %s20 = sshll.u32 %s1, 4
      %s21 = int_to_ptr.hbm [resolvable:$true] %s20
      %s22 = sshll.u32 [#allocation3], 4
      %s23 = int_to_ptr.vmem [resolvable:$true] %s22
      %28 = dma.hbm_to_vmem [thread:$0]  %s21, 2048, %s23, [#allocation4], 64, 64, 4
    $region9: #{transformer_forward.36} parent=1 // pred_fallthru
      _
    // Predicated region
    $region10: #{transformer_forward.36} parent=1 // pred_check
      _
    $region11: #{transformer_forward.36} parent=1 // pred_check_branch
      %30 = sbr.rel (0) target = $region13
    $region12: #{transformer_forward.36} parent=1 // pred_region
      %32 = vsyncadd [#allocation6], 0
      %s34 = sshll.u32 %s2, 4
      %s35 = int_to_ptr.hbm [resolvable:$true] %s34
      %s36 = sshll.u32 [#allocation5], 4
      %s37 = int_to_ptr.vmem [resolvable:$true] %s36
      %39 = dma.hbm_to_vmem [thread:$0]  %s35, 16, %s37, [#allocation6]
    $region13: #{transformer_forward.36} parent=1 // pred_fallthru
      _
    // Predicated region
    $region14: #{transformer_forward.36} parent=1 // pred_check
      _
    $region15: #{transformer_forward.36} parent=1 // pred_check_branch
      %41 = sbr.rel (0) target = $region17
    $region16: #{transformer_forward.36} parent=1 // pred_region
      _
    $region17: #{transformer_forward.36} parent=1 // pred_fallthru
      _
    // Predicated region
    $region18: #{transformer_forward.36} parent=1 // pred_check
      _
    $region19: #{transformer_forward.36} parent=1 // pred_check_branch
      %43 = sbr.rel (0) target = $region21
    $region20: #{transformer_forward.36} parent=1 // pred_region
      %45 = vsyncadd [#allocation6], 0
      %s47 = sshll.u32 %s4, 4
      %s48 = int_to_ptr.hbm [resolvable:$true] %s47
      %s49 = sshll.u32 [#allocation7], 4
      %s50 = int_to_ptr.vmem [resolvable:$true] %s49
      %52 = dma.hbm_to_vmem [thread:$0]  %s48, 16, %s50, [#allocation6]
    $region21: #{transformer_forward.36} parent=1 // pred_fallthru
      _
    // Predicated region
    $region22: #{transformer_forward.36} parent=1 // pred_check
      _
    $region23: #{transformer_forward.36} parent=1 // pred_check_branch
      %54 = sbr.rel (0) target = $region25
    $region24: #{transformer_forward.36} parent=1 // pred_region
      %56 = vsyncadd [#allocation9], 0
      %s58 = sshll.u32 %s5, 4
      %s59 = int_to_ptr.hbm [resolvable:$true] %s58
      %s60 = sshll.u32 [#allocation8], 4
      %s61 = int_to_ptr.vmem [resolvable:$true] %s60
      %63 = dma.hbm_to_vmem [thread:$0]  %s59, 16, %s61, [#allocation9]
    $region25: #{transformer_forward.36} parent=1 // pred_fallthru
      _
    // Predicated region
    $region26: #{transformer_forward.36} parent=1 // pred_check
      _
    $region27: #{transformer_forward.36} parent=1 // pred_check_branch
      %65 = sbr.rel (0) target = $region29
    $region28: #{transformer_forward.36} parent=1 // pred_region
      %67 = dma.done [#allocation4], 2048
    $region29: #{transformer_forward.36} parent=1 // pred_fallthru
      _
    // Predicated region
    $region30: #{transformer_forward.36} parent=1 // pred_check
      _
    $region31: #{transformer_forward.36} parent=1 // pred_check_branch
      %69 = sbr.rel (0) target = $region33
    $region32: #{transformer_forward.36} parent=1 // pred_region
      %71 = dma.done [#allocation6], 16
    $region33: #{transformer_forward.36} parent=1 // pred_fallthru
      _
    // Predicated region
    $region34: #{transformer_forward.36} parent=1 // pred_check
      _
    $region35: #{transformer_forward.36} parent=1 // pred_check_branch
      %73 = sbr.rel (0) target = $region37
    $region36: #{transformer_forward.36} parent=1 // pred_region
      %75 = dma.done [#allocation6], 16
    $region37: #{transformer_forward.36} parent=1 // pred_fallthru
      _
    // Predicated region
    $region38: #{transformer_forward.36} parent=1 // pred_check
      _
    $region39: #{transformer_forward.36} parent=1 // pred_check_branch
      %77 = sbr.rel (0) target = $region41
    $region40: #{transformer_forward.36} parent=1 // pred_region
      %79 = dma.done [#allocation9], 16
    $region41: #{transformer_forward.36} parent=1 // pred_fallthru
      _
    %p80 = scmp.eq.s32.totalorder 0, 0
    // Predicated region
    $region42: #{transformer_forward.36} parent=1 // pred_check
      %p81 = pneg %p80
    $region43: #{transformer_forward.36} parent=1 // pred_check_branch
      %83 = sbr.rel (%p81) target = $region45
    $region44: #{transformer_forward.36} parent=1 // pred_region
      %84 = vst [vmem:[#allocation2] sm:$0xff] 0.0
      %85 = vst [vmem:[#allocation2 + $0x8] sm:$0xff] 0.0
    $region45: #{transformer_forward.36} parent=1 // pred_fallthru
      _
    %v86 = vld [vmem:[#allocation2] sm:$0xff]
    %v87 = vld [vmem:[#allocation2 + $0x8] sm:$0xff]
    %v88 = vld [vmem:[%s0] sm:$0xff]
    %v89 = vld [vmem:[%s0 + $0x8] sm:$0xff]
    %v90 = vld [vmem:[#allocation3] sm:$0xf]
    %v91 = vld [vmem:[#allocation3 + $0x4] sm:$0xf]
    %v92 = vld [vmem:[#allocation3 + $0x8] sm:$0xf]
    %v93 = vld [vmem:[#allocation3 + $0xc] sm:$0xf]
    %v94 = vld [vmem:[#allocation3 + $0x10] sm:$0xf]
    %v95 = vld [vmem:[#allocation3 + $0x14] sm:$0xf]
    %v96 = vld [vmem:[#allocation3 + $0x18] sm:$0xf]
    %v97 = vld [vmem:[#allocation3 + $0x1c] sm:$0xf]
    %v98 = vld [vmem:[#allocation3 + $0x20] sm:$0xf]
    %v99 = vld [vmem:[#allocation3 + $0x24] sm:$0xf]
    %v100 = vld [vmem:[#allocation3 + $0x28] sm:$0xf]
    %v101 = vld [vmem:[#allocation3 + $0x2c] sm:$0xf]
    %v102 = vld [vmem:[#allocation3 + $0x30] sm:$0xf]
    %v103 = vld [vmem:[#allocation3 + $0x34] sm:$0xf]
    %v104 = vld [vmem:[#allocation3 + $0x38] sm:$0xf]
    %v105 = vld [vmem:[#allocation3 + $0x3c] sm:$0xf]
    %v106 = vld [vmem:[#allocation3 + $0x40] sm:$0xf]
    %v107 = vld [vmem:[#allocation3 + $0x44] sm:$0xf]
    %v108 = vld [vmem:[#allocation3 + $0x48] sm:$0xf]
    %v109 = vld [vmem:[#allocation3 + $0x4c] sm:$0xf]
    %v110 = vld [vmem:[#allocation3 + $0x50] sm:$0xf]
    %v111 = vld [vmem:[#allocation3 + $0x54] sm:$0xf]
    %v112 = vld [vmem:[#allocation3 + $0x58] sm:$0xf]
    %v113 = vld [vmem:[#allocation3 + $0x5c] sm:$0xf]
    %v114 = vld [vmem:[#allocation3 + $0x60] sm:$0xf]
    %v115 = vld [vmem:[#allocation3 + $0x64] sm:$0xf]
    %v116 = vld [vmem:[#allocation3 + $0x68] sm:$0xf]
    %v117 = vld [vmem:[#allocation3 + $0x6c] sm:$0xf]
    %v118 = vld [vmem:[#allocation3 + $0x70] sm:$0xf]
    %v119 = vld [vmem:[#allocation3 + $0x74] sm:$0xf]
    %v120 = vld [vmem:[#allocation3 + $0x78] sm:$0xf]
    %v121 = vld [vmem:[#allocation3 + $0x7c] sm:$0xf]
    %v124 = vunpack.c.l.b16 %v88
    %v125 = vunpack.c.h.b16 %v88
    %v126 = vunpack.c.l.b16 %v89
    %v127 = vunpack.c.h.b16 %v89
    %v128 = vpack.c.b16 %v126, %v124
    %v129 = vpack.c.b16 %v127, %v125
    %v164 = vunpack.c.l.b16 %v90
    %v165 = vunpack.c.l.b16 %v91
    %v166 = vunpack.c.l.b16 %v92
    %v167 = vunpack.c.l.b16 %v93
    %v168 = vunpack.c.l.b16 %v94
    %v169 = vunpack.c.l.b16 %v95
    %v170 = vunpack.c.l.b16 %v96
    %v171 = vunpack.c.l.b16 %v97
    %v172 = vunpack.c.l.b16 %v98
    %v173 = vunpack.c.l.b16 %v99
    %v174 = vunpack.c.l.b16 %v100
    %v175 = vunpack.c.l.b16 %v101
    %v176 = vunpack.c.l.b16 %v102
    %v177 = vunpack.c.l.b16 %v103
    %v178 = vunpack.c.l.b16 %v104
    %v179 = vunpack.c.l.b16 %v105
    %v180 = vunpack.c.l.b16 %v106
    %v181 = vunpack.c.l.b16 %v107
    %v182 = vunpack.c.l.b16 %v108
    %v183 = vunpack.c.l.b16 %v109
    %v184 = vunpack.c.l.b16 %v110
    %v185 = vunpack.c.l.b16 %v111
    %v186 = vunpack.c.l.b16 %v112
    %v187 = vunpack.c.l.b16 %v113
    %v188 = vunpack.c.l.b16 %v114
    %v189 = vunpack.c.l.b16 %v115
    %v190 = vunpack.c.l.b16 %v116
    %v191 = vunpack.c.l.b16 %v117
    %v192 = vunpack.c.l.b16 %v118
    %v193 = vunpack.c.l.b16 %v119
    %v194 = vunpack.c.l.b16 %v120
    %v195 = vunpack.c.l.b16 %v121
    %v196 = vpack.c.b16 %v165, %v164
    %v197 = vpack.c.b16 %v167, %v166
    %v198 = vpack.c.b16 %v169, %v168
    %v199 = vpack.c.b16 %v171, %v170
    %v200 = vpack.c.b16 %v173, %v172
    %v201 = vpack.c.b16 %v175, %v174
    %v202 = vpack.c.b16 %v177, %v176
    %v203 = vpack.c.b16 %v179, %v178
    %v204 = vpack.c.b16 %v181, %v180
    %v205 = vpack.c.b16 %v183, %v182
    %v206 = vpack.c.b16 %v185, %v184
    %v207 = vpack.c.b16 %v187, %v186
    %v208 = vpack.c.b16 %v189, %v188
    %v209 = vpack.c.b16 %v191, %v190
    %v210 = vpack.c.b16 %v193, %v192
    %v211 = vpack.c.b16 %v195, %v194
    %228 = vmatpush.bf16.msra.mxu0 %v203
    %229 = vmatpush.bf16.msra.mxu0 %v202
    %230 = vmatpush.bf16.msra.mxu0 %v201
    %231 = vmatpush.bf16.msra.mxu0 %v200
    %232 = vmatpush.bf16.msra.mxu0 %v199
    %233 = vmatpush.bf16.msra.mxu0 %v198
    %234 = vmatpush.bf16.msra.mxu0 %v197
    %235 = vmatpush.bf16.msra.mxu0 %v196
    %236 = vmatmul.bf16.gmra.mxu0 %v128
    %v237 = vpop.f32.mrf.mxu0
    %v238 = vadd.f32 0.0, %v237
    %v239 = vpop.f32.mrf.mxu0
    %v240 = vadd.f32 0.0, %v239
    %241 = vdwg.mxu0
    %242 = vmatpush.bf16.msra.mxu0 %v211
    %243 = vmatpush.bf16.msra.mxu0 %v210
    %244 = vmatpush.bf16.msra.mxu0 %v209
    %245 = vmatpush.bf16.msra.mxu0 %v208
    %246 = vmatpush.bf16.msra.mxu0 %v207
    %247 = vmatpush.bf16.msra.mxu0 %v206
    %248 = vmatpush.bf16.msra.mxu0 %v205
    %249 = vmatpush.bf16.msra.mxu0 %v204
    %250 = vmatmul.bf16.gmra.mxu0 %v129
    %v251 = vpop.f32.mrf.mxu0
    %v252 = vadd.f32 %v238, %v251
    %v253 = vpop.f32.mrf.mxu0
    %v254 = vadd.f32 %v240, %v253
    %255 = vdwg.mxu0
    %v256 = vadd.f32 %v86, %v252
    %v257 = vadd.f32 %v87, %v254
    %258 = vst [vmem:[#allocation2] sm:$0xff] %v256
    %259 = vst [vmem:[#allocation2 + $0x8] sm:$0xff] %v257
    // Predicated region
    $region46: #{transformer_forward.36} parent=1 // pred_check
      %p260 = pneg %p80
    $region47: #{transformer_forward.36} parent=1 // pred_check_branch
      %262 = sbr.rel (%p260) target = $region49
    $region48: #{transformer_forward.36} parent=1 // pred_region
      %v263 = vld [vmem:[#allocation2] sm:$0xff]
      %v264 = vld [vmem:[#allocation2 + $0x8] sm:$0xff]
      %v265 = vld [vmem:[#allocation5] sm:$0x1]
      %v267 = vperm.slane %v265, 0
      %v269 = vadd.f32 %v263, %v267
      %v270 = vadd.f32 %v264, %v267
      %v271 = vld [vmem:[%s3] sm:$0xf]
      %v272 = vld [vmem:[%s3 + $0x4] sm:$0xf]
      %v273 = vunpack.c.l.bf16 %v271
      %v274 = vunpack.c.l.bf16 %v272
      %v275 = vadd.f32 %v269, %v273
      %v276 = vadd.f32 %v270, %v274
      %277 = vadd.xlane.f32.xlu0 %v275
      %v278 = vpop.xlane.xlu0 %277
      %279 = vadd.xlane.f32.xlu0 %v276
      %v280 = vpop.xlane.xlu0 %279
      %v281 = vrcp.pop 128.0
      %v282 = vmul.f32 128.0, %v281
      %v283 = vsub.f32 1.0, %v282
      %v284 = vmul.f32 %v281, %v283
      %v285 = vadd.f32 %v281, %v284
      %vm286 = vweird.f32 %v281
      %v287 = vsel %vm286, %v281, %v285
      %v288 = vmul.f32 %v278, %v287
      %v289 = vmul.f32 %v280, %v287
      %v290 = vsub.f32 %v275, %v288
      %v291 = vsub.f32 %v276, %v289
      %v292 = vmul.f32 %v290, %v290
      %v293 = vmul.f32 %v291, %v291
      %294 = vadd.xlane.f32.xlu0 %v292
      %v295 = vpop.xlane.xlu0 %294
      %296 = vadd.xlane.f32.xlu0 %v293
      %v297 = vpop.xlane.xlu0 %296
      %v298 = vmul.f32 %v295, %v287
      %v299 = vmul.f32 %v297, %v287
      %v300 = vadd.f32 %v298, 1e-05
      %v301 = vadd.f32 %v299, 1e-05
      %v302 = vrsqrt.pop %v300
      %v303 = vmul.f32 %v302, %v300
      %v304 = vmul.f32 %v303, %v302
      %v305 = vmul.f32 0.5, %v304
      %v306 = vsub.f32 1.5, %v305
      %v307 = vmul.f32 %v302, %v306
      %vm308 = vweird.f32 %v300
      %vm309 = vweird.f32 %v302
      %vm310 = vmor %vm308, %vm309
      %v311 = vsel %vm310, %v302, %v307
      %v312 = vrsqrt.pop %v301
      %v313 = vmul.f32 %v312, %v301
      %v314 = vmul.f32 %v313, %v312
      %v315 = vmul.f32 0.5, %v314
      %v316 = vsub.f32 1.5, %v315
      %v317 = vmul.f32 %v312, %v316
      %vm318 = vweird.f32 %v301
      %vm319 = vweird.f32 %v312
      %vm320 = vmor %vm318, %vm319
      %v321 = vsel %vm320, %v312, %v317
      %v322 = vmul.f32 %v290, %v311
      %v323 = vmul.f32 %v291, %v321
      %v324 = vld [vmem:[#allocation7] sm:$0x1]
      %v326 = vperm.slane %v324, 0
      %v328 = vmul.f32 %v322, %v326
      %v329 = vmul.f32 %v323, %v326
      %v330 = vld [vmem:[#allocation8] sm:$0x1]
      %v332 = vperm.slane %v330, 0
      %v334 = vadd.f32 %v328, %v332
      %v335 = vadd.f32 %v329, %v332
      %v336 = vpack.c.bf16 %v334, %v334
      %v337 = vpack.c.bf16 %v335, %v335
      %338 = vst [vmem:[%s6] sm:$0xf] %v336
      %339 = vst [vmem:[%s6 + $0x4] sm:$0xf] %v337
    $region49: #{transformer_forward.36} parent=1 // pred_fallthru
      _
    // Predicated region
    $region50: #{transformer_forward.36} parent=1 // pred_check
      _
    $region51: #{transformer_forward.36} parent=1 // pred_check_branch
      %341 = sbr.rel (0) target = $region53
    $region52: #{transformer_forward.36} parent=1 // pred_region
      _
    $region53: #{transformer_forward.36} parent=1 // pred_fallthru
      _
    // Predicated region
    $region54: #{transformer_forward.36} parent=1 // pred_check
      _
    $region55: #{transformer_forward.36} parent=1 // pred_check_branch
      %343 = sbr.rel (0) target = $region57
    $region56: #{transformer_forward.36} parent=1 // pred_region
      _
    $region57: #{transformer_forward.36} parent=1 // pred_fallthru
      _
    %344 = vsyncpa [#allocation4], 1
    %345 = vsyncpa [#allocation6], 1
    %346 = vsyncpa [#allocation9], 1

// kernel: transformer_forward.35
$region0: #{transformer_forward.35}
  #allocation0 [shape = 'u32[]', space=smem, size = 0x4, offset = 0x4, fixed_abs, tag = 'smem constant byte address 0x4 - core index']
  #allocation1 [shape = 'u32[72,128]{1,0:T(1,128)}', space=vmem, size = 0x9000, scoped, tag = 'internal scratch']
  #allocation2 [shape = 'f32[16,256]{1,0:T(8,128)}', space=vmem, size = 0x4000, scoped, tag = 'scratch operand']
  %s0 = inlined_call_operand.vmem [shape: bf16[16,128], index: 0, kind: input, shape index: {}]
  %s1 = inlined_call_operand.vmem [shape: bf16[128,256], index: 1, kind: input, shape index: {}]
  %s2 = inlined_call_operand.vmem [shape: f32[1,256], index: 2, kind: input, shape index: {}]
  %s3 = inlined_call_operand.vmem [shape: bf16[16,256], index: 3, kind: output, shape index: {}]
  %s4 = sld [smem:[#allocation0]]
  $region30: #{transformer_forward.35} parent=0
    _
  %s6 = ssub.s32 1, %s4
  %s7 = scalar_select 0, %s6, %s4
  // Predicated region
  $region2: #{transformer_forward.35} parent=0 // pred_check
    _
  $region3: #{transformer_forward.35} parent=0 // pred_check_branch
    %9 = sbr.rel (0) target = $region5
  $region4: #{transformer_forward.35} parent=0 // pred_region
    _
  $region5: #{transformer_forward.35} parent=0 // pred_fallthru
    _
  // Predicated region
  $region6: #{transformer_forward.35} parent=0 // pred_check
    _
  $region7: #{transformer_forward.35} parent=0 // pred_check_branch
    %11 = sbr.rel (0) target = $region9
  $region8: #{transformer_forward.35} parent=0 // pred_region
    _
  $region9: #{transformer_forward.35} parent=0 // pred_fallthru
    _
  // Predicated region
  $region10: #{transformer_forward.35} parent=0 // pred_check
    _
  $region11: #{transformer_forward.35} parent=0 // pred_check_branch
    %13 = sbr.rel (0) target = $region13
  $region12: #{transformer_forward.35} parent=0 // pred_region
    _
  $region13: #{transformer_forward.35} parent=0 // pred_fallthru
    _
  %p14 = scmp.eq.s32.totalorder 0, 0
  // Predicated region
  $region14: #{transformer_forward.35} parent=0 // pred_check
    %p15 = pneg %p14
  $region15: #{transformer_forward.35} parent=0 // pred_check_branch
    %17 = sbr.rel (%p15) target = $region17
  $region16: #{transformer_forward.35} parent=0 // pred_region
    %18 = vst [vmem:[#allocation2] sm:$0xff] 0.0
    %19 = vst [vmem:[#allocation2 + $0x8] sm:$0xff] 0.0
    %20 = vst [vmem:[#allocation2 + $0x10] sm:$0xff] 0.0
    %21 = vst [vmem:[#allocation2 + $0x18] sm:$0xff] 0.0
  $region17: #{transformer_forward.35} parent=0 // pred_fallthru
    _
  %v22 = vld [vmem:[#allocation2] sm:$0xff]
  %v23 = vld [vmem:[#allocation2 + $0x8] sm:$0xff]
  %v24 = vld [vmem:[#allocation2 + $0x10] sm:$0xff]
  %v25 = vld [vmem:[#allocation2 + $0x18] sm:$0xff]
  %v26 = vld [vmem:[%s0] sm:$0xf]
  %v27 = vld [vmem:[%s0 + $0x4] sm:$0xf]
  %v28 = vld [vmem:[%s1] sm:$0xff]
  %v29 = vld [vmem:[%s1 + $0x8] sm:$0xff]
  %v30 = vld [vmem:[%s1 + $0x10] sm:$0xff]
  %v31 = vld [vmem:[%s1 + $0x18] sm:$0xff]
  %v32 = vld [vmem:[%s1 + $0x20] sm:$0xff]
  %v33 = vld [vmem:[%s1 + $0x28] sm:$0xff]
  %v34 = vld [vmem:[%s1 + $0x30] sm:$0xff]
  %v35 = vld [vmem:[%s1 + $0x38] sm:$0xff]
  %v36 = vld [vmem:[%s1 + $0x40] sm:$0xff]
  %v37 = vld [vmem:[%s1 + $0x48] sm:$0xff]
  %v38 = vld [vmem:[%s1 + $0x50] sm:$0xff]
  %v39 = vld [vmem:[%s1 + $0x58] sm:$0xff]
  %v40 = vld [vmem:[%s1 + $0x60] sm:$0xff]
  %v41 = vld [vmem:[%s1 + $0x68] sm:$0xff]
  %v42 = vld [vmem:[%s1 + $0x70] sm:$0xff]
  %v43 = vld [vmem:[%s1 + $0x78] sm:$0xff]
  %v46 = vunpack.c.l.b16 %v26
  %v47 = vunpack.c.l.b16 %v27
  %v48 = vpack.c.b16 %v47, %v46
  %v66 = vunpack.c.l.b16 %v28
  %v67 = vunpack.c.h.b16 %v28
  %v68 = vunpack.c.l.b16 %v29
  %v69 = vunpack.c.h.b16 %v29
  %v70 = vunpack.c.l.b16 %v30
  %v71 = vunpack.c.h.b16 %v30
  %v72 = vunpack.c.l.b16 %v31
  %v73 = vunpack.c.h.b16 %v31
  %v74 = vunpack.c.l.b16 %v32
  %v75 = vunpack.c.h.b16 %v32
  %v76 = vunpack.c.l.b16 %v33
  %v77 = vunpack.c.h.b16 %v33
  %v78 = vunpack.c.l.b16 %v34
  %v79 = vunpack.c.h.b16 %v34
  %v80 = vunpack.c.l.b16 %v35
  %v81 = vunpack.c.h.b16 %v35
  %v82 = vunpack.c.l.b16 %v36
  %v83 = vunpack.c.h.b16 %v36
  %v84 = vunpack.c.l.b16 %v37
  %v85 = vunpack.c.h.b16 %v37
  %v86 = vunpack.c.l.b16 %v38
  %v87 = vunpack.c.h.b16 %v38
  %v88 = vunpack.c.l.b16 %v39
  %v89 = vunpack.c.h.b16 %v39
  %v90 = vunpack.c.l.b16 %v40
  %v91 = vunpack.c.h.b16 %v40
  %v92 = vunpack.c.l.b16 %v41
  %v93 = vunpack.c.h.b16 %v41
  %v94 = vunpack.c.l.b16 %v42
  %v95 = vunpack.c.h.b16 %v42
  %v96 = vunpack.c.l.b16 %v43
  %v97 = vunpack.c.h.b16 %v43
  %v98 = vpack.c.b16 %v68, %v66
  %v99 = vpack.c.b16 %v69, %v67
  %v100 = vpack.c.b16 %v72, %v70
  %v101 = vpack.c.b16 %v73, %v71
  %v102 = vpack.c.b16 %v76, %v74
  %v103 = vpack.c.b16 %v77, %v75
  %v104 = vpack.c.b16 %v80, %v78
  %v105 = vpack.c.b16 %v81, %v79
  %v106 = vpack.c.b16 %v84, %v82
  %v107 = vpack.c.b16 %v85, %v83
  %v108 = vpack.c.b16 %v88, %v86
  %v109 = vpack.c.b16 %v89, %v87
  %v110 = vpack.c.b16 %v92, %v90
  %v111 = vpack.c.b16 %v93, %v91
  %v112 = vpack.c.b16 %v96, %v94
  %v113 = vpack.c.b16 %v97, %v95
  %130 = vmatpush.bf16.msra.mxu0 %v112
  %131 = vmatpush.bf16.msra.mxu0 %v110
  %132 = vmatpush.bf16.msra.mxu0 %v108
  %133 = vmatpush.bf16.msra.mxu0 %v106
  %134 = vmatpush.bf16.msra.mxu0 %v104
  %135 = vmatpush.bf16.msra.mxu0 %v102
  %136 = vmatpush.bf16.msra.mxu0 %v100
  %137 = vmatpush.bf16.msra.mxu0 %v98
  %138 = vmatmul.bf16.gmra.mxu0 %v48
  %v139 = vpop.f32.mrf.mxu0
  %v140 = vadd.f32 0.0, %v139
  %v141 = vpop.f32.mrf.mxu0
  %v142 = vadd.f32 0.0, %v141
  %143 = vdwg.mxu0
  %144 = vmatpush.bf16.msra.mxu0 %v113
  %145 = vmatpush.bf16.msra.mxu0 %v111
  %146 = vmatpush.bf16.msra.mxu0 %v109
  %147 = vmatpush.bf16.msra.mxu0 %v107
  %148 = vmatpush.bf16.msra.mxu0 %v105
  %149 = vmatpush.bf16.msra.mxu0 %v103
  %150 = vmatpush.bf16.msra.mxu0 %v101
  %151 = vmatpush.bf16.msra.mxu0 %v99
  %152 = vmatmul.bf16.gmra.mxu0 %v48
  %v153 = vpop.f32.mrf.mxu0
  %v154 = vadd.f32 0.0, %v153
  %v155 = vpop.f32.mrf.mxu0
  %v156 = vadd.f32 0.0, %v155
  %157 = vdwg.mxu0
  %v158 = vadd.f32 %v22, %v140
  %v159 = vadd.f32 %v23, %v154
  %v160 = vadd.f32 %v24, %v142
  %v161 = vadd.f32 %v25, %v156
  %162 = vst [vmem:[#allocation2] sm:$0xff] %v158
  %163 = vst [vmem:[#allocation2 + $0x8] sm:$0xff] %v159
  %164 = vst [vmem:[#allocation2 + $0x10] sm:$0xff] %v160
  %165 = vst [vmem:[#allocation2 + $0x18] sm:$0xff] %v161
  // Predicated region
  $region18: #{transformer_forward.35} parent=0 // pred_check
    %p166 = pneg %p14
  $region19: #{transformer_forward.35} parent=0 // pred_check_branch
    %168 = sbr.rel (%p166) target = $region21
  $region20: #{transformer_forward.35} parent=0 // pred_region
    %v169 = vld [vmem:[#allocation2] sm:$0xff]
    %v170 = vld [vmem:[#allocation2 + $0x8] sm:$0xff]
    %v171 = vld [vmem:[#allocation2 + $0x10] sm:$0xff]
    %v172 = vld [vmem:[#allocation2 + $0x18] sm:$0xff]
    %v173 = vld [vmem:[%s2] sm:$0x3]
    %v175 = vperm.slane %v173, 0
    %v176 = vperm.slane %v173, 1
    %v179 = vadd.f32 %v169, %v175
    %v180 = vadd.f32 %v170, %v176
    %v181 = vadd.f32 %v171, %v175
    %v182 = vadd.f32 %v172, %v176
    %v183 = vmax.f32 %v179, 0.0
    %v184 = vmax.f32 %v180, 0.0
    %v185 = vmax.f32 %v181, 0.0
    %v186 = vmax.f32 %v182, 0.0
    %v187 = vpack.c.bf16 %v184, %v183
    %v188 = vpack.c.bf16 %v186, %v185
    %189 = vst [vmem:[%s3] sm:$0xff] %v187
    %190 = vst [vmem:[%s3 + $0x8] sm:$0xff] %v188
  $region21: #{transformer_forward.35} parent=0 // pred_fallthru
    _
  // Predicated region
  $region22: #{transformer_forward.35} parent=0 // pred_check
    _
  $region23: #{transformer_forward.35} parent=0 // pred_check_branch
    %192 = sbr.rel (0) target = $region25
  $region24: #{transformer_forward.35} parent=0 // pred_region
    _
  $region25: #{transformer_forward.35} parent=0 // pred_fallthru
    _
  // Predicated region
  $region26: #{transformer_forward.35} parent=0 // pred_check
    _
  $region27: #{transformer_forward.35} parent=0 // pred_check_branch
    %194 = sbr.rel (0) target = $region29
  $region28: #{transformer_forward.35} parent=0 // pred_region
    _
  $region29: #{transformer_forward.35} parent=0 // pred_fallthru
    _

// kernel: transformer_forward.39
$region0: #{transformer_forward.39}
  #allocation0 [shape = 'u32[]', space=smem, size = 0x4, offset = 0x4, fixed_abs, tag = 'smem constant byte address 0x4 - core index']
  #allocation1 [shape = 'u32[72,128]{1,0:T(1,128)}', space=vmem, size = 0x9000, scoped, tag = 'internal scratch']
  #allocation2 [shape = 'f32[16,128]{1,0:T(8,128)}', space=vmem, size = 0x2000, scoped, tag = 'scratch operand']
  %s0 = inlined_call_operand.vmem [shape: bf16[16,128], index: 0, kind: input, shape index: {}]
  %s1 = inlined_call_operand.hbm [shape: bf16[128,128], index: 1, kind: input, shape index: {}]
  %s2 = inlined_call_operand.vmem [shape: f32[1,128], index: 2, kind: input, shape index: {}]
  %s3 = inlined_call_operand.vmem [shape: bf16[16,128], index: 3, kind: input, shape index: {}]
  %s4 = inlined_call_operand.vmem [shape: f32[1,128], index: 4, kind: input, shape index: {}]
  %s5 = inlined_call_operand.vmem [shape: f32[1,128], index: 5, kind: input, shape index: {}]
  %s6 = inlined_call_operand.vmem [shape: bf16[16,128], index: 6, kind: output, shape index: {}]
  %s7 = sld [smem:[#allocation0]]
  $region46: #{transformer_forward.39} parent=0
    _
  %s9 = ssub.s32 1, %s7
  %s10 = scalar_select 0, %s9, %s7
  $region1: #{transformer_forward.39} parent=0
    #allocation3 [shape = 'u8[32768]{0}', space=vmem, size = 0x8000, scoped, tag = 'input window, operand 1, single buffered']
    #allocation4 [shape = 's32[1]{0}', space=sflag, size = 0x4, scoped, tag = 'scoped memory for transformer_forward.39']
    %11 = vsyncpa [#allocation4], 0
    // Predicated region
    $region2: #{transformer_forward.39} parent=1 // pred_check
      _
    $region3: #{transformer_forward.39} parent=1 // pred_check_branch
      %13 = sbr.rel (0) target = $region5
    $region4: #{transformer_forward.39} parent=1 // pred_region
      _
    $region5: #{transformer_forward.39} parent=1 // pred_fallthru
      _
    // Predicated region
    $region6: #{transformer_forward.39} parent=1 // pred_check
      _
    $region7: #{transformer_forward.39} parent=1 // pred_check_branch
      %15 = sbr.rel (0) target = $region9
    $region8: #{transformer_forward.39} parent=1 // pred_region
      %17 = vsyncadd [#allocation4], 0
      %s18 = sshll.u32 %s1, 4
      %s19 = int_to_ptr.hbm [resolvable:$true] %s18
      %s20 = sshll.u32 [#allocation3], 4
      %s21 = int_to_ptr.vmem [resolvable:$true] %s20
      %26 = dma.hbm_to_vmem [thread:$0]  %s19, 1024, %s21, [#allocation4], 64, 64, 4
    $region9: #{transformer_forward.39} parent=1 // pred_fallthru
      _
    // Predicated region
    $region10: #{transformer_forward.39} parent=1 // pred_check
      _
    $region11: #{transformer_forward.39} parent=1 // pred_check_branch
      %28 = sbr.rel (0) target = $region13
    $region12: #{transformer_forward.39} parent=1 // pred_region
      _
    $region13: #{transformer_forward.39} parent=1 // pred_fallthru
      _
    // Predicated region
    $region14: #{transformer_forward.39} parent=1 // pred_check
      _
    $region15: #{transformer_forward.39} parent=1 // pred_check_branch
      %30 = sbr.rel (0) target = $region17
    $region16: #{transformer_forward.39} parent=1 // pred_region
      _
    $region17: #{transformer_forward.39} parent=1 // pred_fallthru
      _
    // Predicated region
    $region18: #{transformer_forward.39} parent=1 // pred_check
      _
    $region19: #{transformer_forward.39} parent=1 // pred_check_branch
      %32 = sbr.rel (0) target = $region21
    $region20: #{transformer_forward.39} parent=1 // pred_region
      _
    $region21: #{transformer_forward.39} parent=1 // pred_fallthru
      _
    // Predicated region
    $region22: #{transformer_forward.39} parent=1 // pred_check
      _
    $region23: #{transformer_forward.39} parent=1 // pred_check_branch
      %34 = sbr.rel (0) target = $region25
    $region24: #{transformer_forward.39} parent=1 // pred_region
      _
    $region25: #{transformer_forward.39} parent=1 // pred_fallthru
      _
    // Predicated region
    $region26: #{transformer_forward.39} parent=1 // pred_check
      _
    $region27: #{transformer_forward.39} parent=1 // pred_check_branch
      %36 = sbr.rel (0) target = $region29
    $region28: #{transformer_forward.39} parent=1 // pred_region
      %38 = dma.done [#allocation4], 1024
    $region29: #{transformer_forward.39} parent=1 // pred_fallthru
      _
    %p39 = scmp.eq.s32.totalorder 0, 0
    // Predicated region
    $region30: #{transformer_forward.39} parent=1 // pred_check
      %p40 = pneg %p39
    $region31: #{transformer_forward.39} parent=1 // pred_check_branch
      %42 = sbr.rel (%p40) target = $region33
    $region32: #{transformer_forward.39} parent=1 // pred_region
      %43 = vst [vmem:[#allocation2] sm:$0xff] 0.0
      %44 = vst [vmem:[#allocation2 + $0x8] sm:$0xff] 0.0
    $region33: #{transformer_forward.39} parent=1 // pred_fallthru
      _
    %v45 = vld [vmem:[#allocation2] sm:$0xff]
    %v46 = vld [vmem:[#allocation2 + $0x8] sm:$0xff]
    %v47 = vld [vmem:[%s0] sm:$0xf]
    %v48 = vld [vmem:[%s0 + $0x4] sm:$0xf]
    %v49 = vld [vmem:[#allocation3] sm:$0xf]
    %v50 = vld [vmem:[#allocation3 + $0x4] sm:$0xf]
    %v51 = vld [vmem:[#allocation3 + $0x8] sm:$0xf]
    %v52 = vld [vmem:[#allocation3 + $0xc] sm:$0xf]
    %v53 = vld [vmem:[#allocation3 + $0x10] sm:$0xf]
    %v54 = vld [vmem:[#allocation3 + $0x14] sm:$0xf]
    %v55 = vld [vmem:[#allocation3 + $0x18] sm:$0xf]
    %v56 = vld [vmem:[#allocation3 + $0x1c] sm:$0xf]
    %v57 = vld [vmem:[#allocation3 + $0x20] sm:$0xf]
    %v58 = vld [vmem:[#allocation3 + $0x24] sm:$0xf]
    %v59 = vld [vmem:[#allocation3 + $0x28] sm:$0xf]
    %v60 = vld [vmem:[#allocation3 + $0x2c] sm:$0xf]
    %v61 = vld [vmem:[#allocation3 + $0x30] sm:$0xf]
    %v62 = vld [vmem:[#allocation3 + $0x34] sm:$0xf]
    %v63 = vld [vmem:[#allocation3 + $0x38] sm:$0xf]
    %v64 = vld [vmem:[#allocation3 + $0x3c] sm:$0xf]
    %v67 = vunpack.c.l.b16 %v47
    %v68 = vunpack.c.l.b16 %v48
    %v69 = vpack.c.b16 %v68, %v67
    %v87 = vunpack.c.l.b16 %v49
    %v88 = vunpack.c.l.b16 %v50
    %v89 = vunpack.c.l.b16 %v51
    %v90 = vunpack.c.l.b16 %v52
    %v91 = vunpack.c.l.b16 %v53
    %v92 = vunpack.c.l.b16 %v54
    %v93 = vunpack.c.l.b16 %v55
    %v94 = vunpack.c.l.b16 %v56
    %v95 = vunpack.c.l.b16 %v57
    %v96 = vunpack.c.l.b16 %v58
    %v97 = vunpack.c.l.b16 %v59
    %v98 = vunpack.c.l.b16 %v60
    %v99 = vunpack.c.l.b16 %v61
    %v100 = vunpack.c.l.b16 %v62
    %v101 = vunpack.c.l.b16 %v63
    %v102 = vunpack.c.l.b16 %v64
    %v103 = vpack.c.b16 %v88, %v87
    %v104 = vpack.c.b16 %v90, %v89
    %v105 = vpack.c.b16 %v92, %v91
    %v106 = vpack.c.b16 %v94, %v93
    %v107 = vpack.c.b16 %v96, %v95
    %v108 = vpack.c.b16 %v98, %v97
    %v109 = vpack.c.b16 %v100, %v99
    %v110 = vpack.c.b16 %v102, %v101
    %119 = vmatpush.bf16.msra.mxu0 %v110
    %120 = vmatpush.bf16.msra.mxu0 %v109
    %121 = vmatpush.bf16.msra.mxu0 %v108
    %122 = vmatpush.bf16.msra.mxu0 %v107
    %123 = vmatpush.bf16.msra.mxu0 %v106
    %124 = vmatpush.bf16.msra.mxu0 %v105
    %125 = vmatpush.bf16.msra.mxu0 %v104
    %126 = vmatpush.bf16.msra.mxu0 %v103
    %127 = vmatmul.bf16.gmra.mxu0 %v69
    %v128 = vpop.f32.mrf.mxu0
    %v129 = vadd.f32 0.0, %v128
    %v130 = vpop.f32.mrf.mxu0
    %v131 = vadd.f32 0.0, %v130
    %132 = vdwg.mxu0
    %v133 = vadd.f32 %v45, %v129
    %v134 = vadd.f32 %v46, %v131
    %135 = vst [vmem:[#allocation2] sm:$0xff] %v133
    %136 = vst [vmem:[#allocation2 + $0x8] sm:$0xff] %v134
    // Predicated region
    $region34: #{transformer_forward.39} parent=1 // pred_check
      %p137 = pneg %p39
    $region35: #{transformer_forward.39} parent=1 // pred_check_branch
      %139 = sbr.rel (%p137) target = $region37
    $region36: #{transformer_forward.39} parent=1 // pred_region
      %v140 = vld [vmem:[#allocation2] sm:$0xff]
      %v141 = vld [vmem:[#allocation2 + $0x8] sm:$0xff]
      %v142 = vld [vmem:[%s2] sm:$0x1]
      %v144 = vperm.slane %v142, 0
      %v146 = vadd.f32 %v140, %v144
      %v147 = vadd.f32 %v141, %v144
      %v148 = vld [vmem:[%s3] sm:$0xf]
      %v149 = vld [vmem:[%s3 + $0x4] sm:$0xf]
      %v150 = vunpack.c.l.bf16 %v148
      %v151 = vunpack.c.l.bf16 %v149
      %v152 = vadd.f32 %v146, %v150
      %v153 = vadd.f32 %v147, %v151
      %154 = vadd.xlane.f32.xlu0 %v152
      %v155 = vpop.xlane.xlu0 %154
      %156 = vadd.xlane.f32.xlu0 %v153
      %v157 = vpop.xlane.xlu0 %156
      %v158 = vrcp.pop 128.0
      %v159 = vmul.f32 128.0, %v158
      %v160 = vsub.f32 1.0, %v159
      %v161 = vmul.f32 %v158, %v160
      %v162 = vadd.f32 %v158, %v161
      %vm163 = vweird.f32 %v158
      %v164 = vsel %vm163, %v158, %v162
      %v165 = vmul.f32 %v155, %v164
      %v166 = vmul.f32 %v157, %v164
      %v167 = vsub.f32 %v152, %v165
      %v168 = vsub.f32 %v153, %v166
      %v169 = vmul.f32 %v167, %v167
      %v170 = vmul.f32 %v168, %v168
      %171 = vadd.xlane.f32.xlu0 %v169
      %v172 = vpop.xlane.xlu0 %171
      %173 = vadd.xlane.f32.xlu0 %v170
      %v174 = vpop.xlane.xlu0 %173
      %v175 = vmul.f32 %v172, %v164
      %v176 = vmul.f32 %v174, %v164
      %v177 = vadd.f32 %v175, 1e-05
      %v178 = vadd.f32 %v176, 1e-05
      %v179 = vrsqrt.pop %v177
      %v180 = vmul.f32 %v179, %v177
      %v181 = vmul.f32 %v180, %v179
      %v182 = vmul.f32 0.5, %v181
      %v183 = vsub.f32 1.5, %v182
      %v184 = vmul.f32 %v179, %v183
      %vm185 = vweird.f32 %v177
      %vm186 = vweird.f32 %v179
      %vm187 = vmor %vm185, %vm186
      %v188 = vsel %vm187, %v179, %v184
      %v189 = vrsqrt.pop %v178
      %v190 = vmul.f32 %v189, %v178
      %v191 = vmul.f32 %v190, %v189
      %v192 = vmul.f32 0.5, %v191
      %v193 = vsub.f32 1.5, %v192
      %v194 = vmul.f32 %v189, %v193
      %vm195 = vweird.f32 %v178
      %vm196 = vweird.f32 %v189
      %vm197 = vmor %vm195, %vm196
      %v198 = vsel %vm197, %v189, %v194
      %v199 = vmul.f32 %v167, %v188
      %v200 = vmul.f32 %v168, %v198
      %v201 = vld [vmem:[%s4] sm:$0x1]
      %v203 = vperm.slane %v201, 0
      %v205 = vmul.f32 %v199, %v203
      %v206 = vmul.f32 %v200, %v203
      %v207 = vld [vmem:[%s5] sm:$0x1]
      %v209 = vperm.slane %v207, 0
      %v211 = vadd.f32 %v205, %v209
      %v212 = vadd.f32 %v206, %v209
      %v213 = vpack.c.bf16 %v211, %v211
      %v214 = vpack.c.bf16 %v212, %v212
      %215 = vst [vmem:[%s6] sm:$0xf] %v213
      %216 = vst [vmem:[%s6 + $0x4] sm:$0xf] %v214
    $region37: #{transformer_forward.39} parent=1 // pred_fallthru
      _
    // Predicated region
    $region38: #{transformer_forward.39} parent=1 // pred_check
      _
    $region39: #{transformer_forward.39} parent=1 // pred_check_branch
      %218 = sbr.rel (0) target = $region41
    $region40: #{transformer_forward.39} parent=1 // pred_region
      _
    $region41: #{transformer_forward.39} parent=1 // pred_fallthru
      _
    // Predicated region
    $region42: #{transformer_forward.39} parent=1 // pred_check
      _
    $region43: #{transformer_forward.39} parent=1 // pred_check_branch
      %220 = sbr.rel (0) target = $region45
    $region44: #{transformer_forward.39} parent=1 // pred_region
      _
    $region45: #{transformer_forward.39} parent=1 // pred_fallthru
      _
    %221 = vsyncpa [#allocation4], 1

// kernel: transformer_forward.41
$region0: #{transformer_forward.41}
  #allocation0 [shape = 'u32[]', space=smem, size = 0x4, offset = 0x4, fixed_abs, tag = 'smem constant byte address 0x4 - core index']
  #allocation1 [shape = 'u32[72,128]{1,0:T(1,128)}', space=vmem, size = 0x9000, scoped, tag = 'internal scratch']
  #allocation2 [shape = 'f32[16,128]{1,0:T(8,128)}', space=vmem, size = 0x2000, scoped, tag = 'scratch operand']
  %s0 = inlined_call_operand.vmem [shape: bf16[16,256], index: 0, kind: input, shape index: {}]
  %s1 = inlined_call_operand.vmem [shape: bf16[256,128], index: 1, kind: input, shape index: {}]
  %s2 = inlined_call_operand.vmem [shape: f32[1,128], index: 2, kind: input, shape index: {}]
  %s3 = inlined_call_operand.vmem [shape: bf16[16,128], index: 3, kind: input, shape index: {}]
  %s4 = inlined_call_operand.hbm [shape: f32[1,128], index: 4, kind: input, shape index: {}]
  %s5 = inlined_call_operand.hbm [shape: f32[1,128], index: 5, kind: input, shape index: {}]
  %s6 = inlined_call_operand.vmem [shape: bf16[16,128], index: 6, kind: output, shape index: {}]
  %s7 = sld [smem:[#allocation0]]
  $region50: #{transformer_forward.41} parent=0
    _
  %s9 = ssub.s32 1, %s7
  %s10 = scalar_select 0, %s9, %s7
  $region1: #{transformer_forward.41} parent=0
    #allocation3 [shape = 'u8[512]{0}', space=vmem, size = 0x400, scoped, tag = 'input window, operand 4, single buffered']
    #allocation4 [shape = 's32[1]{0}', space=sflag, size = 0x4, scoped, tag = 'scoped memory for transformer_forward.41']
    #allocation5 [shape = 'u8[512]{0}', space=vmem, size = 0x400, scoped, tag = 'input window, operand 5, single buffered']
    #allocation6 [shape = 's32[1]{0}', space=sflag, size = 0x4, scoped, tag = 'scoped memory for transformer_forward.41']
    %11 = vsyncpa [#allocation4], 0
    %12 = vsyncpa [#allocation6], 0
    // Predicated region
    $region2: #{transformer_forward.41} parent=1 // pred_check
      _
    $region3: #{transformer_forward.41} parent=1 // pred_check_branch
      %14 = sbr.rel (0) target = $region5
    $region4: #{transformer_forward.41} parent=1 // pred_region
      _
    $region5: #{transformer_forward.41} parent=1 // pred_fallthru
      _
    // Predicated region
    $region6: #{transformer_forward.41} parent=1 // pred_check
      _
    $region7: #{transformer_forward.41} parent=1 // pred_check_branch
      %16 = sbr.rel (0) target = $region9
    $region8: #{transformer_forward.41} parent=1 // pred_region
      _
    $region9: #{transformer_forward.41} parent=1 // pred_fallthru
      _
    // Predicated region
    $region10: #{transformer_forward.41} parent=1 // pred_check
      _
    $region11: #{transformer_forward.41} parent=1 // pred_check_branch
      %18 = sbr.rel (0) target = $region13
    $region12: #{transformer_forward.41} parent=1 // pred_region
      _
    $region13: #{transformer_forward.41} parent=1 // pred_fallthru
      _
    // Predicated region
    $region14: #{transformer_forward.41} parent=1 // pred_check
      _
    $region15: #{transformer_forward.41} parent=1 // pred_check_branch
      %20 = sbr.rel (0) target = $region17
    $region16: #{transformer_forward.41} parent=1 // pred_region
      _
    $region17: #{transformer_forward.41} parent=1 // pred_fallthru
      _
    // Predicated region
    $region18: #{transformer_forward.41} parent=1 // pred_check
      _
    $region19: #{transformer_forward.41} parent=1 // pred_check_branch
      %22 = sbr.rel (0) target = $region21
    $region20: #{transformer_forward.41} parent=1 // pred_region
      %24 = vsyncadd [#allocation4], 0
      %s26 = sshll.u32 %s4, 4
      %s27 = int_to_ptr.hbm [resolvable:$true] %s26
      %s28 = sshll.u32 [#allocation3], 4
      %s29 = int_to_ptr.vmem [resolvable:$true] %s28
      %31 = dma.hbm_to_vmem [thread:$0]  %s27, 16, %s29, [#allocation4]
    $region21: #{transformer_forward.41} parent=1 // pred_fallthru
      _
    // Predicated region
    $region22: #{transformer_forward.41} parent=1 // pred_check
      _
    $region23: #{transformer_forward.41} parent=1 // pred_check_branch
      %33 = sbr.rel (0) target = $region25
    $region24: #{transformer_forward.41} parent=1 // pred_region
      %35 = vsyncadd [#allocation6], 0
      %s37 = sshll.u32 %s5, 4
      %s38 = int_to_ptr.hbm [resolvable:$true] %s37
      %s39 = sshll.u32 [#allocation5], 4
      %s40 = int_to_ptr.vmem [resolvable:$true] %s39
      %42 = dma.hbm_to_vmem [thread:$0]  %s38, 16, %s40, [#allocation6]
    $region25: #{transformer_forward.41} parent=1 // pred_fallthru
      _
    // Predicated region
    $region26: #{transformer_forward.41} parent=1 // pred_check
      _
    $region27: #{transformer_forward.41} parent=1 // pred_check_branch
      %44 = sbr.rel (0) target = $region29
    $region28: #{transformer_forward.41} parent=1 // pred_region
      %46 = dma.done [#allocation4], 16
    $region29: #{transformer_forward.41} parent=1 // pred_fallthru
      _
    // Predicated region
    $region30: #{transformer_forward.41} parent=1 // pred_check
      _
    $region31: #{transformer_forward.41} parent=1 // pred_check_branch
      %48 = sbr.rel (0) target = $region33
    $region32: #{transformer_forward.41} parent=1 // pred_region
      %50 = dma.done [#allocation6], 16
    $region33: #{transformer_forward.41} parent=1 // pred_fallthru
      _
    %p51 = scmp.eq.s32.totalorder 0, 0
    // Predicated region
    $region34: #{transformer_forward.41} parent=1 // pred_check
      %p52 = pneg %p51
    $region35: #{transformer_forward.41} parent=1 // pred_check_branch
      %54 = sbr.rel (%p52) target = $region37
    $region36: #{transformer_forward.41} parent=1 // pred_region
      %55 = vst [vmem:[#allocation2] sm:$0xff] 0.0
      %56 = vst [vmem:[#allocation2 + $0x8] sm:$0xff] 0.0
    $region37: #{transformer_forward.41} parent=1 // pred_fallthru
      _
    %v57 = vld [vmem:[#allocation2] sm:$0xff]
    %v58 = vld [vmem:[#allocation2 + $0x8] sm:$0xff]
    %v59 = vld [vmem:[%s0] sm:$0xff]
    %v60 = vld [vmem:[%s0 + $0x8] sm:$0xff]
    %v61 = vld [vmem:[%s1] sm:$0xf]
    %v62 = vld [vmem:[%s1 + $0x4] sm:$0xf]
    %v63 = vld [vmem:[%s1 + $0x8] sm:$0xf]
    %v64 = vld [vmem:[%s1 + $0xc] sm:$0xf]
    %v65 = vld [vmem:[%s1 + $0x10] sm:$0xf]
    %v66 = vld [vmem:[%s1 + $0x14] sm:$0xf]
    %v67 = vld [vmem:[%s1 + $0x18] sm:$0xf]
    %v68 = vld [vmem:[%s1 + $0x1c] sm:$0xf]
    %v69 = vld [vmem:[%s1 + $0x20] sm:$0xf]
    %v70 = vld [vmem:[%s1 + $0x24] sm:$0xf]
    %v71 = vld [vmem:[%s1 + $0x28] sm:$0xf]
    %v72 = vld [vmem:[%s1 + $0x2c] sm:$0xf]
    %v73 = vld [vmem:[%s1 + $0x30] sm:$0xf]
    %v74 = vld [vmem:[%s1 + $0x34] sm:$0xf]
    %v75 = vld [vmem:[%s1 + $0x38] sm:$0xf]
    %v76 = vld [vmem:[%s1 + $0x3c] sm:$0xf]
    %v77 = vld [vmem:[%s1 + $0x40] sm:$0xf]
    %v78 = vld [vmem:[%s1 + $0x44] sm:$0xf]
    %v79 = vld [vmem:[%s1 + $0x48] sm:$0xf]
    %v80 = vld [vmem:[%s1 + $0x4c] sm:$0xf]
    %v81 = vld [vmem:[%s1 + $0x50] sm:$0xf]
    %v82 = vld [vmem:[%s1 + $0x54] sm:$0xf]
    %v83 = vld [vmem:[%s1 + $0x58] sm:$0xf]
    %v84 = vld [vmem:[%s1 + $0x5c] sm:$0xf]
    %v85 = vld [vmem:[%s1 + $0x60] sm:$0xf]
    %v86 = vld [vmem:[%s1 + $0x64] sm:$0xf]
    %v87 = vld [vmem:[%s1 + $0x68] sm:$0xf]
    %v88 = vld [vmem:[%s1 + $0x6c] sm:$0xf]
    %v89 = vld [vmem:[%s1 + $0x70] sm:$0xf]
    %v90 = vld [vmem:[%s1 + $0x74] sm:$0xf]
    %v91 = vld [vmem:[%s1 + $0x78] sm:$0xf]
    %v92 = vld [vmem:[%s1 + $0x7c] sm:$0xf]
    %v95 = vunpack.c.l.b16 %v59
    %v96 = vunpack.c.h.b16 %v59
    %v97 = vunpack.c.l.b16 %v60
    %v98 = vunpack.c.h.b16 %v60
    %v99 = vpack.c.b16 %v97, %v95
    %v100 = vpack.c.b16 %v98, %v96
    %v135 = vunpack.c.l.b16 %v61
    %v136 = vunpack.c.l.b16 %v62
    %v137 = vunpack.c.l.b16 %v63
    %v138 = vunpack.c.l.b16 %v64
    %v139 = vunpack.c.l.b16 %v65
    %v140 = vunpack.c.l.b16 %v66
    %v141 = vunpack.c.l.b16 %v67
    %v142 = vunpack.c.l.b16 %v68
    %v143 = vunpack.c.l.b16 %v69
    %v144 = vunpack.c.l.b16 %v70
    %v145 = vunpack.c.l.b16 %v71
    %v146 = vunpack.c.l.b16 %v72
    %v147 = vunpack.c.l.b16 %v73
    %v148 = vunpack.c.l.b16 %v74
    %v149 = vunpack.c.l.b16 %v75
    %v150 = vunpack.c.l.b16 %v76
    %v151 = vunpack.c.l.b16 %v77
    %v152 = vunpack.c.l.b16 %v78
    %v153 = vunpack.c.l.b16 %v79
    %v154 = vunpack.c.l.b16 %v80
    %v155 = vunpack.c.l.b16 %v81
    %v156 = vunpack.c.l.b16 %v82
    %v157 = vunpack.c.l.b16 %v83
    %v158 = vunpack.c.l.b16 %v84
    %v159 = vunpack.c.l.b16 %v85
    %v160 = vunpack.c.l.b16 %v86
    %v161 = vunpack.c.l.b16 %v87
    %v162 = vunpack.c.l.b16 %v88
    %v163 = vunpack.c.l.b16 %v89
    %v164 = vunpack.c.l.b16 %v90
    %v165 = vunpack.c.l.b16 %v91
    %v166 = vunpack.c.l.b16 %v92
    %v167 = vpack.c.b16 %v136, %v135
    %v168 = vpack.c.b16 %v138, %v137
    %v169 = vpack.c.b16 %v140, %v139
    %v170 = vpack.c.b16 %v142, %v141
    %v171 = vpack.c.b16 %v144, %v143
    %v172 = vpack.c.b16 %v146, %v145
    %v173 = vpack.c.b16 %v148, %v147
    %v174 = vpack.c.b16 %v150, %v149
    %v175 = vpack.c.b16 %v152, %v151
    %v176 = vpack.c.b16 %v154, %v153
    %v177 = vpack.c.b16 %v156, %v155
    %v178 = vpack.c.b16 %v158, %v157
    %v179 = vpack.c.b16 %v160, %v159
    %v180 = vpack.c.b16 %v162, %v161
    %v181 = vpack.c.b16 %v164, %v163
    %v182 = vpack.c.b16 %v166, %v165
    %199 = vmatpush.bf16.msra.mxu0 %v174
    %200 = vmatpush.bf16.msra.mxu0 %v173
    %201 = vmatpush.bf16.msra.mxu0 %v172
    %202 = vmatpush.bf16.msra.mxu0 %v171
    %203 = vmatpush.bf16.msra.mxu0 %v170
    %204 = vmatpush.bf16.msra.mxu0 %v169
    %205 = vmatpush.bf16.msra.mxu0 %v168
    %206 = vmatpush.bf16.msra.mxu0 %v167
    %207 = vmatmul.bf16.gmra.mxu0 %v99
    %v208 = vpop.f32.mrf.mxu0
    %v209 = vadd.f32 0.0, %v208
    %v210 = vpop.f32.mrf.mxu0
    %v211 = vadd.f32 0.0, %v210
    %212 = vdwg.mxu0
    %213 = vmatpush.bf16.msra.mxu0 %v182
    %214 = vmatpush.bf16.msra.mxu0 %v181
    %215 = vmatpush.bf16.msra.mxu0 %v180
    %216 = vmatpush.bf16.msra.mxu0 %v179
    %217 = vmatpush.bf16.msra.mxu0 %v178
    %218 = vmatpush.bf16.msra.mxu0 %v177
    %219 = vmatpush.bf16.msra.mxu0 %v176
    %220 = vmatpush.bf16.msra.mxu0 %v175
    %221 = vmatmul.bf16.gmra.mxu0 %v100
    %v222 = vpop.f32.mrf.mxu0
    %v223 = vadd.f32 %v209, %v222
    %v224 = vpop.f32.mrf.mxu0
    %v225 = vadd.f32 %v211, %v224
    %226 = vdwg.mxu0
    %v227 = vadd.f32 %v57, %v223
    %v228 = vadd.f32 %v58, %v225
    %229 = vst [vmem:[#allocation2] sm:$0xff] %v227
    %230 = vst [vmem:[#allocation2 + $0x8] sm:$0xff] %v228
    // Predicated region
    $region38: #{transformer_forward.41} parent=1 // pred_check
      %p231 = pneg %p51
    $region39: #{transformer_forward.41} parent=1 // pred_check_branch
      %233 = sbr.rel (%p231) target = $region41
    $region40: #{transformer_forward.41} parent=1 // pred_region
      %v234 = vld [vmem:[#allocation2] sm:$0xff]
      %v235 = vld [vmem:[#allocation2 + $0x8] sm:$0xff]
      %v236 = vld [vmem:[%s2] sm:$0x1]
      %v238 = vperm.slane %v236, 0
      %v240 = vadd.f32 %v234, %v238
      %v241 = vadd.f32 %v235, %v238
      %v242 = vld [vmem:[%s3] sm:$0xf]
      %v243 = vld [vmem:[%s3 + $0x4] sm:$0xf]
      %v244 = vunpack.c.l.bf16 %v242
      %v245 = vunpack.c.l.bf16 %v243
      %v246 = vadd.f32 %v240, %v244
      %v247 = vadd.f32 %v241, %v245
      %248 = vadd.xlane.f32.xlu0 %v246
      %v249 = vpop.xlane.xlu0 %248
      %250 = vadd.xlane.f32.xlu0 %v247
      %v251 = vpop.xlane.xlu0 %250
      %v252 = vrcp.pop 128.0
      %v253 = vmul.f32 128.0, %v252
      %v254 = vsub.f32 1.0, %v253
      %v255 = vmul.f32 %v252, %v254
      %v256 = vadd.f32 %v252, %v255
      %vm257 = vweird.f32 %v252
      %v258 = vsel %vm257, %v252, %v256
      %v259 = vmul.f32 %v249, %v258
      %v260 = vmul.f32 %v251, %v258
      %v261 = vsub.f32 %v246, %v259
      %v262 = vsub.f32 %v247, %v260
      %v263 = vmul.f32 %v261, %v261
      %v264 = vmul.f32 %v262, %v262
      %265 = vadd.xlane.f32.xlu0 %v263
      %v266 = vpop.xlane.xlu0 %265
      %267 = vadd.xlane.f32.xlu0 %v264
      %v268 = vpop.xlane.xlu0 %267
      %v269 = vmul.f32 %v266, %v258
      %v270 = vmul.f32 %v268, %v258
      %v271 = vadd.f32 %v269, 1e-05
      %v272 = vadd.f32 %v270, 1e-05
      %v273 = vrsqrt.pop %v271
      %v274 = vmul.f32 %v273, %v271
      %v275 = vmul.f32 %v274, %v273
      %v276 = vmul.f32 0.5, %v275
      %v277 = vsub.f32 1.5, %v276
      %v278 = vmul.f32 %v273, %v277
      %vm279 = vweird.f32 %v271
      %vm280 = vweird.f32 %v273
      %vm281 = vmor %vm279, %vm280
      %v282 = vsel %vm281, %v273, %v278
      %v283 = vrsqrt.pop %v272
      %v284 = vmul.f32 %v283, %v272
      %v285 = vmul.f32 %v284, %v283
      %v286 = vmul.f32 0.5, %v285
      %v287 = vsub.f32 1.5, %v286
      %v288 = vmul.f32 %v283, %v287
      %vm289 = vweird.f32 %v272
      %vm290 = vweird.f32 %v283
      %vm291 = vmor %vm289, %vm290
      %v292 = vsel %vm291, %v283, %v288
      %v293 = vmul.f32 %v261, %v282
      %v294 = vmul.f32 %v262, %v292
      %v295 = vld [vmem:[#allocation3] sm:$0x1]
      %v297 = vperm.slane %v295, 0
      %v299 = vmul.f32 %v293, %v297
      %v300 = vmul.f32 %v294, %v297
      %v301 = vld [vmem:[#allocation5] sm:$0x1]
      %v303 = vperm.slane %v301, 0
      %v305 = vadd.f32 %v299, %v303
      %v306 = vadd.f32 %v300, %v303
      %v307 = vpack.c.bf16 %v305, %v305
      %v308 = vpack.c.bf16 %v306, %v306
      %309 = vst [vmem:[%s6] sm:$0xf] %v307
      %310 = vst [vmem:[%s6 + $0x4] sm:$0xf] %v308
    $region41: #{transformer_forward.41} parent=1 // pred_fallthru
      _
    // Predicated region
    $region42: #{transformer_forward.41} parent=1 // pred_check
      _
    $region43: #{transformer_forward.41} parent=1 // pred_check_branch
      %312 = sbr.rel (0) target = $region45
    $region44: #{transformer_forward.41} parent=1 // pred_region
      _
    $region45: #{transformer_forward.41} parent=1 // pred_fallthru
      _
    // Predicated region
    $region46: #{transformer_forward.41} parent=1 // pred_check
      _
    $region47: #{transformer_forward.41} parent=1 // pred_check_branch
      %314 = sbr.rel (0) target = $region49
    $region48: #{transformer_forward.41} parent=1 // pred_region
      _
    $region49: #{transformer_forward.41} parent=1 // pred_fallthru
      _
    %315 = vsyncpa [#allocation4], 1
    %316 = vsyncpa [#allocation6], 1

// kernel: transformer_forward.47
$region0: #{transformer_forward.47}
  #allocation0 [shape = 'u32[]', space=smem, size = 0x4, offset = 0x4, fixed_abs, tag = 'smem constant byte address 0x4 - core index']
  #allocation1 [shape = 'u32[72,128]{1,0:T(1,128)}', space=vmem, size = 0x9000, scoped, tag = 'internal scratch']
  #allocation2 [shape = 'f32[16,256]{1,0:T(8,128)}', space=vmem, size = 0x4000, scoped, tag = 'scratch operand']
  %s0 = inlined_call_operand.vmem [shape: bf16[16,128], index: 0, kind: input, shape index: {}]
  %s1 = inlined_call_operand.vmem [shape: bf16[128,256], index: 1, kind: input, shape index: {}]
  %s2 = inlined_call_operand.vmem [shape: f32[1,256], index: 2, kind: input, shape index: {}]
  %s3 = inlined_call_operand.vmem [shape: bf16[16,256], index: 3, kind: output, shape index: {}]
  %s4 = sld [smem:[#allocation0]]
  $region30: #{transformer_forward.47} parent=0
    _
  %s6 = ssub.s32 1, %s4
  %s7 = scalar_select 0, %s6, %s4
  // Predicated region
  $region2: #{transformer_forward.47} parent=0 // pred_check
    _
  $region3: #{transformer_forward.47} parent=0 // pred_check_branch
    %9 = sbr.rel (0) target = $region5
  $region4: #{transformer_forward.47} parent=0 // pred_region
    _
  $region5: #{transformer_forward.47} parent=0 // pred_fallthru
    _
  // Predicated region
  $region6: #{transformer_forward.47} parent=0 // pred_check
    _
  $region7: #{transformer_forward.47} parent=0 // pred_check_branch
    %11 = sbr.rel (0) target = $region9
  $region8: #{transformer_forward.47} parent=0 // pred_region
    _
  $region9: #{transformer_forward.47} parent=0 // pred_fallthru
    _
  // Predicated region
  $region10: #{transformer_forward.47} parent=0 // pred_check
    _
  $region11: #{transformer_forward.47} parent=0 // pred_check_branch
    %13 = sbr.rel (0) target = $region13
  $region12: #{transformer_forward.47} parent=0 // pred_region
    _
  $region13: #{transformer_forward.47} parent=0 // pred_fallthru
    _
  %p14 = scmp.eq.s32.totalorder 0, 0
  // Predicated region
  $region14: #{transformer_forward.47} parent=0 // pred_check
    %p15 = pneg %p14
  $region15: #{transformer_forward.47} parent=0 // pred_check_branch
    %17 = sbr.rel (%p15) target = $region17
  $region16: #{transformer_forward.47} parent=0 // pred_region
    %18 = vst [vmem:[#allocation2] sm:$0xff] 0.0
    %19 = vst [vmem:[#allocation2 + $0x8] sm:$0xff] 0.0
    %20 = vst [vmem:[#allocation2 + $0x10] sm:$0xff] 0.0
    %21 = vst [vmem:[#allocation2 + $0x18] sm:$0xff] 0.0
  $region17: #{transformer_forward.47} parent=0 // pred_fallthru
    _
  %v22 = vld [vmem:[#allocation2] sm:$0xff]
  %v23 = vld [vmem:[#allocation2 + $0x8] sm:$0xff]
  %v24 = vld [vmem:[#allocation2 + $0x10] sm:$0xff]
  %v25 = vld [vmem:[#allocation2 + $0x18] sm:$0xff]
  %v26 = vld [vmem:[%s0] sm:$0xf]
  %v27 = vld [vmem:[%s0 + $0x4] sm:$0xf]
  %v28 = vld [vmem:[%s1] sm:$0xff]
  %v29 = vld [vmem:[%s1 + $0x8] sm:$0xff]
  %v30 = vld [vmem:[%s1 + $0x10] sm:$0xff]
  %v31 = vld [vmem:[%s1 + $0x18] sm:$0xff]
  %v32 = vld [vmem:[%s1 + $0x20] sm:$0xff]
  %v33 = vld [vmem:[%s1 + $0x28] sm:$0xff]
  %v34 = vld [vmem:[%s1 + $0x30] sm:$0xff]
  %v35 = vld [vmem:[%s1 + $0x38] sm:$0xff]
  %v36 = vld [vmem:[%s1 + $0x40] sm:$0xff]
  %v37 = vld [vmem:[%s1 + $0x48] sm:$0xff]
  %v38 = vld [vmem:[%s1 + $0x50] sm:$0xff]
  %v39 = vld [vmem:[%s1 + $0x58] sm:$0xff]
  %v40 = vld [vmem:[%s1 + $0x60] sm:$0xff]
  %v41 = vld [vmem:[%s1 + $0x68] sm:$0xff]
  %v42 = vld [vmem:[%s1 + $0x70] sm:$0xff]
  %v43 = vld [vmem:[%s1 + $0x78] sm:$0xff]
  %v46 = vunpack.c.l.b16 %v26
  %v47 = vunpack.c.l.b16 %v27
  %v48 = vpack.c.b16 %v47, %v46
  %v66 = vunpack.c.l.b16 %v28
  %v67 = vunpack.c.h.b16 %v28
  %v68 = vunpack.c.l.b16 %v29
  %v69 = vunpack.c.h.b16 %v29
  %v70 = vunpack.c.l.b16 %v30
  %v71 = vunpack.c.h.b16 %v30
  %v72 = vunpack.c.l.b16 %v31
  %v73 = vunpack.c.h.b16 %v31
  %v74 = vunpack.c.l.b16 %v32
  %v75 = vunpack.c.h.b16 %v32
  %v76 = vunpack.c.l.b16 %v33
  %v77 = vunpack.c.h.b16 %v33
  %v78 = vunpack.c.l.b16 %v34
  %v79 = vunpack.c.h.b16 %v34
  %v80 = vunpack.c.l.b16 %v35
  %v81 = vunpack.c.h.b16 %v35
  %v82 = vunpack.c.l.b16 %v36
  %v83 = vunpack.c.h.b16 %v36
  %v84 = vunpack.c.l.b16 %v37
  %v85 = vunpack.c.h.b16 %v37
  %v86 = vunpack.c.l.b16 %v38
  %v87 = vunpack.c.h.b16 %v38
  %v88 = vunpack.c.l.b16 %v39
  %v89 = vunpack.c.h.b16 %v39
  %v90 = vunpack.c.l.b16 %v40
  %v91 = vunpack.c.h.b16 %v40
  %v92 = vunpack.c.l.b16 %v41
  %v93 = vunpack.c.h.b16 %v41
  %v94 = vunpack.c.l.b16 %v42
  %v95 = vunpack.c.h.b16 %v42
  %v96 = vunpack.c.l.b16 %v43
  %v97 = vunpack.c.h.b16 %v43
  %v98 = vpack.c.b16 %v68, %v66
  %v99 = vpack.c.b16 %v69, %v67
  %v100 = vpack.c.b16 %v72, %v70
  %v101 = vpack.c.b16 %v73, %v71
  %v102 = vpack.c.b16 %v76, %v74
  %v103 = vpack.c.b16 %v77, %v75
  %v104 = vpack.c.b16 %v80, %v78
  %v105 = vpack.c.b16 %v81, %v79
  %v106 = vpack.c.b16 %v84, %v82
  %v107 = vpack.c.b16 %v85, %v83
  %v108 = vpack.c.b16 %v88, %v86
  %v109 = vpack.c.b16 %v89, %v87
  %v110 = vpack.c.b16 %v92, %v90
  %v111 = vpack.c.b16 %v93, %v91
  %v112 = vpack.c.b16 %v96, %v94
  %v113 = vpack.c.b16 %v97, %v95
  %130 = vmatpush.bf16.msra.mxu0 %v112
  %131 = vmatpush.bf16.msra.mxu0 %v110
  %132 = vmatpush.bf16.msra.mxu0 %v108
  %133 = vmatpush.bf16.msra.mxu0 %v106
  %134 = vmatpush.bf16.msra.mxu0 %v104
  %135 = vmatpush.bf16.msra.mxu0 %v102
  %136 = vmatpush.bf16.msra.mxu0 %v100
  %137 = vmatpush.bf16.msra.mxu0 %v98
  %138 = vmatmul.bf16.gmra.mxu0 %v48
  %v139 = vpop.f32.mrf.mxu0
  %v140 = vadd.f32 0.0, %v139
  %v141 = vpop.f32.mrf.mxu0
  %v142 = vadd.f32 0.0, %v141
  %143 = vdwg.mxu0
  %144 = vmatpush.bf16.msra.mxu0 %v113
  %145 = vmatpush.bf16.msra.mxu0 %v111
  %146 = vmatpush.bf16.msra.mxu0 %v109
  %147 = vmatpush.bf16.msra.mxu0 %v107
  %148 = vmatpush.bf16.msra.mxu0 %v105
  %149 = vmatpush.bf16.msra.mxu0 %v103
  %150 = vmatpush.bf16.msra.mxu0 %v101
  %151 = vmatpush.bf16.msra.mxu0 %v99
  %152 = vmatmul.bf16.gmra.mxu0 %v48
  %v153 = vpop.f32.mrf.mxu0
  %v154 = vadd.f32 0.0, %v153
  %v155 = vpop.f32.mrf.mxu0
  %v156 = vadd.f32 0.0, %v155
  %157 = vdwg.mxu0
  %v158 = vadd.f32 %v22, %v140
  %v159 = vadd.f32 %v23, %v154
  %v160 = vadd.f32 %v24, %v142
  %v161 = vadd.f32 %v25, %v156
  %162 = vst [vmem:[#allocation2] sm:$0xff] %v158
  %163 = vst [vmem:[#allocation2 + $0x8] sm:$0xff] %v159
  %164 = vst [vmem:[#allocation2 + $0x10] sm:$0xff] %v160
  %165 = vst [vmem:[#allocation2 + $0x18] sm:$0xff] %v161
  // Predicated region
  $region18: #{transformer_forward.47} parent=0 // pred_check
    %p166 = pneg %p14
  $region19: #{transformer_forward.47} parent=0 // pred_check_branch
    %168 = sbr.rel (%p166) target = $region21
  $region20: #{transformer_forward.47} parent=0 // pred_region
    %v169 = vld [vmem:[#allocation2] sm:$0xff]
    %v170 = vld [vmem:[#allocation2 + $0x8] sm:$0xff]
    %v171 = vld [vmem:[#allocation2 + $0x10] sm:$0xff]
    %v172 = vld [vmem:[#allocation2 + $0x18] sm:$0xff]
    %v173 = vld [vmem:[%s2] sm:$0x3]
    %v175 = vperm.slane %v173, 0
    %v176 = vperm.slane %v173, 1
    %v179 = vadd.f32 %v169, %v175
    %v180 = vadd.f32 %v170, %v176
    %v181 = vadd.f32 %v171, %v175
    %v182 = vadd.f32 %v172, %v176
    %v183 = vpack.c.bf16 %v180, %v179
    %v184 = vpack.c.bf16 %v182, %v181
    %185 = vst [vmem:[%s3] sm:$0xff] %v183
    %186 = vst [vmem:[%s3 + $0x8] sm:$0xff] %v184
  $region21: #{transformer_forward.47} parent=0 // pred_fallthru
    _
  // Predicated region
  $region22: #{transformer_forward.47} parent=0 // pred_check
    _
  $region23: #{transformer_forward.47} parent=0 // pred_check_branch
    %188 = sbr.rel (0) target = $region25
  $region24: #{transformer_forward.47} parent=0 // pred_region
    _
  $region25: #{transformer_forward.47} parent=0 // pred_fallthru
    _
  // Predicated region
  $region26: #{transformer_forward.47} parent=0 // pred_check
    _
  $region27: #{transformer_forward.47} parent=0 // pred_check_branch
    %190 = sbr.rel (0) target = $region29
  $region28: #{transformer_forward.47} parent=0 // pred_region
    _
  $region29: #{transformer_forward.47} parent=0 // pred_fallthru
    _

// kernel: transformer_forward.46
$region0: #{transformer_forward.46}
  #allocation0 [shape = 'u32[]', space=smem, size = 0x4, offset = 0x4, fixed_abs, tag = 'smem constant byte address 0x4 - core index']
  #allocation1 [shape = 'u32[72,128]{1,0:T(1,128)}', space=vmem, size = 0x9000, scoped, tag = 'internal scratch']
  #allocation2 [shape = 'f32[16,128]{1,0:T(8,128)}', space=vmem, size = 0x2000, scoped, tag = 'scratch operand']
  %s0 = inlined_call_operand.vmem [shape: bf16[16,128], index: 0, kind: input, shape index: {}]
  %s1 = inlined_call_operand.vmem [shape: bf16[128,128], index: 1, kind: input, shape index: {}]
  %s2 = inlined_call_operand.vmem [shape: f32[1,128], index: 2, kind: input, shape index: {}]
  %s3 = inlined_call_operand.vmem [shape: bf16[16,128], index: 3, kind: output, shape index: {}]
  %s4 = sld [smem:[#allocation0]]
  $region30: #{transformer_forward.46} parent=0
    _
  %s6 = ssub.s32 1, %s4
  %s7 = scalar_select 0, %s6, %s4
  // Predicated region
  $region2: #{transformer_forward.46} parent=0 // pred_check
    _
  $region3: #{transformer_forward.46} parent=0 // pred_check_branch
    %9 = sbr.rel (0) target = $region5
  $region4: #{transformer_forward.46} parent=0 // pred_region
    _
  $region5: #{transformer_forward.46} parent=0 // pred_fallthru
    _
  // Predicated region
  $region6: #{transformer_forward.46} parent=0 // pred_check
    _
  $region7: #{transformer_forward.46} parent=0 // pred_check_branch
    %11 = sbr.rel (0) target = $region9
  $region8: #{transformer_forward.46} parent=0 // pred_region
    _
  $region9: #{transformer_forward.46} parent=0 // pred_fallthru
    _
  // Predicated region
  $region10: #{transformer_forward.46} parent=0 // pred_check
    _
  $region11: #{transformer_forward.46} parent=0 // pred_check_branch
    %13 = sbr.rel (0) target = $region13
  $region12: #{transformer_forward.46} parent=0 // pred_region
    _
  $region13: #{transformer_forward.46} parent=0 // pred_fallthru
    _
  %p14 = scmp.eq.s32.totalorder 0, 0
  // Predicated region
  $region14: #{transformer_forward.46} parent=0 // pred_check
    %p15 = pneg %p14
  $region15: #{transformer_forward.46} parent=0 // pred_check_branch
    %17 = sbr.rel (%p15) target = $region17
  $region16: #{transformer_forward.46} parent=0 // pred_region
    %18 = vst [vmem:[#allocation2] sm:$0xff] 0.0
    %19 = vst [vmem:[#allocation2 + $0x8] sm:$0xff] 0.0
  $region17: #{transformer_forward.46} parent=0 // pred_fallthru
    _
  %v20 = vld [vmem:[#allocation2] sm:$0xff]
  %v21 = vld [vmem:[#allocation2 + $0x8] sm:$0xff]
  %v22 = vld [vmem:[%s0] sm:$0xf]
  %v23 = vld [vmem:[%s0 + $0x4] sm:$0xf]
  %v24 = vld [vmem:[%s1] sm:$0xf]
  %v25 = vld [vmem:[%s1 + $0x4] sm:$0xf]
  %v26 = vld [vmem:[%s1 + $0x8] sm:$0xf]
  %v27 = vld [vmem:[%s1 + $0xc] sm:$0xf]
  %v28 = vld [vmem:[%s1 + $0x10] sm:$0xf]
  %v29 = vld [vmem:[%s1 + $0x14] sm:$0xf]
  %v30 = vld [vmem:[%s1 + $0x18] sm:$0xf]
  %v31 = vld [vmem:[%s1 + $0x1c] sm:$0xf]
  %v32 = vld [vmem:[%s1 + $0x20] sm:$0xf]
  %v33 = vld [vmem:[%s1 + $0x24] sm:$0xf]
  %v34 = vld [vmem:[%s1 + $0x28] sm:$0xf]
  %v35 = vld [vmem:[%s1 + $0x2c] sm:$0xf]
  %v36 = vld [vmem:[%s1 + $0x30] sm:$0xf]
  %v37 = vld [vmem:[%s1 + $0x34] sm:$0xf]
  %v38 = vld [vmem:[%s1 + $0x38] sm:$0xf]
  %v39 = vld [vmem:[%s1 + $0x3c] sm:$0xf]
  %v42 = vunpack.c.l.b16 %v22
  %v43 = vunpack.c.l.b16 %v23
  %v44 = vpack.c.b16 %v43, %v42
  %v62 = vunpack.c.l.b16 %v24
  %v63 = vunpack.c.l.b16 %v25
  %v64 = vunpack.c.l.b16 %v26
  %v65 = vunpack.c.l.b16 %v27
  %v66 = vunpack.c.l.b16 %v28
  %v67 = vunpack.c.l.b16 %v29
  %v68 = vunpack.c.l.b16 %v30
  %v69 = vunpack.c.l.b16 %v31
  %v70 = vunpack.c.l.b16 %v32
  %v71 = vunpack.c.l.b16 %v33
  %v72 = vunpack.c.l.b16 %v34
  %v73 = vunpack.c.l.b16 %v35
  %v74 = vunpack.c.l.b16 %v36
  %v75 = vunpack.c.l.b16 %v37
  %v76 = vunpack.c.l.b16 %v38
  %v77 = vunpack.c.l.b16 %v39
  %v78 = vpack.c.b16 %v63, %v62
  %v79 = vpack.c.b16 %v65, %v64
  %v80 = vpack.c.b16 %v67, %v66
  %v81 = vpack.c.b16 %v69, %v68
  %v82 = vpack.c.b16 %v71, %v70
  %v83 = vpack.c.b16 %v73, %v72
  %v84 = vpack.c.b16 %v75, %v74
  %v85 = vpack.c.b16 %v77, %v76
  %94 = vmatpush.bf16.msra.mxu0 %v85
  %95 = vmatpush.bf16.msra.mxu0 %v84
  %96 = vmatpush.bf16.msra.mxu0 %v83
  %97 = vmatpush.bf16.msra.mxu0 %v82
  %98 = vmatpush.bf16.msra.mxu0 %v81
  %99 = vmatpush.bf16.msra.mxu0 %v80
  %100 = vmatpush.bf16.msra.mxu0 %v79
  %101 = vmatpush.bf16.msra.mxu0 %v78
  %102 = vmatmul.bf16.gmra.mxu0 %v44
  %v103 = vpop.f32.mrf.mxu0
  %v104 = vadd.f32 0.0, %v103
  %v105 = vpop.f32.mrf.mxu0
  %v106 = vadd.f32 0.0, %v105
  %107 = vdwg.mxu0
  %v108 = vadd.f32 %v20, %v104
  %v109 = vadd.f32 %v21, %v106
  %110 = vst [vmem:[#allocation2] sm:$0xff] %v108
  %111 = vst [vmem:[#allocation2 + $0x8] sm:$0xff] %v109
  // Predicated region
  $region18: #{transformer_forward.46} parent=0 // pred_check
    %p112 = pneg %p14
  $region19: #{transformer_forward.46} parent=0 // pred_check_branch
    %114 = sbr.rel (%p112) target = $region21
  $region20: #{transformer_forward.46} parent=0 // pred_region
    %v115 = vld [vmem:[#allocation2] sm:$0xff]
    %v116 = vld [vmem:[#allocation2 + $0x8] sm:$0xff]
    %v117 = vld [vmem:[%s2] sm:$0x1]
    %v119 = vperm.slane %v117, 0
    %v121 = vadd.f32 %v115, %v119
    %v122 = vadd.f32 %v116, %v119
    %v123 = vpack.c.bf16 %v121, %v121
    %v124 = vpack.c.bf16 %v122, %v122
    %125 = vst [vmem:[%s3] sm:$0xf] %v123
    %126 = vst [vmem:[%s3 + $0x4] sm:$0xf] %v124
  $region21: #{transformer_forward.46} parent=0 // pred_fallthru
    _
  // Predicated region
  $region22: #{transformer_forward.46} parent=0 // pred_check
    _
  $region23: #{transformer_forward.46} parent=0 // pred_check_branch
    %128 = sbr.rel (0) target = $region25
  $region24: #{transformer_forward.46} parent=0 // pred_region
    _
  $region25: #{transformer_forward.46} parent=0 // pred_fallthru
    _
  // Predicated region
  $region26: #{transformer_forward.46} parent=0 // pred_check
    _
  $region27: #{transformer_forward.46} parent=0 // pred_check_branch
    %130 = sbr.rel (0) target = $region29
  $region28: #{transformer_forward.46} parent=0 // pred_region
    _
  $region29: #{transformer_forward.46} parent=0 // pred_fallthru
    _

// kernel: transformer_forward.44
$region0: #{transformer_forward.44}
  #allocation0 [shape = 'u32[]', space=smem, size = 0x4, offset = 0x4, fixed_abs, tag = 'smem constant byte address 0x4 - core index']
  #allocation1 [shape = 'u32[72,128]{1,0:T(1,128)}', space=vmem, size = 0x9000, scoped, tag = 'internal scratch']
  #allocation2 [shape = 'f32[4,8,1]{2,1,0:T(8,128)}', space=vmem, size = 0x4000, scoped, tag = 'scratch operand']
  #allocation3 [shape = 'f32[4,8,1]{2,1,0:T(8,128)}', space=vmem, size = 0x4000, scoped, tag = 'scratch operand']
  #allocation4 [shape = 'f32[8,128]{1,0:T(8,128)}', space=vmem, size = 0x1000, scoped, tag = 'scratch operand']
  %s0 = inlined_call_operand.vmem [shape: bf16[2,8,384], index: 0, kind: input, shape index: {}, may-alias: {0,1,2}]
  %s1 = inlined_call_operand.vmem [shape: bf16[2,8,384], index: 1, kind: input, shape index: {}, may-alias: {0,1,2}]
  %s2 = inlined_call_operand.vmem [shape: bf16[2,8,384], index: 2, kind: input, shape index: {}, may-alias: {0,1,2}]
  %s3 = inlined_call_operand.vmem [shape: bf16[2,8,128], index: 3, kind: output, shape index: {}]
  %s4 = sld [smem:[#allocation0]]
  $region57: #{transformer_forward.44} parent=0
    _
  %s6 = ssub.s32 1, %s4
  %s7 = scalar_select 0, %s6, %s4
  loop: start=0, step=1, limit=4
  $region2: #{transformer_forward.44} parent=0 // loop_pre_header
    _
  $region3: #{transformer_forward.44} parent=0 // loop_header
    %s9 = sphi 0, %s13
    %p10 = scmp.ge.s32.totalorder %s9, 4
    %s16 = sphi 0, %s35
    %s17 = sphi 0, %s31
    %s18 = sphi 0, %s27
    %s19 = sphi 0, %s16
    %s20 = sphi 0, %s17
    %s21 = sphi 0, %s18
    %s22 = sphi 0, %s19
    %s23 = sphi 0, %s20
    %s24 = sphi 0, %s21
    %s40 = sphi 0, %s42
    %s43 = sphi 0, %s40
    %s44 = sphi 0, %s43
    %s60 = sphi 0, %s44
    %s68 = sphi 0, %s70
    %s71 = sphi 0, %s68
    %s72 = sphi 0, %s71
    %s88 = sphi 0, %s72
    %s96 = sphi 0, %s98
    %s99 = sphi 0, %s96
    %s100 = sphi 0, %s99
    %s116 = sphi 0, %s100
    %s124 = sphi 0, %s126
    %s127 = sphi 0, %s124
    %s128 = sphi 0, %s127
    %s144 = sphi 0, %s128
  $region4: #{transformer_forward.44} parent=0 // loop_header_branch
    %12 = sbr.rel (%p10) target = $region8
  $region5: #{transformer_forward.44} parent=0 // loop_body
    %s14 = ssub.s32 %s9, 1
    %s15 = ssub.s32 %s9, 2
    %s25 = sadd.s32 1, %s18
    %p26 = scmp.ge.s32.totalorder %s25, 1
    %s27 = scalar_select %p26, 0, %s25
    %s28 = sadd.s32 1, %s17
    %s29 = scalar_select %p26, %s28, %s17
    %p30 = scmp.ge.s32.totalorder %s29, 1
    %s31 = scalar_select %p30, 0, %s29
    %s32 = sadd.s32 1, %s16
    %s33 = scalar_select %p30, %s32, %s16
    %p34 = scmp.ge.s32.totalorder %s33, 2
    %s35 = scalar_select %p34, 0, %s33
    %s36 = ssub.s32 %s16, %s35
    %s37 = ssub.s32 %s17, %s31
    %s38 = sor.u32 %s36, %s37
    %p39 = scmp.eq.s32.totalorder %s38, 0
    %s41 = sadd.s32 %s40, 1
    %s42 = scalar_select %p39, %s40, %s41
    %p45 = pneg %p39
    %p46 = scmp.eq.s32.totalorder %s9, 1
    %p47 = por %p45, %p46
    %p48 = scmp.ne.s32.totalorder %s40, %s43
    %p49 = scmp.eq.s32.totalorder %s9, 0
    %p50 = por %p48, %p49
    %p51 = scmp.ne.s32.totalorder %s40, %s43
    %p52 = scmp.eq.s32.totalorder %s14, 1
    %p53 = por %p51, %p52
    %p54 = scmp.ne.s32.totalorder %s43, %s44
    %p55 = scmp.eq.s32.totalorder %s14, 0
    %p56 = por %p54, %p55
    %p57 = scmp.ne.s32.totalorder %s43, %s44
    %p58 = scmp.eq.s32.totalorder %s15, 1
    %p59 = por %p57, %p58
    %p61 = scmp.ne.s32.totalorder %s44, %s60
    %p62 = scmp.eq.s32.totalorder %s15, 0
    %p63 = por %p61, %p62
    %s64 = ssub.s32 %s16, %s35
    %s65 = ssub.s32 %s18, %s27
    %s66 = sor.u32 %s64, %s65
    %p67 = scmp.eq.s32.totalorder %s66, 0
    %s69 = sadd.s32 %s68, 1
    %s70 = scalar_select %p67, %s68, %s69
    %p73 = pneg %p67
    %p74 = scmp.eq.s32.totalorder %s9, 1
    %p75 = por %p73, %p74
    %p76 = scmp.ne.s32.totalorder %s68, %s71
    %p77 = scmp.eq.s32.totalorder %s9, 0
    %p78 = por %p76, %p77
    %p79 = scmp.ne.s32.totalorder %s68, %s71
    %p80 = scmp.eq.s32.totalorder %s14, 1
    %p81 = por %p79, %p80
    %p82 = scmp.ne.s32.totalorder %s71, %s72
    %p83 = scmp.eq.s32.totalorder %s14, 0
    %p84 = por %p82, %p83
    %p85 = scmp.ne.s32.totalorder %s71, %s72
    %p86 = scmp.eq.s32.totalorder %s15, 1
    %p87 = por %p85, %p86
    %p89 = scmp.ne.s32.totalorder %s72, %s88
    %p90 = scmp.eq.s32.totalorder %s15, 0
    %p91 = por %p89, %p90
    %s92 = ssub.s32 %s16, %s35
    %s93 = ssub.s32 %s18, %s27
    %s94 = sor.u32 %s92, %s93
    %p95 = scmp.eq.s32.totalorder %s94, 0
    %s97 = sadd.s32 %s96, 1
    %s98 = scalar_select %p95, %s96, %s97
    %p101 = pneg %p95
    %p102 = scmp.eq.s32.totalorder %s9, 1
    %p103 = por %p101, %p102
    %p104 = scmp.ne.s32.totalorder %s96, %s99
    %p105 = scmp.eq.s32.totalorder %s9, 0
    %p106 = por %p104, %p105
    %p107 = scmp.ne.s32.totalorder %s96, %s99
    %p108 = scmp.eq.s32.totalorder %s14, 1
    %p109 = por %p107, %p108
    %p110 = scmp.ne.s32.totalorder %s99, %s100
    %p111 = scmp.eq.s32.totalorder %s14, 0
    %p112 = por %p110, %p111
    %p113 = scmp.ne.s32.totalorder %s99, %s100
    %p114 = scmp.eq.s32.totalorder %s15, 1
    %p115 = por %p113, %p114
    %p117 = scmp.ne.s32.totalorder %s100, %s116
    %p118 = scmp.eq.s32.totalorder %s15, 0
    %p119 = por %p117, %p118
    %s120 = ssub.s32 %s16, %s35
    %s121 = ssub.s32 %s17, %s31
    %s122 = sor.u32 %s120, %s121
    %p123 = scmp.eq.s32.totalorder %s122, 0
    %s125 = sadd.s32 %s124, 1
    %s126 = scalar_select %p123, %s124, %s125
    %p129 = pneg %p123
    %p130 = scmp.eq.s32.totalorder %s9, 1
    %p131 = por %p129, %p130
    %p132 = scmp.ne.s32.totalorder %s124, %s127
    %p133 = scmp.eq.s32.totalorder %s9, 0
    %p134 = por %p132, %p133
    %p135 = scmp.ne.s32.totalorder %s124, %s127
    %p136 = scmp.eq.s32.totalorder %s14, 1
    %p137 = por %p135, %p136
    %p138 = scmp.ne.s32.totalorder %s127, %s128
    %p139 = scmp.eq.s32.totalorder %s14, 0
    %p140 = por %p138, %p139
    %p141 = scmp.ne.s32.totalorder %s127, %s128
    %p142 = scmp.eq.s32.totalorder %s15, 1
    %p143 = por %p141, %p142
    %p145 = scmp.ne.s32.totalorder %s128, %s144
    %p146 = scmp.eq.s32.totalorder %s15, 0
    %p147 = por %p145, %p146
    %p148 = scmp.le.s32.totalorder 1, %s9
    %p149 = scmp.lt.s32.totalorder %s9, 3
    %p150 = pnand %p148, %p149
    %p151 = pneg %p150
    // Predicated region
    $region9: #{transformer_forward.44} parent=5 // pred_check
      _
    $region10: #{transformer_forward.44} parent=5 // pred_check_branch
      %153 = sbr.rel (%p150) target = $region12
    $region11: #{transformer_forward.44} parent=5 // pred_region
      %s154 = ssub.s32 %s9, 1
    $region12: #{transformer_forward.44} parent=5 // pred_fallthru
      _
    %p155 = scmp.lt.s32.totalorder %s9, 2
    // Predicated region
    $region13: #{transformer_forward.44} parent=5 // pred_check
      %p156 = pneg %p155
    $region14: #{transformer_forward.44} parent=5 // pred_check_branch
      %158 = sbr.rel (%p156) target = $region16
    $region15: #{transformer_forward.44} parent=5 // pred_region
      // Predicated region
      $region17: #{transformer_forward.44} parent=15 // pred_check
        %p159 = pneg %p50
      $region18: #{transformer_forward.44} parent=15 // pred_check_branch
        %161 = sbr.rel (%p159) target = $region20
      $region19: #{transformer_forward.44} parent=15 // pred_region
        %p162 = scmp.lt.s32.totalorder %s16, 1
        %s163 = scalar_select %p162, %s16, 1
        %p164 = scmp.lt.s32.totalorder %s17, 0
        %s165 = scalar_select %p164, %s17, 0
        %s166 = smul.addr %s165, 3
        %s167 = smul.addr %s163, 3
        %s168 = sadd.s32 %s166, %s167
        %s169 = smul.addr %s168, 4
        %s170 = scalar_lea.vmem %s0, %s169
      $region20: #{transformer_forward.44} parent=15 // pred_fallthru
        _
      // Predicated region
      $region21: #{transformer_forward.44} parent=15 // pred_check
        %p171 = pneg %p78
      $region22: #{transformer_forward.44} parent=15 // pred_check_branch
        %173 = sbr.rel (%p171) target = $region24
      $region23: #{transformer_forward.44} parent=15 // pred_region
        %p174 = scmp.lt.s32.totalorder %s16, 1
        %s175 = scalar_select %p174, %s16, 1
        %p176 = scmp.lt.s32.totalorder %s18, 0
        %s177 = scalar_select %p176, %s18, 0
        %s178 = smul.addr %s177, 3
        %s179 = sadd.s32 1, %s178
        %s180 = smul.addr %s175, 3
        %s181 = sadd.s32 %s179, %s180
        %s182 = smul.addr %s181, 4
        %s183 = scalar_lea.vmem %s1, %s182
      $region24: #{transformer_forward.44} parent=15 // pred_fallthru
        _
      // Predicated region
      $region25: #{transformer_forward.44} parent=15 // pred_check
        %p184 = pneg %p106
      $region26: #{transformer_forward.44} parent=15 // pred_check_branch
        %186 = sbr.rel (%p184) target = $region28
      $region27: #{transformer_forward.44} parent=15 // pred_region
        %p187 = scmp.lt.s32.totalorder %s16, 1
        %s188 = scalar_select %p187, %s16, 1
        %p189 = scmp.lt.s32.totalorder %s18, 0
        %s190 = scalar_select %p189, %s18, 0
        %s191 = smul.addr %s190, 3
        %s192 = sadd.s32 2, %s191
        %s193 = smul.addr %s188, 3
        %s194 = sadd.s32 %s192, %s193
        %s195 = smul.addr %s194, 4
        %s196 = scalar_lea.vmem %s2, %s195
      $region28: #{transformer_forward.44} parent=15 // pred_fallthru
        _
    $region16: #{transformer_forward.44} parent=5 // pred_fallthru
      _
    %p197 = scmp.le.s32.totalorder 1, %s9
    %p198 = scmp.lt.s32.totalorder %s9, 3
    %p199 = pnand %p197, %p198
    %p200 = pneg %p199
    // Predicated region
    $region29: #{transformer_forward.44} parent=5 // pred_check
      _
    $region30: #{transformer_forward.44} parent=5 // pred_check_branch
      %202 = sbr.rel (%p199) target = $region32
    $region31: #{transformer_forward.44} parent=5 // pred_region
      %s203 = ssub.s32 %s9, 1
      %p204 = scmp.lt.s32.totalorder %s19, 1
      %s205 = scalar_select %p204, %s19, 1
      %p206 = scmp.lt.s32.totalorder %s20, 0
      %s207 = scalar_select %p206, %s20, 0
      %s208 = smul.addr %s207, 3
      %s209 = smul.addr %s205, 3
      %s210 = sadd.s32 %s208, %s209
      %s211 = smul.addr %s210, 4
      %s212 = scalar_lea.vmem %s0, %s211
      %p213 = pneg %p56
      %p214 = pneg %p53
      %p215 = scmp.lt.s32.totalorder %s19, 1
      %s216 = scalar_select %p215, %s19, 1
      %p217 = scmp.lt.s32.totalorder %s21, 0
      %s218 = scalar_select %p217, %s21, 0
      %s219 = smul.addr %s218, 3
      %s220 = sadd.s32 1, %s219
      %s221 = smul.addr %s216, 3
      %s222 = sadd.s32 %s220, %s221
      %s223 = smul.addr %s222, 4
      %s224 = scalar_lea.vmem %s1, %s223
      %p225 = pneg %p84
      %p226 = pneg %p81
      %p227 = scmp.lt.s32.totalorder %s19, 1
      %s228 = scalar_select %p227, %s19, 1
      %p229 = scmp.lt.s32.totalorder %s21, 0
      %s230 = scalar_select %p229, %s21, 0
      %s231 = smul.addr %s230, 3
      %s232 = sadd.s32 2, %s231
      %s233 = smul.addr %s228, 3
      %s234 = sadd.s32 %s232, %s233
      %s235 = smul.addr %s234, 4
      %s236 = scalar_lea.vmem %s2, %s235
      %p237 = pneg %p112
      %p238 = pneg %p109
      %p239 = pneg %p140
      %p240 = pneg %p137
      %p241 = scmp.lt.s32.totalorder %s19, 1
      %s242 = scalar_select %p241, %s19, 1
      %p243 = scmp.lt.s32.totalorder %s20, 0
      %s244 = scalar_select %p243, %s20, 0
      %s245 = sadd.s32 %s244, %s242
      %s246 = smul.addr %s245, 4
      %s247 = scalar_lea.vmem %s3, %s246
      %p248 = scmp.lt.s32.totalorder %s19, 1
      %s249 = scalar_select %p248, %s19, 1
      %p250 = scmp.lt.s32.totalorder %s20, 0
      %s251 = scalar_select %p250, %s20, 0
      %s252 = smul.addr %s251, 3
      %s253 = smul.addr %s249, 3
      %s254 = sadd.s32 %s252, %s253
      %s255 = smul.addr %s254, 4
      %s256 = scalar_lea.vmem %s0, %s255
      %p257 = scmp.lt.s32.totalorder %s19, 1
      %s258 = scalar_select %p257, %s19, 1
      %p259 = scmp.lt.s32.totalorder %s21, 0
      %s260 = scalar_select %p259, %s21, 0
      %s261 = smul.addr %s260, 3
      %s262 = sadd.s32 1, %s261
      %s263 = smul.addr %s258, 3
      %s264 = sadd.s32 %s262, %s263
      %s265 = smul.addr %s264, 4
      %s266 = scalar_lea.vmem %s1, %s265
      %p267 = scmp.lt.s32.totalorder %s19, 1
      %s268 = scalar_select %p267, %s19, 1
      %p269 = scmp.lt.s32.totalorder %s21, 0
      %s270 = scalar_select %p269, %s21, 0
      %s271 = smul.addr %s270, 3
      %s272 = sadd.s32 2, %s271
      %s273 = smul.addr %s268, 3
      %s274 = sadd.s32 %s272, %s273
      %s275 = smul.addr %s274, 4
      %s276 = scalar_lea.vmem %s2, %s275
      %p277 = scmp.lt.s32.totalorder %s19, 1
      %s278 = scalar_select %p277, %s19, 1
      %p279 = scmp.lt.s32.totalorder %s20, 0
      %s280 = scalar_select %p279, %s20, 0
      %s281 = sadd.s32 %s280, %s278
      %s282 = smul.addr %s281, 4
      %s283 = scalar_lea.vmem %s3, %s282
      %p285 = scmp.eq.s32.totalorder %s21, 0
      // Predicated region
      $region33: #{transformer_forward.44} parent=31 // pred_check
        %p286 = pneg %p285
      $region34: #{transformer_forward.44} parent=31 // pred_check_branch
        %288 = sbr.rel (%p286) target = $region36
      $region35: #{transformer_forward.44} parent=31 // pred_region
        %vm289 = vcmask 7168
        %290 = vst.msk [vmem:[#allocation2] sm:$0xff] %vm289, -inf
        %291 = vst.msk [vmem:[#allocation2 + $0x8] sm:$0xff] %vm289, -inf
        %292 = vst.msk [vmem:[#allocation2 + $0x10] sm:$0xff] %vm289, -inf
        %293 = vst.msk [vmem:[#allocation2 + $0x18] sm:$0xff] %vm289, -inf
        %294 = vst.msk [vmem:[#allocation3] sm:$0xff] %vm289, 0.0
        %295 = vst.msk [vmem:[#allocation3 + $0x8] sm:$0xff] %vm289, 0.0
        %296 = vst.msk [vmem:[#allocation3 + $0x10] sm:$0xff] %vm289, 0.0
        %297 = vst.msk [vmem:[#allocation3 + $0x18] sm:$0xff] %vm289, 0.0
        %298 = vst [vmem:[#allocation4] sm:$0xff] 0.0
      $region36: #{transformer_forward.44} parent=31 // pred_fallthru
        _
      %s299 = smul.u32 %s21, 8
      %s300 = smul.u32 %s20, 8
      %s301 = sadd.s32 %s300, 7
      %p302 = scmp.le.s32.totalorder %s299, %s301
      // Predicated region
      $region37: #{transformer_forward.44} parent=31 // pred_check
        %p303 = pneg %p302
      $region38: #{transformer_forward.44} parent=31 // pred_check_branch
        %305 = sbr.rel (%p303) target = $region40
      $region39: #{transformer_forward.44} parent=31 // pred_region
        %v306 = vlaneseq
        %v307 = vshrl.u32 %v306, 7
        %v308 = vstv %s300
        %v309 = vadd.s32 %v308, %v307
        %v310 = vlaneseq
        %v311 = vand.u32 %v310, 127
        %v312 = vstv %s299
        %v313 = vadd.s32 %v312, %v311
        %vm314 = vcmp.le.s32.totalorder %v313, %v309
        %v315 = vld [vmem:[%s256] sm:$0xf]
        %v316 = vunpack.c.l.bf16 %v315
        %v317 = vmul.f32 %v316, 0.17675781
        %v318 = vpack.c.bf16 %v317, %v317
        %v319 = vld [vmem:[%s266] sm:$0xf]
        %v320 = vld [vmem:[%s276] sm:$0xf]
        %vm321 = vcmask 261120
        %v323 = vsel %vm321, %v318, 0
        %v326 = vsel %vm321, %v319, 0
        %328 = vmatpush.bf16.xpose.msra.mxu0 0
        %329 = vmatpush.bf16.xpose.msra.mxu0 0
        %330 = vmatpush.bf16.xpose.msra.mxu0 0
        %331 = vmatpush.bf16.xpose.msra.mxu0 0
        %332 = vmatpush.bf16.xpose.msra.mxu0 0
        %333 = vmatpush.bf16.xpose.msra.mxu0 0
        %334 = vmatpush.bf16.xpose.msra.mxu0 0
        %335 = vmatpush.bf16.xpose.msra.mxu0 %v326
        %336 = vmatmul.bf16.gmra.mxu0 %v323
        %v337 = vpop.f32.mrf.mxu0
        %v338 = vadd.f32 0.0, %v337
        %v339 = vpop.f32.mrf.mxu0
        %340 = vdwg.mxu0
        %v341 = vsel %vm314, %v338, -1e+30
        %v342 = vld [vmem:[#allocation2] sm:$0xff]
        %vm343 = vcmask 64512
        %v344 = vsel %vm343, %v341, -inf
        %345 = vmax.xlane.f32.xlu0 %v344
        %v346 = vpop.xlane.xlu0 %345
        %v347 = vmax.f32 %v342, %v346
        %v348 = vsub.f32 %v342, %v347
        %v349 = vmul.f32 %v348, 1.442695
        %v350 = vpow.pop %v349
        %352 = vset.pattern.permute.xlu0 0
        %353 = vperm.xlu0 %352, %v347
        %v354 = vpop.permute.xlu0 %353
        %v356 = vsub.f32 %v341, %v354
        %v357 = vmul.f32 %v356, 1.442695
        %v358 = vpow.pop %v357
        %v359 = vld [vmem:[#allocation3] sm:$0xff]
        %v360 = vmul.f32 %v350, %v359
        %v361 = vsel %vm343, %v358, 0.0
        %362 = vadd.xlane.f32.xlu0 %v361
        %v363 = vpop.xlane.xlu0 %362
        %v364 = vadd.f32 %v360, %v363
        %vm365 = vcmask 7168
        %366 = vst.msk [vmem:[#allocation3] sm:$0xff] %vm365, %v364
        %367 = vst.msk [vmem:[#allocation2] sm:$0xff] %vm365, %v347
        %v368 = vpack.c.bf16 %v358, %v358
        %v370 = vsel %vm343, %v368, 0
        %vm372 = vcmask 1043456
        %v374 = vsel %vm372, %v320, 0
        %376 = vmatpush.bf16.msra.mxu0 0
        %377 = vmatpush.bf16.msra.mxu0 0
        %378 = vmatpush.bf16.msra.mxu0 0
        %379 = vmatpush.bf16.msra.mxu0 0
        %380 = vmatpush.bf16.msra.mxu0 0
        %381 = vmatpush.bf16.msra.mxu0 0
        %382 = vmatpush.bf16.msra.mxu0 0
        %383 = vmatpush.bf16.msra.mxu0 %v374
        %384 = vmatmul.bf16.gmra.mxu0 %v370
        %v385 = vpop.f32.mrf.mxu0
        %v386 = vadd.f32 0.0, %v385
        %v387 = vpop.f32.mrf.mxu0
        %388 = vdwg.mxu0
        %v389 = vld [vmem:[#allocation4] sm:$0xff]
        %391 = vset.pattern.permute.xlu0 0
        %392 = vperm.xlu0 %391, %v350
        %v393 = vpop.permute.xlu0 %392
        %v395 = vmul.f32 %v393, %v389
        %v396 = vadd.f32 %v395, %v386
        %397 = vst.msk [vmem:[#allocation4] sm:$0xff] %vm321, %v396
        %v398 = vld [vmem:[%s256] sm:$0xf]
        %v399 = vunpack.c.l.bf16 %v398
        %v400 = vmul.f32 %v399, 0.17675781
        %v401 = vpack.c.bf16 %v400, %v400
        %v402 = vld [vmem:[%s266] sm:$0xf]
        %v403 = vld [vmem:[%s276] sm:$0xf]
        %405 = vrot.lane.b32.xlu0 %v401, 96
        %v406 = vpop.permute.xlu0 %405
        %v408 = vunpack.c.l.b16 %v402
        %v409 = vpack.c.b16 %v408, %v408
        %410 = vrot.lane.b32.xlu0 %v409, 96
        %v411 = vpop.permute.xlu0 %410
        %v413 = vsel %vm321, %v406, 0
        %v416 = vsel %vm321, %v411, 0
        %418 = vmatpush.bf16.xpose.msra.mxu0 0
        %419 = vmatpush.bf16.xpose.msra.mxu0 0
        %420 = vmatpush.bf16.xpose.msra.mxu0 0
        %421 = vmatpush.bf16.xpose.msra.mxu0 0
        %422 = vmatpush.bf16.xpose.msra.mxu0 0
        %423 = vmatpush.bf16.xpose.msra.mxu0 0
        %424 = vmatpush.bf16.xpose.msra.mxu0 0
        %425 = vmatpush.bf16.xpose.msra.mxu0 %v416
        %426 = vmatmul.bf16.gmra.mxu0 %v413
        %v427 = vpop.f32.mrf.mxu0
        %v428 = vadd.f32 0.0, %v427
        %v429 = vpop.f32.mrf.mxu0
        %430 = vdwg.mxu0
        %v431 = vsel %vm314, %v428, -1e+30
        %s432 = scalar_lea.vmem [#allocation2], 8
        %v433 = vld [vmem:[%s432] sm:$0xff]
        %v434 = vsel %vm343, %v431, -inf
        %435 = vmax.xlane.f32.xlu0 %v434
        %v436 = vpop.xlane.xlu0 %435
        %v437 = vmax.f32 %v433, %v436
        %v438 = vsub.f32 %v433, %v437
        %v439 = vmul.f32 %v438, 1.442695
        %v440 = vpow.pop %v439
        %442 = vset.pattern.permute.xlu0 0
        %443 = vperm.xlu0 %442, %v437
        %v444 = vpop.permute.xlu0 %443
        %v446 = vsub.f32 %v431, %v444
        %v447 = vmul.f32 %v446, 1.442695
        %v448 = vpow.pop %v447
        %s449 = scalar_lea.vmem [#allocation3], 8
        %v450 = vld [vmem:[%s449] sm:$0xff]
        %v451 = vmul.f32 %v440, %v450
        %v452 = vsel %vm343, %v448, 0.0
        %453 = vadd.xlane.f32.xlu0 %v452
        %v454 = vpop.xlane.xlu0 %453
        %v455 = vadd.f32 %v451, %v454
        %456 = vst.msk [vmem:[%s449] sm:$0xff] %vm365, %v455
        %457 = vst.msk [vmem:[%s432] sm:$0xff] %vm365, %v437
        %v458 = vpack.c.bf16 %v448, %v448
        %v460 = vunpack.c.l.b16 %v403
        %v461 = vpack.c.b16 %v460, %v460
        %462 = vrot.lane.b32.xlu0 %v461, 96
        %v463 = vpop.permute.xlu0 %462
        %v465 = vsel %vm343, %v458, 0
        %v468 = vsel %vm372, %v463, 0
        %470 = vmatpush.bf16.msra.mxu0 0
        %471 = vmatpush.bf16.msra.mxu0 0
        %472 = vmatpush.bf16.msra.mxu0 0
        %473 = vmatpush.bf16.msra.mxu0 0
        %474 = vmatpush.bf16.msra.mxu0 0
        %475 = vmatpush.bf16.msra.mxu0 0
        %476 = vmatpush.bf16.msra.mxu0 0
        %477 = vmatpush.bf16.msra.mxu0 %v468
        %478 = vmatmul.bf16.gmra.mxu0 %v465
        %v479 = vpop.f32.mrf.mxu0
        %v480 = vadd.f32 0.0, %v479
        %v481 = vpop.f32.mrf.mxu0
        %482 = vdwg.mxu0
        %v483 = vld [vmem:[#allocation4] sm:$0xff]
        %485 = vset.pattern.permute.xlu0 0
        %486 = vperm.xlu0 %485, %v440
        %v487 = vpop.permute.xlu0 %486
        %v489 = vmul.f32 %v487, %v483
        %491 = vrot.lane.b32.xlu0 %v480, 32
        %v492 = vpop.permute.xlu0 %491
        %v494 = vadd.f32 %v489, %v492
        %vm495 = vcmask 523520
        %496 = vst.msk [vmem:[#allocation4] sm:$0xff] %vm495, %v494
        %v497 = vld [vmem:[%s256] sm:$0xf]
        %v498 = vunpack.c.l.bf16 %v497
        %v499 = vmul.f32 %v498, 0.17675781
        %v500 = vpack.c.bf16 %v499, %v499
        %v501 = vld [vmem:[%s266] sm:$0xf]
        %v502 = vld [vmem:[%s276] sm:$0xf]
        %504 = vrot.lane.b32.xlu0 %v500, 64
        %v505 = vpop.permute.xlu0 %504
        %v507 = vunpack.c.l.b16 %v501
        %v508 = vpack.c.b16 %v507, %v507
        %509 = vrot.lane.b32.xlu0 %v508, 64
        %v510 = vpop.permute.xlu0 %509
        %v512 = vsel %vm321, %v505, 0
        %v515 = vsel %vm321, %v510, 0
        %517 = vmatpush.bf16.xpose.msra.mxu0 0
        %518 = vmatpush.bf16.xpose.msra.mxu0 0
        %519 = vmatpush.bf16.xpose.msra.mxu0 0
        %520 = vmatpush.bf16.xpose.msra.mxu0 0
        %521 = vmatpush.bf16.xpose.msra.mxu0 0
        %522 = vmatpush.bf16.xpose.msra.mxu0 0
        %523 = vmatpush.bf16.xpose.msra.mxu0 0
        %524 = vmatpush.bf16.xpose.msra.mxu0 %v515
        %525 = vmatmul.bf16.gmra.mxu0 %v512
        %v526 = vpop.f32.mrf.mxu0
        %v527 = vadd.f32 0.0, %v526
        %v528 = vpop.f32.mrf.mxu0
        %529 = vdwg.mxu0
        %v530 = vsel %vm314, %v527, -1e+30
        %s531 = scalar_lea.vmem [#allocation2], 16
        %v532 = vld [vmem:[%s531] sm:$0xff]
        %v533 = vsel %vm343, %v530, -inf
        %534 = vmax.xlane.f32.xlu0 %v533
        %v535 = vpop.xlane.xlu0 %534
        %v536 = vmax.f32 %v532, %v535
        %v537 = vsub.f32 %v532, %v536
        %v538 = vmul.f32 %v537, 1.442695
        %v539 = vpow.pop %v538
        %541 = vset.pattern.permute.xlu0 0
        %542 = vperm.xlu0 %541, %v536
        %v543 = vpop.permute.xlu0 %542
        %v545 = vsub.f32 %v530, %v543
        %v546 = vmul.f32 %v545, 1.442695
        %v547 = vpow.pop %v546
        %s548 = scalar_lea.vmem [#allocation3], 16
        %v549 = vld [vmem:[%s548] sm:$0xff]
        %v550 = vmul.f32 %v539, %v549
        %v551 = vsel %vm343, %v547, 0.0
        %552 = vadd.xlane.f32.xlu0 %v551
        %v553 = vpop.xlane.xlu0 %552
        %v554 = vadd.f32 %v550, %v553
        %555 = vst.msk [vmem:[%s548] sm:$0xff] %vm365, %v554
        %556 = vst.msk [vmem:[%s531] sm:$0xff] %vm365, %v536
        %v557 = vpack.c.bf16 %v547, %v547
        %v559 = vunpack.c.l.b16 %v502
        %v560 = vpack.c.b16 %v559, %v559
        %561 = vrot.lane.b32.xlu0 %v560, 64
        %v562 = vpop.permute.xlu0 %561
        %v564 = vsel %vm343, %v557, 0
        %v567 = vsel %vm372, %v562, 0
        %569 = vmatpush.bf16.msra.mxu0 0
        %570 = vmatpush.bf16.msra.mxu0 0
        %571 = vmatpush.bf16.msra.mxu0 0
        %572 = vmatpush.bf16.msra.mxu0 0
        %573 = vmatpush.bf16.msra.mxu0 0
        %574 = vmatpush.bf16.msra.mxu0 0
        %575 = vmatpush.bf16.msra.mxu0 0
        %576 = vmatpush.bf16.msra.mxu0 %v567
        %577 = vmatmul.bf16.gmra.mxu0 %v564
        %v578 = vpop.f32.mrf.mxu0
        %v579 = vadd.f32 0.0, %v578
        %v580 = vpop.f32.mrf.mxu0
        %581 = vdwg.mxu0
        %v582 = vld [vmem:[#allocation4] sm:$0xff]
        %584 = vset.pattern.permute.xlu0 0
        %585 = vperm.xlu0 %584, %v539
        %v586 = vpop.permute.xlu0 %585
        %v588 = vmul.f32 %v586, %v582
        %590 = vrot.lane.b32.xlu0 %v579, 64
        %v591 = vpop.permute.xlu0 %590
        %v593 = vadd.f32 %v588, %v591
        %vm594 = vcmask 785920
        %595 = vst.msk [vmem:[#allocation4] sm:$0xff] %vm594, %v593
        %v596 = vld [vmem:[%s256] sm:$0xf]
        %v597 = vunpack.c.l.bf16 %v596
        %v598 = vmul.f32 %v597, 0.17675781
        %v599 = vpack.c.bf16 %v598, %v598
        %v600 = vld [vmem:[%s266] sm:$0xf]
        %v601 = vld [vmem:[%s276] sm:$0xf]
        %603 = vrot.lane.b32.xlu0 %v599, 32
        %v604 = vpop.permute.xlu0 %603
        %v606 = vunpack.c.l.b16 %v600
        %v607 = vpack.c.b16 %v606, %v606
        %608 = vrot.lane.b32.xlu0 %v607, 32
        %v609 = vpop.permute.xlu0 %608
        %v611 = vsel %vm321, %v604, 0
        %v614 = vsel %vm321, %v609, 0
        %616 = vmatpush.bf16.xpose.msra.mxu0 0
        %617 = vmatpush.bf16.xpose.msra.mxu0 0
        %618 = vmatpush.bf16.xpose.msra.mxu0 0
        %619 = vmatpush.bf16.xpose.msra.mxu0 0
        %620 = vmatpush.bf16.xpose.msra.mxu0 0
        %621 = vmatpush.bf16.xpose.msra.mxu0 0
        %622 = vmatpush.bf16.xpose.msra.mxu0 0
        %623 = vmatpush.bf16.xpose.msra.mxu0 %v614
        %624 = vmatmul.bf16.gmra.mxu0 %v611
        %v625 = vpop.f32.mrf.mxu0
        %v626 = vadd.f32 0.0, %v625
        %v627 = vpop.f32.mrf.mxu0
        %628 = vdwg.mxu0
        %v629 = vsel %vm314, %v626, -1e+30
        %s630 = scalar_lea.vmem [#allocation2], 24
        %v631 = vld [vmem:[%s630] sm:$0xff]
        %v632 = vsel %vm343, %v629, -inf
        %633 = vmax.xlane.f32.xlu0 %v632
        %v634 = vpop.xlane.xlu0 %633
        %v635 = vmax.f32 %v631, %v634
        %v636 = vsub.f32 %v631, %v635
        %v637 = vmul.f32 %v636, 1.442695
        %v638 = vpow.pop %v637
        %640 = vset.pattern.permute.xlu0 0
        %641 = vperm.xlu0 %640, %v635
        %v642 = vpop.permute.xlu0 %641
        %v644 = vsub.f32 %v629, %v642
        %v645 = vmul.f32 %v644, 1.442695
        %v646 = vpow.pop %v645
        %s647 = scalar_lea.vmem [#allocation3], 24
        %v648 = vld [vmem:[%s647] sm:$0xff]
        %v649 = vmul.f32 %v638, %v648
        %v650 = vsel %vm343, %v646, 0.0
        %651 = vadd.xlane.f32.xlu0 %v650
        %v652 = vpop.xlane.xlu0 %651
        %v653 = vadd.f32 %v649, %v652
        %654 = vst.msk [vmem:[%s647] sm:$0xff] %vm365, %v653
        %655 = vst.msk [vmem:[%s630] sm:$0xff] %vm365, %v635
        %v656 = vpack.c.bf16 %v646, %v646
        %v658 = vunpack.c.l.b16 %v601
        %v659 = vpack.c.b16 %v658, %v658
        %660 = vrot.lane.b32.xlu0 %v659, 32
        %v661 = vpop.permute.xlu0 %660
        %v663 = vsel %vm343, %v656, 0
        %v666 = vsel %vm372, %v661, 0
        %668 = vmatpush.bf16.msra.mxu0 0
        %669 = vmatpush.bf16.msra.mxu0 0
        %670 = vmatpush.bf16.msra.mxu0 0
        %671 = vmatpush.bf16.msra.mxu0 0
        %672 = vmatpush.bf16.msra.mxu0 0
        %673 = vmatpush.bf16.msra.mxu0 0
        %674 = vmatpush.bf16.msra.mxu0 0
        %675 = vmatpush.bf16.msra.mxu0 %v666
        %676 = vmatmul.bf16.gmra.mxu0 %v663
        %v677 = vpop.f32.mrf.mxu0
        %v678 = vadd.f32 0.0, %v677
        %v679 = vpop.f32.mrf.mxu0
        %680 = vdwg.mxu0
        %v681 = vld [vmem:[#allocation4] sm:$0xff]
        %683 = vset.pattern.permute.xlu0 0
        %684 = vperm.xlu0 %683, %v638
        %v685 = vpop.permute.xlu0 %684
        %v687 = vmul.f32 %v685, %v681
        %689 = vrot.lane.b32.xlu0 %v678, 96
        %v690 = vpop.permute.xlu0 %689
        %v692 = vadd.f32 %v687, %v690
        %vm693 = vcmask 1048320
        %694 = vst.msk [vmem:[#allocation4] sm:$0xff] %vm693, %v692
      $region40: #{transformer_forward.44} parent=31 // pred_fallthru
        _
      // Predicated region
      $region41: #{transformer_forward.44} parent=31 // pred_check
        %p695 = pneg %p285
      $region42: #{transformer_forward.44} parent=31 // pred_check_branch
        %697 = sbr.rel (%p695) target = $region44
      $region43: #{transformer_forward.44} parent=31 // pred_region
        %v698 = vld [vmem:[#allocation3] sm:$0xff]
        %v699 = vrcp.pop %v698
        %v700 = vmul.f32 %v698, %v699
        %v701 = vsub.f32 1.0, %v700
        %v702 = vmul.f32 %v699, %v701
        %v703 = vadd.f32 %v699, %v702
        %vm704 = vweird.f32 %v698
        %vm705 = vweird.f32 %v699
        %vm706 = vmor %vm704, %vm705
        %v707 = vsel %vm706, %v699, %v703
        %v708 = vand.u32 2147483647, %v698
        %vm709 = vcmp.eq.f32.partialorder %v708, 8.507059e+37
        %v710 = vand.u32 %v698, 2147483648
        %v711 = vor.u32 1.1754944e-38, %v710
        %v712 = vsel %vm709, %v711, %v707
        %v713 = vmul.f32 1.0, %v712
        %v714 = vld [vmem:[#allocation4] sm:$0xff]
        %716 = vset.pattern.permute.xlu0 0
        %717 = vperm.xlu0 %716, %v713
        %v718 = vpop.permute.xlu0 %717
        %v720 = vmul.f32 %v714, %v718
        %v721 = vpack.c.bf16 %v720, %v720
        %vm722 = vcmask 257024
        %723 = vst.msk [vmem:[%s283] sm:$0xf] %vm722, %v721
        %s724 = scalar_lea.vmem [#allocation3], 8
        %v725 = vld [vmem:[%s724] sm:$0xff]
        %v726 = vrcp.pop %v725
        %v727 = vmul.f32 %v725, %v726
        %v728 = vsub.f32 1.0, %v727
        %v729 = vmul.f32 %v726, %v728
        %v730 = vadd.f32 %v726, %v729
        %vm731 = vweird.f32 %v725
        %vm732 = vweird.f32 %v726
        %vm733 = vmor %vm731, %vm732
        %v734 = vsel %vm733, %v726, %v730
        %v735 = vand.u32 2147483647, %v725
        %vm736 = vcmp.eq.f32.partialorder %v735, 8.507059e+37
        %v737 = vand.u32 %v725, 2147483648
        %v738 = vor.u32 1.1754944e-38, %v737
        %v739 = vsel %vm736, %v738, %v734
        %v740 = vmul.f32 1.0, %v739
        %v741 = vld [vmem:[#allocation4] sm:$0xff]
        %743 = vset.pattern.permute.xlu0 0
        %744 = vperm.xlu0 %743, %v740
        %v745 = vpop.permute.xlu0 %744
        %v747 = vmul.f32 %v741, %v745
        %v748 = vpack.c.bf16 %v747, %v747
        %vm749 = vcmask 519424
        %750 = vst.msk [vmem:[%s283] sm:$0xf] %vm749, %v748
        %s751 = scalar_lea.vmem [#allocation3], 16
        %v752 = vld [vmem:[%s751] sm:$0xff]
        %v753 = vrcp.pop %v752
        %v754 = vmul.f32 %v752, %v753
        %v755 = vsub.f32 1.0, %v754
        %v756 = vmul.f32 %v753, %v755
        %v757 = vadd.f32 %v753, %v756
        %vm758 = vweird.f32 %v752
        %vm759 = vweird.f32 %v753
        %vm760 = vmor %vm758, %vm759
        %v761 = vsel %vm760, %v753, %v757
        %v762 = vand.u32 2147483647, %v752
        %vm763 = vcmp.eq.f32.partialorder %v762, 8.507059e+37
        %v764 = vand.u32 %v752, 2147483648
        %v765 = vor.u32 1.1754944e-38, %v764
        %v766 = vsel %vm763, %v765, %v761
        %v767 = vmul.f32 1.0, %v766
        %v768 = vld [vmem:[#allocation4] sm:$0xff]
        %770 = vset.pattern.permute.xlu0 0
        %771 = vperm.xlu0 %770, %v767
        %v772 = vpop.permute.xlu0 %771
        %v774 = vmul.f32 %v768, %v772
        %v775 = vpack.c.bf16 %v774, %v774
        %vm776 = vcmask 781824
        %777 = vst.msk [vmem:[%s283] sm:$0xf] %vm776, %v775
        %s778 = scalar_lea.vmem [#allocation3], 24
        %v779 = vld [vmem:[%s778] sm:$0xff]
        %v780 = vrcp.pop %v779
        %v781 = vmul.f32 %v779, %v780
        %v782 = vsub.f32 1.0, %v781
        %v783 = vmul.f32 %v780, %v782
        %v784 = vadd.f32 %v780, %v783
        %vm785 = vweird.f32 %v779
        %vm786 = vweird.f32 %v780
        %vm787 = vmor %vm785, %vm786
        %v788 = vsel %vm787, %v780, %v784
        %v789 = vand.u32 2147483647, %v779
        %vm790 = vcmp.eq.f32.partialorder %v789, 8.507059e+37
        %v791 = vand.u32 %v779, 2147483648
        %v792 = vor.u32 1.1754944e-38, %v791
        %v793 = vsel %vm790, %v792, %v788
        %v794 = vmul.f32 1.0, %v793
        %v795 = vld [vmem:[#allocation4] sm:$0xff]
        %797 = vset.pattern.permute.xlu0 0
        %798 = vperm.xlu0 %797, %v794
        %v799 = vpop.permute.xlu0 %798
        %v801 = vmul.f32 %v795, %v799
        %v802 = vpack.c.bf16 %v801, %v801
        %vm803 = vcmask 1044224
        %804 = vst.msk [vmem:[%s283] sm:$0xf] %vm803, %v802
      $region44: #{transformer_forward.44} parent=31 // pred_fallthru
        _
      %p805 = scmp.lt.s32.totalorder %s19, 1
      %s806 = scalar_select %p805, %s19, 1
      %p807 = scmp.lt.s32.totalorder %s20, 0
      %s808 = scalar_select %p807, %s20, 0
      %s809 = sadd.s32 %s808, %s806
      %s810 = smul.addr %s809, 4
      %s811 = scalar_lea.vmem %s3, %s810
      // Predicated region
      $region45: #{transformer_forward.44} parent=31 // pred_check
        %p812 = pneg %p137
      $region46: #{transformer_forward.44} parent=31 // pred_check_branch
        %814 = sbr.rel (%p812) target = $region48
      $region47: #{transformer_forward.44} parent=31 // pred_region
        _
      $region48: #{transformer_forward.44} parent=31 // pred_fallthru
        _
    $region32: #{transformer_forward.44} parent=5 // pred_fallthru
      _
    %p815 = scmp.le.s32.totalorder 2, %s9
    // Predicated region
    $region49: #{transformer_forward.44} parent=5 // pred_check
      %p816 = pneg %p815
    $region50: #{transformer_forward.44} parent=5 // pred_check_branch
      %818 = sbr.rel (%p816) target = $region52
    $region51: #{transformer_forward.44} parent=5 // pred_region
      %s819 = ssub.s32 %s9, 2
      // Predicated region
      $region53: #{transformer_forward.44} parent=51 // pred_check
        %p820 = pneg %p143
      $region54: #{transformer_forward.44} parent=51 // pred_check_branch
        %822 = sbr.rel (%p820) target = $region56
      $region55: #{transformer_forward.44} parent=51 // pred_region
        %p823 = scmp.lt.s32.totalorder %s22, 1
        %s824 = scalar_select %p823, %s22, 1
        %p825 = scmp.lt.s32.totalorder %s23, 0
        %s826 = scalar_select %p825, %s23, 0
        %s827 = sadd.s32 %s826, %s824
        %s828 = smul.addr %s827, 4
        %s829 = scalar_lea.vmem %s3, %s828
      $region56: #{transformer_forward.44} parent=51 // pred_fallthru
        _
    $region52: #{transformer_forward.44} parent=5 // pred_fallthru
      _
  $region6: #{transformer_forward.44} parent=0 // loop_footer
    %s13 = sadd.s32 1, %s9
  $region7: #{transformer_forward.44} parent=0 // loop_footer_branch
    %8 = sbr.rel target = $region3
  $region8: #{transformer_forward.44} parent=0 // loop_exit
    _

// kernel: transformer_forward.48
$region0: #{transformer_forward.48}
  #allocation0 [shape = 'u32[]', space=smem, size = 0x4, offset = 0x4, fixed_abs, tag = 'smem constant byte address 0x4 - core index']
  #allocation1 [shape = 'u32[72,128]{1,0:T(1,128)}', space=vmem, size = 0x9000, scoped, tag = 'internal scratch']
  #allocation2 [shape = 'f32[4,8,1]{2,1,0:T(8,128)}', space=vmem, size = 0x4000, scoped, tag = 'scratch operand']
  #allocation3 [shape = 'f32[4,8,1]{2,1,0:T(8,128)}', space=vmem, size = 0x4000, scoped, tag = 'scratch operand']
  #allocation4 [shape = 'f32[8,128]{1,0:T(8,128)}', space=vmem, size = 0x1000, scoped, tag = 'scratch operand']
  %s0 = inlined_call_operand.vmem [shape: bf16[2,8,128], index: 0, kind: input, shape index: {}]
  %s1 = inlined_call_operand.vmem [shape: bf16[2,8,256], index: 1, kind: input, shape index: {}, may-alias: {1,2}]
  %s2 = inlined_call_operand.vmem [shape: bf16[2,8,256], index: 2, kind: input, shape index: {}, may-alias: {1,2}]
  %s3 = inlined_call_operand.vmem [shape: bf16[2,8,128], index: 3, kind: output, shape index: {}]
  %s4 = sld [smem:[#allocation0]]
  $region53: #{transformer_forward.48} parent=0
    _
  %s6 = ssub.s32 1, %s4
  %s7 = scalar_select 0, %s6, %s4
  loop: start=0, step=1, limit=4
  $region2: #{transformer_forward.48} parent=0 // loop_pre_header
    _
  $region3: #{transformer_forward.48} parent=0 // loop_header
    %s9 = sphi 0, %s13
    %p10 = scmp.ge.s32.totalorder %s9, 4
    %s16 = sphi 0, %s35
    %s17 = sphi 0, %s31
    %s18 = sphi 0, %s27
    %s19 = sphi 0, %s16
    %s20 = sphi 0, %s17
    %s21 = sphi 0, %s18
    %s22 = sphi 0, %s19
    %s23 = sphi 0, %s20
    %s24 = sphi 0, %s21
    %s40 = sphi 0, %s42
    %s43 = sphi 0, %s40
    %s44 = sphi 0, %s43
    %s60 = sphi 0, %s44
    %s68 = sphi 0, %s70
    %s71 = sphi 0, %s68
    %s72 = sphi 0, %s71
    %s88 = sphi 0, %s72
    %s96 = sphi 0, %s98
    %s99 = sphi 0, %s96
    %s100 = sphi 0, %s99
    %s116 = sphi 0, %s100
    %s124 = sphi 0, %s126
    %s127 = sphi 0, %s124
    %s128 = sphi 0, %s127
    %s144 = sphi 0, %s128
  $region4: #{transformer_forward.48} parent=0 // loop_header_branch
    %12 = sbr.rel (%p10) target = $region8
  $region5: #{transformer_forward.48} parent=0 // loop_body
    %s14 = ssub.s32 %s9, 1
    %s15 = ssub.s32 %s9, 2
    %s25 = sadd.s32 1, %s18
    %p26 = scmp.ge.s32.totalorder %s25, 1
    %s27 = scalar_select %p26, 0, %s25
    %s28 = sadd.s32 1, %s17
    %s29 = scalar_select %p26, %s28, %s17
    %p30 = scmp.ge.s32.totalorder %s29, 1
    %s31 = scalar_select %p30, 0, %s29
    %s32 = sadd.s32 1, %s16
    %s33 = scalar_select %p30, %s32, %s16
    %p34 = scmp.ge.s32.totalorder %s33, 2
    %s35 = scalar_select %p34, 0, %s33
    %s36 = ssub.s32 %s16, %s35
    %s37 = ssub.s32 %s17, %s31
    %s38 = sor.u32 %s36, %s37
    %p39 = scmp.eq.s32.totalorder %s38, 0
    %s41 = sadd.s32 %s40, 1
    %s42 = scalar_select %p39, %s40, %s41
    %p45 = pneg %p39
    %p46 = scmp.eq.s32.totalorder %s9, 1
    %p47 = por %p45, %p46
    %p48 = scmp.ne.s32.totalorder %s40, %s43
    %p49 = scmp.eq.s32.totalorder %s9, 0
    %p50 = por %p48, %p49
    %p51 = scmp.ne.s32.totalorder %s40, %s43
    %p52 = scmp.eq.s32.totalorder %s14, 1
    %p53 = por %p51, %p52
    %p54 = scmp.ne.s32.totalorder %s43, %s44
    %p55 = scmp.eq.s32.totalorder %s14, 0
    %p56 = por %p54, %p55
    %p57 = scmp.ne.s32.totalorder %s43, %s44
    %p58 = scmp.eq.s32.totalorder %s15, 1
    %p59 = por %p57, %p58
    %p61 = scmp.ne.s32.totalorder %s44, %s60
    %p62 = scmp.eq.s32.totalorder %s15, 0
    %p63 = por %p61, %p62
    %s64 = ssub.s32 %s16, %s35
    %s65 = ssub.s32 %s18, %s27
    %s66 = sor.u32 %s64, %s65
    %p67 = scmp.eq.s32.totalorder %s66, 0
    %s69 = sadd.s32 %s68, 1
    %s70 = scalar_select %p67, %s68, %s69
    %p73 = pneg %p67
    %p74 = scmp.eq.s32.totalorder %s9, 1
    %p75 = por %p73, %p74
    %p76 = scmp.ne.s32.totalorder %s68, %s71
    %p77 = scmp.eq.s32.totalorder %s9, 0
    %p78 = por %p76, %p77
    %p79 = scmp.ne.s32.totalorder %s68, %s71
    %p80 = scmp.eq.s32.totalorder %s14, 1
    %p81 = por %p79, %p80
    %p82 = scmp.ne.s32.totalorder %s71, %s72
    %p83 = scmp.eq.s32.totalorder %s14, 0
    %p84 = por %p82, %p83
    %p85 = scmp.ne.s32.totalorder %s71, %s72
    %p86 = scmp.eq.s32.totalorder %s15, 1
    %p87 = por %p85, %p86
    %p89 = scmp.ne.s32.totalorder %s72, %s88
    %p90 = scmp.eq.s32.totalorder %s15, 0
    %p91 = por %p89, %p90
    %s92 = ssub.s32 %s16, %s35
    %s93 = ssub.s32 %s18, %s27
    %s94 = sor.u32 %s92, %s93
    %p95 = scmp.eq.s32.totalorder %s94, 0
    %s97 = sadd.s32 %s96, 1
    %s98 = scalar_select %p95, %s96, %s97
    %p101 = pneg %p95
    %p102 = scmp.eq.s32.totalorder %s9, 1
    %p103 = por %p101, %p102
    %p104 = scmp.ne.s32.totalorder %s96, %s99
    %p105 = scmp.eq.s32.totalorder %s9, 0
    %p106 = por %p104, %p105
    %p107 = scmp.ne.s32.totalorder %s96, %s99
    %p108 = scmp.eq.s32.totalorder %s14, 1
    %p109 = por %p107, %p108
    %p110 = scmp.ne.s32.totalorder %s99, %s100
    %p111 = scmp.eq.s32.totalorder %s14, 0
    %p112 = por %p110, %p111
    %p113 = scmp.ne.s32.totalorder %s99, %s100
    %p114 = scmp.eq.s32.totalorder %s15, 1
    %p115 = por %p113, %p114
    %p117 = scmp.ne.s32.totalorder %s100, %s116
    %p118 = scmp.eq.s32.totalorder %s15, 0
    %p119 = por %p117, %p118
    %s120 = ssub.s32 %s16, %s35
    %s121 = ssub.s32 %s17, %s31
    %s122 = sor.u32 %s120, %s121
    %p123 = scmp.eq.s32.totalorder %s122, 0
    %s125 = sadd.s32 %s124, 1
    %s126 = scalar_select %p123, %s124, %s125
    %p129 = pneg %p123
    %p130 = scmp.eq.s32.totalorder %s9, 1
    %p131 = por %p129, %p130
    %p132 = scmp.ne.s32.totalorder %s124, %s127
    %p133 = scmp.eq.s32.totalorder %s9, 0
    %p134 = por %p132, %p133
    %p135 = scmp.ne.s32.totalorder %s124, %s127
    %p136 = scmp.eq.s32.totalorder %s14, 1
    %p137 = por %p135, %p136
    %p138 = scmp.ne.s32.totalorder %s127, %s128
    %p139 = scmp.eq.s32.totalorder %s14, 0
    %p140 = por %p138, %p139
    %p141 = scmp.ne.s32.totalorder %s127, %s128
    %p142 = scmp.eq.s32.totalorder %s15, 1
    %p143 = por %p141, %p142
    %p145 = scmp.ne.s32.totalorder %s128, %s144
    %p146 = scmp.eq.s32.totalorder %s15, 0
    %p147 = por %p145, %p146
    %p148 = scmp.le.s32.totalorder 1, %s9
    %p149 = scmp.lt.s32.totalorder %s9, 3
    %p150 = pnand %p148, %p149
    %p151 = pneg %p150
    // Predicated region
    $region9: #{transformer_forward.48} parent=5 // pred_check
      _
    $region10: #{transformer_forward.48} parent=5 // pred_check_branch
      %153 = sbr.rel (%p150) target = $region12
    $region11: #{transformer_forward.48} parent=5 // pred_region
      %s154 = ssub.s32 %s9, 1
    $region12: #{transformer_forward.48} parent=5 // pred_fallthru
      _
    %p155 = scmp.lt.s32.totalorder %s9, 2
    // Predicated region
    $region13: #{transformer_forward.48} parent=5 // pred_check
      %p156 = pneg %p155
    $region14: #{transformer_forward.48} parent=5 // pred_check_branch
      %158 = sbr.rel (%p156) target = $region16
    $region15: #{transformer_forward.48} parent=5 // pred_region
      // Predicated region
      $region17: #{transformer_forward.48} parent=15 // pred_check
        %p159 = pneg %p50
      $region18: #{transformer_forward.48} parent=15 // pred_check_branch
        %161 = sbr.rel (%p159) target = $region20
      $region19: #{transformer_forward.48} parent=15 // pred_region
        %p162 = scmp.lt.s32.totalorder %s16, 1
        %s163 = scalar_select %p162, %s16, 1
        %p164 = scmp.lt.s32.totalorder %s17, 0
        %s165 = scalar_select %p164, %s17, 0
        %s166 = sadd.s32 %s165, %s163
        %s167 = smul.addr %s166, 4
        %s168 = scalar_lea.vmem %s0, %s167
      $region20: #{transformer_forward.48} parent=15 // pred_fallthru
        _
      // Predicated region
      $region21: #{transformer_forward.48} parent=15 // pred_check
        %p169 = pneg %p78
      $region22: #{transformer_forward.48} parent=15 // pred_check_branch
        %171 = sbr.rel (%p169) target = $region24
      $region23: #{transformer_forward.48} parent=15 // pred_region
        %p172 = scmp.lt.s32.totalorder %s16, 1
        %s173 = scalar_select %p172, %s16, 1
        %p174 = scmp.lt.s32.totalorder %s18, 0
        %s175 = scalar_select %p174, %s18, 0
        %s176 = smul.addr %s175, 2
        %s177 = smul.addr %s173, 2
        %s178 = sadd.s32 %s176, %s177
        %s179 = smul.addr %s178, 4
        %s180 = scalar_lea.vmem %s1, %s179
      $region24: #{transformer_forward.48} parent=15 // pred_fallthru
        _
      // Predicated region
      $region25: #{transformer_forward.48} parent=15 // pred_check
        %p181 = pneg %p106
      $region26: #{transformer_forward.48} parent=15 // pred_check_branch
        %183 = sbr.rel (%p181) target = $region28
      $region27: #{transformer_forward.48} parent=15 // pred_region
        %p184 = scmp.lt.s32.totalorder %s16, 1
        %s185 = scalar_select %p184, %s16, 1
        %p186 = scmp.lt.s32.totalorder %s18, 0
        %s187 = scalar_select %p186, %s18, 0
        %s188 = smul.addr %s187, 2
        %s189 = sadd.s32 1, %s188
        %s190 = smul.addr %s185, 2
        %s191 = sadd.s32 %s189, %s190
        %s192 = smul.addr %s191, 4
        %s193 = scalar_lea.vmem %s2, %s192
      $region28: #{transformer_forward.48} parent=15 // pred_fallthru
        _
    $region16: #{transformer_forward.48} parent=5 // pred_fallthru
      _
    %p194 = scmp.le.s32.totalorder 1, %s9
    %p195 = scmp.lt.s32.totalorder %s9, 3
    %p196 = pnand %p194, %p195
    %p197 = pneg %p196
    // Predicated region
    $region29: #{transformer_forward.48} parent=5 // pred_check
      _
    $region30: #{transformer_forward.48} parent=5 // pred_check_branch
      %199 = sbr.rel (%p196) target = $region32
    $region31: #{transformer_forward.48} parent=5 // pred_region
      %s200 = ssub.s32 %s9, 1
      %p201 = scmp.lt.s32.totalorder %s19, 1
      %s202 = scalar_select %p201, %s19, 1
      %p203 = scmp.lt.s32.totalorder %s20, 0
      %s204 = scalar_select %p203, %s20, 0
      %s205 = sadd.s32 %s204, %s202
      %s206 = smul.addr %s205, 4
      %s207 = scalar_lea.vmem %s0, %s206
      %p208 = pneg %p56
      %p209 = pneg %p53
      %p210 = scmp.lt.s32.totalorder %s19, 1
      %s211 = scalar_select %p210, %s19, 1
      %p212 = scmp.lt.s32.totalorder %s21, 0
      %s213 = scalar_select %p212, %s21, 0
      %s214 = smul.addr %s213, 2
      %s215 = smul.addr %s211, 2
      %s216 = sadd.s32 %s214, %s215
      %s217 = smul.addr %s216, 4
      %s218 = scalar_lea.vmem %s1, %s217
      %p219 = pneg %p84
      %p220 = pneg %p81
      %p221 = scmp.lt.s32.totalorder %s19, 1
      %s222 = scalar_select %p221, %s19, 1
      %p223 = scmp.lt.s32.totalorder %s21, 0
      %s224 = scalar_select %p223, %s21, 0
      %s225 = smul.addr %s224, 2
      %s226 = sadd.s32 1, %s225
      %s227 = smul.addr %s222, 2
      %s228 = sadd.s32 %s226, %s227
      %s229 = smul.addr %s228, 4
      %s230 = scalar_lea.vmem %s2, %s229
      %p231 = pneg %p112
      %p232 = pneg %p109
      %p233 = pneg %p140
      %p234 = pneg %p137
      %p235 = scmp.lt.s32.totalorder %s19, 1
      %s236 = scalar_select %p235, %s19, 1
      %p237 = scmp.lt.s32.totalorder %s20, 0
      %s238 = scalar_select %p237, %s20, 0
      %s239 = sadd.s32 %s238, %s236
      %s240 = smul.addr %s239, 4
      %s241 = scalar_lea.vmem %s3, %s240
      %p242 = scmp.lt.s32.totalorder %s19, 1
      %s243 = scalar_select %p242, %s19, 1
      %p244 = scmp.lt.s32.totalorder %s20, 0
      %s245 = scalar_select %p244, %s20, 0
      %s246 = sadd.s32 %s245, %s243
      %s247 = smul.addr %s246, 4
      %s248 = scalar_lea.vmem %s0, %s247
      %p249 = scmp.lt.s32.totalorder %s19, 1
      %s250 = scalar_select %p249, %s19, 1
      %p251 = scmp.lt.s32.totalorder %s21, 0
      %s252 = scalar_select %p251, %s21, 0
      %s253 = smul.addr %s252, 2
      %s254 = smul.addr %s250, 2
      %s255 = sadd.s32 %s253, %s254
      %s256 = smul.addr %s255, 4
      %s257 = scalar_lea.vmem %s1, %s256
      %p258 = scmp.lt.s32.totalorder %s19, 1
      %s259 = scalar_select %p258, %s19, 1
      %p260 = scmp.lt.s32.totalorder %s21, 0
      %s261 = scalar_select %p260, %s21, 0
      %s262 = smul.addr %s261, 2
      %s263 = sadd.s32 1, %s262
      %s264 = smul.addr %s259, 2
      %s265 = sadd.s32 %s263, %s264
      %s266 = smul.addr %s265, 4
      %s267 = scalar_lea.vmem %s2, %s266
      %p268 = scmp.lt.s32.totalorder %s19, 1
      %s269 = scalar_select %p268, %s19, 1
      %p270 = scmp.lt.s32.totalorder %s20, 0
      %s271 = scalar_select %p270, %s20, 0
      %s272 = sadd.s32 %s271, %s269
      %s273 = smul.addr %s272, 4
      %s274 = scalar_lea.vmem %s3, %s273
      %p276 = scmp.eq.s32.totalorder %s21, 0
      // Predicated region
      $region33: #{transformer_forward.48} parent=31 // pred_check
        %p277 = pneg %p276
      $region34: #{transformer_forward.48} parent=31 // pred_check_branch
        %279 = sbr.rel (%p277) target = $region36
      $region35: #{transformer_forward.48} parent=31 // pred_region
        %vm280 = vcmask 7168
        %281 = vst.msk [vmem:[#allocation2] sm:$0xff] %vm280, -inf
        %282 = vst.msk [vmem:[#allocation2 + $0x8] sm:$0xff] %vm280, -inf
        %283 = vst.msk [vmem:[#allocation2 + $0x10] sm:$0xff] %vm280, -inf
        %284 = vst.msk [vmem:[#allocation2 + $0x18] sm:$0xff] %vm280, -inf
        %285 = vst.msk [vmem:[#allocation3] sm:$0xff] %vm280, 0.0
        %286 = vst.msk [vmem:[#allocation3 + $0x8] sm:$0xff] %vm280, 0.0
        %287 = vst.msk [vmem:[#allocation3 + $0x10] sm:$0xff] %vm280, 0.0
        %288 = vst.msk [vmem:[#allocation3 + $0x18] sm:$0xff] %vm280, 0.0
        %289 = vst [vmem:[#allocation4] sm:$0xff] 0.0
      $region36: #{transformer_forward.48} parent=31 // pred_fallthru
        _
      %v290 = vld [vmem:[%s248] sm:$0xf]
      %v291 = vunpack.c.l.bf16 %v290
      %v292 = vmul.f32 %v291, 0.17675781
      %v293 = vpack.c.bf16 %v292, %v292
      %v294 = vld [vmem:[%s257] sm:$0xf]
      %v295 = vld [vmem:[%s267] sm:$0xf]
      %vm296 = vcmask 261120
      %v298 = vsel %vm296, %v293, 0
      %v301 = vsel %vm296, %v294, 0
      %303 = vmatpush.bf16.xpose.msra.mxu0 0
      %304 = vmatpush.bf16.xpose.msra.mxu0 0
      %305 = vmatpush.bf16.xpose.msra.mxu0 0
      %306 = vmatpush.bf16.xpose.msra.mxu0 0
      %307 = vmatpush.bf16.xpose.msra.mxu0 0
      %308 = vmatpush.bf16.xpose.msra.mxu0 0
      %309 = vmatpush.bf16.xpose.msra.mxu0 0
      %310 = vmatpush.bf16.xpose.msra.mxu0 %v301
      %311 = vmatmul.bf16.gmra.mxu0 %v298
      %v312 = vpop.f32.mrf.mxu0
      %v313 = vadd.f32 0.0, %v312
      %v314 = vpop.f32.mrf.mxu0
      %315 = vdwg.mxu0
      %v316 = vld [vmem:[#allocation2] sm:$0xff]
      %vm317 = vcmask 64512
      %v318 = vsel %vm317, %v313, -inf
      %319 = vmax.xlane.f32.xlu0 %v318
      %v320 = vpop.xlane.xlu0 %319
      %v321 = vmax.f32 %v316, %v320
      %v322 = vsub.f32 %v316, %v321
      %v323 = vmul.f32 %v322, 1.442695
      %v324 = vpow.pop %v323
      %326 = vset.pattern.permute.xlu0 0
      %327 = vperm.xlu0 %326, %v321
      %v328 = vpop.permute.xlu0 %327
      %v330 = vsub.f32 %v313, %v328
      %v331 = vmul.f32 %v330, 1.442695
      %v332 = vpow.pop %v331
      %v333 = vld [vmem:[#allocation3] sm:$0xff]
      %v334 = vmul.f32 %v324, %v333
      %v335 = vsel %vm317, %v332, 0.0
      %336 = vadd.xlane.f32.xlu0 %v335
      %v337 = vpop.xlane.xlu0 %336
      %v338 = vadd.f32 %v334, %v337
      %vm339 = vcmask 7168
      %340 = vst.msk [vmem:[#allocation3] sm:$0xff] %vm339, %v338
      %341 = vst.msk [vmem:[#allocation2] sm:$0xff] %vm339, %v321
      %v342 = vpack.c.bf16 %v332, %v332
      %v344 = vsel %vm317, %v342, 0
      %vm346 = vcmask 1043456
      %v348 = vsel %vm346, %v295, 0
      %350 = vmatpush.bf16.msra.mxu0 0
      %351 = vmatpush.bf16.msra.mxu0 0
      %352 = vmatpush.bf16.msra.mxu0 0
      %353 = vmatpush.bf16.msra.mxu0 0
      %354 = vmatpush.bf16.msra.mxu0 0
      %355 = vmatpush.bf16.msra.mxu0 0
      %356 = vmatpush.bf16.msra.mxu0 0
      %357 = vmatpush.bf16.msra.mxu0 %v348
      %358 = vmatmul.bf16.gmra.mxu0 %v344
      %v359 = vpop.f32.mrf.mxu0
      %v360 = vadd.f32 0.0, %v359
      %v361 = vpop.f32.mrf.mxu0
      %362 = vdwg.mxu0
      %v363 = vld [vmem:[#allocation4] sm:$0xff]
      %365 = vset.pattern.permute.xlu0 0
      %366 = vperm.xlu0 %365, %v324
      %v367 = vpop.permute.xlu0 %366
      %v369 = vmul.f32 %v367, %v363
      %v370 = vadd.f32 %v369, %v360
      %371 = vst.msk [vmem:[#allocation4] sm:$0xff] %vm296, %v370
      %v372 = vld [vmem:[%s248] sm:$0xf]
      %v373 = vunpack.c.l.bf16 %v372
      %v374 = vmul.f32 %v373, 0.17675781
      %v375 = vpack.c.bf16 %v374, %v374
      %v376 = vld [vmem:[%s257] sm:$0xf]
      %v377 = vld [vmem:[%s267] sm:$0xf]
      %379 = vrot.lane.b32.xlu0 %v375, 96
      %v380 = vpop.permute.xlu0 %379
      %v382 = vunpack.c.l.b16 %v376
      %v383 = vpack.c.b16 %v382, %v382
      %384 = vrot.lane.b32.xlu0 %v383, 96
      %v385 = vpop.permute.xlu0 %384
      %v387 = vsel %vm296, %v380, 0
      %v390 = vsel %vm296, %v385, 0
      %392 = vmatpush.bf16.xpose.msra.mxu0 0
      %393 = vmatpush.bf16.xpose.msra.mxu0 0
      %394 = vmatpush.bf16.xpose.msra.mxu0 0
      %395 = vmatpush.bf16.xpose.msra.mxu0 0
      %396 = vmatpush.bf16.xpose.msra.mxu0 0
      %397 = vmatpush.bf16.xpose.msra.mxu0 0
      %398 = vmatpush.bf16.xpose.msra.mxu0 0
      %399 = vmatpush.bf16.xpose.msra.mxu0 %v390
      %400 = vmatmul.bf16.gmra.mxu0 %v387
      %v401 = vpop.f32.mrf.mxu0
      %v402 = vadd.f32 0.0, %v401
      %v403 = vpop.f32.mrf.mxu0
      %404 = vdwg.mxu0
      %s405 = scalar_lea.vmem [#allocation2], 8
      %v406 = vld [vmem:[%s405] sm:$0xff]
      %v407 = vsel %vm317, %v402, -inf
      %408 = vmax.xlane.f32.xlu0 %v407
      %v409 = vpop.xlane.xlu0 %408
      %v410 = vmax.f32 %v406, %v409
      %v411 = vsub.f32 %v406, %v410
      %v412 = vmul.f32 %v411, 1.442695
      %v413 = vpow.pop %v412
      %415 = vset.pattern.permute.xlu0 0
      %416 = vperm.xlu0 %415, %v410
      %v417 = vpop.permute.xlu0 %416
      %v419 = vsub.f32 %v402, %v417
      %v420 = vmul.f32 %v419, 1.442695
      %v421 = vpow.pop %v420
      %s422 = scalar_lea.vmem [#allocation3], 8
      %v423 = vld [vmem:[%s422] sm:$0xff]
      %v424 = vmul.f32 %v413, %v423
      %v425 = vsel %vm317, %v421, 0.0
      %426 = vadd.xlane.f32.xlu0 %v425
      %v427 = vpop.xlane.xlu0 %426
      %v428 = vadd.f32 %v424, %v427
      %429 = vst.msk [vmem:[%s422] sm:$0xff] %vm339, %v428
      %430 = vst.msk [vmem:[%s405] sm:$0xff] %vm339, %v410
      %v431 = vpack.c.bf16 %v421, %v421
      %v433 = vunpack.c.l.b16 %v377
      %v434 = vpack.c.b16 %v433, %v433
      %435 = vrot.lane.b32.xlu0 %v434, 96
      %v436 = vpop.permute.xlu0 %435
      %v438 = vsel %vm317, %v431, 0
      %v441 = vsel %vm346, %v436, 0
      %443 = vmatpush.bf16.msra.mxu0 0
      %444 = vmatpush.bf16.msra.mxu0 0
      %445 = vmatpush.bf16.msra.mxu0 0
      %446 = vmatpush.bf16.msra.mxu0 0
      %447 = vmatpush.bf16.msra.mxu0 0
      %448 = vmatpush.bf16.msra.mxu0 0
      %449 = vmatpush.bf16.msra.mxu0 0
      %450 = vmatpush.bf16.msra.mxu0 %v441
      %451 = vmatmul.bf16.gmra.mxu0 %v438
      %v452 = vpop.f32.mrf.mxu0
      %v453 = vadd.f32 0.0, %v452
      %v454 = vpop.f32.mrf.mxu0
      %455 = vdwg.mxu0
      %v456 = vld [vmem:[#allocation4] sm:$0xff]
      %458 = vset.pattern.permute.xlu0 0
      %459 = vperm.xlu0 %458, %v413
      %v460 = vpop.permute.xlu0 %459
      %v462 = vmul.f32 %v460, %v456
      %464 = vrot.lane.b32.xlu0 %v453, 32
      %v465 = vpop.permute.xlu0 %464
      %v467 = vadd.f32 %v462, %v465
      %vm468 = vcmask 523520
      %469 = vst.msk [vmem:[#allocation4] sm:$0xff] %vm468, %v467
      %v470 = vld [vmem:[%s248] sm:$0xf]
      %v471 = vunpack.c.l.bf16 %v470
      %v472 = vmul.f32 %v471, 0.17675781
      %v473 = vpack.c.bf16 %v472, %v472
      %v474 = vld [vmem:[%s257] sm:$0xf]
      %v475 = vld [vmem:[%s267] sm:$0xf]
      %477 = vrot.lane.b32.xlu0 %v473, 64
      %v478 = vpop.permute.xlu0 %477
      %v480 = vunpack.c.l.b16 %v474
      %v481 = vpack.c.b16 %v480, %v480
      %482 = vrot.lane.b32.xlu0 %v481, 64
      %v483 = vpop.permute.xlu0 %482
      %v485 = vsel %vm296, %v478, 0
      %v488 = vsel %vm296, %v483, 0
      %490 = vmatpush.bf16.xpose.msra.mxu0 0
      %491 = vmatpush.bf16.xpose.msra.mxu0 0
      %492 = vmatpush.bf16.xpose.msra.mxu0 0
      %493 = vmatpush.bf16.xpose.msra.mxu0 0
      %494 = vmatpush.bf16.xpose.msra.mxu0 0
      %495 = vmatpush.bf16.xpose.msra.mxu0 0
      %496 = vmatpush.bf16.xpose.msra.mxu0 0
      %497 = vmatpush.bf16.xpose.msra.mxu0 %v488
      %498 = vmatmul.bf16.gmra.mxu0 %v485
      %v499 = vpop.f32.mrf.mxu0
      %v500 = vadd.f32 0.0, %v499
      %v501 = vpop.f32.mrf.mxu0
      %502 = vdwg.mxu0
      %s503 = scalar_lea.vmem [#allocation2], 16
      %v504 = vld [vmem:[%s503] sm:$0xff]
      %v505 = vsel %vm317, %v500, -inf
      %506 = vmax.xlane.f32.xlu0 %v505
      %v507 = vpop.xlane.xlu0 %506
      %v508 = vmax.f32 %v504, %v507
      %v509 = vsub.f32 %v504, %v508
      %v510 = vmul.f32 %v509, 1.442695
      %v511 = vpow.pop %v510
      %513 = vset.pattern.permute.xlu0 0
      %514 = vperm.xlu0 %513, %v508
      %v515 = vpop.permute.xlu0 %514
      %v517 = vsub.f32 %v500, %v515
      %v518 = vmul.f32 %v517, 1.442695
      %v519 = vpow.pop %v518
      %s520 = scalar_lea.vmem [#allocation3], 16
      %v521 = vld [vmem:[%s520] sm:$0xff]
      %v522 = vmul.f32 %v511, %v521
      %v523 = vsel %vm317, %v519, 0.0
      %524 = vadd.xlane.f32.xlu0 %v523
      %v525 = vpop.xlane.xlu0 %524
      %v526 = vadd.f32 %v522, %v525
      %527 = vst.msk [vmem:[%s520] sm:$0xff] %vm339, %v526
      %528 = vst.msk [vmem:[%s503] sm:$0xff] %vm339, %v508
      %v529 = vpack.c.bf16 %v519, %v519
      %v531 = vunpack.c.l.b16 %v475
      %v532 = vpack.c.b16 %v531, %v531
      %533 = vrot.lane.b32.xlu0 %v532, 64
      %v534 = vpop.permute.xlu0 %533
      %v536 = vsel %vm317, %v529, 0
      %v539 = vsel %vm346, %v534, 0
      %541 = vmatpush.bf16.msra.mxu0 0
      %542 = vmatpush.bf16.msra.mxu0 0
      %543 = vmatpush.bf16.msra.mxu0 0
      %544 = vmatpush.bf16.msra.mxu0 0
      %545 = vmatpush.bf16.msra.mxu0 0
      %546 = vmatpush.bf16.msra.mxu0 0
      %547 = vmatpush.bf16.msra.mxu0 0
      %548 = vmatpush.bf16.msra.mxu0 %v539
      %549 = vmatmul.bf16.gmra.mxu0 %v536
      %v550 = vpop.f32.mrf.mxu0
      %v551 = vadd.f32 0.0, %v550
      %v552 = vpop.f32.mrf.mxu0
      %553 = vdwg.mxu0
      %v554 = vld [vmem:[#allocation4] sm:$0xff]
      %556 = vset.pattern.permute.xlu0 0
      %557 = vperm.xlu0 %556, %v511
      %v558 = vpop.permute.xlu0 %557
      %v560 = vmul.f32 %v558, %v554
      %562 = vrot.lane.b32.xlu0 %v551, 64
      %v563 = vpop.permute.xlu0 %562
      %v565 = vadd.f32 %v560, %v563
      %vm566 = vcmask 785920
      %567 = vst.msk [vmem:[#allocation4] sm:$0xff] %vm566, %v565
      %v568 = vld [vmem:[%s248] sm:$0xf]
      %v569 = vunpack.c.l.bf16 %v568
      %v570 = vmul.f32 %v569, 0.17675781
      %v571 = vpack.c.bf16 %v570, %v570
      %v572 = vld [vmem:[%s257] sm:$0xf]
      %v573 = vld [vmem:[%s267] sm:$0xf]
      %575 = vrot.lane.b32.xlu0 %v571, 32
      %v576 = vpop.permute.xlu0 %575
      %v578 = vunpack.c.l.b16 %v572
      %v579 = vpack.c.b16 %v578, %v578
      %580 = vrot.lane.b32.xlu0 %v579, 32
      %v581 = vpop.permute.xlu0 %580
      %v583 = vsel %vm296, %v576, 0
      %v586 = vsel %vm296, %v581, 0
      %588 = vmatpush.bf16.xpose.msra.mxu0 0
      %589 = vmatpush.bf16.xpose.msra.mxu0 0
      %590 = vmatpush.bf16.xpose.msra.mxu0 0
      %591 = vmatpush.bf16.xpose.msra.mxu0 0
      %592 = vmatpush.bf16.xpose.msra.mxu0 0
      %593 = vmatpush.bf16.xpose.msra.mxu0 0
      %594 = vmatpush.bf16.xpose.msra.mxu0 0
      %595 = vmatpush.bf16.xpose.msra.mxu0 %v586
      %596 = vmatmul.bf16.gmra.mxu0 %v583
      %v597 = vpop.f32.mrf.mxu0
      %v598 = vadd.f32 0.0, %v597
      %v599 = vpop.f32.mrf.mxu0
      %600 = vdwg.mxu0
      %s601 = scalar_lea.vmem [#allocation2], 24
      %v602 = vld [vmem:[%s601] sm:$0xff]
      %v603 = vsel %vm317, %v598, -inf
      %604 = vmax.xlane.f32.xlu0 %v603
      %v605 = vpop.xlane.xlu0 %604
      %v606 = vmax.f32 %v602, %v605
      %v607 = vsub.f32 %v602, %v606
      %v608 = vmul.f32 %v607, 1.442695
      %v609 = vpow.pop %v608
      %611 = vset.pattern.permute.xlu0 0
      %612 = vperm.xlu0 %611, %v606
      %v613 = vpop.permute.xlu0 %612
      %v615 = vsub.f32 %v598, %v613
      %v616 = vmul.f32 %v615, 1.442695
      %v617 = vpow.pop %v616
      %s618 = scalar_lea.vmem [#allocation3], 24
      %v619 = vld [vmem:[%s618] sm:$0xff]
      %v620 = vmul.f32 %v609, %v619
      %v621 = vsel %vm317, %v617, 0.0
      %622 = vadd.xlane.f32.xlu0 %v621
      %v623 = vpop.xlane.xlu0 %622
      %v624 = vadd.f32 %v620, %v623
      %625 = vst.msk [vmem:[%s618] sm:$0xff] %vm339, %v624
      %626 = vst.msk [vmem:[%s601] sm:$0xff] %vm339, %v606
      %v627 = vpack.c.bf16 %v617, %v617
      %v629 = vunpack.c.l.b16 %v573
      %v630 = vpack.c.b16 %v629, %v629
      %631 = vrot.lane.b32.xlu0 %v630, 32
      %v632 = vpop.permute.xlu0 %631
      %v634 = vsel %vm317, %v627, 0
      %v637 = vsel %vm346, %v632, 0
      %639 = vmatpush.bf16.msra.mxu0 0
      %640 = vmatpush.bf16.msra.mxu0 0
      %641 = vmatpush.bf16.msra.mxu0 0
      %642 = vmatpush.bf16.msra.mxu0 0
      %643 = vmatpush.bf16.msra.mxu0 0
      %644 = vmatpush.bf16.msra.mxu0 0
      %645 = vmatpush.bf16.msra.mxu0 0
      %646 = vmatpush.bf16.msra.mxu0 %v637
      %647 = vmatmul.bf16.gmra.mxu0 %v634
      %v648 = vpop.f32.mrf.mxu0
      %v649 = vadd.f32 0.0, %v648
      %v650 = vpop.f32.mrf.mxu0
      %651 = vdwg.mxu0
      %v652 = vld [vmem:[#allocation4] sm:$0xff]
      %654 = vset.pattern.permute.xlu0 0
      %655 = vperm.xlu0 %654, %v609
      %v656 = vpop.permute.xlu0 %655
      %v658 = vmul.f32 %v656, %v652
      %660 = vrot.lane.b32.xlu0 %v649, 96
      %v661 = vpop.permute.xlu0 %660
      %v663 = vadd.f32 %v658, %v661
      %vm664 = vcmask 1048320
      %665 = vst.msk [vmem:[#allocation4] sm:$0xff] %vm664, %v663
      // Predicated region
      $region37: #{transformer_forward.48} parent=31 // pred_check
        %p666 = pneg %p276
      $region38: #{transformer_forward.48} parent=31 // pred_check_branch
        %668 = sbr.rel (%p666) target = $region40
      $region39: #{transformer_forward.48} parent=31 // pred_region
        %v669 = vld [vmem:[#allocation3] sm:$0xff]
        %v670 = vrcp.pop %v669
        %v671 = vmul.f32 %v669, %v670
        %v672 = vsub.f32 1.0, %v671
        %v673 = vmul.f32 %v670, %v672
        %v674 = vadd.f32 %v670, %v673
        %vm675 = vweird.f32 %v669
        %vm676 = vweird.f32 %v670
        %vm677 = vmor %vm675, %vm676
        %v678 = vsel %vm677, %v670, %v674
        %v679 = vand.u32 2147483647, %v669
        %vm680 = vcmp.eq.f32.partialorder %v679, 8.507059e+37
        %v681 = vand.u32 %v669, 2147483648
        %v682 = vor.u32 1.1754944e-38, %v681
        %v683 = vsel %vm680, %v682, %v678
        %v684 = vmul.f32 1.0, %v683
        %v685 = vld [vmem:[#allocation4] sm:$0xff]
        %687 = vset.pattern.permute.xlu0 0
        %688 = vperm.xlu0 %687, %v684
        %v689 = vpop.permute.xlu0 %688
        %v691 = vmul.f32 %v685, %v689
        %v692 = vpack.c.bf16 %v691, %v691
        %vm693 = vcmask 257024
        %694 = vst.msk [vmem:[%s274] sm:$0xf] %vm693, %v692
        %v695 = vld [vmem:[%s422] sm:$0xff]
        %v696 = vrcp.pop %v695
        %v697 = vmul.f32 %v695, %v696
        %v698 = vsub.f32 1.0, %v697
        %v699 = vmul.f32 %v696, %v698
        %v700 = vadd.f32 %v696, %v699
        %vm701 = vweird.f32 %v695
        %vm702 = vweird.f32 %v696
        %vm703 = vmor %vm701, %vm702
        %v704 = vsel %vm703, %v696, %v700
        %v705 = vand.u32 2147483647, %v695
        %vm706 = vcmp.eq.f32.partialorder %v705, 8.507059e+37
        %v707 = vand.u32 %v695, 2147483648
        %v708 = vor.u32 1.1754944e-38, %v707
        %v709 = vsel %vm706, %v708, %v704
        %v710 = vmul.f32 1.0, %v709
        %v711 = vld [vmem:[#allocation4] sm:$0xff]
        %713 = vset.pattern.permute.xlu0 0
        %714 = vperm.xlu0 %713, %v710
        %v715 = vpop.permute.xlu0 %714
        %v717 = vmul.f32 %v711, %v715
        %v718 = vpack.c.bf16 %v717, %v717
        %vm719 = vcmask 519424
        %720 = vst.msk [vmem:[%s274] sm:$0xf] %vm719, %v718
        %v721 = vld [vmem:[%s520] sm:$0xff]
        %v722 = vrcp.pop %v721
        %v723 = vmul.f32 %v721, %v722
        %v724 = vsub.f32 1.0, %v723
        %v725 = vmul.f32 %v722, %v724
        %v726 = vadd.f32 %v722, %v725
        %vm727 = vweird.f32 %v721
        %vm728 = vweird.f32 %v722
        %vm729 = vmor %vm727, %vm728
        %v730 = vsel %vm729, %v722, %v726
        %v731 = vand.u32 2147483647, %v721
        %vm732 = vcmp.eq.f32.partialorder %v731, 8.507059e+37
        %v733 = vand.u32 %v721, 2147483648
        %v734 = vor.u32 1.1754944e-38, %v733
        %v735 = vsel %vm732, %v734, %v730
        %v736 = vmul.f32 1.0, %v735
        %v737 = vld [vmem:[#allocation4] sm:$0xff]
        %739 = vset.pattern.permute.xlu0 0
        %740 = vperm.xlu0 %739, %v736
        %v741 = vpop.permute.xlu0 %740
        %v743 = vmul.f32 %v737, %v741
        %v744 = vpack.c.bf16 %v743, %v743
        %vm745 = vcmask 781824
        %746 = vst.msk [vmem:[%s274] sm:$0xf] %vm745, %v744
        %v747 = vld [vmem:[%s618] sm:$0xff]
        %v748 = vrcp.pop %v747
        %v749 = vmul.f32 %v747, %v748
        %v750 = vsub.f32 1.0, %v749
        %v751 = vmul.f32 %v748, %v750
        %v752 = vadd.f32 %v748, %v751
        %vm753 = vweird.f32 %v747
        %vm754 = vweird.f32 %v748
        %vm755 = vmor %vm753, %vm754
        %v756 = vsel %vm755, %v748, %v752
        %v757 = vand.u32 2147483647, %v747
        %vm758 = vcmp.eq.f32.partialorder %v757, 8.507059e+37
        %v759 = vand.u32 %v747, 2147483648
        %v760 = vor.u32 1.1754944e-38, %v759
        %v761 = vsel %vm758, %v760, %v756
        %v762 = vmul.f32 1.0, %v761
        %v763 = vld [vmem:[#allocation4] sm:$0xff]
        %765 = vset.pattern.permute.xlu0 0
        %766 = vperm.xlu0 %765, %v762
        %v767 = vpop.permute.xlu0 %766
        %v769 = vmul.f32 %v763, %v767
        %v770 = vpack.c.bf16 %v769, %v769
        %vm771 = vcmask 1044224
        %772 = vst.msk [vmem:[%s274] sm:$0xf] %vm771, %v770
      $region40: #{transformer_forward.48} parent=31 // pred_fallthru
        _
      %p773 = scmp.lt.s32.totalorder %s19, 1
      %s774 = scalar_select %p773, %s19, 1
      %p775 = scmp.lt.s32.totalorder %s20, 0
      %s776 = scalar_select %p775, %s20, 0
      %s777 = sadd.s32 %s776, %s774
      %s778 = smul.addr %s777, 4
      %s779 = scalar_lea.vmem %s3, %s778
      // Predicated region
      $region41: #{transformer_forward.48} parent=31 // pred_check
        %p780 = pneg %p137
      $region42: #{transformer_forward.48} parent=31 // pred_check_branch
        %782 = sbr.rel (%p780) target = $region44
      $region43: #{transformer_forward.48} parent=31 // pred_region
        _
      $region44: #{transformer_forward.48} parent=31 // pred_fallthru
        _
    $region32: #{transformer_forward.48} parent=5 // pred_fallthru
      _
    %p783 = scmp.le.s32.totalorder 2, %s9
    // Predicated region
    $region45: #{transformer_forward.48} parent=5 // pred_check
      %p784 = pneg %p783
    $region46: #{transformer_forward.48} parent=5 // pred_check_branch
      %786 = sbr.rel (%p784) target = $region48
    $region47: #{transformer_forward.48} parent=5 // pred_region
      %s787 = ssub.s32 %s9, 2
      // Predicated region
      $region49: #{transformer_forward.48} parent=47 // pred_check
        %p788 = pneg %p143
      $region50: #{transformer_forward.48} parent=47 // pred_check_branch
        %790 = sbr.rel (%p788) target = $region52
      $region51: #{transformer_forward.48} parent=47 // pred_region
        %p791 = scmp.lt.s32.totalorder %s22, 1
        %s792 = scalar_select %p791, %s22, 1
        %p793 = scmp.lt.s32.totalorder %s23, 0
        %s794 = scalar_select %p793, %s23, 0
        %s795 = sadd.s32 %s794, %s792
        %s796 = smul.addr %s795, 4
        %s797 = scalar_lea.vmem %s3, %s796
      $region52: #{transformer_forward.48} parent=47 // pred_fallthru
        _
    $region48: #{transformer_forward.48} parent=5 // pred_fallthru
      _
  $region6: #{transformer_forward.48} parent=0 // loop_footer
    %s13 = sadd.s32 1, %s9
  $region7: #{transformer_forward.48} parent=0 // loop_footer_branch
    %8 = sbr.rel target = $region3
  $region8: #{transformer_forward.48} parent=0 // loop_exit
    _

// kernel: transformer_forward.49
$region0: #{transformer_forward.49}
  #allocation0 [shape = 'u32[]', space=smem, size = 0x4, offset = 0x4, fixed_abs, tag = 'smem constant byte address 0x4 - core index']
  #allocation1 [shape = 'u32[72,128]{1,0:T(1,128)}', space=vmem, size = 0x9000, scoped, tag = 'internal scratch']
  #allocation2 [shape = 'f32[16,128]{1,0:T(8,128)}', space=vmem, size = 0x2000, scoped, tag = 'scratch operand']
  %s0 = inlined_call_operand.vmem [shape: bf16[16,128], index: 0, kind: input, shape index: {}]
  %s1 = inlined_call_operand.vmem [shape: bf16[128,128], index: 1, kind: input, shape index: {}]
  %s2 = inlined_call_operand.vmem [shape: f32[1,128], index: 2, kind: input, shape index: {}]
  %s3 = inlined_call_operand.vmem [shape: bf16[16,128], index: 3, kind: input, shape index: {}]
  %s4 = inlined_call_operand.vmem [shape: f32[1,128], index: 4, kind: input, shape index: {}]
  %s5 = inlined_call_operand.vmem [shape: f32[1,128], index: 5, kind: input, shape index: {}]
  %s6 = inlined_call_operand.vmem [shape: bf16[16,128], index: 6, kind: output, shape index: {}]
  %s7 = sld [smem:[#allocation0]]
  $region42: #{transformer_forward.49} parent=0
    _
  %s9 = ssub.s32 1, %s7
  %s10 = scalar_select 0, %s9, %s7
  // Predicated region
  $region2: #{transformer_forward.49} parent=0 // pred_check
    _
  $region3: #{transformer_forward.49} parent=0 // pred_check_branch
    %12 = sbr.rel (0) target = $region5
  $region4: #{transformer_forward.49} parent=0 // pred_region
    _
  $region5: #{transformer_forward.49} parent=0 // pred_fallthru
    _
  // Predicated region
  $region6: #{transformer_forward.49} parent=0 // pred_check
    _
  $region7: #{transformer_forward.49} parent=0 // pred_check_branch
    %14 = sbr.rel (0) target = $region9
  $region8: #{transformer_forward.49} parent=0 // pred_region
    _
  $region9: #{transformer_forward.49} parent=0 // pred_fallthru
    _
  // Predicated region
  $region10: #{transformer_forward.49} parent=0 // pred_check
    _
  $region11: #{transformer_forward.49} parent=0 // pred_check_branch
    %16 = sbr.rel (0) target = $region13
  $region12: #{transformer_forward.49} parent=0 // pred_region
    _
  $region13: #{transformer_forward.49} parent=0 // pred_fallthru
    _
  // Predicated region
  $region14: #{transformer_forward.49} parent=0 // pred_check
    _
  $region15: #{transformer_forward.49} parent=0 // pred_check_branch
    %18 = sbr.rel (0) target = $region17
  $region16: #{transformer_forward.49} parent=0 // pred_region
    _
  $region17: #{transformer_forward.49} parent=0 // pred_fallthru
    _
  // Predicated region
  $region18: #{transformer_forward.49} parent=0 // pred_check
    _
  $region19: #{transformer_forward.49} parent=0 // pred_check_branch
    %20 = sbr.rel (0) target = $region21
  $region20: #{transformer_forward.49} parent=0 // pred_region
    _
  $region21: #{transformer_forward.49} parent=0 // pred_fallthru
    _
  // Predicated region
  $region22: #{transformer_forward.49} parent=0 // pred_check
    _
  $region23: #{transformer_forward.49} parent=0 // pred_check_branch
    %22 = sbr.rel (0) target = $region25
  $region24: #{transformer_forward.49} parent=0 // pred_region
    _
  $region25: #{transformer_forward.49} parent=0 // pred_fallthru
    _
  %p23 = scmp.eq.s32.totalorder 0, 0
  // Predicated region
  $region26: #{transformer_forward.49} parent=0 // pred_check
    %p24 = pneg %p23
  $region27: #{transformer_forward.49} parent=0 // pred_check_branch
    %26 = sbr.rel (%p24) target = $region29
  $region28: #{transformer_forward.49} parent=0 // pred_region
    %27 = vst [vmem:[#allocation2] sm:$0xff] 0.0
    %28 = vst [vmem:[#allocation2 + $0x8] sm:$0xff] 0.0
  $region29: #{transformer_forward.49} parent=0 // pred_fallthru
    _
  %v29 = vld [vmem:[#allocation2] sm:$0xff]
  %v30 = vld [vmem:[#allocation2 + $0x8] sm:$0xff]
  %v31 = vld [vmem:[%s0] sm:$0xf]
  %v32 = vld [vmem:[%s0 + $0x4] sm:$0xf]
  %v33 = vld [vmem:[%s1] sm:$0xf]
  %v34 = vld [vmem:[%s1 + $0x4] sm:$0xf]
  %v35 = vld [vmem:[%s1 + $0x8] sm:$0xf]
  %v36 = vld [vmem:[%s1 + $0xc] sm:$0xf]
  %v37 = vld [vmem:[%s1 + $0x10] sm:$0xf]
  %v38 = vld [vmem:[%s1 + $0x14] sm:$0xf]
  %v39 = vld [vmem:[%s1 + $0x18] sm:$0xf]
  %v40 = vld [vmem:[%s1 + $0x1c] sm:$0xf]
  %v41 = vld [vmem:[%s1 + $0x20] sm:$0xf]
  %v42 = vld [vmem:[%s1 + $0x24] sm:$0xf]
  %v43 = vld [vmem:[%s1 + $0x28] sm:$0xf]
  %v44 = vld [vmem:[%s1 + $0x2c] sm:$0xf]
  %v45 = vld [vmem:[%s1 + $0x30] sm:$0xf]
  %v46 = vld [vmem:[%s1 + $0x34] sm:$0xf]
  %v47 = vld [vmem:[%s1 + $0x38] sm:$0xf]
  %v48 = vld [vmem:[%s1 + $0x3c] sm:$0xf]
  %v51 = vunpack.c.l.b16 %v31
  %v52 = vunpack.c.l.b16 %v32
  %v53 = vpack.c.b16 %v52, %v51
  %v71 = vunpack.c.l.b16 %v33
  %v72 = vunpack.c.l.b16 %v34
  %v73 = vunpack.c.l.b16 %v35
  %v74 = vunpack.c.l.b16 %v36
  %v75 = vunpack.c.l.b16 %v37
  %v76 = vunpack.c.l.b16 %v38
  %v77 = vunpack.c.l.b16 %v39
  %v78 = vunpack.c.l.b16 %v40
  %v79 = vunpack.c.l.b16 %v41
  %v80 = vunpack.c.l.b16 %v42
  %v81 = vunpack.c.l.b16 %v43
  %v82 = vunpack.c.l.b16 %v44
  %v83 = vunpack.c.l.b16 %v45
  %v84 = vunpack.c.l.b16 %v46
  %v85 = vunpack.c.l.b16 %v47
  %v86 = vunpack.c.l.b16 %v48
  %v87 = vpack.c.b16 %v72, %v71
  %v88 = vpack.c.b16 %v74, %v73
  %v89 = vpack.c.b16 %v76, %v75
  %v90 = vpack.c.b16 %v78, %v77
  %v91 = vpack.c.b16 %v80, %v79
  %v92 = vpack.c.b16 %v82, %v81
  %v93 = vpack.c.b16 %v84, %v83
  %v94 = vpack.c.b16 %v86, %v85
  %103 = vmatpush.bf16.msra.mxu0 %v94
  %104 = vmatpush.bf16.msra.mxu0 %v93
  %105 = vmatpush.bf16.msra.mxu0 %v92
  %106 = vmatpush.bf16.msra.mxu0 %v91
  %107 = vmatpush.bf16.msra.mxu0 %v90
  %108 = vmatpush.bf16.msra.mxu0 %v89
  %109 = vmatpush.bf16.msra.mxu0 %v88
  %110 = vmatpush.bf16.msra.mxu0 %v87
  %111 = vmatmul.bf16.gmra.mxu0 %v53
  %v112 = vpop.f32.mrf.mxu0
  %v113 = vadd.f32 0.0, %v112
  %v114 = vpop.f32.mrf.mxu0
  %v115 = vadd.f32 0.0, %v114
  %116 = vdwg.mxu0
  %v117 = vadd.f32 %v29, %v113
  %v118 = vadd.f32 %v30, %v115
  %119 = vst [vmem:[#allocation2] sm:$0xff] %v117
  %120 = vst [vmem:[#allocation2 + $0x8] sm:$0xff] %v118
  // Predicated region
  $region30: #{transformer_forward.49} parent=0 // pred_check
    %p121 = pneg %p23
  $region31: #{transformer_forward.49} parent=0 // pred_check_branch
    %123 = sbr.rel (%p121) target = $region33
  $region32: #{transformer_forward.49} parent=0 // pred_region
    %v124 = vld [vmem:[#allocation2] sm:$0xff]
    %v125 = vld [vmem:[#allocation2 + $0x8] sm:$0xff]
    %v126 = vld [vmem:[%s2] sm:$0x1]
    %v128 = vperm.slane %v126, 0
    %v130 = vadd.f32 %v124, %v128
    %v131 = vadd.f32 %v125, %v128
    %v132 = vld [vmem:[%s3] sm:$0xf]
    %v133 = vld [vmem:[%s3 + $0x4] sm:$0xf]
    %v134 = vunpack.c.l.bf16 %v132
    %v135 = vunpack.c.l.bf16 %v133
    %v136 = vadd.f32 %v130, %v134
    %v137 = vadd.f32 %v131, %v135
    %138 = vadd.xlane.f32.xlu0 %v136
    %v139 = vpop.xlane.xlu0 %138
    %140 = vadd.xlane.f32.xlu0 %v137
    %v141 = vpop.xlane.xlu0 %140
    %v142 = vrcp.pop 128.0
    %v143 = vmul.f32 128.0, %v142
    %v144 = vsub.f32 1.0, %v143
    %v145 = vmul.f32 %v142, %v144
    %v146 = vadd.f32 %v142, %v145
    %vm147 = vweird.f32 %v142
    %v148 = vsel %vm147, %v142, %v146
    %v149 = vmul.f32 %v139, %v148
    %v150 = vmul.f32 %v141, %v148
    %v151 = vsub.f32 %v136, %v149
    %v152 = vsub.f32 %v137, %v150
    %v153 = vmul.f32 %v151, %v151
    %v154 = vmul.f32 %v152, %v152
    %155 = vadd.xlane.f32.xlu0 %v153
    %v156 = vpop.xlane.xlu0 %155
    %157 = vadd.xlane.f32.xlu0 %v154
    %v158 = vpop.xlane.xlu0 %157
    %v159 = vmul.f32 %v156, %v148
    %v160 = vmul.f32 %v158, %v148
    %v161 = vadd.f32 %v159, 1e-05
    %v162 = vadd.f32 %v160, 1e-05
    %v163 = vrsqrt.pop %v161
    %v164 = vmul.f32 %v163, %v161
    %v165 = vmul.f32 %v164, %v163
    %v166 = vmul.f32 0.5, %v165
    %v167 = vsub.f32 1.5, %v166
    %v168 = vmul.f32 %v163, %v167
    %vm169 = vweird.f32 %v161
    %vm170 = vweird.f32 %v163
    %vm171 = vmor %vm169, %vm170
    %v172 = vsel %vm171, %v163, %v168
    %v173 = vrsqrt.pop %v162
    %v174 = vmul.f32 %v173, %v162
    %v175 = vmul.f32 %v174, %v173
    %v176 = vmul.f32 0.5, %v175
    %v177 = vsub.f32 1.5, %v176
    %v178 = vmul.f32 %v173, %v177
    %vm179 = vweird.f32 %v162
    %vm180 = vweird.f32 %v173
    %vm181 = vmor %vm179, %vm180
    %v182 = vsel %vm181, %v173, %v178
    %v183 = vmul.f32 %v151, %v172
    %v184 = vmul.f32 %v152, %v182
    %v185 = vld [vmem:[%s4] sm:$0x1]
    %v187 = vperm.slane %v185, 0
    %v189 = vmul.f32 %v183, %v187
    %v190 = vmul.f32 %v184, %v187
    %v191 = vld [vmem:[%s5] sm:$0x1]
    %v193 = vperm.slane %v191, 0
    %v195 = vadd.f32 %v189, %v193
    %v196 = vadd.f32 %v190, %v193
    %v197 = vpack.c.bf16 %v195, %v195
    %v198 = vpack.c.bf16 %v196, %v196
    %199 = vst [vmem:[%s6] sm:$0xf] %v197
    %200 = vst [vmem:[%s6 + $0x4] sm:$0xf] %v198
  $region33: #{transformer_forward.49} parent=0 // pred_fallthru
    _
  // Predicated region
  $region34: #{transformer_forward.49} parent=0 // pred_check
    _
  $region35: #{transformer_forward.49} parent=0 // pred_check_branch
    %202 = sbr.rel (0) target = $region37
  $region36: #{transformer_forward.49} parent=0 // pred_region
    _
  $region37: #{transformer_forward.49} parent=0 // pred_fallthru
    _
  // Predicated region
  $region38: #{transformer_forward.49} parent=0 // pred_check
    _
  $region39: #{transformer_forward.49} parent=0 // pred_check_branch
    %204 = sbr.rel (0) target = $region41
  $region40: #{transformer_forward.49} parent=0 // pred_region
    _
  $region41: #{transformer_forward.49} parent=0 // pred_fallthru
    _

// kernel: transformer_forward.51
$region0: #{transformer_forward.51}
  #allocation0 [shape = 'u32[]', space=smem, size = 0x4, offset = 0x4, fixed_abs, tag = 'smem constant byte address 0x4 - core index']
  #allocation1 [shape = 'u32[72,128]{1,0:T(1,128)}', space=vmem, size = 0x9000, scoped, tag = 'internal scratch']
  #allocation2 [shape = 'f32[16,128]{1,0:T(8,128)}', space=vmem, size = 0x2000, scoped, tag = 'scratch operand']
  %s0 = inlined_call_operand.vmem [shape: bf16[16,256], index: 0, kind: input, shape index: {}]
  %s1 = inlined_call_operand.vmem [shape: bf16[256,128], index: 1, kind: input, shape index: {}]
  %s2 = inlined_call_operand.vmem [shape: f32[1,128], index: 2, kind: input, shape index: {}]
  %s3 = inlined_call_operand.vmem [shape: bf16[16,128], index: 3, kind: input, shape index: {}]
  %s4 = inlined_call_operand.vmem [shape: f32[1,128], index: 4, kind: input, shape index: {}]
  %s5 = inlined_call_operand.vmem [shape: f32[1,128], index: 5, kind: input, shape index: {}]
  %s6 = inlined_call_operand.vmem [shape: bf16[16,128], index: 6, kind: output, shape index: {}]
  %s7 = sld [smem:[#allocation0]]
  $region42: #{transformer_forward.51} parent=0
    _
  %s9 = ssub.s32 1, %s7
  %s10 = scalar_select 0, %s9, %s7
  // Predicated region
  $region2: #{transformer_forward.51} parent=0 // pred_check
    _
  $region3: #{transformer_forward.51} parent=0 // pred_check_branch
    %12 = sbr.rel (0) target = $region5
  $region4: #{transformer_forward.51} parent=0 // pred_region
    _
  $region5: #{transformer_forward.51} parent=0 // pred_fallthru
    _
  // Predicated region
  $region6: #{transformer_forward.51} parent=0 // pred_check
    _
  $region7: #{transformer_forward.51} parent=0 // pred_check_branch
    %14 = sbr.rel (0) target = $region9
  $region8: #{transformer_forward.51} parent=0 // pred_region
    _
  $region9: #{transformer_forward.51} parent=0 // pred_fallthru
    _
  // Predicated region
  $region10: #{transformer_forward.51} parent=0 // pred_check
    _
  $region11: #{transformer_forward.51} parent=0 // pred_check_branch
    %16 = sbr.rel (0) target = $region13
  $region12: #{transformer_forward.51} parent=0 // pred_region
    _
  $region13: #{transformer_forward.51} parent=0 // pred_fallthru
    _
  // Predicated region
  $region14: #{transformer_forward.51} parent=0 // pred_check
    _
  $region15: #{transformer_forward.51} parent=0 // pred_check_branch
    %18 = sbr.rel (0) target = $region17
  $region16: #{transformer_forward.51} parent=0 // pred_region
    _
  $region17: #{transformer_forward.51} parent=0 // pred_fallthru
    _
  // Predicated region
  $region18: #{transformer_forward.51} parent=0 // pred_check
    _
  $region19: #{transformer_forward.51} parent=0 // pred_check_branch
    %20 = sbr.rel (0) target = $region21
  $region20: #{transformer_forward.51} parent=0 // pred_region
    _
  $region21: #{transformer_forward.51} parent=0 // pred_fallthru
    _
  // Predicated region
  $region22: #{transformer_forward.51} parent=0 // pred_check
    _
  $region23: #{transformer_forward.51} parent=0 // pred_check_branch
    %22 = sbr.rel (0) target = $region25
  $region24: #{transformer_forward.51} parent=0 // pred_region
    _
  $region25: #{transformer_forward.51} parent=0 // pred_fallthru
    _
  %p23 = scmp.eq.s32.totalorder 0, 0
  // Predicated region
  $region26: #{transformer_forward.51} parent=0 // pred_check
    %p24 = pneg %p23
  $region27: #{transformer_forward.51} parent=0 // pred_check_branch
    %26 = sbr.rel (%p24) target = $region29
  $region28: #{transformer_forward.51} parent=0 // pred_region
    %27 = vst [vmem:[#allocation2] sm:$0xff] 0.0
    %28 = vst [vmem:[#allocation2 + $0x8] sm:$0xff] 0.0
  $region29: #{transformer_forward.51} parent=0 // pred_fallthru
    _
  %v29 = vld [vmem:[#allocation2] sm:$0xff]
  %v30 = vld [vmem:[#allocation2 + $0x8] sm:$0xff]
  %v31 = vld [vmem:[%s0] sm:$0xff]
  %v32 = vld [vmem:[%s0 + $0x8] sm:$0xff]
  %v33 = vld [vmem:[%s1] sm:$0xf]
  %v34 = vld [vmem:[%s1 + $0x4] sm:$0xf]
  %v35 = vld [vmem:[%s1 + $0x8] sm:$0xf]
  %v36 = vld [vmem:[%s1 + $0xc] sm:$0xf]
  %v37 = vld [vmem:[%s1 + $0x10] sm:$0xf]
  %v38 = vld [vmem:[%s1 + $0x14] sm:$0xf]
  %v39 = vld [vmem:[%s1 + $0x18] sm:$0xf]
  %v40 = vld [vmem:[%s1 + $0x1c] sm:$0xf]
  %v41 = vld [vmem:[%s1 + $0x20] sm:$0xf]
  %v42 = vld [vmem:[%s1 + $0x24] sm:$0xf]
  %v43 = vld [vmem:[%s1 + $0x28] sm:$0xf]
  %v44 = vld [vmem:[%s1 + $0x2c] sm:$0xf]
  %v45 = vld [vmem:[%s1 + $0x30] sm:$0xf]
  %v46 = vld [vmem:[%s1 + $0x34] sm:$0xf]
  %v47 = vld [vmem:[%s1 + $0x38] sm:$0xf]
  %v48 = vld [vmem:[%s1 + $0x3c] sm:$0xf]
  %v49 = vld [vmem:[%s1 + $0x40] sm:$0xf]
  %v50 = vld [vmem:[%s1 + $0x44] sm:$0xf]
  %v51 = vld [vmem:[%s1 + $0x48] sm:$0xf]
  %v52 = vld [vmem:[%s1 + $0x4c] sm:$0xf]
  %v53 = vld [vmem:[%s1 + $0x50] sm:$0xf]
  %v54 = vld [vmem:[%s1 + $0x54] sm:$0xf]
  %v55 = vld [vmem:[%s1 + $0x58] sm:$0xf]
  %v56 = vld [vmem:[%s1 + $0x5c] sm:$0xf]
  %v57 = vld [vmem:[%s1 + $0x60] sm:$0xf]
  %v58 = vld [vmem:[%s1 + $0x64] sm:$0xf]
  %v59 = vld [vmem:[%s1 + $0x68] sm:$0xf]
  %v60 = vld [vmem:[%s1 + $0x6c] sm:$0xf]
  %v61 = vld [vmem:[%s1 + $0x70] sm:$0xf]
  %v62 = vld [vmem:[%s1 + $0x74] sm:$0xf]
  %v63 = vld [vmem:[%s1 + $0x78] sm:$0xf]
  %v64 = vld [vmem:[%s1 + $0x7c] sm:$0xf]
  %v67 = vunpack.c.l.b16 %v31
  %v68 = vunpack.c.h.b16 %v31
  %v69 = vunpack.c.l.b16 %v32
  %v70 = vunpack.c.h.b16 %v32
  %v71 = vpack.c.b16 %v69, %v67
  %v72 = vpack.c.b16 %v70, %v68
  %v107 = vunpack.c.l.b16 %v33
  %v108 = vunpack.c.l.b16 %v34
  %v109 = vunpack.c.l.b16 %v35
  %v110 = vunpack.c.l.b16 %v36
  %v111 = vunpack.c.l.b16 %v37
  %v112 = vunpack.c.l.b16 %v38
  %v113 = vunpack.c.l.b16 %v39
  %v114 = vunpack.c.l.b16 %v40
  %v115 = vunpack.c.l.b16 %v41
  %v116 = vunpack.c.l.b16 %v42
  %v117 = vunpack.c.l.b16 %v43
  %v118 = vunpack.c.l.b16 %v44
  %v119 = vunpack.c.l.b16 %v45
  %v120 = vunpack.c.l.b16 %v46
  %v121 = vunpack.c.l.b16 %v47
  %v122 = vunpack.c.l.b16 %v48
  %v123 = vunpack.c.l.b16 %v49
  %v124 = vunpack.c.l.b16 %v50
  %v125 = vunpack.c.l.b16 %v51
  %v126 = vunpack.c.l.b16 %v52
  %v127 = vunpack.c.l.b16 %v53
  %v128 = vunpack.c.l.b16 %v54
  %v129 = vunpack.c.l.b16 %v55
  %v130 = vunpack.c.l.b16 %v56
  %v131 = vunpack.c.l.b16 %v57
  %v132 = vunpack.c.l.b16 %v58
  %v133 = vunpack.c.l.b16 %v59
  %v134 = vunpack.c.l.b16 %v60
  %v135 = vunpack.c.l.b16 %v61
  %v136 = vunpack.c.l.b16 %v62
  %v137 = vunpack.c.l.b16 %v63
  %v138 = vunpack.c.l.b16 %v64
  %v139 = vpack.c.b16 %v108, %v107
  %v140 = vpack.c.b16 %v110, %v109
  %v141 = vpack.c.b16 %v112, %v111
  %v142 = vpack.c.b16 %v114, %v113
  %v143 = vpack.c.b16 %v116, %v115
  %v144 = vpack.c.b16 %v118, %v117
  %v145 = vpack.c.b16 %v120, %v119
  %v146 = vpack.c.b16 %v122, %v121
  %v147 = vpack.c.b16 %v124, %v123
  %v148 = vpack.c.b16 %v126, %v125
  %v149 = vpack.c.b16 %v128, %v127
  %v150 = vpack.c.b16 %v130, %v129
  %v151 = vpack.c.b16 %v132, %v131
  %v152 = vpack.c.b16 %v134, %v133
  %v153 = vpack.c.b16 %v136, %v135
  %v154 = vpack.c.b16 %v138, %v137
  %171 = vmatpush.bf16.msra.mxu0 %v146
  %172 = vmatpush.bf16.msra.mxu0 %v145
  %173 = vmatpush.bf16.msra.mxu0 %v144
  %174 = vmatpush.bf16.msra.mxu0 %v143
  %175 = vmatpush.bf16.msra.mxu0 %v142
  %176 = vmatpush.bf16.msra.mxu0 %v141
  %177 = vmatpush.bf16.msra.mxu0 %v140
  %178 = vmatpush.bf16.msra.mxu0 %v139
  %179 = vmatmul.bf16.gmra.mxu0 %v71
  %v180 = vpop.f32.mrf.mxu0
  %v181 = vadd.f32 0.0, %v180
  %v182 = vpop.f32.mrf.mxu0
  %v183 = vadd.f32 0.0, %v182
  %184 = vdwg.mxu0
  %185 = vmatpush.bf16.msra.mxu0 %v154
  %186 = vmatpush.bf16.msra.mxu0 %v153
  %187 = vmatpush.bf16.msra.mxu0 %v152
  %188 = vmatpush.bf16.msra.mxu0 %v151
  %189 = vmatpush.bf16.msra.mxu0 %v150
  %190 = vmatpush.bf16.msra.mxu0 %v149
  %191 = vmatpush.bf16.msra.mxu0 %v148
  %192 = vmatpush.bf16.msra.mxu0 %v147
  %193 = vmatmul.bf16.gmra.mxu0 %v72
  %v194 = vpop.f32.mrf.mxu0
  %v195 = vadd.f32 %v181, %v194
  %v196 = vpop.f32.mrf.mxu0
  %v197 = vadd.f32 %v183, %v196
  %198 = vdwg.mxu0
  %v199 = vadd.f32 %v29, %v195
  %v200 = vadd.f32 %v30, %v197
  %201 = vst [vmem:[#allocation2] sm:$0xff] %v199
  %202 = vst [vmem:[#allocation2 + $0x8] sm:$0xff] %v200
  // Predicated region
  $region30: #{transformer_forward.51} parent=0 // pred_check
    %p203 = pneg %p23
  $region31: #{transformer_forward.51} parent=0 // pred_check_branch
    %205 = sbr.rel (%p203) target = $region33
  $region32: #{transformer_forward.51} parent=0 // pred_region
    %v206 = vld [vmem:[#allocation2] sm:$0xff]
    %v207 = vld [vmem:[#allocation2 + $0x8] sm:$0xff]
    %v208 = vld [vmem:[%s2] sm:$0x1]
    %v210 = vperm.slane %v208, 0
    %v212 = vadd.f32 %v206, %v210
    %v213 = vadd.f32 %v207, %v210
    %v214 = vld [vmem:[%s3] sm:$0xf]
    %v215 = vld [vmem:[%s3 + $0x4] sm:$0xf]
    %v216 = vunpack.c.l.bf16 %v214
    %v217 = vunpack.c.l.bf16 %v215
    %v218 = vadd.f32 %v212, %v216
    %v219 = vadd.f32 %v213, %v217
    %220 = vadd.xlane.f32.xlu0 %v218
    %v221 = vpop.xlane.xlu0 %220
    %222 = vadd.xlane.f32.xlu0 %v219
    %v223 = vpop.xlane.xlu0 %222
    %v224 = vrcp.pop 128.0
    %v225 = vmul.f32 128.0, %v224
    %v226 = vsub.f32 1.0, %v225
    %v227 = vmul.f32 %v224, %v226
    %v228 = vadd.f32 %v224, %v227
    %vm229 = vweird.f32 %v224
    %v230 = vsel %vm229, %v224, %v228
    %v231 = vmul.f32 %v221, %v230
    %v232 = vmul.f32 %v223, %v230
    %v233 = vsub.f32 %v218, %v231
    %v234 = vsub.f32 %v219, %v232
    %v235 = vmul.f32 %v233, %v233
    %v236 = vmul.f32 %v234, %v234
    %237 = vadd.xlane.f32.xlu0 %v235
    %v238 = vpop.xlane.xlu0 %237
    %239 = vadd.xlane.f32.xlu0 %v236
    %v240 = vpop.xlane.xlu0 %239
    %v241 = vmul.f32 %v238, %v230
    %v242 = vmul.f32 %v240, %v230
    %v243 = vadd.f32 %v241, 1e-05
    %v244 = vadd.f32 %v242, 1e-05
    %v245 = vrsqrt.pop %v243
    %v246 = vmul.f32 %v245, %v243
    %v247 = vmul.f32 %v246, %v245
    %v248 = vmul.f32 0.5, %v247
    %v249 = vsub.f32 1.5, %v248
    %v250 = vmul.f32 %v245, %v249
    %vm251 = vweird.f32 %v243
    %vm252 = vweird.f32 %v245
    %vm253 = vmor %vm251, %vm252
    %v254 = vsel %vm253, %v245, %v250
    %v255 = vrsqrt.pop %v244
    %v256 = vmul.f32 %v255, %v244
    %v257 = vmul.f32 %v256, %v255
    %v258 = vmul.f32 0.5, %v257
    %v259 = vsub.f32 1.5, %v258
    %v260 = vmul.f32 %v255, %v259
    %vm261 = vweird.f32 %v244
    %vm262 = vweird.f32 %v255
    %vm263 = vmor %vm261, %vm262
    %v264 = vsel %vm263, %v255, %v260
    %v265 = vmul.f32 %v233, %v254
    %v266 = vmul.f32 %v234, %v264
    %v267 = vld [vmem:[%s4] sm:$0x1]
    %v269 = vperm.slane %v267, 0
    %v271 = vmul.f32 %v265, %v269
    %v272 = vmul.f32 %v266, %v269
    %v273 = vld [vmem:[%s5] sm:$0x1]
    %v275 = vperm.slane %v273, 0
    %v277 = vadd.f32 %v271, %v275
    %v278 = vadd.f32 %v272, %v275
    %v279 = vpack.c.bf16 %v277, %v277
    %v280 = vpack.c.bf16 %v278, %v278
    %281 = vst [vmem:[%s6] sm:$0xf] %v279
    %282 = vst [vmem:[%s6 + $0x4] sm:$0xf] %v280
  $region33: #{transformer_forward.51} parent=0 // pred_fallthru
    _
  // Predicated region
  $region34: #{transformer_forward.51} parent=0 // pred_check
    _
  $region35: #{transformer_forward.51} parent=0 // pred_check_branch
    %284 = sbr.rel (0) target = $region37
  $region36: #{transformer_forward.51} parent=0 // pred_region
    _
  $region37: #{transformer_forward.51} parent=0 // pred_fallthru
    _
  // Predicated region
  $region38: #{transformer_forward.51} parent=0 // pred_check
    _
  $region39: #{transformer_forward.51} parent=0 // pred_check_branch
    %286 = sbr.rel (0) target = $region41
  $region40: #{transformer_forward.51} parent=0 // pred_region
    _
  $region41: #{transformer_forward.51} parent=0 // pred_fallthru
    _

// kernel: transformer_forward.61
$region0: #{transformer_forward.61}
  #allocation0 [shape = 'u32[]', space=smem, size = 0x4, offset = 0x4, fixed_abs, tag = 'smem constant byte address 0x4 - core index']
  #allocation1 [shape = 'u32[72,128]{1,0:T(1,128)}', space=vmem, size = 0x9000, scoped, tag = 'internal scratch']
  #allocation2 [shape = 'f32[16,128]{1,0:T(8,128)}', space=vmem, size = 0x2000, scoped, tag = 'scratch operand']
  %s0 = inlined_call_operand.vmem [shape: bf16[16,128], index: 0, kind: input, shape index: {}]
  %s1 = inlined_call_operand.vmem [shape: bf16[128,128], index: 1, kind: input, shape index: {}]
  %s2 = inlined_call_operand.vmem [shape: f32[1,128], index: 2, kind: input, shape index: {}]
  %s3 = inlined_call_operand.vmem [shape: f32[16,128], index: 3, kind: output, shape index: {}]
  %s4 = sld [smem:[#allocation0]]
  $region30: #{transformer_forward.61} parent=0
    _
  %s6 = ssub.s32 1, %s4
  %s7 = scalar_select 0, %s6, %s4
  // Predicated region
  $region2: #{transformer_forward.61} parent=0 // pred_check
    _
  $region3: #{transformer_forward.61} parent=0 // pred_check_branch
    %9 = sbr.rel (0) target = $region5
  $region4: #{transformer_forward.61} parent=0 // pred_region
    _
  $region5: #{transformer_forward.61} parent=0 // pred_fallthru
    _
  // Predicated region
  $region6: #{transformer_forward.61} parent=0 // pred_check
    _
  $region7: #{transformer_forward.61} parent=0 // pred_check_branch
    %11 = sbr.rel (0) target = $region9
  $region8: #{transformer_forward.61} parent=0 // pred_region
    _
  $region9: #{transformer_forward.61} parent=0 // pred_fallthru
    _
  // Predicated region
  $region10: #{transformer_forward.61} parent=0 // pred_check
    _
  $region11: #{transformer_forward.61} parent=0 // pred_check_branch
    %13 = sbr.rel (0) target = $region13
  $region12: #{transformer_forward.61} parent=0 // pred_region
    _
  $region13: #{transformer_forward.61} parent=0 // pred_fallthru
    _
  %p14 = scmp.eq.s32.totalorder 0, 0
  // Predicated region
  $region14: #{transformer_forward.61} parent=0 // pred_check
    %p15 = pneg %p14
  $region15: #{transformer_forward.61} parent=0 // pred_check_branch
    %17 = sbr.rel (%p15) target = $region17
  $region16: #{transformer_forward.61} parent=0 // pred_region
    %18 = vst [vmem:[#allocation2] sm:$0xff] 0.0
    %19 = vst [vmem:[#allocation2 + $0x8] sm:$0xff] 0.0
  $region17: #{transformer_forward.61} parent=0 // pred_fallthru
    _
  %v20 = vld [vmem:[#allocation2] sm:$0xff]
  %v21 = vld [vmem:[#allocation2 + $0x8] sm:$0xff]
  %v22 = vld [vmem:[%s0] sm:$0xf]
  %v23 = vld [vmem:[%s0 + $0x4] sm:$0xf]
  %v24 = vld [vmem:[%s1] sm:$0xf]
  %v25 = vld [vmem:[%s1 + $0x4] sm:$0xf]
  %v26 = vld [vmem:[%s1 + $0x8] sm:$0xf]
  %v27 = vld [vmem:[%s1 + $0xc] sm:$0xf]
  %v28 = vld [vmem:[%s1 + $0x10] sm:$0xf]
  %v29 = vld [vmem:[%s1 + $0x14] sm:$0xf]
  %v30 = vld [vmem:[%s1 + $0x18] sm:$0xf]
  %v31 = vld [vmem:[%s1 + $0x1c] sm:$0xf]
  %v32 = vld [vmem:[%s1 + $0x20] sm:$0xf]
  %v33 = vld [vmem:[%s1 + $0x24] sm:$0xf]
  %v34 = vld [vmem:[%s1 + $0x28] sm:$0xf]
  %v35 = vld [vmem:[%s1 + $0x2c] sm:$0xf]
  %v36 = vld [vmem:[%s1 + $0x30] sm:$0xf]
  %v37 = vld [vmem:[%s1 + $0x34] sm:$0xf]
  %v38 = vld [vmem:[%s1 + $0x38] sm:$0xf]
  %v39 = vld [vmem:[%s1 + $0x3c] sm:$0xf]
  %v42 = vunpack.c.l.b16 %v22
  %v43 = vunpack.c.l.b16 %v23
  %v44 = vpack.c.b16 %v43, %v42
  %v62 = vunpack.c.l.b16 %v24
  %v63 = vunpack.c.l.b16 %v25
  %v64 = vunpack.c.l.b16 %v26
  %v65 = vunpack.c.l.b16 %v27
  %v66 = vunpack.c.l.b16 %v28
  %v67 = vunpack.c.l.b16 %v29
  %v68 = vunpack.c.l.b16 %v30
  %v69 = vunpack.c.l.b16 %v31
  %v70 = vunpack.c.l.b16 %v32
  %v71 = vunpack.c.l.b16 %v33
  %v72 = vunpack.c.l.b16 %v34
  %v73 = vunpack.c.l.b16 %v35
  %v74 = vunpack.c.l.b16 %v36
  %v75 = vunpack.c.l.b16 %v37
  %v76 = vunpack.c.l.b16 %v38
  %v77 = vunpack.c.l.b16 %v39
  %v78 = vpack.c.b16 %v63, %v62
  %v79 = vpack.c.b16 %v65, %v64
  %v80 = vpack.c.b16 %v67, %v66
  %v81 = vpack.c.b16 %v69, %v68
  %v82 = vpack.c.b16 %v71, %v70
  %v83 = vpack.c.b16 %v73, %v72
  %v84 = vpack.c.b16 %v75, %v74
  %v85 = vpack.c.b16 %v77, %v76
  %94 = vmatpush.bf16.msra.mxu0 %v85
  %95 = vmatpush.bf16.msra.mxu0 %v84
  %96 = vmatpush.bf16.msra.mxu0 %v83
  %97 = vmatpush.bf16.msra.mxu0 %v82
  %98 = vmatpush.bf16.msra.mxu0 %v81
  %99 = vmatpush.bf16.msra.mxu0 %v80
  %100 = vmatpush.bf16.msra.mxu0 %v79
  %101 = vmatpush.bf16.msra.mxu0 %v78
  %102 = vmatmul.bf16.gmra.mxu0 %v44
  %v103 = vpop.f32.mrf.mxu0
  %v104 = vadd.f32 0.0, %v103
  %v105 = vpop.f32.mrf.mxu0
  %v106 = vadd.f32 0.0, %v105
  %107 = vdwg.mxu0
  %v108 = vadd.f32 %v20, %v104
  %v109 = vadd.f32 %v21, %v106
  %110 = vst [vmem:[#allocation2] sm:$0xff] %v108
  %111 = vst [vmem:[#allocation2 + $0x8] sm:$0xff] %v109
  // Predicated region
  $region18: #{transformer_forward.61} parent=0 // pred_check
    %p112 = pneg %p14
  $region19: #{transformer_forward.61} parent=0 // pred_check_branch
    %114 = sbr.rel (%p112) target = $region21
  $region20: #{transformer_forward.61} parent=0 // pred_region
    %v115 = vld [vmem:[#allocation2] sm:$0xff]
    %v116 = vld [vmem:[#allocation2 + $0x8] sm:$0xff]
    %v117 = vld [vmem:[%s2] sm:$0x1]
    %v119 = vperm.slane %v117, 0
    %v121 = vadd.f32 %v115, %v119
    %v122 = vadd.f32 %v116, %v119
    %123 = vst [vmem:[%s3] sm:$0xff] %v121
    %124 = vst [vmem:[%s3 + $0x8] sm:$0xff] %v122
  $region21: #{transformer_forward.61} parent=0 // pred_fallthru
    _
  // Predicated region
  $region22: #{transformer_forward.61} parent=0 // pred_check
    _
  $region23: #{transformer_forward.61} parent=0 // pred_check_branch
    %126 = sbr.rel (0) target = $region25
  $region24: #{transformer_forward.61} parent=0 // pred_region
    _
  $region25: #{transformer_forward.61} parent=0 // pred_fallthru
    _
  // Predicated region
  $region26: #{transformer_forward.61} parent=0 // pred_check
    _
  $region27: #{transformer_forward.61} parent=0 // pred_check_branch
    %128 = sbr.rel (0) target = $region29
  $region28: #{transformer_forward.61} parent=0 // pred_region
    _
  $region29: #{transformer_forward.61} parent=0 // pred_fallthru
    _

</llo_original>
